<compile_context>
chip_gen: v7x
topology: tpu7x:2x2x1
jax: 0.10.0
libtpu: 0.0.40
codegen_flags: <defaults>
</compile_context>

<pallas_src>
import jax
import jax.numpy as jnp
from jax.experimental import pallas as pl
from jax.experimental.pallas import tpu as pltpu


def _make_kernel(H, W, Cout, TH, CW, compute_dtype):
    """Kernel closure over the static shape parameters of one row tile."""

    def kernel(x_ref, w1_ref, b1_ref, w3_ref, t3_ref, o_ref, s_ref):
        # x_ref : (1, H+4, Cin, W)  bf16, rows zero-padded by 2 (one batch elem)
        # w1_ref: (Cout, Cin)       bf16
        # b1_ref: (Cout, 1)         f32
        # w3_ref: (9, Cout, Cout)   bf16  (BN2 scale folded in, tap-major, [o,i])
        # t3_ref: (Cout, 1)         f32   (b3*s2 + t2 folded shift)
        # o_ref : (1, TH, Cout, W)  bf16 output tile
        # s_ref : (TH+4, Cout, W+4) bf16 scratch: column-padded conv1 result
        t = pl.program_id(1)
        row0 = pl.multiple_of(t * TH, TH)

        w1 = w1_ref[...]
        b1 = b1_ref[...]
        t3 = t3_ref[...]
        zpad = jnp.zeros((Cout, 2), compute_dtype)

        # ---- phase 1: conv1 (1x1) into the column-padded scratch --------------
        # LeakyReLU(True) == identity, so the shortcut is conv1(x) + b1.
        for yp in range(TH + 4):
            g = row0 + yp                                    # global padded row
            valid = jnp.logical_and(g >= 2, g < H + 2)
            bias = jnp.where(valid, b1, 0.0)                 # (Cout, 1) f32
            # re-zero the 2+2 pad lanes of this row slab (cheap, done every step)
            s_ref[yp, :, 0:2] = zpad
            s_ref[yp, :, W + 2:W + 4] = zpad
            for c0 in range(0, W, CW):
                xa = x_ref[0, g, :, pl.ds(c0, CW)]           # (Cin, CW) bf16
                sp = jnp.dot(w1, xa,
                             preferred_element_type=jnp.float32) + bias
                s_ref[yp, :, pl.ds(2 + c0, CW)] = sp.astype(compute_dtype)

        # ---- phase 2: conv3 (3x3, pad=2, dilation=2) + folded BN2 + residual ---
        wtaps = [w3_ref[k] for k in range(9)]                # 9 x (Cout, Cout)
        for y in range(TH):
            for c0 in range(0, W, CW):
                acc = jnp.zeros((Cout, CW), jnp.float32)     # lives in vregs
                for ky in range(3):
                    for kx in range(3):
                        sa = s_ref[y + 2 * ky, :, pl.ds(c0 + 2 * kx, CW)]
                        acc = acc + jnp.dot(wtaps[3 * ky + kx], sa,
                                            preferred_element_type=jnp.float32)
                shortcut = s_ref[y + 2, :, pl.ds(c0 + 2, CW)].astype(jnp.float32)
                res = acc + t3 + shortcut
                o_ref[0, y, :, pl.ds(c0, CW)] = res.astype(o_ref.dtype)

    return kernel


def res_context_block(x_nchw, params, *, eps=1e-5, tile_h=8,
                      compute_dtype=jnp.bfloat16, out_dtype=jnp.bfloat16):
    """Pallas implementation of ResContextBlock.forward (NCHW in / NCHW out)."""
    N, Cin, H, W = x_nchw.shape
    Cout = params["w1"].shape[1]

    # Row tile: v5e/v6e can raise to 16-32 (128 MiB VMEM); keep 8 on v7x.
    TH = tile_h if (tile_h <= H and H % tile_h == 0) else H
    T = H // TH
    # Column chunk: lane-dense but small enough that the (Cout, CW) f32
    # accumulator stays in vector registers.
    CW = W
    for c in (512, 256, 128):
        if W % c == 0:
            CW = c
            break

    # NCHW -> (N, H, Cin, W) planar rows; zero-pad 2 rows top/bottom (conv3 pad).
    x = jnp.transpose(x_nchw, (0, 2, 1, 3))
    xp = jnp.pad(x, ((0, 0), (2, 2), (0, 0), (0, 0))).astype(compute_dtype)

    # Fold bias + eval-mode BatchNorm2d into conv3 (activations are identity).
    s2 = params["bn2_g"] / jnp.sqrt(params["bn2_v"] + eps)
    t2 = params["bn2_b"] - params["bn2_m"] * s2
    w1k = params["w1"].T.astype(compute_dtype)                         # (Cout, Cin)
    b1k = params["b1"].reshape(Cout, 1).astype(jnp.float32)
    w3k = jnp.transpose(params["w3"] * s2[None, None, None, :], (0, 1, 3, 2))
    w3k = w3k.reshape(9, Cout, Cout).astype(compute_dtype)             # (tap, o, i)
    t3k = (params["b3"] * s2 + t2).reshape(Cout, 1).astype(jnp.float32)

    kernel = _make_kernel(H, W, Cout, TH, CW, compute_dtype)

    out = pl.pallas_call(
        kernel,
        out_shape=jax.ShapeDtypeStruct((N, H, Cout, W), out_dtype),
        grid_spec=pltpu.PrefetchScalarGridSpec(
            num_scalar_prefetch=0,
            grid=(N, T),
            in_specs=[
                # All padded rows of one batch element; the block index is
                # constant across t, so it is DMA'd once per batch element.
                pl.BlockSpec((1, H + 4, Cin, W), lambda n, t: (n, 0, 0, 0)),
                pl.BlockSpec((Cout, Cin), lambda n, t: (0, 0)),
                pl.BlockSpec((Cout, 1), lambda n, t: (0, 0)),
                pl.BlockSpec((9, Cout, Cout), lambda n, t: (0, 0, 0)),
                pl.BlockSpec((Cout, 1), lambda n, t: (0, 0)),
            ],
            out_specs=pl.BlockSpec((1, TH, Cout, W), lambda n, t: (n, t, 0, 0)),
            scratch_shapes=[pltpu.VMEM((TH + 4, Cout, W + 4), compute_dtype)],
        ),
        compiler_params=pltpu.CompilerParams(
            # Batch axis "parallel" so v7x megacore splits on n and keeps the
            # once-per-batch input DMA amortization; row tiles run sequentially.
            dimension_semantics=("parallel", "arbitrary"),
        ),
    )(xp, w1k, b1k, w3k, t3k)

    return jnp.transpose(out, (0, 2, 1, 3))        # (N, H, Cout, W) -> NCHW


def reference(x_nchw, params, eps=1e-5):
    """Pure-JAX f32 reference (live path: conv1 -> conv3 -> bn2 + shortcut).

    LeakyReLU(True) has negative_slope=1.0, i.e. identity, so it is omitted."""
    Cin, Cout = params["w1"].shape
    x = jnp.transpose(x_nchw, (0, 2, 3, 1)).astype(jnp.float32)
    dn = ("NHWC", "HWIO", "NHWC")
    w1 = params["w1"].reshape(1, 1, Cin, Cout)
    sc = jax.lax.conv_general_dilated(x, w1, (1, 1), "VALID",
                                      dimension_numbers=dn) + params["b1"]
    c3 = jax.lax.conv_general_dilated(sc, params["w3"], (1, 1),
                                      ((2, 2), (2, 2)), rhs_dilation=(2, 2),
                                      dimension_numbers=dn) + params["b3"]
    bn2 = ((c3 - params["bn2_m"]) / jnp.sqrt(params["bn2_v"] + eps)
           * params["bn2_g"] + params["bn2_b"])
    return jnp.transpose(bn2 + sc, (0, 3, 1, 2))


if __name__ == "__main__":
    N, Cin, Cout, H, W = 2, 4, 8, 16, 16

    key = jax.random.PRNGKey(0)
    ks = jax.random.split(key, 16)
    # Conv weights stored in HWIO (== PyTorch OIHW transposed (2,3,1,0));
    # conv1's 1x1 weight is stored as (Cin, Cout).
    # w2/b2/bn1 belong to the dead conv2 branch (its result is overwritten in
    # forward); they exist in the module but are not consumed here.
    params = {
        "w1": 0.2 * jax.random.normal(ks[0], (Cin, Cout), jnp.float32),
        "b1": 0.1 * jax.random.normal(ks[1], (Cout,), jnp.float32),
        "w2": 0.1 * jax.random.normal(ks[2], (3, 3, Cout, Cout), jnp.float32),
        "b2": 0.1 * jax.random.normal(ks[3], (Cout,), jnp.float32),
        "w3": 0.1 * jax.random.normal(ks[4], (3, 3, Cout, Cout), jnp.float32),
        "b3": 0.1 * jax.random.normal(ks[5], (Cout,), jnp.float32),
        "bn1_g": 0.5 + jax.random.uniform(ks[6], (Cout,), jnp.float32),
        "bn1_b": 0.1 * jax.random.normal(ks[7], (Cout,), jnp.float32),
        "bn1_m": 0.1 * jax.random.normal(ks[8], (Cout,), jnp.float32),
        "bn1_v": 0.5 + jax.random.uniform(ks[9], (Cout,), jnp.float32),
        "bn2_g": 0.5 + jax.random.uniform(ks[10], (Cout,), jnp.float32),
        "bn2_b": 0.1 * jax.random.normal(ks[11], (Cout,), jnp.float32),
        "bn2_m": 0.1 * jax.random.normal(ks[12], (Cout,), jnp.float32),
        "bn2_v": 0.5 + jax.random.uniform(ks[13], (Cout,), jnp.float32),
    }

    x = jax.random.normal(ks[14], (N, Cin, H, W), jnp.float32)  # NCHW like PyTorch

    out = res_context_block(x, params)
    out = jax.block_until_ready(out)
    assert out.shape == (N, Cout, H, W), out.shape

    ref = reference(x, params)
    max_err = float(jnp.max(jnp.abs(out.astype(jnp.float32) - ref)))
    # bf16 activations/weights/output with f32 accumulation vs an all-f32 ref.
    assert max_err < 5e-2, f"mismatch vs reference: {max_err}"

    print("KERNEL_OK")
</pallas_src>

<mosaic_0001>
module attributes {stable_mosaic.version = 11 : i64} {
  func.func @kernel(%arg0: i32, %arg1: i32, %arg2: memref<1x20x4x16xbf16, #tpu.memory_space<vmem>>, %arg3: memref<8x4xbf16, #tpu.memory_space<vmem>>, %arg4: memref<8x1xf32, #tpu.memory_space<vmem>>, %arg5: memref<9x8x8xbf16, #tpu.memory_space<vmem>>, %arg6: memref<8x1xf32, #tpu.memory_space<vmem>>, %arg7: memref<1x8x8x16xbf16, #tpu.memory_space<vmem>>, %arg8: memref<12x8x20xbf16, #tpu.memory_space<vmem>>) attributes {dimension_semantics = [#tpu.dimension_semantics<parallel>, #tpu.dimension_semantics<arbitrary>], iteration_bounds = array<i64: 2, 2>, scalar_prefetch = 0 : i64, scratch_operands = 1 : i64, tpu.core_type = #tpu.core_type<tc>, window_params = [{transform_indices = @transform_0, window_bounds = array<i64: 1, 20, 4, 16>}, {pipeline_mode = #tpu.pipeline_mode<synchronous>, transform_indices = @transform_1, window_bounds = array<i64: 8, 4>}, {pipeline_mode = #tpu.pipeline_mode<synchronous>, transform_indices = @transform_2, window_bounds = array<i64: 8, 1>}, {pipeline_mode = #tpu.pipeline_mode<synchronous>, transform_indices = @transform_3, window_bounds = array<i64: 9, 8, 8>}, {pipeline_mode = #tpu.pipeline_mode<synchronous>, transform_indices = @transform_4, window_bounds = array<i64: 8, 1>}, {transform_indices = @transform_5, window_bounds = array<i64: 1, 8, 8, 16>}]} {
    %c8_i32 = arith.constant 8 : i32
    %0 = arith.muli %arg1, %c8_i32 : i32
    %1 = tpu.assume_multiple %0, 8 : i32
    %c0 = arith.constant 0 : index
    %c0_0 = arith.constant 0 : index
    %2 = vector.load %arg3[%c0, %c0_0] : memref<8x4xbf16, #tpu.memory_space<vmem>>, vector<8x4xbf16>
    %c0_1 = arith.constant 0 : index
    %c0_2 = arith.constant 0 : index
    %3 = vector.load %arg4[%c0_1, %c0_2] : memref<8x1xf32, #tpu.memory_space<vmem>>, vector<8x1xf32>
    %c0_3 = arith.constant 0 : index
    %c0_4 = arith.constant 0 : index
    %4 = vector.load %arg6[%c0_3, %c0_4] : memref<8x1xf32, #tpu.memory_space<vmem>>, vector<8x1xf32>
    %cst = arith.constant 0.000000e+00 : bf16
    %5 = vector.broadcast %cst : bf16 to vector<8x2xbf16>
    %c0_i32 = arith.constant 0 : i32
    %6 = arith.addi %1, %c0_i32 : i32
    %c2_i32 = arith.constant 2 : i32
    %7 = arith.cmpi sge, %6, %c2_i32 : i32
    %c18_i32 = arith.constant 18 : i32
    %8 = arith.cmpi slt, %6, %c18_i32 : i32
    %9 = arith.andi %7, %8 : i1
    %cst_5 = arith.constant 0.000000e+00 : f32
    %10 = vector.broadcast %cst_5 : f32 to vector<8x1xf32>
    %11 = arith.select %9, %3, %10 : vector<8x1xf32>
    %c0_6 = arith.constant 0 : index
    %c0_7 = arith.constant 0 : index
    %c0_8 = arith.constant 0 : index
    %12 = vector.load %arg8[%c0_6, %c0_7, %c0_8] : memref<12x8x20xbf16, #tpu.memory_space<vmem>>, vector<1x8x2xbf16>
    %13 = vector.shape_cast %12 : vector<1x8x2xbf16> to vector<8x2xbf16>
    %14 = vector.shape_cast %5 : vector<8x2xbf16> to vector<1x8x2xbf16>
    tpu.vector_store %arg8[%c0_6, %c0_7, %c0_8], %14 {strides = array<i32>} : memref<12x8x20xbf16, #tpu.memory_space<vmem>>, vector<1x8x2xbf16>,
    %c0_9 = arith.constant 0 : index
    %c0_10 = arith.constant 0 : index
    %c18 = arith.constant 18 : index
    %15 = vector.load %arg8[%c0_9, %c0_10, %c18] : memref<12x8x20xbf16, #tpu.memory_space<vmem>>, vector<1x8x2xbf16>
    %16 = vector.shape_cast %15 : vector<1x8x2xbf16> to vector<8x2xbf16>
    %17 = vector.shape_cast %5 : vector<8x2xbf16> to vector<1x8x2xbf16>
    tpu.vector_store %arg8[%c0_9, %c0_10, %c18], %17 {strides = array<i32>} : memref<12x8x20xbf16, #tpu.memory_space<vmem>>, vector<1x8x2xbf16>,
    %c0_11 = arith.constant 0 : index
    %18 = arith.index_cast %6 : i32 to index
    %c0_12 = arith.constant 0 : index
    %c0_13 = arith.constant 0 : index
    %19 = vector.load %arg2[%c0_11, %18, %c0_12, %c0_13] : memref<1x20x4x16xbf16, #tpu.memory_space<vmem>>, vector<1x1x4x16xbf16>
    %20 = vector.shape_cast %19 : vector<1x1x4x16xbf16> to vector<4x16xbf16>
    %cst_14 = arith.constant dense<0.000000e+00> : vector<8x16xf32>
    %21 = tpu.matmul %2, %20, %cst_14 {dimension_numbers = #tpu.dot_dimension_numbers<[1], [0], [0], [1], [0, 0, 1, 1], [], []>} : vector<8x4xbf16>, vector<4x16xbf16>, vector<8x16xf32> -> vector<8x16xf32>
    %22 = vector.broadcast %11 : vector<8x1xf32> to vector<8x16xf32>
    %23 = arith.addf %21, %22 : vector<8x16xf32>
    %24 = arith.truncf %23 : vector<8x16xf32> to vector<8x16xbf16>
    %c0_15 = arith.constant 0 : index
    %c0_16 = arith.constant 0 : index
    %c2 = arith.constant 2 : index
    %25 = vector.load %arg8[%c0_15, %c0_16, %c2] : memref<12x8x20xbf16, #tpu.memory_space<vmem>>, vector<1x8x16xbf16>
    %26 = vector.shape_cast %25 : vector<1x8x16xbf16> to vector<8x16xbf16>
    %27 = vector.shape_cast %24 : vector<8x16xbf16> to vector<1x8x16xbf16>
    tpu.vector_store %arg8[%c0_15, %c0_16, %c2], %27 {strides = array<i32>} : memref<12x8x20xbf16, #tpu.memory_space<vmem>>, vector<1x8x16xbf16>,
    %c1_i32 = arith.constant 1 : i32
    %28 = arith.addi %1, %c1_i32 : i32
    %c2_i32_17 = arith.constant 2 : i32
    %29 = arith.cmpi sge, %28, %c2_i32_17 : i32
    %c18_i32_18 = arith.constant 18 : i32
    %30 = arith.cmpi slt, %28, %c18_i32_18 : i32
    %31 = arith.andi %29, %30 : i1
    %cst_19 = arith.constant 0.000000e+00 : f32
    %32 = vector.broadcast %cst_19 : f32 to vector<8x1xf32>
    %33 = arith.select %31, %3, %32 : vector<8x1xf32>
    %c1 = arith.constant 1 : index
    %c0_20 = arith.constant 0 : index
    %c0_21 = arith.constant 0 : index
    %34 = vector.load %arg8[%c1, %c0_20, %c0_21] : memref<12x8x20xbf16, #tpu.memory_space<vmem>>, vector<1x8x2xbf16>
    %35 = vector.shape_cast %34 : vector<1x8x2xbf16> to vector<8x2xbf16>
    %36 = vector.shape_cast %5 : vector<8x2xbf16> to vector<1x8x2xbf16>
    tpu.vector_store %arg8[%c1, %c0_20, %c0_21], %36 {strides = array<i32>} : memref<12x8x20xbf16, #tpu.memory_space<vmem>>, vector<1x8x2xbf16>,
    %c1_22 = arith.constant 1 : index
    %c0_23 = arith.constant 0 : index
    %c18_24 = arith.constant 18 : index
    %37 = vector.load %arg8[%c1_22, %c0_23, %c18_24] : memref<12x8x20xbf16, #tpu.memory_space<vmem>>, vector<1x8x2xbf16>
    %38 = vector.shape_cast %37 : vector<1x8x2xbf16> to vector<8x2xbf16>
    %39 = vector.shape_cast %5 : vector<8x2xbf16> to vector<1x8x2xbf16>
    tpu.vector_store %arg8[%c1_22, %c0_23, %c18_24], %39 {strides = array<i32>} : memref<12x8x20xbf16, #tpu.memory_space<vmem>>, vector<1x8x2xbf16>,
    %c0_25 = arith.constant 0 : index
    %40 = arith.index_cast %28 : i32 to index
    %c0_26 = arith.constant 0 : index
    %c0_27 = arith.constant 0 : index
    %41 = vector.load %arg2[%c0_25, %40, %c0_26, %c0_27] : memref<1x20x4x16xbf16, #tpu.memory_space<vmem>>, vector<1x1x4x16xbf16>
    %42 = vector.shape_cast %41 : vector<1x1x4x16xbf16> to vector<4x16xbf16>
    %cst_28 = arith.constant dense<0.000000e+00> : vector<8x16xf32>
    %43 = tpu.matmul %2, %42, %cst_28 {dimension_numbers = #tpu.dot_dimension_numbers<[1], [0], [0], [1], [0, 0, 1, 1], [], []>} : vector<8x4xbf16>, vector<4x16xbf16>, vector<8x16xf32> -> vector<8x16xf32>
    %44 = vector.broadcast %33 : vector<8x1xf32> to vector<8x16xf32>
    %45 = arith.addf %43, %44 : vector<8x16xf32>
    %46 = arith.truncf %45 : vector<8x16xf32> to vector<8x16xbf16>
    %c1_29 = arith.constant 1 : index
    %c0_30 = arith.constant 0 : index
    %c2_31 = arith.constant 2 : index
    %47 = vector.load %arg8[%c1_29, %c0_30, %c2_31] : memref<12x8x20xbf16, #tpu.memory_space<vmem>>, vector<1x8x16xbf16>
    %48 = vector.shape_cast %47 : vector<1x8x16xbf16> to vector<8x16xbf16>
    %49 = vector.shape_cast %46 : vector<8x16xbf16> to vector<1x8x16xbf16>
    tpu.vector_store %arg8[%c1_29, %c0_30, %c2_31], %49 {strides = array<i32>} : memref<12x8x20xbf16, #tpu.memory_space<vmem>>, vector<1x8x16xbf16>,
    %c2_i32_32 = arith.constant 2 : i32
    %50 = arith.addi %1, %c2_i32_32 : i32
    %c2_i32_33 = arith.constant 2 : i32
    %51 = arith.cmpi sge, %50, %c2_i32_33 : i32
    %c18_i32_34 = arith.constant 18 : i32
    %52 = arith.cmpi slt, %50, %c18_i32_34 : i32
    %53 = arith.andi %51, %52 : i1
    %cst_35 = arith.constant 0.000000e+00 : f32
    %54 = vector.broadcast %cst_35 : f32 to vector<8x1xf32>
    %55 = arith.select %53, %3, %54 : vector<8x1xf32>
    %c2_36 = arith.constant 2 : index
    %c0_37 = arith.constant 0 : index
    %c0_38 = arith.constant 0 : index
    %56 = vector.load %arg8[%c2_36, %c0_37, %c0_38] : memref<12x8x20xbf16, #tpu.memory_space<vmem>>, vector<1x8x2xbf16>
    %57 = vector.shape_cast %56 : vector<1x8x2xbf16> to vector<8x2xbf16>
    %58 = vector.shape_cast %5 : vector<8x2xbf16> to vector<1x8x2xbf16>
    tpu.vector_store %arg8[%c2_36, %c0_37, %c0_38], %58 {strides = array<i32>} : memref<12x8x20xbf16, #tpu.memory_space<vmem>>, vector<1x8x2xbf16>,
    %c2_39 = arith.constant 2 : index
    %c0_40 = arith.constant 0 : index
    %c18_41 = arith.constant 18 : index
    %59 = vector.load %arg8[%c2_39, %c0_40, %c18_41] : memref<12x8x20xbf16, #tpu.memory_space<vmem>>, vector<1x8x2xbf16>
    %60 = vector.shape_cast %59 : vector<1x8x2xbf16> to vector<8x2xbf16>
    %61 = vector.shape_cast %5 : vector<8x2xbf16> to vector<1x8x2xbf16>
    tpu.vector_store %arg8[%c2_39, %c0_40, %c18_41], %61 {strides = array<i32>} : memref<12x8x20xbf16, #tpu.memory_space<vmem>>, vector<1x8x2xbf16>,
    %c0_42 = arith.constant 0 : index
    %62 = arith.index_cast %50 : i32 to index
    %c0_43 = arith.constant 0 : index
    %c0_44 = arith.constant 0 : index
    %63 = vector.load %arg2[%c0_42, %62, %c0_43, %c0_44] : memref<1x20x4x16xbf16, #tpu.memory_space<vmem>>, vector<1x1x4x16xbf16>
    %64 = vector.shape_cast %63 : vector<1x1x4x16xbf16> to vector<4x16xbf16>
    %cst_45 = arith.constant dense<0.000000e+00> : vector<8x16xf32>
    %65 = tpu.matmul %2, %64, %cst_45 {dimension_numbers = #tpu.dot_dimension_numbers<[1], [0], [0], [1], [0, 0, 1, 1], [], []>} : vector<8x4xbf16>, vector<4x16xbf16>, vector<8x16xf32> -> vector<8x16xf32>
    %66 = vector.broadcast %55 : vector<8x1xf32> to vector<8x16xf32>
    %67 = arith.addf %65, %66 : vector<8x16xf32>
    %68 = arith.truncf %67 : vector<8x16xf32> to vector<8x16xbf16>
    %c2_46 = arith.constant 2 : index
    %c0_47 = arith.constant 0 : index
    %c2_48 = arith.constant 2 : index
    %69 = vector.load %arg8[%c2_46, %c0_47, %c2_48] : memref<12x8x20xbf16, #tpu.memory_space<vmem>>, vector<1x8x16xbf16>
    %70 = vector.shape_cast %69 : vector<1x8x16xbf16> to vector<8x16xbf16>
    %71 = vector.shape_cast %68 : vector<8x16xbf16> to vector<1x8x16xbf16>
    tpu.vector_store %arg8[%c2_46, %c0_47, %c2_48], %71 {strides = array<i32>} : memref<12x8x20xbf16, #tpu.memory_space<vmem>>, vector<1x8x16xbf16>,
    %c3_i32 = arith.constant 3 : i32
    %72 = arith.addi %1, %c3_i32 : i32
    %c2_i32_49 = arith.constant 2 : i32
    %73 = arith.cmpi sge, %72, %c2_i32_49 : i32
    %c18_i32_50 = arith.constant 18 : i32
    %74 = arith.cmpi slt, %72, %c18_i32_50 : i32
    %75 = arith.andi %73, %74 : i1
    %cst_51 = arith.constant 0.000000e+00 : f32
    %76 = vector.broadcast %cst_51 : f32 to vector<8x1xf32>
    %77 = arith.select %75, %3, %76 : vector<8x1xf32>
    %c3 = arith.constant 3 : index
    %c0_52 = arith.constant 0 : index
    %c0_53 = arith.constant 0 : index
    %78 = vector.load %arg8[%c3, %c0_52, %c0_53] : memref<12x8x20xbf16, #tpu.memory_space<vmem>>, vector<1x8x2xbf16>
    %79 = vector.shape_cast %78 : vector<1x8x2xbf16> to vector<8x2xbf16>
    %80 = vector.shape_cast %5 : vector<8x2xbf16> to vector<1x8x2xbf16>
    tpu.vector_store %arg8[%c3, %c0_52, %c0_53], %80 {strides = array<i32>} : memref<12x8x20xbf16, #tpu.memory_space<vmem>>, vector<1x8x2xbf16>,
    %c3_54 = arith.constant 3 : index
    %c0_55 = arith.constant 0 : index
    %c18_56 = arith.constant 18 : index
    %81 = vector.load %arg8[%c3_54, %c0_55, %c18_56] : memref<12x8x20xbf16, #tpu.memory_space<vmem>>, vector<1x8x2xbf16>
    %82 = vector.shape_cast %81 : vector<1x8x2xbf16> to vector<8x2xbf16>
    %83 = vector.shape_cast %5 : vector<8x2xbf16> to vector<1x8x2xbf16>
    tpu.vector_store %arg8[%c3_54, %c0_55, %c18_56], %83 {strides = array<i32>} : memref<12x8x20xbf16, #tpu.memory_space<vmem>>, vector<1x8x2xbf16>,
    %c0_57 = arith.constant 0 : index
    %84 = arith.index_cast %72 : i32 to index
    %c0_58 = arith.constant 0 : index
    %c0_59 = arith.constant 0 : index
    %85 = vector.load %arg2[%c0_57, %84, %c0_58, %c0_59] : memref<1x20x4x16xbf16, #tpu.memory_space<vmem>>, vector<1x1x4x16xbf16>
    %86 = vector.shape_cast %85 : vector<1x1x4x16xbf16> to vector<4x16xbf16>
    %cst_60 = arith.constant dense<0.000000e+00> : vector<8x16xf32>
    %87 = tpu.matmul %2, %86, %cst_60 {dimension_numbers = #tpu.dot_dimension_numbers<[1], [0], [0], [1], [0, 0, 1, 1], [], []>} : vector<8x4xbf16>, vector<4x16xbf16>, vector<8x16xf32> -> vector<8x16xf32>
    %88 = vector.broadcast %77 : vector<8x1xf32> to vector<8x16xf32>
    %89 = arith.addf %87, %88 : vector<8x16xf32>
    %90 = arith.truncf %89 : vector<8x16xf32> to vector<8x16xbf16>
    %c3_61 = arith.constant 3 : index
    %c0_62 = arith.constant 0 : index
    %c2_63 = arith.constant 2 : index
    %91 = vector.load %arg8[%c3_61, %c0_62, %c2_63] : memref<12x8x20xbf16, #tpu.memory_space<vmem>>, vector<1x8x16xbf16>
    %92 = vector.shape_cast %91 : vector<1x8x16xbf16> to vector<8x16xbf16>
    %93 = vector.shape_cast %90 : vector<8x16xbf16> to vector<1x8x16xbf16>
    tpu.vector_store %arg8[%c3_61, %c0_62, %c2_63], %93 {strides = array<i32>} : memref<12x8x20xbf16, #tpu.memory_space<vmem>>, vector<1x8x16xbf16>,
    %c4_i32 = arith.constant 4 : i32
    %94 = arith.addi %1, %c4_i32 : i32
    %c2_i32_64 = arith.constant 2 : i32
    %95 = arith.cmpi sge, %94, %c2_i32_64 : i32
    %c18_i32_65 = arith.constant 18 : i32
    %96 = arith.cmpi slt, %94, %c18_i32_65 : i32
    %97 = arith.andi %95, %96 : i1
    %cst_66 = arith.constant 0.000000e+00 : f32
    %98 = vector.broadcast %cst_66 : f32 to vector<8x1xf32>
    %99 = arith.select %97, %3, %98 : vector<8x1xf32>
    %c4 = arith.constant 4 : index
    %c0_67 = arith.constant 0 : index
    %c0_68 = arith.constant 0 : index
    %100 = vector.load %arg8[%c4, %c0_67, %c0_68] : memref<12x8x20xbf16, #tpu.memory_space<vmem>>, vector<1x8x2xbf16>
    %101 = vector.shape_cast %100 : vector<1x8x2xbf16> to vector<8x2xbf16>
    %102 = vector.shape_cast %5 : vector<8x2xbf16> to vector<1x8x2xbf16>
    tpu.vector_store %arg8[%c4, %c0_67, %c0_68], %102 {strides = array<i32>} : memref<12x8x20xbf16, #tpu.memory_space<vmem>>, vector<1x8x2xbf16>,
    %c4_69 = arith.constant 4 : index
    %c0_70 = arith.constant 0 : index
    %c18_71 = arith.constant 18 : index
    %103 = vector.load %arg8[%c4_69, %c0_70, %c18_71] : memref<12x8x20xbf16, #tpu.memory_space<vmem>>, vector<1x8x2xbf16>
    %104 = vector.shape_cast %103 : vector<1x8x2xbf16> to vector<8x2xbf16>
    %105 = vector.shape_cast %5 : vector<8x2xbf16> to vector<1x8x2xbf16>
    tpu.vector_store %arg8[%c4_69, %c0_70, %c18_71], %105 {strides = array<i32>} : memref<12x8x20xbf16, #tpu.memory_space<vmem>>, vector<1x8x2xbf16>,
    %c0_72 = arith.constant 0 : index
    %106 = arith.index_cast %94 : i32 to index
    %c0_73 = arith.constant 0 : index
    %c0_74 = arith.constant 0 : index
    %107 = vector.load %arg2[%c0_72, %106, %c0_73, %c0_74] : memref<1x20x4x16xbf16, #tpu.memory_space<vmem>>, vector<1x1x4x16xbf16>
    %108 = vector.shape_cast %107 : vector<1x1x4x16xbf16> to vector<4x16xbf16>
    %cst_75 = arith.constant dense<0.000000e+00> : vector<8x16xf32>
    %109 = tpu.matmul %2, %108, %cst_75 {dimension_numbers = #tpu.dot_dimension_numbers<[1], [0], [0], [1], [0, 0, 1, 1], [], []>} : vector<8x4xbf16>, vector<4x16xbf16>, vector<8x16xf32> -> vector<8x16xf32>
    %110 = vector.broadcast %99 : vector<8x1xf32> to vector<8x16xf32>
    %111 = arith.addf %109, %110 : vector<8x16xf32>
    %112 = arith.truncf %111 : vector<8x16xf32> to vector<8x16xbf16>
    %c4_76 = arith.constant 4 : index
    %c0_77 = arith.constant 0 : index
    %c2_78 = arith.constant 2 : index
    %113 = vector.load %arg8[%c4_76, %c0_77, %c2_78] : memref<12x8x20xbf16, #tpu.memory_space<vmem>>, vector<1x8x16xbf16>
    %114 = vector.shape_cast %113 : vector<1x8x16xbf16> to vector<8x16xbf16>
    %115 = vector.shape_cast %112 : vector<8x16xbf16> to vector<1x8x16xbf16>
    tpu.vector_store %arg8[%c4_76, %c0_77, %c2_78], %115 {strides = array<i32>} : memref<12x8x20xbf16, #tpu.memory_space<vmem>>, vector<1x8x16xbf16>,
    %c5_i32 = arith.constant 5 : i32
    %116 = arith.addi %1, %c5_i32 : i32
    %c2_i32_79 = arith.constant 2 : i32
    %117 = arith.cmpi sge, %116, %c2_i32_79 : i32
    %c18_i32_80 = arith.constant 18 : i32
    %118 = arith.cmpi slt, %116, %c18_i32_80 : i32
    %119 = arith.andi %117, %118 : i1
    %cst_81 = arith.constant 0.000000e+00 : f32
    %120 = vector.broadcast %cst_81 : f32 to vector<8x1xf32>
    %121 = arith.select %119, %3, %120 : vector<8x1xf32>
    %c5 = arith.constant 5 : index
    %c0_82 = arith.constant 0 : index
    %c0_83 = arith.constant 0 : index
    %122 = vector.load %arg8[%c5, %c0_82, %c0_83] : memref<12x8x20xbf16, #tpu.memory_space<vmem>>, vector<1x8x2xbf16>
    %123 = vector.shape_cast %122 : vector<1x8x2xbf16> to vector<8x2xbf16>
    %124 = vector.shape_cast %5 : vector<8x2xbf16> to vector<1x8x2xbf16>
    tpu.vector_store %arg8[%c5, %c0_82, %c0_83], %124 {strides = array<i32>} : memref<12x8x20xbf16, #tpu.memory_space<vmem>>, vector<1x8x2xbf16>,
    %c5_84 = arith.constant 5 : index
    %c0_85 = arith.constant 0 : index
    %c18_86 = arith.constant 18 : index
    %125 = vector.load %arg8[%c5_84, %c0_85, %c18_86] : memref<12x8x20xbf16, #tpu.memory_space<vmem>>, vector<1x8x2xbf16>
    %126 = vector.shape_cast %125 : vector<1x8x2xbf16> to vector<8x2xbf16>
    %127 = vector.shape_cast %5 : vector<8x2xbf16> to vector<1x8x2xbf16>
    tpu.vector_store %arg8[%c5_84, %c0_85, %c18_86], %127 {strides = array<i32>} : memref<12x8x20xbf16, #tpu.memory_space<vmem>>, vector<1x8x2xbf16>,
    %c0_87 = arith.constant 0 : index
    %128 = arith.index_cast %116 : i32 to index
    %c0_88 = arith.constant 0 : index
    %c0_89 = arith.constant 0 : index
    %129 = vector.load %arg2[%c0_87, %128, %c0_88, %c0_89] : memref<1x20x4x16xbf16, #tpu.memory_space<vmem>>, vector<1x1x4x16xbf16>
    %130 = vector.shape_cast %129 : vector<1x1x4x16xbf16> to vector<4x16xbf16>
    %cst_90 = arith.constant dense<0.000000e+00> : vector<8x16xf32>
    %131 = tpu.matmul %2, %130, %cst_90 {dimension_numbers = #tpu.dot_dimension_numbers<[1], [0], [0], [1], [0, 0, 1, 1], [], []>} : vector<8x4xbf16>, vector<4x16xbf16>, vector<8x16xf32> -> vector<8x16xf32>
    %132 = vector.broadcast %121 : vector<8x1xf32> to vector<8x16xf32>
    %133 = arith.addf %131, %132 : vector<8x16xf32>
    %134 = arith.truncf %133 : vector<8x16xf32> to vector<8x16xbf16>
    %c5_91 = arith.constant 5 : index
    %c0_92 = arith.constant 0 : index
    %c2_93 = arith.constant 2 : index
    %135 = vector.load %arg8[%c5_91, %c0_92, %c2_93] : memref<12x8x20xbf16, #tpu.memory_space<vmem>>, vector<1x8x16xbf16>
    %136 = vector.shape_cast %135 : vector<1x8x16xbf16> to vector<8x16xbf16>
    %137 = vector.shape_cast %134 : vector<8x16xbf16> to vector<1x8x16xbf16>
    tpu.vector_store %arg8[%c5_91, %c0_92, %c2_93], %137 {strides = array<i32>} : memref<12x8x20xbf16, #tpu.memory_space<vmem>>, vector<1x8x16xbf16>,
    %c6_i32 = arith.constant 6 : i32
    %138 = arith.addi %1, %c6_i32 : i32
    %c2_i32_94 = arith.constant 2 : i32
    %139 = arith.cmpi sge, %138, %c2_i32_94 : i32
    %c18_i32_95 = arith.constant 18 : i32
    %140 = arith.cmpi slt, %138, %c18_i32_95 : i32
    %141 = arith.andi %139, %140 : i1
    %cst_96 = arith.constant 0.000000e+00 : f32
    %142 = vector.broadcast %cst_96 : f32 to vector<8x1xf32>
    %143 = arith.select %141, %3, %142 : vector<8x1xf32>
    %c6 = arith.constant 6 : index
    %c0_97 = arith.constant 0 : index
    %c0_98 = arith.constant 0 : index
    %144 = vector.load %arg8[%c6, %c0_97, %c0_98] : memref<12x8x20xbf16, #tpu.memory_space<vmem>>, vector<1x8x2xbf16>
    %145 = vector.shape_cast %144 : vector<1x8x2xbf16> to vector<8x2xbf16>
    %146 = vector.shape_cast %5 : vector<8x2xbf16> to vector<1x8x2xbf16>
    tpu.vector_store %arg8[%c6, %c0_97, %c0_98], %146 {strides = array<i32>} : memref<12x8x20xbf16, #tpu.memory_space<vmem>>, vector<1x8x2xbf16>,
    %c6_99 = arith.constant 6 : index
    %c0_100 = arith.constant 0 : index
    %c18_101 = arith.constant 18 : index
    %147 = vector.load %arg8[%c6_99, %c0_100, %c18_101] : memref<12x8x20xbf16, #tpu.memory_space<vmem>>, vector<1x8x2xbf16>
    %148 = vector.shape_cast %147 : vector<1x8x2xbf16> to vector<8x2xbf16>
    %149 = vector.shape_cast %5 : vector<8x2xbf16> to vector<1x8x2xbf16>
    tpu.vector_store %arg8[%c6_99, %c0_100, %c18_101], %149 {strides = array<i32>} : memref<12x8x20xbf16, #tpu.memory_space<vmem>>, vector<1x8x2xbf16>,
    %c0_102 = arith.constant 0 : index
    %150 = arith.index_cast %138 : i32 to index
    %c0_103 = arith.constant 0 : index
    %c0_104 = arith.constant 0 : index
    %151 = vector.load %arg2[%c0_102, %150, %c0_103, %c0_104] : memref<1x20x4x16xbf16, #tpu.memory_space<vmem>>, vector<1x1x4x16xbf16>
    %152 = vector.shape_cast %151 : vector<1x1x4x16xbf16> to vector<4x16xbf16>
    %cst_105 = arith.constant dense<0.000000e+00> : vector<8x16xf32>
    %153 = tpu.matmul %2, %152, %cst_105 {dimension_numbers = #tpu.dot_dimension_numbers<[1], [0], [0], [1], [0, 0, 1, 1], [], []>} : vector<8x4xbf16>, vector<4x16xbf16>, vector<8x16xf32> -> vector<8x16xf32>
    %154 = vector.broadcast %143 : vector<8x1xf32> to vector<8x16xf32>
    %155 = arith.addf %153, %154 : vector<8x16xf32>
    %156 = arith.truncf %155 : vector<8x16xf32> to vector<8x16xbf16>
    %c6_106 = arith.constant 6 : index
    %c0_107 = arith.constant 0 : index
    %c2_108 = arith.constant 2 : index
    %157 = vector.load %arg8[%c6_106, %c0_107, %c2_108] : memref<12x8x20xbf16, #tpu.memory_space<vmem>>, vector<1x8x16xbf16>
    %158 = vector.shape_cast %157 : vector<1x8x16xbf16> to vector<8x16xbf16>
    %159 = vector.shape_cast %156 : vector<8x16xbf16> to vector<1x8x16xbf16>
    tpu.vector_store %arg8[%c6_106, %c0_107, %c2_108], %159 {strides = array<i32>} : memref<12x8x20xbf16, #tpu.memory_space<vmem>>, vector<1x8x16xbf16>,
    %c7_i32 = arith.constant 7 : i32
    %160 = arith.addi %1, %c7_i32 : i32
    %c2_i32_109 = arith.constant 2 : i32
    %161 = arith.cmpi sge, %160, %c2_i32_109 : i32
    %c18_i32_110 = arith.constant 18 : i32
    %162 = arith.cmpi slt, %160, %c18_i32_110 : i32
    %163 = arith.andi %161, %162 : i1
    %cst_111 = arith.constant 0.000000e+00 : f32
    %164 = vector.broadcast %cst_111 : f32 to vector<8x1xf32>
    %165 = arith.select %163, %3, %164 : vector<8x1xf32>
    %c7 = arith.constant 7 : index
    %c0_112 = arith.constant 0 : index
    %c0_113 = arith.constant 0 : index
    %166 = vector.load %arg8[%c7, %c0_112, %c0_113] : memref<12x8x20xbf16, #tpu.memory_space<vmem>>, vector<1x8x2xbf16>
    %167 = vector.shape_cast %166 : vector<1x8x2xbf16> to vector<8x2xbf16>
    %168 = vector.shape_cast %5 : vector<8x2xbf16> to vector<1x8x2xbf16>
    tpu.vector_store %arg8[%c7, %c0_112, %c0_113], %168 {strides = array<i32>} : memref<12x8x20xbf16, #tpu.memory_space<vmem>>, vector<1x8x2xbf16>,
    %c7_114 = arith.constant 7 : index
    %c0_115 = arith.constant 0 : index
    %c18_116 = arith.constant 18 : index
    %169 = vector.load %arg8[%c7_114, %c0_115, %c18_116] : memref<12x8x20xbf16, #tpu.memory_space<vmem>>, vector<1x8x2xbf16>
    %170 = vector.shape_cast %169 : vector<1x8x2xbf16> to vector<8x2xbf16>
    %171 = vector.shape_cast %5 : vector<8x2xbf16> to vector<1x8x2xbf16>
    tpu.vector_store %arg8[%c7_114, %c0_115, %c18_116], %171 {strides = array<i32>} : memref<12x8x20xbf16, #tpu.memory_space<vmem>>, vector<1x8x2xbf16>,
    %c0_117 = arith.constant 0 : index
    %172 = arith.index_cast %160 : i32 to index
    %c0_118 = arith.constant 0 : index
    %c0_119 = arith.constant 0 : index
    %173 = vector.load %arg2[%c0_117, %172, %c0_118, %c0_119] : memref<1x20x4x16xbf16, #tpu.memory_space<vmem>>, vector<1x1x4x16xbf16>
    %174 = vector.shape_cast %173 : vector<1x1x4x16xbf16> to vector<4x16xbf16>
    %cst_120 = arith.constant dense<0.000000e+00> : vector<8x16xf32>
    %175 = tpu.matmul %2, %174, %cst_120 {dimension_numbers = #tpu.dot_dimension_numbers<[1], [0], [0], [1], [0, 0, 1, 1], [], []>} : vector<8x4xbf16>, vector<4x16xbf16>, vector<8x16xf32> -> vector<8x16xf32>
    %176 = vector.broadcast %165 : vector<8x1xf32> to vector<8x16xf32>
    %177 = arith.addf %175, %176 : vector<8x16xf32>
    %178 = arith.truncf %177 : vector<8x16xf32> to vector<8x16xbf16>
    %c7_121 = arith.constant 7 : index
    %c0_122 = arith.constant 0 : index
    %c2_123 = arith.constant 2 : index
    %179 = vector.load %arg8[%c7_121, %c0_122, %c2_123] : memref<12x8x20xbf16, #tpu.memory_space<vmem>>, vector<1x8x16xbf16>
    %180 = vector.shape_cast %179 : vector<1x8x16xbf16> to vector<8x16xbf16>
    %181 = vector.shape_cast %178 : vector<8x16xbf16> to vector<1x8x16xbf16>
    tpu.vector_store %arg8[%c7_121, %c0_122, %c2_123], %181 {strides = array<i32>} : memref<12x8x20xbf16, #tpu.memory_space<vmem>>, vector<1x8x16xbf16>,
    %c8_i32_124 = arith.constant 8 : i32
    %182 = arith.addi %1, %c8_i32_124 : i32
    %c2_i32_125 = arith.constant 2 : i32
    %183 = arith.cmpi sge, %182, %c2_i32_125 : i32
    %c18_i32_126 = arith.constant 18 : i32
    %184 = arith.cmpi slt, %182, %c18_i32_126 : i32
    %185 = arith.andi %183, %184 : i1
    %cst_127 = arith.constant 0.000000e+00 : f32
    %186 = vector.broadcast %cst_127 : f32 to vector<8x1xf32>
    %187 = arith.select %185, %3, %186 : vector<8x1xf32>
    %c8 = arith.constant 8 : index
    %c0_128 = arith.constant 0 : index
    %c0_129 = arith.constant 0 : index
    %188 = vector.load %arg8[%c8, %c0_128, %c0_129] : memref<12x8x20xbf16, #tpu.memory_space<vmem>>, vector<1x8x2xbf16>
    %189 = vector.shape_cast %188 : vector<1x8x2xbf16> to vector<8x2xbf16>
    %190 = vector.shape_cast %5 : vector<8x2xbf16> to vector<1x8x2xbf16>
    tpu.vector_store %arg8[%c8, %c0_128, %c0_129], %190 {strides = array<i32>} : memref<12x8x20xbf16, #tpu.memory_space<vmem>>, vector<1x8x2xbf16>,
    %c8_130 = arith.constant 8 : index
    %c0_131 = arith.constant 0 : index
    %c18_132 = arith.constant 18 : index
    %191 = vector.load %arg8[%c8_130, %c0_131, %c18_132] : memref<12x8x20xbf16, #tpu.memory_space<vmem>>, vector<1x8x2xbf16>
    %192 = vector.shape_cast %191 : vector<1x8x2xbf16> to vector<8x2xbf16>
    %193 = vector.shape_cast %5 : vector<8x2xbf16> to vector<1x8x2xbf16>
    tpu.vector_store %arg8[%c8_130, %c0_131, %c18_132], %193 {strides = array<i32>} : memref<12x8x20xbf16, #tpu.memory_space<vmem>>, vector<1x8x2xbf16>,
    %c0_133 = arith.constant 0 : index
    %194 = arith.index_cast %182 : i32 to index
    %c0_134 = arith.constant 0 : index
    %c0_135 = arith.constant 0 : index
    %195 = vector.load %arg2[%c0_133, %194, %c0_134, %c0_135] : memref<1x20x4x16xbf16, #tpu.memory_space<vmem>>, vector<1x1x4x16xbf16>
    %196 = vector.shape_cast %195 : vector<1x1x4x16xbf16> to vector<4x16xbf16>
    %cst_136 = arith.constant dense<0.000000e+00> : vector<8x16xf32>
    %197 = tpu.matmul %2, %196, %cst_136 {dimension_numbers = #tpu.dot_dimension_numbers<[1], [0], [0], [1], [0, 0, 1, 1], [], []>} : vector<8x4xbf16>, vector<4x16xbf16>, vector<8x16xf32> -> vector<8x16xf32>
    %198 = vector.broadcast %187 : vector<8x1xf32> to vector<8x16xf32>
    %199 = arith.addf %197, %198 : vector<8x16xf32>
    %200 = arith.truncf %199 : vector<8x16xf32> to vector<8x16xbf16>
    %c8_137 = arith.constant 8 : index
    %c0_138 = arith.constant 0 : index
    %c2_139 = arith.constant 2 : index
    %201 = vector.load %arg8[%c8_137, %c0_138, %c2_139] : memref<12x8x20xbf16, #tpu.memory_space<vmem>>, vector<1x8x16xbf16>
    %202 = vector.shape_cast %201 : vector<1x8x16xbf16> to vector<8x16xbf16>
    %203 = vector.shape_cast %200 : vector<8x16xbf16> to vector<1x8x16xbf16>
    tpu.vector_store %arg8[%c8_137, %c0_138, %c2_139], %203 {strides = array<i32>} : memref<12x8x20xbf16, #tpu.memory_space<vmem>>, vector<1x8x16xbf16>,
    %c9_i32 = arith.constant 9 : i32
    %204 = arith.addi %1, %c9_i32 : i32
    %c2_i32_140 = arith.constant 2 : i32
    %205 = arith.cmpi sge, %204, %c2_i32_140 : i32
    %c18_i32_141 = arith.constant 18 : i32
    %206 = arith.cmpi slt, %204, %c18_i32_141 : i32
    %207 = arith.andi %205, %206 : i1
    %cst_142 = arith.constant 0.000000e+00 : f32
    %208 = vector.broadcast %cst_142 : f32 to vector<8x1xf32>
    %209 = arith.select %207, %3, %208 : vector<8x1xf32>
    %c9 = arith.constant 9 : index
    %c0_143 = arith.constant 0 : index
    %c0_144 = arith.constant 0 : index
    %210 = vector.load %arg8[%c9, %c0_143, %c0_144] : memref<12x8x20xbf16, #tpu.memory_space<vmem>>, vector<1x8x2xbf16>
    %211 = vector.shape_cast %210 : vector<1x8x2xbf16> to vector<8x2xbf16>
    %212 = vector.shape_cast %5 : vector<8x2xbf16> to vector<1x8x2xbf16>
    tpu.vector_store %arg8[%c9, %c0_143, %c0_144], %212 {strides = array<i32>} : memref<12x8x20xbf16, #tpu.memory_space<vmem>>, vector<1x8x2xbf16>,
    %c9_145 = arith.constant 9 : index
    %c0_146 = arith.constant 0 : index
    %c18_147 = arith.constant 18 : index
    %213 = vector.load %arg8[%c9_145, %c0_146, %c18_147] : memref<12x8x20xbf16, #tpu.memory_space<vmem>>, vector<1x8x2xbf16>
    %214 = vector.shape_cast %213 : vector<1x8x2xbf16> to vector<8x2xbf16>
    %215 = vector.shape_cast %5 : vector<8x2xbf16> to vector<1x8x2xbf16>
    tpu.vector_store %arg8[%c9_145, %c0_146, %c18_147], %215 {strides = array<i32>} : memref<12x8x20xbf16, #tpu.memory_space<vmem>>, vector<1x8x2xbf16>,
    %c0_148 = arith.constant 0 : index
    %216 = arith.index_cast %204 : i32 to index
    %c0_149 = arith.constant 0 : index
    %c0_150 = arith.constant 0 : index
    %217 = vector.load %arg2[%c0_148, %216, %c0_149, %c0_150] : memref<1x20x4x16xbf16, #tpu.memory_space<vmem>>, vector<1x1x4x16xbf16>
    %218 = vector.shape_cast %217 : vector<1x1x4x16xbf16> to vector<4x16xbf16>
    %cst_151 = arith.constant dense<0.000000e+00> : vector<8x16xf32>
    %219 = tpu.matmul %2, %218, %cst_151 {dimension_numbers = #tpu.dot_dimension_numbers<[1], [0], [0], [1], [0, 0, 1, 1], [], []>} : vector<8x4xbf16>, vector<4x16xbf16>, vector<8x16xf32> -> vector<8x16xf32>
    %220 = vector.broadcast %209 : vector<8x1xf32> to vector<8x16xf32>
    %221 = arith.addf %219, %220 : vector<8x16xf32>
    %222 = arith.truncf %221 : vector<8x16xf32> to vector<8x16xbf16>
    %c9_152 = arith.constant 9 : index
    %c0_153 = arith.constant 0 : index
    %c2_154 = arith.constant 2 : index
    %223 = vector.load %arg8[%c9_152, %c0_153, %c2_154] : memref<12x8x20xbf16, #tpu.memory_space<vmem>>, vector<1x8x16xbf16>
    %224 = vector.shape_cast %223 : vector<1x8x16xbf16> to vector<8x16xbf16>
    %225 = vector.shape_cast %222 : vector<8x16xbf16> to vector<1x8x16xbf16>
    tpu.vector_store %arg8[%c9_152, %c0_153, %c2_154], %225 {strides = array<i32>} : memref<12x8x20xbf16, #tpu.memory_space<vmem>>, vector<1x8x16xbf16>,
    %c10_i32 = arith.constant 10 : i32
    %226 = arith.addi %1, %c10_i32 : i32
    %c2_i32_155 = arith.constant 2 : i32
    %227 = arith.cmpi sge, %226, %c2_i32_155 : i32
    %c18_i32_156 = arith.constant 18 : i32
    %228 = arith.cmpi slt, %226, %c18_i32_156 : i32
    %229 = arith.andi %227, %228 : i1
    %cst_157 = arith.constant 0.000000e+00 : f32
    %230 = vector.broadcast %cst_157 : f32 to vector<8x1xf32>
    %231 = arith.select %229, %3, %230 : vector<8x1xf32>
    %c10 = arith.constant 10 : index
    %c0_158 = arith.constant 0 : index
    %c0_159 = arith.constant 0 : index
    %232 = vector.load %arg8[%c10, %c0_158, %c0_159] : memref<12x8x20xbf16, #tpu.memory_space<vmem>>, vector<1x8x2xbf16>
    %233 = vector.shape_cast %232 : vector<1x8x2xbf16> to vector<8x2xbf16>
    %234 = vector.shape_cast %5 : vector<8x2xbf16> to vector<1x8x2xbf16>
    tpu.vector_store %arg8[%c10, %c0_158, %c0_159], %234 {strides = array<i32>} : memref<12x8x20xbf16, #tpu.memory_space<vmem>>, vector<1x8x2xbf16>,
    %c10_160 = arith.constant 10 : index
    %c0_161 = arith.constant 0 : index
    %c18_162 = arith.constant 18 : index
    %235 = vector.load %arg8[%c10_160, %c0_161, %c18_162] : memref<12x8x20xbf16, #tpu.memory_space<vmem>>, vector<1x8x2xbf16>
    %236 = vector.shape_cast %235 : vector<1x8x2xbf16> to vector<8x2xbf16>
    %237 = vector.shape_cast %5 : vector<8x2xbf16> to vector<1x8x2xbf16>
    tpu.vector_store %arg8[%c10_160, %c0_161, %c18_162], %237 {strides = array<i32>} : memref<12x8x20xbf16, #tpu.memory_space<vmem>>, vector<1x8x2xbf16>,
    %c0_163 = arith.constant 0 : index
    %238 = arith.index_cast %226 : i32 to index
    %c0_164 = arith.constant 0 : index
    %c0_165 = arith.constant 0 : index
    %239 = vector.load %arg2[%c0_163, %238, %c0_164, %c0_165] : memref<1x20x4x16xbf16, #tpu.memory_space<vmem>>, vector<1x1x4x16xbf16>
    %240 = vector.shape_cast %239 : vector<1x1x4x16xbf16> to vector<4x16xbf16>
    %cst_166 = arith.constant dense<0.000000e+00> : vector<8x16xf32>
    %241 = tpu.matmul %2, %240, %cst_166 {dimension_numbers = #tpu.dot_dimension_numbers<[1], [0], [0], [1], [0, 0, 1, 1], [], []>} : vector<8x4xbf16>, vector<4x16xbf16>, vector<8x16xf32> -> vector<8x16xf32>
    %242 = vector.broadcast %231 : vector<8x1xf32> to vector<8x16xf32>
    %243 = arith.addf %241, %242 : vector<8x16xf32>
    %244 = arith.truncf %243 : vector<8x16xf32> to vector<8x16xbf16>
    %c10_167 = arith.constant 10 : index
    %c0_168 = arith.constant 0 : index
    %c2_169 = arith.constant 2 : index
    %245 = vector.load %arg8[%c10_167, %c0_168, %c2_169] : memref<12x8x20xbf16, #tpu.memory_space<vmem>>, vector<1x8x16xbf16>
    %246 = vector.shape_cast %245 : vector<1x8x16xbf16> to vector<8x16xbf16>
    %247 = vector.shape_cast %244 : vector<8x16xbf16> to vector<1x8x16xbf16>
    tpu.vector_store %arg8[%c10_167, %c0_168, %c2_169], %247 {strides = array<i32>} : memref<12x8x20xbf16, #tpu.memory_space<vmem>>, vector<1x8x16xbf16>,
    %c11_i32 = arith.constant 11 : i32
    %248 = arith.addi %1, %c11_i32 : i32
    %c2_i32_170 = arith.constant 2 : i32
    %249 = arith.cmpi sge, %248, %c2_i32_170 : i32
    %c18_i32_171 = arith.constant 18 : i32
    %250 = arith.cmpi slt, %248, %c18_i32_171 : i32
    %251 = arith.andi %249, %250 : i1
    %cst_172 = arith.constant 0.000000e+00 : f32
    %252 = vector.broadcast %cst_172 : f32 to vector<8x1xf32>
    %253 = arith.select %251, %3, %252 : vector<8x1xf32>
    %c11 = arith.constant 11 : index
    %c0_173 = arith.constant 0 : index
    %c0_174 = arith.constant 0 : index
    %254 = vector.load %arg8[%c11, %c0_173, %c0_174] : memref<12x8x20xbf16, #tpu.memory_space<vmem>>, vector<1x8x2xbf16>
    %255 = vector.shape_cast %254 : vector<1x8x2xbf16> to vector<8x2xbf16>
    %256 = vector.shape_cast %5 : vector<8x2xbf16> to vector<1x8x2xbf16>
    tpu.vector_store %arg8[%c11, %c0_173, %c0_174], %256 {strides = array<i32>} : memref<12x8x20xbf16, #tpu.memory_space<vmem>>, vector<1x8x2xbf16>,
    %c11_175 = arith.constant 11 : index
    %c0_176 = arith.constant 0 : index
    %c18_177 = arith.constant 18 : index
    %257 = vector.load %arg8[%c11_175, %c0_176, %c18_177] : memref<12x8x20xbf16, #tpu.memory_space<vmem>>, vector<1x8x2xbf16>
    %258 = vector.shape_cast %257 : vector<1x8x2xbf16> to vector<8x2xbf16>
    %259 = vector.shape_cast %5 : vector<8x2xbf16> to vector<1x8x2xbf16>
    tpu.vector_store %arg8[%c11_175, %c0_176, %c18_177], %259 {strides = array<i32>} : memref<12x8x20xbf16, #tpu.memory_space<vmem>>, vector<1x8x2xbf16>,
    %c0_178 = arith.constant 0 : index
    %260 = arith.index_cast %248 : i32 to index
    %c0_179 = arith.constant 0 : index
    %c0_180 = arith.constant 0 : index
    %261 = vector.load %arg2[%c0_178, %260, %c0_179, %c0_180] : memref<1x20x4x16xbf16, #tpu.memory_space<vmem>>, vector<1x1x4x16xbf16>
    %262 = vector.shape_cast %261 : vector<1x1x4x16xbf16> to vector<4x16xbf16>
    %cst_181 = arith.constant dense<0.000000e+00> : vector<8x16xf32>
    %263 = tpu.matmul %2, %262, %cst_181 {dimension_numbers = #tpu.dot_dimension_numbers<[1], [0], [0], [1], [0, 0, 1, 1], [], []>} : vector<8x4xbf16>, vector<4x16xbf16>, vector<8x16xf32> -> vector<8x16xf32>
    %264 = vector.broadcast %253 : vector<8x1xf32> to vector<8x16xf32>
    %265 = arith.addf %263, %264 : vector<8x16xf32>
    %266 = arith.truncf %265 : vector<8x16xf32> to vector<8x16xbf16>
    %c11_182 = arith.constant 11 : index
    %c0_183 = arith.constant 0 : index
    %c2_184 = arith.constant 2 : index
    %267 = vector.load %arg8[%c11_182, %c0_183, %c2_184] : memref<12x8x20xbf16, #tpu.memory_space<vmem>>, vector<1x8x16xbf16>
    %268 = vector.shape_cast %267 : vector<1x8x16xbf16> to vector<8x16xbf16>
    %269 = vector.shape_cast %266 : vector<8x16xbf16> to vector<1x8x16xbf16>
    tpu.vector_store %arg8[%c11_182, %c0_183, %c2_184], %269 {strides = array<i32>} : memref<12x8x20xbf16, #tpu.memory_space<vmem>>, vector<1x8x16xbf16>,
    %c0_185 = arith.constant 0 : index
    %c0_186 = arith.constant 0 : index
    %c0_187 = arith.constant 0 : index
    %270 = vector.load %arg5[%c0_185, %c0_186, %c0_187] : memref<9x8x8xbf16, #tpu.memory_space<vmem>>, vector<1x8x8xbf16>
    %271 = vector.shape_cast %270 : vector<1x8x8xbf16> to vector<8x8xbf16>
    %c1_188 = arith.constant 1 : index
    %c0_189 = arith.constant 0 : index
    %c0_190 = arith.constant 0 : index
    %272 = vector.load %arg5[%c1_188, %c0_189, %c0_190] : memref<9x8x8xbf16, #tpu.memory_space<vmem>>, vector<1x8x8xbf16>
    %273 = vector.shape_cast %272 : vector<1x8x8xbf16> to vector<8x8xbf16>
    %c2_191 = arith.constant 2 : index
    %c0_192 = arith.constant 0 : index
    %c0_193 = arith.constant 0 : index
    %274 = vector.load %arg5[%c2_191, %c0_192, %c0_193] : memref<9x8x8xbf16, #tpu.memory_space<vmem>>, vector<1x8x8xbf16>
    %275 = vector.shape_cast %274 : vector<1x8x8xbf16> to vector<8x8xbf16>
    %c3_194 = arith.constant 3 : index
    %c0_195 = arith.constant 0 : index
    %c0_196 = arith.constant 0 : index
    %276 = vector.load %arg5[%c3_194, %c0_195, %c0_196] : memref<9x8x8xbf16, #tpu.memory_space<vmem>>, vector<1x8x8xbf16>
    %277 = vector.shape_cast %276 : vector<1x8x8xbf16> to vector<8x8xbf16>
    %c4_197 = arith.constant 4 : index
    %c0_198 = arith.constant 0 : index
    %c0_199 = arith.constant 0 : index
    %278 = vector.load %arg5[%c4_197, %c0_198, %c0_199] : memref<9x8x8xbf16, #tpu.memory_space<vmem>>, vector<1x8x8xbf16>
    %279 = vector.shape_cast %278 : vector<1x8x8xbf16> to vector<8x8xbf16>
    %c5_200 = arith.constant 5 : index
    %c0_201 = arith.constant 0 : index
    %c0_202 = arith.constant 0 : index
    %280 = vector.load %arg5[%c5_200, %c0_201, %c0_202] : memref<9x8x8xbf16, #tpu.memory_space<vmem>>, vector<1x8x8xbf16>
    %281 = vector.shape_cast %280 : vector<1x8x8xbf16> to vector<8x8xbf16>
    %c6_203 = arith.constant 6 : index
    %c0_204 = arith.constant 0 : index
    %c0_205 = arith.constant 0 : index
    %282 = vector.load %arg5[%c6_203, %c0_204, %c0_205] : memref<9x8x8xbf16, #tpu.memory_space<vmem>>, vector<1x8x8xbf16>
    %283 = vector.shape_cast %282 : vector<1x8x8xbf16> to vector<8x8xbf16>
    %c7_206 = arith.constant 7 : index
    %c0_207 = arith.constant 0 : index
    %c0_208 = arith.constant 0 : index
    %284 = vector.load %arg5[%c7_206, %c0_207, %c0_208] : memref<9x8x8xbf16, #tpu.memory_space<vmem>>, vector<1x8x8xbf16>
    %285 = vector.shape_cast %284 : vector<1x8x8xbf16> to vector<8x8xbf16>
    %c8_209 = arith.constant 8 : index
    %c0_210 = arith.constant 0 : index
    %c0_211 = arith.constant 0 : index
    %286 = vector.load %arg5[%c8_209, %c0_210, %c0_211] : memref<9x8x8xbf16, #tpu.memory_space<vmem>>, vector<1x8x8xbf16>
    %287 = vector.shape_cast %286 : vector<1x8x8xbf16> to vector<8x8xbf16>
    %cst_212 = arith.constant 0.000000e+00 : f32
    %288 = vector.broadcast %cst_212 : f32 to vector<8x16xf32>
    %c0_213 = arith.constant 0 : index
    %c0_214 = arith.constant 0 : index
    %c0_215 = arith.constant 0 : index
    %289 = vector.load %arg8[%c0_213, %c0_214, %c0_215] : memref<12x8x20xbf16, #tpu.memory_space<vmem>>, vector<1x8x16xbf16>
    %290 = vector.shape_cast %289 : vector<1x8x16xbf16> to vector<8x16xbf16>
    %cst_216 = arith.constant dense<0.000000e+00> : vector<8x16xf32>
    %291 = tpu.matmul %271, %290, %cst_216 {dimension_numbers = #tpu.dot_dimension_numbers<[1], [0], [0], [1], [0, 0, 1, 1], [], []>} : vector<8x8xbf16>, vector<8x16xbf16>, vector<8x16xf32> -> vector<8x16xf32>
    %292 = arith.addf %288, %291 : vector<8x16xf32>
    %c0_217 = arith.constant 0 : index
    %c0_218 = arith.constant 0 : index
    %c2_219 = arith.constant 2 : index
    %293 = vector.load %arg8[%c0_217, %c0_218, %c2_219] : memref<12x8x20xbf16, #tpu.memory_space<vmem>>, vector<1x8x16xbf16>
    %294 = vector.shape_cast %293 : vector<1x8x16xbf16> to vector<8x16xbf16>
    %cst_220 = arith.constant dense<0.000000e+00> : vector<8x16xf32>
    %295 = tpu.matmul %273, %294, %cst_220 {dimension_numbers = #tpu.dot_dimension_numbers<[1], [0], [0], [1], [0, 0, 1, 1], [], []>} : vector<8x8xbf16>, vector<8x16xbf16>, vector<8x16xf32> -> vector<8x16xf32>
    %296 = arith.addf %292, %295 : vector<8x16xf32>
    %c0_221 = arith.constant 0 : index
    %c0_222 = arith.constant 0 : index
    %c4_223 = arith.constant 4 : index
    %297 = vector.load %arg8[%c0_221, %c0_222, %c4_223] : memref<12x8x20xbf16, #tpu.memory_space<vmem>>, vector<1x8x16xbf16>
    %298 = vector.shape_cast %297 : vector<1x8x16xbf16> to vector<8x16xbf16>
    %cst_224 = arith.constant dense<0.000000e+00> : vector<8x16xf32>
    %299 = tpu.matmul %275, %298, %cst_224 {dimension_numbers = #tpu.dot_dimension_numbers<[1], [0], [0], [1], [0, 0, 1, 1], [], []>} : vector<8x8xbf16>, vector<8x16xbf16>, vector<8x16xf32> -> vector<8x16xf32>
    %300 = arith.addf %296, %299 : vector<8x16xf32>
    %c2_225 = arith.constant 2 : index
    %c0_226 = arith.constant 0 : index
    %c0_227 = arith.constant 0 : index
    %301 = vector.load %arg8[%c2_225, %c0_226, %c0_227] : memref<12x8x20xbf16, #tpu.memory_space<vmem>>, vector<1x8x16xbf16>
    %302 = vector.shape_cast %301 : vector<1x8x16xbf16> to vector<8x16xbf16>
    %cst_228 = arith.constant dense<0.000000e+00> : vector<8x16xf32>
    %303 = tpu.matmul %277, %302, %cst_228 {dimension_numbers = #tpu.dot_dimension_numbers<[1], [0], [0], [1], [0, 0, 1, 1], [], []>} : vector<8x8xbf16>, vector<8x16xbf16>, vector<8x16xf32> -> vector<8x16xf32>
    %304 = arith.addf %300, %303 : vector<8x16xf32>
    %c2_229 = arith.constant 2 : index
    %c0_230 = arith.constant 0 : index
    %c2_231 = arith.constant 2 : index
    %305 = vector.load %arg8[%c2_229, %c0_230, %c2_231] : memref<12x8x20xbf16, #tpu.memory_space<vmem>>, vector<1x8x16xbf16>
    %306 = vector.shape_cast %305 : vector<1x8x16xbf16> to vector<8x16xbf16>
    %cst_232 = arith.constant dense<0.000000e+00> : vector<8x16xf32>
    %307 = tpu.matmul %279, %306, %cst_232 {dimension_numbers = #tpu.dot_dimension_numbers<[1], [0], [0], [1], [0, 0, 1, 1], [], []>} : vector<8x8xbf16>, vector<8x16xbf16>, vector<8x16xf32> -> vector<8x16xf32>
    %308 = arith.addf %304, %307 : vector<8x16xf32>
    %c2_233 = arith.constant 2 : index
    %c0_234 = arith.constant 0 : index
    %c4_235 = arith.constant 4 : index
    %309 = vector.load %arg8[%c2_233, %c0_234, %c4_235] : memref<12x8x20xbf16, #tpu.memory_space<vmem>>, vector<1x8x16xbf16>
    %310 = vector.shape_cast %309 : vector<1x8x16xbf16> to vector<8x16xbf16>
    %cst_236 = arith.constant dense<0.000000e+00> : vector<8x16xf32>
    %311 = tpu.matmul %281, %310, %cst_236 {dimension_numbers = #tpu.dot_dimension_numbers<[1], [0], [0], [1], [0, 0, 1, 1], [], []>} : vector<8x8xbf16>, vector<8x16xbf16>, vector<8x16xf32> -> vector<8x16xf32>
    %312 = arith.addf %308, %311 : vector<8x16xf32>
    %c4_237 = arith.constant 4 : index
    %c0_238 = arith.constant 0 : index
    %c0_239 = arith.constant 0 : index
    %313 = vector.load %arg8[%c4_237, %c0_238, %c0_239] : memref<12x8x20xbf16, #tpu.memory_space<vmem>>, vector<1x8x16xbf16>
    %314 = vector.shape_cast %313 : vector<1x8x16xbf16> to vector<8x16xbf16>
    %cst_240 = arith.constant dense<0.000000e+00> : vector<8x16xf32>
    %315 = tpu.matmul %283, %314, %cst_240 {dimension_numbers = #tpu.dot_dimension_numbers<[1], [0], [0], [1], [0, 0, 1, 1], [], []>} : vector<8x8xbf16>, vector<8x16xbf16>, vector<8x16xf32> -> vector<8x16xf32>
    %316 = arith.addf %312, %315 : vector<8x16xf32>
    %c4_241 = arith.constant 4 : index
    %c0_242 = arith.constant 0 : index
    %c2_243 = arith.constant 2 : index
    %317 = vector.load %arg8[%c4_241, %c0_242, %c2_243] : memref<12x8x20xbf16, #tpu.memory_space<vmem>>, vector<1x8x16xbf16>
    %318 = vector.shape_cast %317 : vector<1x8x16xbf16> to vector<8x16xbf16>
    %cst_244 = arith.constant dense<0.000000e+00> : vector<8x16xf32>
    %319 = tpu.matmul %285, %318, %cst_244 {dimension_numbers = #tpu.dot_dimension_numbers<[1], [0], [0], [1], [0, 0, 1, 1], [], []>} : vector<8x8xbf16>, vector<8x16xbf16>, vector<8x16xf32> -> vector<8x16xf32>
    %320 = arith.addf %316, %319 : vector<8x16xf32>
    %c4_245 = arith.constant 4 : index
    %c0_246 = arith.constant 0 : index
    %c4_247 = arith.constant 4 : index
    %321 = vector.load %arg8[%c4_245, %c0_246, %c4_247] : memref<12x8x20xbf16, #tpu.memory_space<vmem>>, vector<1x8x16xbf16>
    %322 = vector.shape_cast %321 : vector<1x8x16xbf16> to vector<8x16xbf16>
    %cst_248 = arith.constant dense<0.000000e+00> : vector<8x16xf32>
    %323 = tpu.matmul %287, %322, %cst_248 {dimension_numbers = #tpu.dot_dimension_numbers<[1], [0], [0], [1], [0, 0, 1, 1], [], []>} : vector<8x8xbf16>, vector<8x16xbf16>, vector<8x16xf32> -> vector<8x16xf32>
    %324 = arith.addf %320, %323 : vector<8x16xf32>
    %c2_249 = arith.constant 2 : index
    %c0_250 = arith.constant 0 : index
    %c2_251 = arith.constant 2 : index
    %325 = vector.load %arg8[%c2_249, %c0_250, %c2_251] : memref<12x8x20xbf16, #tpu.memory_space<vmem>>, vector<1x8x16xbf16>
    %326 = vector.shape_cast %325 : vector<1x8x16xbf16> to vector<8x16xbf16>
    %327 = arith.extf %326 : vector<8x16xbf16> to vector<8x16xf32>
    %328 = vector.broadcast %4 : vector<8x1xf32> to vector<8x16xf32>
    %329 = arith.addf %324, %328 : vector<8x16xf32>
    %330 = arith.addf %329, %327 : vector<8x16xf32>
    %331 = arith.truncf %330 : vector<8x16xf32> to vector<8x16xbf16>
    %c0_252 = arith.constant 0 : index
    %c0_253 = arith.constant 0 : index
    %c0_254 = arith.constant 0 : index
    %c0_255 = arith.constant 0 : index
    %332 = vector.load %arg7[%c0_252, %c0_253, %c0_254, %c0_255] : memref<1x8x8x16xbf16, #tpu.memory_space<vmem>>, vector<1x1x8x16xbf16>
    %333 = vector.shape_cast %332 : vector<1x1x8x16xbf16> to vector<8x16xbf16>
    %334 = vector.shape_cast %331 : vector<8x16xbf16> to vector<1x1x8x16xbf16>
    tpu.vector_store %arg7[%c0_252, %c0_253, %c0_254, %c0_255], %334 {strides = array<i32>} : memref<1x8x8x16xbf16, #tpu.memory_space<vmem>>, vector<1x1x8x16xbf16>,
    %cst_256 = arith.constant 0.000000e+00 : f32
    %335 = vector.broadcast %cst_256 : f32 to vector<8x16xf32>
    %c1_257 = arith.constant 1 : index
    %c0_258 = arith.constant 0 : index
    %c0_259 = arith.constant 0 : index
    %336 = vector.load %arg8[%c1_257, %c0_258, %c0_259] : memref<12x8x20xbf16, #tpu.memory_space<vmem>>, vector<1x8x16xbf16>
    %337 = vector.shape_cast %336 : vector<1x8x16xbf16> to vector<8x16xbf16>
    %cst_260 = arith.constant dense<0.000000e+00> : vector<8x16xf32>
    %338 = tpu.matmul %271, %337, %cst_260 {dimension_numbers = #tpu.dot_dimension_numbers<[1], [0], [0], [1], [0, 0, 1, 1], [], []>} : vector<8x8xbf16>, vector<8x16xbf16>, vector<8x16xf32> -> vector<8x16xf32>
    %339 = arith.addf %335, %338 : vector<8x16xf32>
    %c1_261 = arith.constant 1 : index
    %c0_262 = arith.constant 0 : index
    %c2_263 = arith.constant 2 : index
    %340 = vector.load %arg8[%c1_261, %c0_262, %c2_263] : memref<12x8x20xbf16, #tpu.memory_space<vmem>>, vector<1x8x16xbf16>
    %341 = vector.shape_cast %340 : vector<1x8x16xbf16> to vector<8x16xbf16>
    %cst_264 = arith.constant dense<0.000000e+00> : vector<8x16xf32>
    %342 = tpu.matmul %273, %341, %cst_264 {dimension_numbers = #tpu.dot_dimension_numbers<[1], [0], [0], [1], [0, 0, 1, 1], [], []>} : vector<8x8xbf16>, vector<8x16xbf16>, vector<8x16xf32> -> vector<8x16xf32>
    %343 = arith.addf %339, %342 : vector<8x16xf32>
    %c1_265 = arith.constant 1 : index
    %c0_266 = arith.constant 0 : index
    %c4_267 = arith.constant 4 : index
    %344 = vector.load %arg8[%c1_265, %c0_266, %c4_267] : memref<12x8x20xbf16, #tpu.memory_space<vmem>>, vector<1x8x16xbf16>
    %345 = vector.shape_cast %344 : vector<1x8x16xbf16> to vector<8x16xbf16>
    %cst_268 = arith.constant dense<0.000000e+00> : vector<8x16xf32>
    %346 = tpu.matmul %275, %345, %cst_268 {dimension_numbers = #tpu.dot_dimension_numbers<[1], [0], [0], [1], [0, 0, 1, 1], [], []>} : vector<8x8xbf16>, vector<8x16xbf16>, vector<8x16xf32> -> vector<8x16xf32>
    %347 = arith.addf %343, %346 : vector<8x16xf32>
    %c3_269 = arith.constant 3 : index
    %c0_270 = arith.constant 0 : index
    %c0_271 = arith.constant 0 : index
    %348 = vector.load %arg8[%c3_269, %c0_270, %c0_271] : memref<12x8x20xbf16, #tpu.memory_space<vmem>>, vector<1x8x16xbf16>
    %349 = vector.shape_cast %348 : vector<1x8x16xbf16> to vector<8x16xbf16>
    %cst_272 = arith.constant dense<0.000000e+00> : vector<8x16xf32>
    %350 = tpu.matmul %277, %349, %cst_272 {dimension_numbers = #tpu.dot_dimension_numbers<[1], [0], [0], [1], [0, 0, 1, 1], [], []>} : vector<8x8xbf16>, vector<8x16xbf16>, vector<8x16xf32> -> vector<8x16xf32>
    %351 = arith.addf %347, %350 : vector<8x16xf32>
    %c3_273 = arith.constant 3 : index
    %c0_274 = arith.constant 0 : index
    %c2_275 = arith.constant 2 : index
    %352 = vector.load %arg8[%c3_273, %c0_274, %c2_275] : memref<12x8x20xbf16, #tpu.memory_space<vmem>>, vector<1x8x16xbf16>
    %353 = vector.shape_cast %352 : vector<1x8x16xbf16> to vector<8x16xbf16>
    %cst_276 = arith.constant dense<0.000000e+00> : vector<8x16xf32>
    %354 = tpu.matmul %279, %353, %cst_276 {dimension_numbers = #tpu.dot_dimension_numbers<[1], [0], [0], [1], [0, 0, 1, 1], [], []>} : vector<8x8xbf16>, vector<8x16xbf16>, vector<8x16xf32> -> vector<8x16xf32>
    %355 = arith.addf %351, %354 : vector<8x16xf32>
    %c3_277 = arith.constant 3 : index
    %c0_278 = arith.constant 0 : index
    %c4_279 = arith.constant 4 : index
    %356 = vector.load %arg8[%c3_277, %c0_278, %c4_279] : memref<12x8x20xbf16, #tpu.memory_space<vmem>>, vector<1x8x16xbf16>
    %357 = vector.shape_cast %356 : vector<1x8x16xbf16> to vector<8x16xbf16>
    %cst_280 = arith.constant dense<0.000000e+00> : vector<8x16xf32>
    %358 = tpu.matmul %281, %357, %cst_280 {dimension_numbers = #tpu.dot_dimension_numbers<[1], [0], [0], [1], [0, 0, 1, 1], [], []>} : vector<8x8xbf16>, vector<8x16xbf16>, vector<8x16xf32> -> vector<8x16xf32>
    %359 = arith.addf %355, %358 : vector<8x16xf32>
    %c5_281 = arith.constant 5 : index
    %c0_282 = arith.constant 0 : index
    %c0_283 = arith.constant 0 : index
    %360 = vector.load %arg8[%c5_281, %c0_282, %c0_283] : memref<12x8x20xbf16, #tpu.memory_space<vmem>>, vector<1x8x16xbf16>
    %361 = vector.shape_cast %360 : vector<1x8x16xbf16> to vector<8x16xbf16>
    %cst_284 = arith.constant dense<0.000000e+00> : vector<8x16xf32>
    %362 = tpu.matmul %283, %361, %cst_284 {dimension_numbers = #tpu.dot_dimension_numbers<[1], [0], [0], [1], [0, 0, 1, 1], [], []>} : vector<8x8xbf16>, vector<8x16xbf16>, vector<8x16xf32> -> vector<8x16xf32>
    %363 = arith.addf %359, %362 : vector<8x16xf32>
    %c5_285 = arith.constant 5 : index
    %c0_286 = arith.constant 0 : index
    %c2_287 = arith.constant 2 : index
    %364 = vector.load %arg8[%c5_285, %c0_286, %c2_287] : memref<12x8x20xbf16, #tpu.memory_space<vmem>>, vector<1x8x16xbf16>
    %365 = vector.shape_cast %364 : vector<1x8x16xbf16> to vector<8x16xbf16>
    %cst_288 = arith.constant dense<0.000000e+00> : vector<8x16xf32>
    %366 = tpu.matmul %285, %365, %cst_288 {dimension_numbers = #tpu.dot_dimension_numbers<[1], [0], [0], [1], [0, 0, 1, 1], [], []>} : vector<8x8xbf16>, vector<8x16xbf16>, vector<8x16xf32> -> vector<8x16xf32>
    %367 = arith.addf %363, %366 : vector<8x16xf32>
    %c5_289 = arith.constant 5 : index
    %c0_290 = arith.constant 0 : index
    %c4_291 = arith.constant 4 : index
    %368 = vector.load %arg8[%c5_289, %c0_290, %c4_291] : memref<12x8x20xbf16, #tpu.memory_space<vmem>>, vector<1x8x16xbf16>
    %369 = vector.shape_cast %368 : vector<1x8x16xbf16> to vector<8x16xbf16>
    %cst_292 = arith.constant dense<0.000000e+00> : vector<8x16xf32>
    %370 = tpu.matmul %287, %369, %cst_292 {dimension_numbers = #tpu.dot_dimension_numbers<[1], [0], [0], [1], [0, 0, 1, 1], [], []>} : vector<8x8xbf16>, vector<8x16xbf16>, vector<8x16xf32> -> vector<8x16xf32>
    %371 = arith.addf %367, %370 : vector<8x16xf32>
    %c3_293 = arith.constant 3 : index
    %c0_294 = arith.constant 0 : index
    %c2_295 = arith.constant 2 : index
    %372 = vector.load %arg8[%c3_293, %c0_294, %c2_295] : memref<12x8x20xbf16, #tpu.memory_space<vmem>>, vector<1x8x16xbf16>
    %373 = vector.shape_cast %372 : vector<1x8x16xbf16> to vector<8x16xbf16>
    %374 = arith.extf %373 : vector<8x16xbf16> to vector<8x16xf32>
    %375 = vector.broadcast %4 : vector<8x1xf32> to vector<8x16xf32>
    %376 = arith.addf %371, %375 : vector<8x16xf32>
    %377 = arith.addf %376, %374 : vector<8x16xf32>
    %378 = arith.truncf %377 : vector<8x16xf32> to vector<8x16xbf16>
    %c0_296 = arith.constant 0 : index
    %c1_297 = arith.constant 1 : index
    %c0_298 = arith.constant 0 : index
    %c0_299 = arith.constant 0 : index
    %379 = vector.load %arg7[%c0_296, %c1_297, %c0_298, %c0_299] : memref<1x8x8x16xbf16, #tpu.memory_space<vmem>>, vector<1x1x8x16xbf16>
    %380 = vector.shape_cast %379 : vector<1x1x8x16xbf16> to vector<8x16xbf16>
    %381 = vector.shape_cast %378 : vector<8x16xbf16> to vector<1x1x8x16xbf16>
    tpu.vector_store %arg7[%c0_296, %c1_297, %c0_298, %c0_299], %381 {strides = array<i32>} : memref<1x8x8x16xbf16, #tpu.memory_space<vmem>>, vector<1x1x8x16xbf16>,
    %cst_300 = arith.constant 0.000000e+00 : f32
    %382 = vector.broadcast %cst_300 : f32 to vector<8x16xf32>
    %c2_301 = arith.constant 2 : index
    %c0_302 = arith.constant 0 : index
    %c0_303 = arith.constant 0 : index
    %383 = vector.load %arg8[%c2_301, %c0_302, %c0_303] : memref<12x8x20xbf16, #tpu.memory_space<vmem>>, vector<1x8x16xbf16>
    %384 = vector.shape_cast %383 : vector<1x8x16xbf16> to vector<8x16xbf16>
    %cst_304 = arith.constant dense<0.000000e+00> : vector<8x16xf32>
    %385 = tpu.matmul %271, %384, %cst_304 {dimension_numbers = #tpu.dot_dimension_numbers<[1], [0], [0], [1], [0, 0, 1, 1], [], []>} : vector<8x8xbf16>, vector<8x16xbf16>, vector<8x16xf32> -> vector<8x16xf32>
    %386 = arith.addf %382, %385 : vector<8x16xf32>
    %c2_305 = arith.constant 2 : index
    %c0_306 = arith.constant 0 : index
    %c2_307 = arith.constant 2 : index
    %387 = vector.load %arg8[%c2_305, %c0_306, %c2_307] : memref<12x8x20xbf16, #tpu.memory_space<vmem>>, vector<1x8x16xbf16>
    %388 = vector.shape_cast %387 : vector<1x8x16xbf16> to vector<8x16xbf16>
    %cst_308 = arith.constant dense<0.000000e+00> : vector<8x16xf32>
    %389 = tpu.matmul %273, %388, %cst_308 {dimension_numbers = #tpu.dot_dimension_numbers<[1], [0], [0], [1], [0, 0, 1, 1], [], []>} : vector<8x8xbf16>, vector<8x16xbf16>, vector<8x16xf32> -> vector<8x16xf32>
    %390 = arith.addf %386, %389 : vector<8x16xf32>
    %c2_309 = arith.constant 2 : index
    %c0_310 = arith.constant 0 : index
    %c4_311 = arith.constant 4 : index
    %391 = vector.load %arg8[%c2_309, %c0_310, %c4_311] : memref<12x8x20xbf16, #tpu.memory_space<vmem>>, vector<1x8x16xbf16>
    %392 = vector.shape_cast %391 : vector<1x8x16xbf16> to vector<8x16xbf16>
    %cst_312 = arith.constant dense<0.000000e+00> : vector<8x16xf32>
    %393 = tpu.matmul %275, %392, %cst_312 {dimension_numbers = #tpu.dot_dimension_numbers<[1], [0], [0], [1], [0, 0, 1, 1], [], []>} : vector<8x8xbf16>, vector<8x16xbf16>, vector<8x16xf32> -> vector<8x16xf32>
    %394 = arith.addf %390, %393 : vector<8x16xf32>
    %c4_313 = arith.constant 4 : index
    %c0_314 = arith.constant 0 : index
    %c0_315 = arith.constant 0 : index
    %395 = vector.load %arg8[%c4_313, %c0_314, %c0_315] : memref<12x8x20xbf16, #tpu.memory_space<vmem>>, vector<1x8x16xbf16>
    %396 = vector.shape_cast %395 : vector<1x8x16xbf16> to vector<8x16xbf16>
    %cst_316 = arith.constant dense<0.000000e+00> : vector<8x16xf32>
    %397 = tpu.matmul %277, %396, %cst_316 {dimension_numbers = #tpu.dot_dimension_numbers<[1], [0], [0], [1], [0, 0, 1, 1], [], []>} : vector<8x8xbf16>, vector<8x16xbf16>, vector<8x16xf32> -> vector<8x16xf32>
    %398 = arith.addf %394, %397 : vector<8x16xf32>
    %c4_317 = arith.constant 4 : index
    %c0_318 = arith.constant 0 : index
    %c2_319 = arith.constant 2 : index
    %399 = vector.load %arg8[%c4_317, %c0_318, %c2_319] : memref<12x8x20xbf16, #tpu.memory_space<vmem>>, vector<1x8x16xbf16>
    %400 = vector.shape_cast %399 : vector<1x8x16xbf16> to vector<8x16xbf16>
    %cst_320 = arith.constant dense<0.000000e+00> : vector<8x16xf32>
    %401 = tpu.matmul %279, %400, %cst_320 {dimension_numbers = #tpu.dot_dimension_numbers<[1], [0], [0], [1], [0, 0, 1, 1], [], []>} : vector<8x8xbf16>, vector<8x16xbf16>, vector<8x16xf32> -> vector<8x16xf32>
    %402 = arith.addf %398, %401 : vector<8x16xf32>
    %c4_321 = arith.constant 4 : index
    %c0_322 = arith.constant 0 : index
    %c4_323 = arith.constant 4 : index
    %403 = vector.load %arg8[%c4_321, %c0_322, %c4_323] : memref<12x8x20xbf16, #tpu.memory_space<vmem>>, vector<1x8x16xbf16>
    %404 = vector.shape_cast %403 : vector<1x8x16xbf16> to vector<8x16xbf16>
    %cst_324 = arith.constant dense<0.000000e+00> : vector<8x16xf32>
    %405 = tpu.matmul %281, %404, %cst_324 {dimension_numbers = #tpu.dot_dimension_numbers<[1], [0], [0], [1], [0, 0, 1, 1], [], []>} : vector<8x8xbf16>, vector<8x16xbf16>, vector<8x16xf32> -> vector<8x16xf32>
    %406 = arith.addf %402, %405 : vector<8x16xf32>
    %c6_325 = arith.constant 6 : index
    %c0_326 = arith.constant 0 : index
    %c0_327 = arith.constant 0 : index
    %407 = vector.load %arg8[%c6_325, %c0_326, %c0_327] : memref<12x8x20xbf16, #tpu.memory_space<vmem>>, vector<1x8x16xbf16>
    %408 = vector.shape_cast %407 : vector<1x8x16xbf16> to vector<8x16xbf16>
    %cst_328 = arith.constant dense<0.000000e+00> : vector<8x16xf32>
    %409 = tpu.matmul %283, %408, %cst_328 {dimension_numbers = #tpu.dot_dimension_numbers<[1], [0], [0], [1], [0, 0, 1, 1], [], []>} : vector<8x8xbf16>, vector<8x16xbf16>, vector<8x16xf32> -> vector<8x16xf32>
    %410 = arith.addf %406, %409 : vector<8x16xf32>
    %c6_329 = arith.constant 6 : index
    %c0_330 = arith.constant 0 : index
    %c2_331 = arith.constant 2 : index
    %411 = vector.load %arg8[%c6_329, %c0_330, %c2_331] : memref<12x8x20xbf16, #tpu.memory_space<vmem>>, vector<1x8x16xbf16>
    %412 = vector.shape_cast %411 : vector<1x8x16xbf16> to vector<8x16xbf16>
    %cst_332 = arith.constant dense<0.000000e+00> : vector<8x16xf32>
    %413 = tpu.matmul %285, %412, %cst_332 {dimension_numbers = #tpu.dot_dimension_numbers<[1], [0], [0], [1], [0, 0, 1, 1], [], []>} : vector<8x8xbf16>, vector<8x16xbf16>, vector<8x16xf32> -> vector<8x16xf32>
    %414 = arith.addf %410, %413 : vector<8x16xf32>
    %c6_333 = arith.constant 6 : index
    %c0_334 = arith.constant 0 : index
    %c4_335 = arith.constant 4 : index
    %415 = vector.load %arg8[%c6_333, %c0_334, %c4_335] : memref<12x8x20xbf16, #tpu.memory_space<vmem>>, vector<1x8x16xbf16>
    %416 = vector.shape_cast %415 : vector<1x8x16xbf16> to vector<8x16xbf16>
    %cst_336 = arith.constant dense<0.000000e+00> : vector<8x16xf32>
    %417 = tpu.matmul %287, %416, %cst_336 {dimension_numbers = #tpu.dot_dimension_numbers<[1], [0], [0], [1], [0, 0, 1, 1], [], []>} : vector<8x8xbf16>, vector<8x16xbf16>, vector<8x16xf32> -> vector<8x16xf32>
    %418 = arith.addf %414, %417 : vector<8x16xf32>
    %c4_337 = arith.constant 4 : index
    %c0_338 = arith.constant 0 : index
    %c2_339 = arith.constant 2 : index
    %419 = vector.load %arg8[%c4_337, %c0_338, %c2_339] : memref<12x8x20xbf16, #tpu.memory_space<vmem>>, vector<1x8x16xbf16>
    %420 = vector.shape_cast %419 : vector<1x8x16xbf16> to vector<8x16xbf16>
    %421 = arith.extf %420 : vector<8x16xbf16> to vector<8x16xf32>
    %422 = vector.broadcast %4 : vector<8x1xf32> to vector<8x16xf32>
    %423 = arith.addf %418, %422 : vector<8x16xf32>
    %424 = arith.addf %423, %421 : vector<8x16xf32>
    %425 = arith.truncf %424 : vector<8x16xf32> to vector<8x16xbf16>
    %c0_340 = arith.constant 0 : index
    %c2_341 = arith.constant 2 : index
    %c0_342 = arith.constant 0 : index
    %c0_343 = arith.constant 0 : index
    %426 = vector.load %arg7[%c0_340, %c2_341, %c0_342, %c0_343] : memref<1x8x8x16xbf16, #tpu.memory_space<vmem>>, vector<1x1x8x16xbf16>
    %427 = vector.shape_cast %426 : vector<1x1x8x16xbf16> to vector<8x16xbf16>
    %428 = vector.shape_cast %425 : vector<8x16xbf16> to vector<1x1x8x16xbf16>
    tpu.vector_store %arg7[%c0_340, %c2_341, %c0_342, %c0_343], %428 {strides = array<i32>} : memref<1x8x8x16xbf16, #tpu.memory_space<vmem>>, vector<1x1x8x16xbf16>,
    %cst_344 = arith.constant 0.000000e+00 : f32
    %429 = vector.broadcast %cst_344 : f32 to vector<8x16xf32>
    %c3_345 = arith.constant 3 : index
    %c0_346 = arith.constant 0 : index
    %c0_347 = arith.constant 0 : index
    %430 = vector.load %arg8[%c3_345, %c0_346, %c0_347] : memref<12x8x20xbf16, #tpu.memory_space<vmem>>, vector<1x8x16xbf16>
    %431 = vector.shape_cast %430 : vector<1x8x16xbf16> to vector<8x16xbf16>
    %cst_348 = arith.constant dense<0.000000e+00> : vector<8x16xf32>
    %432 = tpu.matmul %271, %431, %cst_348 {dimension_numbers = #tpu.dot_dimension_numbers<[1], [0], [0], [1], [0, 0, 1, 1], [], []>} : vector<8x8xbf16>, vector<8x16xbf16>, vector<8x16xf32> -> vector<8x16xf32>
    %433 = arith.addf %429, %432 : vector<8x16xf32>
    %c3_349 = arith.constant 3 : index
    %c0_350 = arith.constant 0 : index
    %c2_351 = arith.constant 2 : index
    %434 = vector.load %arg8[%c3_349, %c0_350, %c2_351] : memref<12x8x20xbf16, #tpu.memory_space<vmem>>, vector<1x8x16xbf16>
    %435 = vector.shape_cast %434 : vector<1x8x16xbf16> to vector<8x16xbf16>
    %cst_352 = arith.constant dense<0.000000e+00> : vector<8x16xf32>
    %436 = tpu.matmul %273, %435, %cst_352 {dimension_numbers = #tpu.dot_dimension_numbers<[1], [0], [0], [1], [0, 0, 1, 1], [], []>} : vector<8x8xbf16>, vector<8x16xbf16>, vector<8x16xf32> -> vector<8x16xf32>
    %437 = arith.addf %433, %436 : vector<8x16xf32>
    %c3_353 = arith.constant 3 : index
    %c0_354 = arith.constant 0 : index
    %c4_355 = arith.constant 4 : index
    %438 = vector.load %arg8[%c3_353, %c0_354, %c4_355] : memref<12x8x20xbf16, #tpu.memory_space<vmem>>, vector<1x8x16xbf16>
    %439 = vector.shape_cast %438 : vector<1x8x16xbf16> to vector<8x16xbf16>
    %cst_356 = arith.constant dense<0.000000e+00> : vector<8x16xf32>
    %440 = tpu.matmul %275, %439, %cst_356 {dimension_numbers = #tpu.dot_dimension_numbers<[1], [0], [0], [1], [0, 0, 1, 1], [], []>} : vector<8x8xbf16>, vector<8x16xbf16>, vector<8x16xf32> -> vector<8x16xf32>
    %441 = arith.addf %437, %440 : vector<8x16xf32>
    %c5_357 = arith.constant 5 : index
    %c0_358 = arith.constant 0 : index
    %c0_359 = arith.constant 0 : index
    %442 = vector.load %arg8[%c5_357, %c0_358, %c0_359] : memref<12x8x20xbf16, #tpu.memory_space<vmem>>, vector<1x8x16xbf16>
    %443 = vector.shape_cast %442 : vector<1x8x16xbf16> to vector<8x16xbf16>
    %cst_360 = arith.constant dense<0.000000e+00> : vector<8x16xf32>
    %444 = tpu.matmul %277, %443, %cst_360 {dimension_numbers = #tpu.dot_dimension_numbers<[1], [0], [0], [1], [0, 0, 1, 1], [], []>} : vector<8x8xbf16>, vector<8x16xbf16>, vector<8x16xf32> -> vector<8x16xf32>
    %445 = arith.addf %441, %444 : vector<8x16xf32>
    %c5_361 = arith.constant 5 : index
    %c0_362 = arith.constant 0 : index
    %c2_363 = arith.constant 2 : index
    %446 = vector.load %arg8[%c5_361, %c0_362, %c2_363] : memref<12x8x20xbf16, #tpu.memory_space<vmem>>, vector<1x8x16xbf16>
    %447 = vector.shape_cast %446 : vector<1x8x16xbf16> to vector<8x16xbf16>
    %cst_364 = arith.constant dense<0.000000e+00> : vector<8x16xf32>
    %448 = tpu.matmul %279, %447, %cst_364 {dimension_numbers = #tpu.dot_dimension_numbers<[1], [0], [0], [1], [0, 0, 1, 1], [], []>} : vector<8x8xbf16>, vector<8x16xbf16>, vector<8x16xf32> -> vector<8x16xf32>
    %449 = arith.addf %445, %448 : vector<8x16xf32>
    %c5_365 = arith.constant 5 : index
    %c0_366 = arith.constant 0 : index
    %c4_367 = arith.constant 4 : index
    %450 = vector.load %arg8[%c5_365, %c0_366, %c4_367] : memref<12x8x20xbf16, #tpu.memory_space<vmem>>, vector<1x8x16xbf16>
    %451 = vector.shape_cast %450 : vector<1x8x16xbf16> to vector<8x16xbf16>
    %cst_368 = arith.constant dense<0.000000e+00> : vector<8x16xf32>
    %452 = tpu.matmul %281, %451, %cst_368 {dimension_numbers = #tpu.dot_dimension_numbers<[1], [0], [0], [1], [0, 0, 1, 1], [], []>} : vector<8x8xbf16>, vector<8x16xbf16>, vector<8x16xf32> -> vector<8x16xf32>
    %453 = arith.addf %449, %452 : vector<8x16xf32>
    %c7_369 = arith.constant 7 : index
    %c0_370 = arith.constant 0 : index
    %c0_371 = arith.constant 0 : index
    %454 = vector.load %arg8[%c7_369, %c0_370, %c0_371] : memref<12x8x20xbf16, #tpu.memory_space<vmem>>, vector<1x8x16xbf16>
    %455 = vector.shape_cast %454 : vector<1x8x16xbf16> to vector<8x16xbf16>
    %cst_372 = arith.constant dense<0.000000e+00> : vector<8x16xf32>
    %456 = tpu.matmul %283, %455, %cst_372 {dimension_numbers = #tpu.dot_dimension_numbers<[1], [0], [0], [1], [0, 0, 1, 1], [], []>} : vector<8x8xbf16>, vector<8x16xbf16>, vector<8x16xf32> -> vector<8x16xf32>
    %457 = arith.addf %453, %456 : vector<8x16xf32>
    %c7_373 = arith.constant 7 : index
    %c0_374 = arith.constant 0 : index
    %c2_375 = arith.constant 2 : index
    %458 = vector.load %arg8[%c7_373, %c0_374, %c2_375] : memref<12x8x20xbf16, #tpu.memory_space<vmem>>, vector<1x8x16xbf16>
    %459 = vector.shape_cast %458 : vector<1x8x16xbf16> to vector<8x16xbf16>
    %cst_376 = arith.constant dense<0.000000e+00> : vector<8x16xf32>
    %460 = tpu.matmul %285, %459, %cst_376 {dimension_numbers = #tpu.dot_dimension_numbers<[1], [0], [0], [1], [0, 0, 1, 1], [], []>} : vector<8x8xbf16>, vector<8x16xbf16>, vector<8x16xf32> -> vector<8x16xf32>
    %461 = arith.addf %457, %460 : vector<8x16xf32>
    %c7_377 = arith.constant 7 : index
    %c0_378 = arith.constant 0 : index
    %c4_379 = arith.constant 4 : index
    %462 = vector.load %arg8[%c7_377, %c0_378, %c4_379] : memref<12x8x20xbf16, #tpu.memory_space<vmem>>, vector<1x8x16xbf16>
    %463 = vector.shape_cast %462 : vector<1x8x16xbf16> to vector<8x16xbf16>
    %cst_380 = arith.constant dense<0.000000e+00> : vector<8x16xf32>
    %464 = tpu.matmul %287, %463, %cst_380 {dimension_numbers = #tpu.dot_dimension_numbers<[1], [0], [0], [1], [0, 0, 1, 1], [], []>} : vector<8x8xbf16>, vector<8x16xbf16>, vector<8x16xf32> -> vector<8x16xf32>
    %465 = arith.addf %461, %464 : vector<8x16xf32>
    %c5_381 = arith.constant 5 : index
    %c0_382 = arith.constant 0 : index
    %c2_383 = arith.constant 2 : index
    %466 = vector.load %arg8[%c5_381, %c0_382, %c2_383] : memref<12x8x20xbf16, #tpu.memory_space<vmem>>, vector<1x8x16xbf16>
    %467 = vector.shape_cast %466 : vector<1x8x16xbf16> to vector<8x16xbf16>
    %468 = arith.extf %467 : vector<8x16xbf16> to vector<8x16xf32>
    %469 = vector.broadcast %4 : vector<8x1xf32> to vector<8x16xf32>
    %470 = arith.addf %465, %469 : vector<8x16xf32>
    %471 = arith.addf %470, %468 : vector<8x16xf32>
    %472 = arith.truncf %471 : vector<8x16xf32> to vector<8x16xbf16>
    %c0_384 = arith.constant 0 : index
    %c3_385 = arith.constant 3 : index
    %c0_386 = arith.constant 0 : index
    %c0_387 = arith.constant 0 : index
    %473 = vector.load %arg7[%c0_384, %c3_385, %c0_386, %c0_387] : memref<1x8x8x16xbf16, #tpu.memory_space<vmem>>, vector<1x1x8x16xbf16>
    %474 = vector.shape_cast %473 : vector<1x1x8x16xbf16> to vector<8x16xbf16>
    %475 = vector.shape_cast %472 : vector<8x16xbf16> to vector<1x1x8x16xbf16>
    tpu.vector_store %arg7[%c0_384, %c3_385, %c0_386, %c0_387], %475 {strides = array<i32>} : memref<1x8x8x16xbf16, #tpu.memory_space<vmem>>, vector<1x1x8x16xbf16>,
    %cst_388 = arith.constant 0.000000e+00 : f32
    %476 = vector.broadcast %cst_388 : f32 to vector<8x16xf32>
    %c4_389 = arith.constant 4 : index
    %c0_390 = arith.constant 0 : index
    %c0_391 = arith.constant 0 : index
    %477 = vector.load %arg8[%c4_389, %c0_390, %c0_391] : memref<12x8x20xbf16, #tpu.memory_space<vmem>>, vector<1x8x16xbf16>
    %478 = vector.shape_cast %477 : vector<1x8x16xbf16> to vector<8x16xbf16>
    %cst_392 = arith.constant dense<0.000000e+00> : vector<8x16xf32>
    %479 = tpu.matmul %271, %478, %cst_392 {dimension_numbers = #tpu.dot_dimension_numbers<[1], [0], [0], [1], [0, 0, 1, 1], [], []>} : vector<8x8xbf16>, vector<8x16xbf16>, vector<8x16xf32> -> vector<8x16xf32>
    %480 = arith.addf %476, %479 : vector<8x16xf32>
    %c4_393 = arith.constant 4 : index
    %c0_394 = arith.constant 0 : index
    %c2_395 = arith.constant 2 : index
    %481 = vector.load %arg8[%c4_393, %c0_394, %c2_395] : memref<12x8x20xbf16, #tpu.memory_space<vmem>>, vector<1x8x16xbf16>
    %482 = vector.shape_cast %481 : vector<1x8x16xbf16> to vector<8x16xbf16>
    %cst_396 = arith.constant dense<0.000000e+00> : vector<8x16xf32>
    %483 = tpu.matmul %273, %482, %cst_396 {dimension_numbers = #tpu.dot_dimension_numbers<[1], [0], [0], [1], [0, 0, 1, 1], [], []>} : vector<8x8xbf16>, vector<8x16xbf16>, vector<8x16xf32> -> vector<8x16xf32>
    %484 = arith.addf %480, %483 : vector<8x16xf32>
    %c4_397 = arith.constant 4 : index
    %c0_398 = arith.constant 0 : index
    %c4_399 = arith.constant 4 : index
    %485 = vector.load %arg8[%c4_397, %c0_398, %c4_399] : memref<12x8x20xbf16, #tpu.memory_space<vmem>>, vector<1x8x16xbf16>
    %486 = vector.shape_cast %485 : vector<1x8x16xbf16> to vector<8x16xbf16>
    %cst_400 = arith.constant dense<0.000000e+00> : vector<8x16xf32>
    %487 = tpu.matmul %275, %486, %cst_400 {dimension_numbers = #tpu.dot_dimension_numbers<[1], [0], [0], [1], [0, 0, 1, 1], [], []>} : vector<8x8xbf16>, vector<8x16xbf16>, vector<8x16xf32> -> vector<8x16xf32>
    %488 = arith.addf %484, %487 : vector<8x16xf32>
    %c6_401 = arith.constant 6 : index
    %c0_402 = arith.constant 0 : index
    %c0_403 = arith.constant 0 : index
    %489 = vector.load %arg8[%c6_401, %c0_402, %c0_403] : memref<12x8x20xbf16, #tpu.memory_space<vmem>>, vector<1x8x16xbf16>
    %490 = vector.shape_cast %489 : vector<1x8x16xbf16> to vector<8x16xbf16>
    %cst_404 = arith.constant dense<0.000000e+00> : vector<8x16xf32>
    %491 = tpu.matmul %277, %490, %cst_404 {dimension_numbers = #tpu.dot_dimension_numbers<[1], [0], [0], [1], [0, 0, 1, 1], [], []>} : vector<8x8xbf16>, vector<8x16xbf16>, vector<8x16xf32> -> vector<8x16xf32>
    %492 = arith.addf %488, %491 : vector<8x16xf32>
    %c6_405 = arith.constant 6 : index
    %c0_406 = arith.constant 0 : index
    %c2_407 = arith.constant 2 : index
    %493 = vector.load %arg8[%c6_405, %c0_406, %c2_407] : memref<12x8x20xbf16, #tpu.memory_space<vmem>>, vector<1x8x16xbf16>
    %494 = vector.shape_cast %493 : vector<1x8x16xbf16> to vector<8x16xbf16>
    %cst_408 = arith.constant dense<0.000000e+00> : vector<8x16xf32>
    %495 = tpu.matmul %279, %494, %cst_408 {dimension_numbers = #tpu.dot_dimension_numbers<[1], [0], [0], [1], [0, 0, 1, 1], [], []>} : vector<8x8xbf16>, vector<8x16xbf16>, vector<8x16xf32> -> vector<8x16xf32>
    %496 = arith.addf %492, %495 : vector<8x16xf32>
    %c6_409 = arith.constant 6 : index
    %c0_410 = arith.constant 0 : index
    %c4_411 = arith.constant 4 : index
    %497 = vector.load %arg8[%c6_409, %c0_410, %c4_411] : memref<12x8x20xbf16, #tpu.memory_space<vmem>>, vector<1x8x16xbf16>
    %498 = vector.shape_cast %497 : vector<1x8x16xbf16> to vector<8x16xbf16>
    %cst_412 = arith.constant dense<0.000000e+00> : vector<8x16xf32>
    %499 = tpu.matmul %281, %498, %cst_412 {dimension_numbers = #tpu.dot_dimension_numbers<[1], [0], [0], [1], [0, 0, 1, 1], [], []>} : vector<8x8xbf16>, vector<8x16xbf16>, vector<8x16xf32> -> vector<8x16xf32>
    %500 = arith.addf %496, %499 : vector<8x16xf32>
    %c8_413 = arith.constant 8 : index
    %c0_414 = arith.constant 0 : index
    %c0_415 = arith.constant 0 : index
    %501 = vector.load %arg8[%c8_413, %c0_414, %c0_415] : memref<12x8x20xbf16, #tpu.memory_space<vmem>>, vector<1x8x16xbf16>
    %502 = vector.shape_cast %501 : vector<1x8x16xbf16> to vector<8x16xbf16>
    %cst_416 = arith.constant dense<0.000000e+00> : vector<8x16xf32>
    %503 = tpu.matmul %283, %502, %cst_416 {dimension_numbers = #tpu.dot_dimension_numbers<[1], [0], [0], [1], [0, 0, 1, 1], [], []>} : vector<8x8xbf16>, vector<8x16xbf16>, vector<8x16xf32> -> vector<8x16xf32>
    %504 = arith.addf %500, %503 : vector<8x16xf32>
    %c8_417 = arith.constant 8 : index
    %c0_418 = arith.constant 0 : index
    %c2_419 = arith.constant 2 : index
    %505 = vector.load %arg8[%c8_417, %c0_418, %c2_419] : memref<12x8x20xbf16, #tpu.memory_space<vmem>>, vector<1x8x16xbf16>
    %506 = vector.shape_cast %505 : vector<1x8x16xbf16> to vector<8x16xbf16>
    %cst_420 = arith.constant dense<0.000000e+00> : vector<8x16xf32>
    %507 = tpu.matmul %285, %506, %cst_420 {dimension_numbers = #tpu.dot_dimension_numbers<[1], [0], [0], [1], [0, 0, 1, 1], [], []>} : vector<8x8xbf16>, vector<8x16xbf16>, vector<8x16xf32> -> vector<8x16xf32>
    %508 = arith.addf %504, %507 : vector<8x16xf32>
    %c8_421 = arith.constant 8 : index
    %c0_422 = arith.constant 0 : index
    %c4_423 = arith.constant 4 : index
    %509 = vector.load %arg8[%c8_421, %c0_422, %c4_423] : memref<12x8x20xbf16, #tpu.memory_space<vmem>>, vector<1x8x16xbf16>
    %510 = vector.shape_cast %509 : vector<1x8x16xbf16> to vector<8x16xbf16>
    %cst_424 = arith.constant dense<0.000000e+00> : vector<8x16xf32>
    %511 = tpu.matmul %287, %510, %cst_424 {dimension_numbers = #tpu.dot_dimension_numbers<[1], [0], [0], [1], [0, 0, 1, 1], [], []>} : vector<8x8xbf16>, vector<8x16xbf16>, vector<8x16xf32> -> vector<8x16xf32>
    %512 = arith.addf %508, %511 : vector<8x16xf32>
    %c6_425 = arith.constant 6 : index
    %c0_426 = arith.constant 0 : index
    %c2_427 = arith.constant 2 : index
    %513 = vector.load %arg8[%c6_425, %c0_426, %c2_427] : memref<12x8x20xbf16, #tpu.memory_space<vmem>>, vector<1x8x16xbf16>
    %514 = vector.shape_cast %513 : vector<1x8x16xbf16> to vector<8x16xbf16>
    %515 = arith.extf %514 : vector<8x16xbf16> to vector<8x16xf32>
    %516 = vector.broadcast %4 : vector<8x1xf32> to vector<8x16xf32>
    %517 = arith.addf %512, %516 : vector<8x16xf32>
    %518 = arith.addf %517, %515 : vector<8x16xf32>
    %519 = arith.truncf %518 : vector<8x16xf32> to vector<8x16xbf16>
    %c0_428 = arith.constant 0 : index
    %c4_429 = arith.constant 4 : index
    %c0_430 = arith.constant 0 : index
    %c0_431 = arith.constant 0 : index
    %520 = vector.load %arg7[%c0_428, %c4_429, %c0_430, %c0_431] : memref<1x8x8x16xbf16, #tpu.memory_space<vmem>>, vector<1x1x8x16xbf16>
    %521 = vector.shape_cast %520 : vector<1x1x8x16xbf16> to vector<8x16xbf16>
    %522 = vector.shape_cast %519 : vector<8x16xbf16> to vector<1x1x8x16xbf16>
    tpu.vector_store %arg7[%c0_428, %c4_429, %c0_430, %c0_431], %522 {strides = array<i32>} : memref<1x8x8x16xbf16, #tpu.memory_space<vmem>>, vector<1x1x8x16xbf16>,
    %cst_432 = arith.constant 0.000000e+00 : f32
    %523 = vector.broadcast %cst_432 : f32 to vector<8x16xf32>
    %c5_433 = arith.constant 5 : index
    %c0_434 = arith.constant 0 : index
    %c0_435 = arith.constant 0 : index
    %524 = vector.load %arg8[%c5_433, %c0_434, %c0_435] : memref<12x8x20xbf16, #tpu.memory_space<vmem>>, vector<1x8x16xbf16>
    %525 = vector.shape_cast %524 : vector<1x8x16xbf16> to vector<8x16xbf16>
    %cst_436 = arith.constant dense<0.000000e+00> : vector<8x16xf32>
    %526 = tpu.matmul %271, %525, %cst_436 {dimension_numbers = #tpu.dot_dimension_numbers<[1], [0], [0], [1], [0, 0, 1, 1], [], []>} : vector<8x8xbf16>, vector<8x16xbf16>, vector<8x16xf32> -> vector<8x16xf32>
    %527 = arith.addf %523, %526 : vector<8x16xf32>
    %c5_437 = arith.constant 5 : index
    %c0_438 = arith.constant 0 : index
    %c2_439 = arith.constant 2 : index
    %528 = vector.load %arg8[%c5_437, %c0_438, %c2_439] : memref<12x8x20xbf16, #tpu.memory_space<vmem>>, vector<1x8x16xbf16>
    %529 = vector.shape_cast %528 : vector<1x8x16xbf16> to vector<8x16xbf16>
    %cst_440 = arith.constant dense<0.000000e+00> : vector<8x16xf32>
    %530 = tpu.matmul %273, %529, %cst_440 {dimension_numbers = #tpu.dot_dimension_numbers<[1], [0], [0], [1], [0, 0, 1, 1], [], []>} : vector<8x8xbf16>, vector<8x16xbf16>, vector<8x16xf32> -> vector<8x16xf32>
    %531 = arith.addf %527, %530 : vector<8x16xf32>
    %c5_441 = arith.constant 5 : index
    %c0_442 = arith.constant 0 : index
    %c4_443 = arith.constant 4 : index
    %532 = vector.load %arg8[%c5_441, %c0_442, %c4_443] : memref<12x8x20xbf16, #tpu.memory_space<vmem>>, vector<1x8x16xbf16>
    %533 = vector.shape_cast %532 : vector<1x8x16xbf16> to vector<8x16xbf16>
    %cst_444 = arith.constant dense<0.000000e+00> : vector<8x16xf32>
    %534 = tpu.matmul %275, %533, %cst_444 {dimension_numbers = #tpu.dot_dimension_numbers<[1], [0], [0], [1], [0, 0, 1, 1], [], []>} : vector<8x8xbf16>, vector<8x16xbf16>, vector<8x16xf32> -> vector<8x16xf32>
    %535 = arith.addf %531, %534 : vector<8x16xf32>
    %c7_445 = arith.constant 7 : index
    %c0_446 = arith.constant 0 : index
    %c0_447 = arith.constant 0 : index
    %536 = vector.load %arg8[%c7_445, %c0_446, %c0_447] : memref<12x8x20xbf16, #tpu.memory_space<vmem>>, vector<1x8x16xbf16>
    %537 = vector.shape_cast %536 : vector<1x8x16xbf16> to vector<8x16xbf16>
    %cst_448 = arith.constant dense<0.000000e+00> : vector<8x16xf32>
    %538 = tpu.matmul %277, %537, %cst_448 {dimension_numbers = #tpu.dot_dimension_numbers<[1], [0], [0], [1], [0, 0, 1, 1], [], []>} : vector<8x8xbf16>, vector<8x16xbf16>, vector<8x16xf32> -> vector<8x16xf32>
    %539 = arith.addf %535, %538 : vector<8x16xf32>
    %c7_449 = arith.constant 7 : index
    %c0_450 = arith.constant 0 : index
    %c2_451 = arith.constant 2 : index
    %540 = vector.load %arg8[%c7_449, %c0_450, %c2_451] : memref<12x8x20xbf16, #tpu.memory_space<vmem>>, vector<1x8x16xbf16>
    %541 = vector.shape_cast %540 : vector<1x8x16xbf16> to vector<8x16xbf16>
    %cst_452 = arith.constant dense<0.000000e+00> : vector<8x16xf32>
    %542 = tpu.matmul %279, %541, %cst_452 {dimension_numbers = #tpu.dot_dimension_numbers<[1], [0], [0], [1], [0, 0, 1, 1], [], []>} : vector<8x8xbf16>, vector<8x16xbf16>, vector<8x16xf32> -> vector<8x16xf32>
    %543 = arith.addf %539, %542 : vector<8x16xf32>
    %c7_453 = arith.constant 7 : index
    %c0_454 = arith.constant 0 : index
    %c4_455 = arith.constant 4 : index
    %544 = vector.load %arg8[%c7_453, %c0_454, %c4_455] : memref<12x8x20xbf16, #tpu.memory_space<vmem>>, vector<1x8x16xbf16>
    %545 = vector.shape_cast %544 : vector<1x8x16xbf16> to vector<8x16xbf16>
    %cst_456 = arith.constant dense<0.000000e+00> : vector<8x16xf32>
    %546 = tpu.matmul %281, %545, %cst_456 {dimension_numbers = #tpu.dot_dimension_numbers<[1], [0], [0], [1], [0, 0, 1, 1], [], []>} : vector<8x8xbf16>, vector<8x16xbf16>, vector<8x16xf32> -> vector<8x16xf32>
    %547 = arith.addf %543, %546 : vector<8x16xf32>
    %c9_457 = arith.constant 9 : index
    %c0_458 = arith.constant 0 : index
    %c0_459 = arith.constant 0 : index
    %548 = vector.load %arg8[%c9_457, %c0_458, %c0_459] : memref<12x8x20xbf16, #tpu.memory_space<vmem>>, vector<1x8x16xbf16>
    %549 = vector.shape_cast %548 : vector<1x8x16xbf16> to vector<8x16xbf16>
    %cst_460 = arith.constant dense<0.000000e+00> : vector<8x16xf32>
    %550 = tpu.matmul %283, %549, %cst_460 {dimension_numbers = #tpu.dot_dimension_numbers<[1], [0], [0], [1], [0, 0, 1, 1], [], []>} : vector<8x8xbf16>, vector<8x16xbf16>, vector<8x16xf32> -> vector<8x16xf32>
    %551 = arith.addf %547, %550 : vector<8x16xf32>
    %c9_461 = arith.constant 9 : index
    %c0_462 = arith.constant 0 : index
    %c2_463 = arith.constant 2 : index
    %552 = vector.load %arg8[%c9_461, %c0_462, %c2_463] : memref<12x8x20xbf16, #tpu.memory_space<vmem>>, vector<1x8x16xbf16>
    %553 = vector.shape_cast %552 : vector<1x8x16xbf16> to vector<8x16xbf16>
    %cst_464 = arith.constant dense<0.000000e+00> : vector<8x16xf32>
    %554 = tpu.matmul %285, %553, %cst_464 {dimension_numbers = #tpu.dot_dimension_numbers<[1], [0], [0], [1], [0, 0, 1, 1], [], []>} : vector<8x8xbf16>, vector<8x16xbf16>, vector<8x16xf32> -> vector<8x16xf32>
    %555 = arith.addf %551, %554 : vector<8x16xf32>
    %c9_465 = arith.constant 9 : index
    %c0_466 = arith.constant 0 : index
    %c4_467 = arith.constant 4 : index
    %556 = vector.load %arg8[%c9_465, %c0_466, %c4_467] : memref<12x8x20xbf16, #tpu.memory_space<vmem>>, vector<1x8x16xbf16>
    %557 = vector.shape_cast %556 : vector<1x8x16xbf16> to vector<8x16xbf16>
    %cst_468 = arith.constant dense<0.000000e+00> : vector<8x16xf32>
    %558 = tpu.matmul %287, %557, %cst_468 {dimension_numbers = #tpu.dot_dimension_numbers<[1], [0], [0], [1], [0, 0, 1, 1], [], []>} : vector<8x8xbf16>, vector<8x16xbf16>, vector<8x16xf32> -> vector<8x16xf32>
    %559 = arith.addf %555, %558 : vector<8x16xf32>
    %c7_469 = arith.constant 7 : index
    %c0_470 = arith.constant 0 : index
    %c2_471 = arith.constant 2 : index
    %560 = vector.load %arg8[%c7_469, %c0_470, %c2_471] : memref<12x8x20xbf16, #tpu.memory_space<vmem>>, vector<1x8x16xbf16>
    %561 = vector.shape_cast %560 : vector<1x8x16xbf16> to vector<8x16xbf16>
    %562 = arith.extf %561 : vector<8x16xbf16> to vector<8x16xf32>
    %563 = vector.broadcast %4 : vector<8x1xf32> to vector<8x16xf32>
    %564 = arith.addf %559, %563 : vector<8x16xf32>
    %565 = arith.addf %564, %562 : vector<8x16xf32>
    %566 = arith.truncf %565 : vector<8x16xf32> to vector<8x16xbf16>
    %c0_472 = arith.constant 0 : index
    %c5_473 = arith.constant 5 : index
    %c0_474 = arith.constant 0 : index
    %c0_475 = arith.constant 0 : index
    %567 = vector.load %arg7[%c0_472, %c5_473, %c0_474, %c0_475] : memref<1x8x8x16xbf16, #tpu.memory_space<vmem>>, vector<1x1x8x16xbf16>
    %568 = vector.shape_cast %567 : vector<1x1x8x16xbf16> to vector<8x16xbf16>
    %569 = vector.shape_cast %566 : vector<8x16xbf16> to vector<1x1x8x16xbf16>
    tpu.vector_store %arg7[%c0_472, %c5_473, %c0_474, %c0_475], %569 {strides = array<i32>} : memref<1x8x8x16xbf16, #tpu.memory_space<vmem>>, vector<1x1x8x16xbf16>,
    %cst_476 = arith.constant 0.000000e+00 : f32
    %570 = vector.broadcast %cst_476 : f32 to vector<8x16xf32>
    %c6_477 = arith.constant 6 : index
    %c0_478 = arith.constant 0 : index
    %c0_479 = arith.constant 0 : index
    %571 = vector.load %arg8[%c6_477, %c0_478, %c0_479] : memref<12x8x20xbf16, #tpu.memory_space<vmem>>, vector<1x8x16xbf16>
    %572 = vector.shape_cast %571 : vector<1x8x16xbf16> to vector<8x16xbf16>
    %cst_480 = arith.constant dense<0.000000e+00> : vector<8x16xf32>
    %573 = tpu.matmul %271, %572, %cst_480 {dimension_numbers = #tpu.dot_dimension_numbers<[1], [0], [0], [1], [0, 0, 1, 1], [], []>} : vector<8x8xbf16>, vector<8x16xbf16>, vector<8x16xf32> -> vector<8x16xf32>
    %574 = arith.addf %570, %573 : vector<8x16xf32>
    %c6_481 = arith.constant 6 : index
    %c0_482 = arith.constant 0 : index
    %c2_483 = arith.constant 2 : index
    %575 = vector.load %arg8[%c6_481, %c0_482, %c2_483] : memref<12x8x20xbf16, #tpu.memory_space<vmem>>, vector<1x8x16xbf16>
    %576 = vector.shape_cast %575 : vector<1x8x16xbf16> to vector<8x16xbf16>
    %cst_484 = arith.constant dense<0.000000e+00> : vector<8x16xf32>
    %577 = tpu.matmul %273, %576, %cst_484 {dimension_numbers = #tpu.dot_dimension_numbers<[1], [0], [0], [1], [0, 0, 1, 1], [], []>} : vector<8x8xbf16>, vector<8x16xbf16>, vector<8x16xf32> -> vector<8x16xf32>
    %578 = arith.addf %574, %577 : vector<8x16xf32>
    %c6_485 = arith.constant 6 : index
    %c0_486 = arith.constant 0 : index
    %c4_487 = arith.constant 4 : index
    %579 = vector.load %arg8[%c6_485, %c0_486, %c4_487] : memref<12x8x20xbf16, #tpu.memory_space<vmem>>, vector<1x8x16xbf16>
    %580 = vector.shape_cast %579 : vector<1x8x16xbf16> to vector<8x16xbf16>
    %cst_488 = arith.constant dense<0.000000e+00> : vector<8x16xf32>
    %581 = tpu.matmul %275, %580, %cst_488 {dimension_numbers = #tpu.dot_dimension_numbers<[1], [0], [0], [1], [0, 0, 1, 1], [], []>} : vector<8x8xbf16>, vector<8x16xbf16>, vector<8x16xf32> -> vector<8x16xf32>
    %582 = arith.addf %578, %581 : vector<8x16xf32>
    %c8_489 = arith.constant 8 : index
    %c0_490 = arith.constant 0 : index
    %c0_491 = arith.constant 0 : index
    %583 = vector.load %arg8[%c8_489, %c0_490, %c0_491] : memref<12x8x20xbf16, #tpu.memory_space<vmem>>, vector<1x8x16xbf16>
    %584 = vector.shape_cast %583 : vector<1x8x16xbf16> to vector<8x16xbf16>
    %cst_492 = arith.constant dense<0.000000e+00> : vector<8x16xf32>
    %585 = tpu.matmul %277, %584, %cst_492 {dimension_numbers = #tpu.dot_dimension_numbers<[1], [0], [0], [1], [0, 0, 1, 1], [], []>} : vector<8x8xbf16>, vector<8x16xbf16>, vector<8x16xf32> -> vector<8x16xf32>
    %586 = arith.addf %582, %585 : vector<8x16xf32>
    %c8_493 = arith.constant 8 : index
    %c0_494 = arith.constant 0 : index
    %c2_495 = arith.constant 2 : index
    %587 = vector.load %arg8[%c8_493, %c0_494, %c2_495] : memref<12x8x20xbf16, #tpu.memory_space<vmem>>, vector<1x8x16xbf16>
    %588 = vector.shape_cast %587 : vector<1x8x16xbf16> to vector<8x16xbf16>
    %cst_496 = arith.constant dense<0.000000e+00> : vector<8x16xf32>
    %589 = tpu.matmul %279, %588, %cst_496 {dimension_numbers = #tpu.dot_dimension_numbers<[1], [0], [0], [1], [0, 0, 1, 1], [], []>} : vector<8x8xbf16>, vector<8x16xbf16>, vector<8x16xf32> -> vector<8x16xf32>
    %590 = arith.addf %586, %589 : vector<8x16xf32>
    %c8_497 = arith.constant 8 : index
    %c0_498 = arith.constant 0 : index
    %c4_499 = arith.constant 4 : index
    %591 = vector.load %arg8[%c8_497, %c0_498, %c4_499] : memref<12x8x20xbf16, #tpu.memory_space<vmem>>, vector<1x8x16xbf16>
    %592 = vector.shape_cast %591 : vector<1x8x16xbf16> to vector<8x16xbf16>
    %cst_500 = arith.constant dense<0.000000e+00> : vector<8x16xf32>
    %593 = tpu.matmul %281, %592, %cst_500 {dimension_numbers = #tpu.dot_dimension_numbers<[1], [0], [0], [1], [0, 0, 1, 1], [], []>} : vector<8x8xbf16>, vector<8x16xbf16>, vector<8x16xf32> -> vector<8x16xf32>
    %594 = arith.addf %590, %593 : vector<8x16xf32>
    %c10_501 = arith.constant 10 : index
    %c0_502 = arith.constant 0 : index
    %c0_503 = arith.constant 0 : index
    %595 = vector.load %arg8[%c10_501, %c0_502, %c0_503] : memref<12x8x20xbf16, #tpu.memory_space<vmem>>, vector<1x8x16xbf16>
    %596 = vector.shape_cast %595 : vector<1x8x16xbf16> to vector<8x16xbf16>
    %cst_504 = arith.constant dense<0.000000e+00> : vector<8x16xf32>
    %597 = tpu.matmul %283, %596, %cst_504 {dimension_numbers = #tpu.dot_dimension_numbers<[1], [0], [0], [1], [0, 0, 1, 1], [], []>} : vector<8x8xbf16>, vector<8x16xbf16>, vector<8x16xf32> -> vector<8x16xf32>
    %598 = arith.addf %594, %597 : vector<8x16xf32>
    %c10_505 = arith.constant 10 : index
    %c0_506 = arith.constant 0 : index
    %c2_507 = arith.constant 2 : index
    %599 = vector.load %arg8[%c10_505, %c0_506, %c2_507] : memref<12x8x20xbf16, #tpu.memory_space<vmem>>, vector<1x8x16xbf16>
    %600 = vector.shape_cast %599 : vector<1x8x16xbf16> to vector<8x16xbf16>
    %cst_508 = arith.constant dense<0.000000e+00> : vector<8x16xf32>
    %601 = tpu.matmul %285, %600, %cst_508 {dimension_numbers = #tpu.dot_dimension_numbers<[1], [0], [0], [1], [0, 0, 1, 1], [], []>} : vector<8x8xbf16>, vector<8x16xbf16>, vector<8x16xf32> -> vector<8x16xf32>
    %602 = arith.addf %598, %601 : vector<8x16xf32>
    %c10_509 = arith.constant 10 : index
    %c0_510 = arith.constant 0 : index
    %c4_511 = arith.constant 4 : index
    %603 = vector.load %arg8[%c10_509, %c0_510, %c4_511] : memref<12x8x20xbf16, #tpu.memory_space<vmem>>, vector<1x8x16xbf16>
    %604 = vector.shape_cast %603 : vector<1x8x16xbf16> to vector<8x16xbf16>
    %cst_512 = arith.constant dense<0.000000e+00> : vector<8x16xf32>
    %605 = tpu.matmul %287, %604, %cst_512 {dimension_numbers = #tpu.dot_dimension_numbers<[1], [0], [0], [1], [0, 0, 1, 1], [], []>} : vector<8x8xbf16>, vector<8x16xbf16>, vector<8x16xf32> -> vector<8x16xf32>
    %606 = arith.addf %602, %605 : vector<8x16xf32>
    %c8_513 = arith.constant 8 : index
    %c0_514 = arith.constant 0 : index
    %c2_515 = arith.constant 2 : index
    %607 = vector.load %arg8[%c8_513, %c0_514, %c2_515] : memref<12x8x20xbf16, #tpu.memory_space<vmem>>, vector<1x8x16xbf16>
    %608 = vector.shape_cast %607 : vector<1x8x16xbf16> to vector<8x16xbf16>
    %609 = arith.extf %608 : vector<8x16xbf16> to vector<8x16xf32>
    %610 = vector.broadcast %4 : vector<8x1xf32> to vector<8x16xf32>
    %611 = arith.addf %606, %610 : vector<8x16xf32>
    %612 = arith.addf %611, %609 : vector<8x16xf32>
    %613 = arith.truncf %612 : vector<8x16xf32> to vector<8x16xbf16>
    %c0_516 = arith.constant 0 : index
    %c6_517 = arith.constant 6 : index
    %c0_518 = arith.constant 0 : index
    %c0_519 = arith.constant 0 : index
    %614 = vector.load %arg7[%c0_516, %c6_517, %c0_518, %c0_519] : memref<1x8x8x16xbf16, #tpu.memory_space<vmem>>, vector<1x1x8x16xbf16>
    %615 = vector.shape_cast %614 : vector<1x1x8x16xbf16> to vector<8x16xbf16>
    %616 = vector.shape_cast %613 : vector<8x16xbf16> to vector<1x1x8x16xbf16>
    tpu.vector_store %arg7[%c0_516, %c6_517, %c0_518, %c0_519], %616 {strides = array<i32>} : memref<1x8x8x16xbf16, #tpu.memory_space<vmem>>, vector<1x1x8x16xbf16>,
    %cst_520 = arith.constant 0.000000e+00 : f32
    %617 = vector.broadcast %cst_520 : f32 to vector<8x16xf32>
    %c7_521 = arith.constant 7 : index
    %c0_522 = arith.constant 0 : index
    %c0_523 = arith.constant 0 : index
    %618 = vector.load %arg8[%c7_521, %c0_522, %c0_523] : memref<12x8x20xbf16, #tpu.memory_space<vmem>>, vector<1x8x16xbf16>
    %619 = vector.shape_cast %618 : vector<1x8x16xbf16> to vector<8x16xbf16>
    %cst_524 = arith.constant dense<0.000000e+00> : vector<8x16xf32>
    %620 = tpu.matmul %271, %619, %cst_524 {dimension_numbers = #tpu.dot_dimension_numbers<[1], [0], [0], [1], [0, 0, 1, 1], [], []>} : vector<8x8xbf16>, vector<8x16xbf16>, vector<8x16xf32> -> vector<8x16xf32>
    %621 = arith.addf %617, %620 : vector<8x16xf32>
    %c7_525 = arith.constant 7 : index
    %c0_526 = arith.constant 0 : index
    %c2_527 = arith.constant 2 : index
    %622 = vector.load %arg8[%c7_525, %c0_526, %c2_527] : memref<12x8x20xbf16, #tpu.memory_space<vmem>>, vector<1x8x16xbf16>
    %623 = vector.shape_cast %622 : vector<1x8x16xbf16> to vector<8x16xbf16>
    %cst_528 = arith.constant dense<0.000000e+00> : vector<8x16xf32>
    %624 = tpu.matmul %273, %623, %cst_528 {dimension_numbers = #tpu.dot_dimension_numbers<[1], [0], [0], [1], [0, 0, 1, 1], [], []>} : vector<8x8xbf16>, vector<8x16xbf16>, vector<8x16xf32> -> vector<8x16xf32>
    %625 = arith.addf %621, %624 : vector<8x16xf32>
    %c7_529 = arith.constant 7 : index
    %c0_530 = arith.constant 0 : index
    %c4_531 = arith.constant 4 : index
    %626 = vector.load %arg8[%c7_529, %c0_530, %c4_531] : memref<12x8x20xbf16, #tpu.memory_space<vmem>>, vector<1x8x16xbf16>
    %627 = vector.shape_cast %626 : vector<1x8x16xbf16> to vector<8x16xbf16>
    %cst_532 = arith.constant dense<0.000000e+00> : vector<8x16xf32>
    %628 = tpu.matmul %275, %627, %cst_532 {dimension_numbers = #tpu.dot_dimension_numbers<[1], [0], [0], [1], [0, 0, 1, 1], [], []>} : vector<8x8xbf16>, vector<8x16xbf16>, vector<8x16xf32> -> vector<8x16xf32>
    %629 = arith.addf %625, %628 : vector<8x16xf32>
    %c9_533 = arith.constant 9 : index
    %c0_534 = arith.constant 0 : index
    %c0_535 = arith.constant 0 : index
    %630 = vector.load %arg8[%c9_533, %c0_534, %c0_535] : memref<12x8x20xbf16, #tpu.memory_space<vmem>>, vector<1x8x16xbf16>
    %631 = vector.shape_cast %630 : vector<1x8x16xbf16> to vector<8x16xbf16>
    %cst_536 = arith.constant dense<0.000000e+00> : vector<8x16xf32>
    %632 = tpu.matmul %277, %631, %cst_536 {dimension_numbers = #tpu.dot_dimension_numbers<[1], [0], [0], [1], [0, 0, 1, 1], [], []>} : vector<8x8xbf16>, vector<8x16xbf16>, vector<8x16xf32> -> vector<8x16xf32>
    %633 = arith.addf %629, %632 : vector<8x16xf32>
    %c9_537 = arith.constant 9 : index
    %c0_538 = arith.constant 0 : index
    %c2_539 = arith.constant 2 : index
    %634 = vector.load %arg8[%c9_537, %c0_538, %c2_539] : memref<12x8x20xbf16, #tpu.memory_space<vmem>>, vector<1x8x16xbf16>
    %635 = vector.shape_cast %634 : vector<1x8x16xbf16> to vector<8x16xbf16>
    %cst_540 = arith.constant dense<0.000000e+00> : vector<8x16xf32>
    %636 = tpu.matmul %279, %635, %cst_540 {dimension_numbers = #tpu.dot_dimension_numbers<[1], [0], [0], [1], [0, 0, 1, 1], [], []>} : vector<8x8xbf16>, vector<8x16xbf16>, vector<8x16xf32> -> vector<8x16xf32>
    %637 = arith.addf %633, %636 : vector<8x16xf32>
    %c9_541 = arith.constant 9 : index
    %c0_542 = arith.constant 0 : index
    %c4_543 = arith.constant 4 : index
    %638 = vector.load %arg8[%c9_541, %c0_542, %c4_543] : memref<12x8x20xbf16, #tpu.memory_space<vmem>>, vector<1x8x16xbf16>
    %639 = vector.shape_cast %638 : vector<1x8x16xbf16> to vector<8x16xbf16>
    %cst_544 = arith.constant dense<0.000000e+00> : vector<8x16xf32>
    %640 = tpu.matmul %281, %639, %cst_544 {dimension_numbers = #tpu.dot_dimension_numbers<[1], [0], [0], [1], [0, 0, 1, 1], [], []>} : vector<8x8xbf16>, vector<8x16xbf16>, vector<8x16xf32> -> vector<8x16xf32>
    %641 = arith.addf %637, %640 : vector<8x16xf32>
    %c11_545 = arith.constant 11 : index
    %c0_546 = arith.constant 0 : index
    %c0_547 = arith.constant 0 : index
    %642 = vector.load %arg8[%c11_545, %c0_546, %c0_547] : memref<12x8x20xbf16, #tpu.memory_space<vmem>>, vector<1x8x16xbf16>
    %643 = vector.shape_cast %642 : vector<1x8x16xbf16> to vector<8x16xbf16>
    %cst_548 = arith.constant dense<0.000000e+00> : vector<8x16xf32>
    %644 = tpu.matmul %283, %643, %cst_548 {dimension_numbers = #tpu.dot_dimension_numbers<[1], [0], [0], [1], [0, 0, 1, 1], [], []>} : vector<8x8xbf16>, vector<8x16xbf16>, vector<8x16xf32> -> vector<8x16xf32>
    %645 = arith.addf %641, %644 : vector<8x16xf32>
    %c11_549 = arith.constant 11 : index
    %c0_550 = arith.constant 0 : index
    %c2_551 = arith.constant 2 : index
    %646 = vector.load %arg8[%c11_549, %c0_550, %c2_551] : memref<12x8x20xbf16, #tpu.memory_space<vmem>>, vector<1x8x16xbf16>
    %647 = vector.shape_cast %646 : vector<1x8x16xbf16> to vector<8x16xbf16>
    %cst_552 = arith.constant dense<0.000000e+00> : vector<8x16xf32>
    %648 = tpu.matmul %285, %647, %cst_552 {dimension_numbers = #tpu.dot_dimension_numbers<[1], [0], [0], [1], [0, 0, 1, 1], [], []>} : vector<8x8xbf16>, vector<8x16xbf16>, vector<8x16xf32> -> vector<8x16xf32>
    %649 = arith.addf %645, %648 : vector<8x16xf32>
    %c11_553 = arith.constant 11 : index
    %c0_554 = arith.constant 0 : index
    %c4_555 = arith.constant 4 : index
    %650 = vector.load %arg8[%c11_553, %c0_554, %c4_555] : memref<12x8x20xbf16, #tpu.memory_space<vmem>>, vector<1x8x16xbf16>
    %651 = vector.shape_cast %650 : vector<1x8x16xbf16> to vector<8x16xbf16>
    %cst_556 = arith.constant dense<0.000000e+00> : vector<8x16xf32>
    %652 = tpu.matmul %287, %651, %cst_556 {dimension_numbers = #tpu.dot_dimension_numbers<[1], [0], [0], [1], [0, 0, 1, 1], [], []>} : vector<8x8xbf16>, vector<8x16xbf16>, vector<8x16xf32> -> vector<8x16xf32>
    %653 = arith.addf %649, %652 : vector<8x16xf32>
    %c9_557 = arith.constant 9 : index
    %c0_558 = arith.constant 0 : index
    %c2_559 = arith.constant 2 : index
    %654 = vector.load %arg8[%c9_557, %c0_558, %c2_559] : memref<12x8x20xbf16, #tpu.memory_space<vmem>>, vector<1x8x16xbf16>
    %655 = vector.shape_cast %654 : vector<1x8x16xbf16> to vector<8x16xbf16>
    %656 = arith.extf %655 : vector<8x16xbf16> to vector<8x16xf32>
    %657 = vector.broadcast %4 : vector<8x1xf32> to vector<8x16xf32>
    %658 = arith.addf %653, %657 : vector<8x16xf32>
    %659 = arith.addf %658, %656 : vector<8x16xf32>
    %660 = arith.truncf %659 : vector<8x16xf32> to vector<8x16xbf16>
    %c0_560 = arith.constant 0 : index
    %c7_561 = arith.constant 7 : index
    %c0_562 = arith.constant 0 : index
    %c0_563 = arith.constant 0 : index
    %661 = vector.load %arg7[%c0_560, %c7_561, %c0_562, %c0_563] : memref<1x8x8x16xbf16, #tpu.memory_space<vmem>>, vector<1x1x8x16xbf16>
    %662 = vector.shape_cast %661 : vector<1x1x8x16xbf16> to vector<8x16xbf16>
    %663 = vector.shape_cast %660 : vector<8x16xbf16> to vector<1x1x8x16xbf16>
    tpu.vector_store %arg7[%c0_560, %c7_561, %c0_562, %c0_563], %663 {strides = array<i32>} : memref<1x8x8x16xbf16, #tpu.memory_space<vmem>>, vector<1x1x8x16xbf16>,
    return
  }
  func.func @transform_0(%arg0: i32, %arg1: i32) -> (i32, i32, i32, i32) {
    %c0_i32 = arith.constant 0 : i32
    %c0_i32_0 = arith.constant 0 : i32
    %c0_i32_1 = arith.constant 0 : i32
    %c0_i32_2 = arith.constant 0 : i32
    return %arg0, %c0_i32, %c0_i32_0, %c0_i32_1 : i32, i32, i32, i32
  }
  func.func @transform_1(%arg0: i32, %arg1: i32) -> (i32, i32) {
    %c0_i32 = arith.constant 0 : i32
    %c0_i32_0 = arith.constant 0 : i32
    %c0_i32_1 = arith.constant 0 : i32
    return %c0_i32, %c0_i32_0 : i32, i32
  }
  func.func @transform_2(%arg0: i32, %arg1: i32) -> (i32, i32) {
    %c0_i32 = arith.constant 0 : i32
    %c0_i32_0 = arith.constant 0 : i32
    %c0_i32_1 = arith.constant 0 : i32
    return %c0_i32, %c0_i32_0 : i32, i32
  }
  func.func @transform_3(%arg0: i32, %arg1: i32) -> (i32, i32, i32) {
    %c0_i32 = arith.constant 0 : i32
    %c0_i32_0 = arith.constant 0 : i32
    %c0_i32_1 = arith.constant 0 : i32
    %c0_i32_2 = arith.constant 0 : i32
    return %c0_i32, %c0_i32_0, %c0_i32_1 : i32, i32, i32
  }
  func.func @transform_4(%arg0: i32, %arg1: i32) -> (i32, i32) {
    %c0_i32 = arith.constant 0 : i32
    %c0_i32_0 = arith.constant 0 : i32
    %c0_i32_1 = arith.constant 0 : i32
    return %c0_i32, %c0_i32_0 : i32, i32
  }
  func.func @transform_5(%arg0: i32, %arg1: i32) -> (i32, i32, i32, i32) {
    %c0_i32 = arith.constant 0 : i32
    %c0_i32_0 = arith.constant 0 : i32
    %c0_i32_1 = arith.constant 0 : i32
    return %arg0, %arg1, %c0_i32, %c0_i32_0 : i32, i32, i32, i32
  }
}

</mosaic_0001>

<llo_original>
// kernel: tpu_custom_call.1
$region0: #{tpu_custom_call.1}
  #allocation0 [shape = 'u32[]', space=smem, size = 0x4, offset = 0x4, fixed_abs, tag = 'smem constant byte address 0x4 - core index']
  #allocation1 [shape = 'u32[144,128]{1,0:T(1,128)}', space=vmem, size = 0x12000, scoped, tag = 'internal scratch']
  #allocation2 [shape = 'bf16[12,8,20]{2,1,0:T(8,128)(2,1)}', space=vmem, size = 0x6000, scoped, tag = 'scratch operand']
  %s0 = inlined_call_operand.vmem [shape: bf16[2,20,4,16], index: 0, kind: input, shape index: {}]
  %s1 = inlined_call_operand.vmem [shape: bf16[8,4], index: 1, kind: input, shape index: {}]
  %s2 = inlined_call_operand.vmem [shape: f32[8,1], index: 2, kind: input, shape index: {}]
  %s3 = inlined_call_operand.vmem [shape: bf16[9,8,8], index: 3, kind: input, shape index: {}]
  %s4 = inlined_call_operand.vmem [shape: f32[8,1], index: 4, kind: input, shape index: {}]
  %s5 = inlined_call_operand.hbm [shape: bf16[2,16,8,16], index: 5, kind: output, shape index: {}]
  %s6 = sld [smem:[#allocation0]]
  $region53: #{tpu_custom_call.1} parent=0
    _
  %s8 = ssub.s32 1, %s6
  %s9 = scalar_select 0, %s8, %s6
  $region1: #{tpu_custom_call.1} parent=0
    #allocation3 [shape = 'u8[32768]{0}', space=vmem, size = 0x8000, scoped, tag = 'output window, operand 0']
    #allocation4 [shape = 's32[2]{0}', space=sflag, size = 0x8, scoped, tag = 'scoped memory for tpu_custom_call.1']
    %10 = vsyncpa [#allocation4], 0
    %s11 = scalar_lea.sflag [#allocation4], 1
    %12 = vsyncpa %s11, 0
    loop: start=0, step=1, limit=6
    $region2: #{tpu_custom_call.1} parent=1 // loop_pre_header
      _
    $region3: #{tpu_custom_call.1} parent=1 // loop_header
      %s14 = sphi 0, %s18
      %p15 = scmp.ge.s32.totalorder %s14, 6
      %s21 = sphi 0, %s33
      %s22 = sphi 0, %s29
      %s23 = sphi 0, %s21
      %s24 = sphi 0, %s22
      %s25 = sphi 0, %s23
      %s26 = sphi 0, %s24
      %s36 = sphi 0, %s38
      %s39 = sphi 0, %s36
      %s40 = sphi 0, %s39
      %s56 = sphi 0, %s40
      %s60 = sphi 0, %s60
      %s62 = sphi 0, %s60
      %s63 = sphi 0, %s62
      %s77 = sphi 0, %s63
      %s81 = sphi 0, %s81
      %s83 = sphi 0, %s81
      %s84 = sphi 0, %s83
      %s98 = sphi 0, %s84
      %s102 = sphi 0, %s102
      %s104 = sphi 0, %s102
      %s105 = sphi 0, %s104
      %s119 = sphi 0, %s105
      %s123 = sphi 0, %s123
      %s125 = sphi 0, %s123
      %s126 = sphi 0, %s125
      %s140 = sphi 0, %s126
      %s148 = sphi 0, %s150
      %s151 = sphi 0, %s148
      %s152 = sphi 0, %s151
      %s168 = sphi 0, %s152
    $region4: #{tpu_custom_call.1} parent=1 // loop_header_branch
      %17 = sbr.rel (%p15) target = $region8
    $region5: #{tpu_custom_call.1} parent=1 // loop_body
      %s19 = ssub.s32 %s14, 1
      %s20 = ssub.s32 %s14, 2
      %s27 = sadd.s32 1, %s22
      %p28 = scmp.ge.s32.totalorder %s27, 2
      %s29 = scalar_select %p28, 0, %s27
      %s30 = sadd.s32 1, %s21
      %s31 = scalar_select %p28, %s30, %s21
      %p32 = scmp.ge.s32.totalorder %s31, 2
      %s33 = scalar_select %p32, 0, %s31
      %s34 = ssub.s32 %s21, %s33
      %p35 = scmp.eq.s32.totalorder %s34, 0
      %s37 = sadd.s32 %s36, 1
      %s38 = scalar_select %p35, %s36, %s37
      %p41 = pneg %p35
      %p42 = scmp.eq.s32.totalorder %s14, 3
      %p43 = por %p41, %p42
      %p44 = scmp.ne.s32.totalorder %s36, %s39
      %p45 = scmp.eq.s32.totalorder %s14, 0
      %p46 = por %p44, %p45
      %p47 = scmp.ne.s32.totalorder %s36, %s39
      %p48 = scmp.eq.s32.totalorder %s19, 3
      %p49 = por %p47, %p48
      %p50 = scmp.ne.s32.totalorder %s39, %s40
      %p51 = scmp.eq.s32.totalorder %s19, 0
      %p52 = por %p50, %p51
      %p53 = scmp.ne.s32.totalorder %s39, %s40
      %p54 = scmp.eq.s32.totalorder %s20, 3
      %p55 = por %p53, %p54
      %p57 = scmp.ne.s32.totalorder %s40, %s56
      %p58 = scmp.eq.s32.totalorder %s20, 0
      %p59 = por %p57, %p58
      %s61 = sadd.s32 %s60, 1
      %p64 = scmp.eq.s32.totalorder %s14, 3
      %p65 = scmp.ne.s32.totalorder %s60, %s62
      %p66 = scmp.eq.s32.totalorder %s14, 0
      %p67 = por %p65, %p66
      %p68 = scmp.ne.s32.totalorder %s60, %s62
      %p69 = scmp.eq.s32.totalorder %s19, 3
      %p70 = por %p68, %p69
      %p71 = scmp.ne.s32.totalorder %s62, %s63
      %p72 = scmp.eq.s32.totalorder %s19, 0
      %p73 = por %p71, %p72
      %p74 = scmp.ne.s32.totalorder %s62, %s63
      %p75 = scmp.eq.s32.totalorder %s20, 3
      %p76 = por %p74, %p75
      %p78 = scmp.ne.s32.totalorder %s63, %s77
      %p79 = scmp.eq.s32.totalorder %s20, 0
      %p80 = por %p78, %p79
      %s82 = sadd.s32 %s81, 1
      %p85 = scmp.eq.s32.totalorder %s14, 3
      %p86 = scmp.ne.s32.totalorder %s81, %s83
      %p87 = scmp.eq.s32.totalorder %s14, 0
      %p88 = por %p86, %p87
      %p89 = scmp.ne.s32.totalorder %s81, %s83
      %p90 = scmp.eq.s32.totalorder %s19, 3
      %p91 = por %p89, %p90
      %p92 = scmp.ne.s32.totalorder %s83, %s84
      %p93 = scmp.eq.s32.totalorder %s19, 0
      %p94 = por %p92, %p93
      %p95 = scmp.ne.s32.totalorder %s83, %s84
      %p96 = scmp.eq.s32.totalorder %s20, 3
      %p97 = por %p95, %p96
      %p99 = scmp.ne.s32.totalorder %s84, %s98
      %p100 = scmp.eq.s32.totalorder %s20, 0
      %p101 = por %p99, %p100
      %s103 = sadd.s32 %s102, 1
      %p106 = scmp.eq.s32.totalorder %s14, 3
      %p107 = scmp.ne.s32.totalorder %s102, %s104
      %p108 = scmp.eq.s32.totalorder %s14, 0
      %p109 = por %p107, %p108
      %p110 = scmp.ne.s32.totalorder %s102, %s104
      %p111 = scmp.eq.s32.totalorder %s19, 3
      %p112 = por %p110, %p111
      %p113 = scmp.ne.s32.totalorder %s104, %s105
      %p114 = scmp.eq.s32.totalorder %s19, 0
      %p115 = por %p113, %p114
      %p116 = scmp.ne.s32.totalorder %s104, %s105
      %p117 = scmp.eq.s32.totalorder %s20, 3
      %p118 = por %p116, %p117
      %p120 = scmp.ne.s32.totalorder %s105, %s119
      %p121 = scmp.eq.s32.totalorder %s20, 0
      %p122 = por %p120, %p121
      %s124 = sadd.s32 %s123, 1
      %p127 = scmp.eq.s32.totalorder %s14, 3
      %p128 = scmp.ne.s32.totalorder %s123, %s125
      %p129 = scmp.eq.s32.totalorder %s14, 0
      %p130 = por %p128, %p129
      %p131 = scmp.ne.s32.totalorder %s123, %s125
      %p132 = scmp.eq.s32.totalorder %s19, 3
      %p133 = por %p131, %p132
      %p134 = scmp.ne.s32.totalorder %s125, %s126
      %p135 = scmp.eq.s32.totalorder %s19, 0
      %p136 = por %p134, %p135
      %p137 = scmp.ne.s32.totalorder %s125, %s126
      %p138 = scmp.eq.s32.totalorder %s20, 3
      %p139 = por %p137, %p138
      %p141 = scmp.ne.s32.totalorder %s126, %s140
      %p142 = scmp.eq.s32.totalorder %s20, 0
      %p143 = por %p141, %p142
      %s144 = ssub.s32 %s21, %s33
      %s145 = ssub.s32 %s22, %s29
      %s146 = sor.u32 %s144, %s145
      %p147 = scmp.eq.s32.totalorder %s146, 0
      %s149 = sadd.s32 %s148, 1
      %s150 = scalar_select %p147, %s148, %s149
      %p153 = pneg %p147
      %p154 = scmp.eq.s32.totalorder %s14, 3
      %p155 = por %p153, %p154
      %p156 = scmp.ne.s32.totalorder %s148, %s151
      %p157 = scmp.eq.s32.totalorder %s14, 0
      %p158 = por %p156, %p157
      %p159 = scmp.ne.s32.totalorder %s148, %s151
      %p160 = scmp.eq.s32.totalorder %s19, 3
      %p161 = por %p159, %p160
      %p162 = scmp.ne.s32.totalorder %s151, %s152
      %p163 = scmp.eq.s32.totalorder %s19, 0
      %p164 = por %p162, %p163
      %p165 = scmp.ne.s32.totalorder %s151, %s152
      %p166 = scmp.eq.s32.totalorder %s20, 3
      %p167 = por %p165, %p166
      %p169 = scmp.ne.s32.totalorder %s152, %s168
      %p170 = scmp.eq.s32.totalorder %s20, 0
      %p171 = por %p169, %p170
      %p172 = scmp.le.s32.totalorder 1, %s14
      %p173 = scmp.lt.s32.totalorder %s14, 5
      %p174 = pnand %p172, %p173
      %p175 = pneg %p174
      // Predicated region
      $region9: #{tpu_custom_call.1} parent=5 // pred_check
        _
      $region10: #{tpu_custom_call.1} parent=5 // pred_check_branch
        %177 = sbr.rel (%p174) target = $region12
      $region11: #{tpu_custom_call.1} parent=5 // pred_region
        %s178 = ssub.s32 %s14, 1
        // Predicated region
        $region13: #{tpu_custom_call.1} parent=11 // pred_check
          %p179 = pneg %p73
        $region14: #{tpu_custom_call.1} parent=11 // pred_check_branch
          %181 = sbr.rel (%p179) target = $region16
        $region15: #{tpu_custom_call.1} parent=11 // pred_region
          _
        $region16: #{tpu_custom_call.1} parent=11 // pred_fallthru
          _
        // Predicated region
        $region17: #{tpu_custom_call.1} parent=11 // pred_check
          %p182 = pneg %p94
        $region18: #{tpu_custom_call.1} parent=11 // pred_check_branch
          %184 = sbr.rel (%p182) target = $region20
        $region19: #{tpu_custom_call.1} parent=11 // pred_region
          _
        $region20: #{tpu_custom_call.1} parent=11 // pred_fallthru
          _
        // Predicated region
        $region21: #{tpu_custom_call.1} parent=11 // pred_check
          %p185 = pneg %p115
        $region22: #{tpu_custom_call.1} parent=11 // pred_check_branch
          %187 = sbr.rel (%p185) target = $region24
        $region23: #{tpu_custom_call.1} parent=11 // pred_region
          _
        $region24: #{tpu_custom_call.1} parent=11 // pred_fallthru
          _
        // Predicated region
        $region25: #{tpu_custom_call.1} parent=11 // pred_check
          %p188 = pneg %p136
        $region26: #{tpu_custom_call.1} parent=11 // pred_check_branch
          %190 = sbr.rel (%p188) target = $region28
        $region27: #{tpu_custom_call.1} parent=11 // pred_region
          _
        $region28: #{tpu_custom_call.1} parent=11 // pred_fallthru
          _
      $region12: #{tpu_custom_call.1} parent=5 // pred_fallthru
        _
      %p191 = scmp.lt.s32.totalorder %s14, 4
      // Predicated region
      $region29: #{tpu_custom_call.1} parent=5 // pred_check
        %p192 = pneg %p191
      $region30: #{tpu_custom_call.1} parent=5 // pred_check_branch
        %194 = sbr.rel (%p192) target = $region32
      $region31: #{tpu_custom_call.1} parent=5 // pred_region
        // Predicated region
        $region33: #{tpu_custom_call.1} parent=31 // pred_check
          %p195 = pneg %p46
        $region34: #{tpu_custom_call.1} parent=31 // pred_check_branch
          %197 = sbr.rel (%p195) target = $region36
        $region35: #{tpu_custom_call.1} parent=31 // pred_region
          %p198 = scmp.lt.s32.totalorder %s21, 1
          %s199 = scalar_select %p198, %s21, 1
          %s200 = smul.addr %s199, 20
          %s201 = smul.addr %s200, 2
          %s202 = scalar_lea.vmem %s0, %s201
        $region36: #{tpu_custom_call.1} parent=31 // pred_fallthru
          _
      $region32: #{tpu_custom_call.1} parent=5 // pred_fallthru
        _
      %p203 = scmp.le.s32.totalorder 1, %s14
      %p204 = scmp.lt.s32.totalorder %s14, 5
      %p205 = pnand %p203, %p204
      %p206 = pneg %p205
      // Predicated region
      $region37: #{tpu_custom_call.1} parent=5 // pred_check
        _
      $region38: #{tpu_custom_call.1} parent=5 // pred_check_branch
        %208 = sbr.rel (%p205) target = $region40
      $region39: #{tpu_custom_call.1} parent=5 // pred_region
        %s209 = ssub.s32 %s14, 1
        %p210 = scmp.lt.s32.totalorder %s23, 1
        %s211 = scalar_select %p210, %s23, 1
        %s212 = smul.addr %s211, 20
        %s213 = smul.addr %s212, 2
        %s214 = scalar_lea.vmem %s0, %s213
        %p215 = pneg %p52
        %p216 = pneg %p49
        %p217 = pneg %p73
        %p218 = pneg %p70
        %p219 = pneg %p94
        %p220 = pneg %p91
        %p221 = pneg %p115
        %p222 = pneg %p112
        %p223 = pneg %p136
        %p224 = pneg %p133
        %p225 = pneg %p164
        %p226 = pneg %p161
        %s227 = sand.u32 %s151, 1
        %s228 = scalar_lea.sflag [#allocation4], %s227
        %s229 = sand.u32 %s151, 1
        %s230 = smul.addr %s229, 32
        %s231 = scalar_lea.vmem [#allocation3], %s230
        %p232 = scmp.lt.s32.totalorder %s23, 1
        %s233 = scalar_select %p232, %s23, 1
        %s234 = smul.addr %s233, 20
        %s235 = smul.addr %s234, 2
        %s236 = scalar_lea.vmem %s0, %s235
        %s237 = smul.u32 8, %s24
        %s239 = smul.u32 %s24, 8
        %v240 = vld [vmem:[%s1] sm:$0xf]
        %v241 = vld [vmem:[%s2] sm:$0xff]
        %v242 = vld [vmem:[%s4] sm:$0xff]
        %p243 = scmp.ge.s32.totalorder %s239, 2
        %p244 = scmp.lt.s32.totalorder %s239, 18
        %p245 = pnand %p243, %p244
        %p246 = pneg %p245
        %s247 = scalar_select %p246, 1, 0
        %v248 = vstv %s247
        %vm249 = vcmp.eq.s32.totalorder %v248, 1
        %v250 = vsel %vm249, %v241, 0.0
        %vm251 = vcmask 11264
        %252 = vst.msk [vmem:[#allocation2] sm:$0xf] %vm251, 0
        %vm253 = vcmask 158864
        %254 = vst.msk [vmem:[#allocation2] sm:$0xf] %vm253, 0
        %s255 = smul.addr %s239, 2
        %s256 = scalar_lea.vmem %s236, %s255
        %v257 = vld [vmem:[%s256] sm:$0x3]
        %259 = vset.pattern.permute.xlu0 0
        %260 = vperm.xlu0 %259, %v250
        %v261 = vpop.permute.xlu0 %260
        %vm263 = vcmask 31744
        %v265 = vsel %vm263, %v240, 0
        %vm267 = vcmask 1041408
        %v269 = vsel %vm267, %v257, 0
        %271 = vmatprep.subr.bf16.mxu0 0
        %272 = vmatpush1.bf16.msra.mxu0 %v269
        %273 = vmatprep.subr.bf16.mxu0 0
        %274 = vmatpush1.bf16.msra.mxu0 0
        %275 = vmatprep.subr.bf16.mxu0 0
        %276 = vmatpush1.bf16.msra.mxu0 0
        %277 = vmatprep.subr.bf16.mxu0 0
        %278 = vmatpush1.bf16.msra.mxu0 0
        %279 = vmatprep.subr.bf16.mxu0 0
        %280 = vmatpush1.bf16.msra.mxu0 0
        %281 = vmatprep.subr.bf16.mxu0 0
        %282 = vmatpush1.bf16.msra.mxu0 0
        %283 = vmatprep.subr.bf16.mxu0 0
        %284 = vmatpush1.bf16.msra.mxu0 0
        %285 = vmatprep.subr.bf16.mxu0 0
        %286 = vmatpush1.bf16.msra.mxu0 0
        %287 = vmatprep.subr.bf16.mxu0 0
        %288 = vmatpush1.bf16.msra.mxu0 0
        %289 = vmatprep.subr.bf16.mxu0 0
        %290 = vmatpush1.bf16.msra.mxu0 0
        %291 = vmatprep.subr.bf16.mxu0 0
        %292 = vmatpush1.bf16.msra.mxu0 0
        %293 = vmatprep.subr.bf16.mxu0 0
        %294 = vmatpush1.bf16.msra.mxu0 0
        %295 = vmatprep.subr.bf16.mxu0 0
        %296 = vmatpush1.bf16.msra.mxu0 0
        %297 = vmatprep.subr.bf16.mxu0 0
        %298 = vmatpush1.bf16.msra.mxu0 0
        %299 = vmatprep.subr.bf16.mxu0 0
        %300 = vmatpush1.bf16.msra.mxu0 0
        %301 = vmatprep.subr.bf16.mxu0 0
        %302 = vmatpush1.bf16.msra.mxu0 0
        %303 = vmatprep.mubr.bf16.mxu0 0
        %304 = vmatmul.mubr.bf16.gmra.mrb[0].mxu0 %v265
        %v305 = vpop.f32.mrb[0].mxu0
        %v306 = vadd.f32 %v261, %v305
        %v307 = vpop.f32.mrb[0].mxu0
        %v308 = vpop.f32.mrb[0].mxu0
        %v309 = vpop.f32.mrb[0].mxu0
        %310 = vdwg.mxu0
        %v311 = vpack.c.bf16 %v306, %v306
        %v313 = vunpack.c.l.b16 %v311
        %v314 = vpack.c.b16 %v313, %v313
        %315 = vrot.lane.b32.xlu0 %v314, 2
        %v316 = vpop.permute.xlu0 %315
        %vm318 = vcmask 142352
        %319 = vst.msk [vmem:[#allocation2] sm:$0xf] %vm318, %v316
        %s320 = sadd.s32 %s239, 1
        %p321 = scmp.ge.s32.totalorder %s320, 2
        %p322 = scmp.lt.s32.totalorder %s320, 18
        %p323 = pnand %p321, %p322
        %p324 = pneg %p323
        %s325 = scalar_select %p324, 1, 0
        %v326 = vstv %s325
        %vm327 = vcmp.eq.s32.totalorder %v326, 1
        %v328 = vsel %vm327, %v241, 0.0
        %s329 = scalar_lea.vmem [#allocation2], 4
        %330 = vst.msk [vmem:[%s329] sm:$0xf] %vm251, 0
        %331 = vst.msk [vmem:[%s329] sm:$0xf] %vm253, 0
        %s332 = smul.addr %s320, 2
        %s333 = scalar_lea.vmem %s236, %s332
        %v334 = vld [vmem:[%s333] sm:$0x3]
        %336 = vset.pattern.permute.xlu0 0
        %337 = vperm.xlu0 %336, %v328
        %v338 = vpop.permute.xlu0 %337
        %v341 = vsel %vm267, %v334, 0
        %343 = vmatprep.subr.bf16.mxu0 0
        %344 = vmatpush1.bf16.msra.mxu0 %v341
        %345 = vmatprep.subr.bf16.mxu0 0
        %346 = vmatpush1.bf16.msra.mxu0 0
        %347 = vmatprep.subr.bf16.mxu0 0
        %348 = vmatpush1.bf16.msra.mxu0 0
        %349 = vmatprep.subr.bf16.mxu0 0
        %350 = vmatpush1.bf16.msra.mxu0 0
        %351 = vmatprep.subr.bf16.mxu0 0
        %352 = vmatpush1.bf16.msra.mxu0 0
        %353 = vmatprep.subr.bf16.mxu0 0
        %354 = vmatpush1.bf16.msra.mxu0 0
        %355 = vmatprep.subr.bf16.mxu0 0
        %356 = vmatpush1.bf16.msra.mxu0 0
        %357 = vmatprep.subr.bf16.mxu0 0
        %358 = vmatpush1.bf16.msra.mxu0 0
        %359 = vmatprep.subr.bf16.mxu0 0
        %360 = vmatpush1.bf16.msra.mxu0 0
        %361 = vmatprep.subr.bf16.mxu0 0
        %362 = vmatpush1.bf16.msra.mxu0 0
        %363 = vmatprep.subr.bf16.mxu0 0
        %364 = vmatpush1.bf16.msra.mxu0 0
        %365 = vmatprep.subr.bf16.mxu0 0
        %366 = vmatpush1.bf16.msra.mxu0 0
        %367 = vmatprep.subr.bf16.mxu0 0
        %368 = vmatpush1.bf16.msra.mxu0 0
        %369 = vmatprep.subr.bf16.mxu0 0
        %370 = vmatpush1.bf16.msra.mxu0 0
        %371 = vmatprep.subr.bf16.mxu0 0
        %372 = vmatpush1.bf16.msra.mxu0 0
        %373 = vmatprep.subr.bf16.mxu0 0
        %374 = vmatpush1.bf16.msra.mxu0 0
        %375 = vmatprep.mubr.bf16.mxu0 0
        %376 = vmatmul.mubr.bf16.gmra.mrb[0].mxu0 %v265
        %v377 = vpop.f32.mrb[0].mxu0
        %v378 = vadd.f32 %v338, %v377
        %v379 = vpop.f32.mrb[0].mxu0
        %v380 = vpop.f32.mrb[0].mxu0
        %v381 = vpop.f32.mrb[0].mxu0
        %382 = vdwg.mxu0
        %v383 = vpack.c.bf16 %v378, %v378
        %v385 = vunpack.c.l.b16 %v383
        %v386 = vpack.c.b16 %v385, %v385
        %387 = vrot.lane.b32.xlu0 %v386, 2
        %v388 = vpop.permute.xlu0 %387
        %390 = vst.msk [vmem:[%s329] sm:$0xf] %vm318, %v388
        %s391 = sadd.s32 %s239, 2
        %p392 = scmp.ge.s32.totalorder %s391, 2
        %p393 = scmp.lt.s32.totalorder %s391, 18
        %p394 = pnand %p392, %p393
        %p395 = pneg %p394
        %s396 = scalar_select %p395, 1, 0
        %v397 = vstv %s396
        %vm398 = vcmp.eq.s32.totalorder %v397, 1
        %v399 = vsel %vm398, %v241, 0.0
        %s400 = scalar_lea.vmem [#allocation2], 8
        %401 = vst.msk [vmem:[%s400] sm:$0xf] %vm251, 0
        %402 = vst.msk [vmem:[%s400] sm:$0xf] %vm253, 0
        %s403 = smul.addr %s391, 2
        %s404 = scalar_lea.vmem %s236, %s403
        %v405 = vld [vmem:[%s404] sm:$0x3]
        %407 = vset.pattern.permute.xlu0 0
        %408 = vperm.xlu0 %407, %v399
        %v409 = vpop.permute.xlu0 %408
        %v412 = vsel %vm267, %v405, 0
        %414 = vmatprep.subr.bf16.mxu0 0
        %415 = vmatpush1.bf16.msra.mxu0 %v412
        %416 = vmatprep.subr.bf16.mxu0 0
        %417 = vmatpush1.bf16.msra.mxu0 0
        %418 = vmatprep.subr.bf16.mxu0 0
        %419 = vmatpush1.bf16.msra.mxu0 0
        %420 = vmatprep.subr.bf16.mxu0 0
        %421 = vmatpush1.bf16.msra.mxu0 0
        %422 = vmatprep.subr.bf16.mxu0 0
        %423 = vmatpush1.bf16.msra.mxu0 0
        %424 = vmatprep.subr.bf16.mxu0 0
        %425 = vmatpush1.bf16.msra.mxu0 0
        %426 = vmatprep.subr.bf16.mxu0 0
        %427 = vmatpush1.bf16.msra.mxu0 0
        %428 = vmatprep.subr.bf16.mxu0 0
        %429 = vmatpush1.bf16.msra.mxu0 0
        %430 = vmatprep.subr.bf16.mxu0 0
        %431 = vmatpush1.bf16.msra.mxu0 0
        %432 = vmatprep.subr.bf16.mxu0 0
        %433 = vmatpush1.bf16.msra.mxu0 0
        %434 = vmatprep.subr.bf16.mxu0 0
        %435 = vmatpush1.bf16.msra.mxu0 0
        %436 = vmatprep.subr.bf16.mxu0 0
        %437 = vmatpush1.bf16.msra.mxu0 0
        %438 = vmatprep.subr.bf16.mxu0 0
        %439 = vmatpush1.bf16.msra.mxu0 0
        %440 = vmatprep.subr.bf16.mxu0 0
        %441 = vmatpush1.bf16.msra.mxu0 0
        %442 = vmatprep.subr.bf16.mxu0 0
        %443 = vmatpush1.bf16.msra.mxu0 0
        %444 = vmatprep.subr.bf16.mxu0 0
        %445 = vmatpush1.bf16.msra.mxu0 0
        %446 = vmatprep.mubr.bf16.mxu0 0
        %447 = vmatmul.mubr.bf16.gmra.mrb[0].mxu0 %v265
        %v448 = vpop.f32.mrb[0].mxu0
        %v449 = vadd.f32 %v409, %v448
        %v450 = vpop.f32.mrb[0].mxu0
        %v451 = vpop.f32.mrb[0].mxu0
        %v452 = vpop.f32.mrb[0].mxu0
        %453 = vdwg.mxu0
        %v454 = vpack.c.bf16 %v449, %v449
        %v456 = vunpack.c.l.b16 %v454
        %v457 = vpack.c.b16 %v456, %v456
        %458 = vrot.lane.b32.xlu0 %v457, 2
        %v459 = vpop.permute.xlu0 %458
        %461 = vst.msk [vmem:[%s400] sm:$0xf] %vm318, %v459
        %s462 = sadd.s32 %s239, 3
        %p463 = scmp.ge.s32.totalorder %s462, 2
        %p464 = scmp.lt.s32.totalorder %s462, 18
        %p465 = pnand %p463, %p464
        %p466 = pneg %p465
        %s467 = scalar_select %p466, 1, 0
        %v468 = vstv %s467
        %vm469 = vcmp.eq.s32.totalorder %v468, 1
        %v470 = vsel %vm469, %v241, 0.0
        %s471 = scalar_lea.vmem [#allocation2], 12
        %472 = vst.msk [vmem:[%s471] sm:$0xf] %vm251, 0
        %473 = vst.msk [vmem:[%s471] sm:$0xf] %vm253, 0
        %s474 = smul.addr %s462, 2
        %s475 = scalar_lea.vmem %s236, %s474
        %v476 = vld [vmem:[%s475] sm:$0x3]
        %478 = vset.pattern.permute.xlu0 0
        %479 = vperm.xlu0 %478, %v470
        %v480 = vpop.permute.xlu0 %479
        %v483 = vsel %vm267, %v476, 0
        %485 = vmatprep.subr.bf16.mxu0 0
        %486 = vmatpush1.bf16.msra.mxu0 %v483
        %487 = vmatprep.subr.bf16.mxu0 0
        %488 = vmatpush1.bf16.msra.mxu0 0
        %489 = vmatprep.subr.bf16.mxu0 0
        %490 = vmatpush1.bf16.msra.mxu0 0
        %491 = vmatprep.subr.bf16.mxu0 0
        %492 = vmatpush1.bf16.msra.mxu0 0
        %493 = vmatprep.subr.bf16.mxu0 0
        %494 = vmatpush1.bf16.msra.mxu0 0
        %495 = vmatprep.subr.bf16.mxu0 0
        %496 = vmatpush1.bf16.msra.mxu0 0
        %497 = vmatprep.subr.bf16.mxu0 0
        %498 = vmatpush1.bf16.msra.mxu0 0
        %499 = vmatprep.subr.bf16.mxu0 0
        %500 = vmatpush1.bf16.msra.mxu0 0
        %501 = vmatprep.subr.bf16.mxu0 0
        %502 = vmatpush1.bf16.msra.mxu0 0
        %503 = vmatprep.subr.bf16.mxu0 0
        %504 = vmatpush1.bf16.msra.mxu0 0
        %505 = vmatprep.subr.bf16.mxu0 0
        %506 = vmatpush1.bf16.msra.mxu0 0
        %507 = vmatprep.subr.bf16.mxu0 0
        %508 = vmatpush1.bf16.msra.mxu0 0
        %509 = vmatprep.subr.bf16.mxu0 0
        %510 = vmatpush1.bf16.msra.mxu0 0
        %511 = vmatprep.subr.bf16.mxu0 0
        %512 = vmatpush1.bf16.msra.mxu0 0
        %513 = vmatprep.subr.bf16.mxu0 0
        %514 = vmatpush1.bf16.msra.mxu0 0
        %515 = vmatprep.subr.bf16.mxu0 0
        %516 = vmatpush1.bf16.msra.mxu0 0
        %517 = vmatprep.mubr.bf16.mxu0 0
        %518 = vmatmul.mubr.bf16.gmra.mrb[0].mxu0 %v265
        %v519 = vpop.f32.mrb[0].mxu0
        %v520 = vadd.f32 %v480, %v519
        %v521 = vpop.f32.mrb[0].mxu0
        %v522 = vpop.f32.mrb[0].mxu0
        %v523 = vpop.f32.mrb[0].mxu0
        %524 = vdwg.mxu0
        %v525 = vpack.c.bf16 %v520, %v520
        %v527 = vunpack.c.l.b16 %v525
        %v528 = vpack.c.b16 %v527, %v527
        %529 = vrot.lane.b32.xlu0 %v528, 2
        %v530 = vpop.permute.xlu0 %529
        %532 = vst.msk [vmem:[%s471] sm:$0xf] %vm318, %v530
        %s533 = sadd.s32 %s239, 4
        %p534 = scmp.ge.s32.totalorder %s533, 2
        %p535 = scmp.lt.s32.totalorder %s533, 18
        %p536 = pnand %p534, %p535
        %p537 = pneg %p536
        %s538 = scalar_select %p537, 1, 0
        %v539 = vstv %s538
        %vm540 = vcmp.eq.s32.totalorder %v539, 1
        %v541 = vsel %vm540, %v241, 0.0
        %s542 = scalar_lea.vmem [#allocation2], 16
        %543 = vst.msk [vmem:[%s542] sm:$0xf] %vm251, 0
        %544 = vst.msk [vmem:[%s542] sm:$0xf] %vm253, 0
        %s545 = smul.addr %s533, 2
        %s546 = scalar_lea.vmem %s236, %s545
        %v547 = vld [vmem:[%s546] sm:$0x3]
        %549 = vset.pattern.permute.xlu0 0
        %550 = vperm.xlu0 %549, %v541
        %v551 = vpop.permute.xlu0 %550
        %v554 = vsel %vm267, %v547, 0
        %556 = vmatprep.subr.bf16.mxu0 0
        %557 = vmatpush1.bf16.msra.mxu0 %v554
        %558 = vmatprep.subr.bf16.mxu0 0
        %559 = vmatpush1.bf16.msra.mxu0 0
        %560 = vmatprep.subr.bf16.mxu0 0
        %561 = vmatpush1.bf16.msra.mxu0 0
        %562 = vmatprep.subr.bf16.mxu0 0
        %563 = vmatpush1.bf16.msra.mxu0 0
        %564 = vmatprep.subr.bf16.mxu0 0
        %565 = vmatpush1.bf16.msra.mxu0 0
        %566 = vmatprep.subr.bf16.mxu0 0
        %567 = vmatpush1.bf16.msra.mxu0 0
        %568 = vmatprep.subr.bf16.mxu0 0
        %569 = vmatpush1.bf16.msra.mxu0 0
        %570 = vmatprep.subr.bf16.mxu0 0
        %571 = vmatpush1.bf16.msra.mxu0 0
        %572 = vmatprep.subr.bf16.mxu0 0
        %573 = vmatpush1.bf16.msra.mxu0 0
        %574 = vmatprep.subr.bf16.mxu0 0
        %575 = vmatpush1.bf16.msra.mxu0 0
        %576 = vmatprep.subr.bf16.mxu0 0
        %577 = vmatpush1.bf16.msra.mxu0 0
        %578 = vmatprep.subr.bf16.mxu0 0
        %579 = vmatpush1.bf16.msra.mxu0 0
        %580 = vmatprep.subr.bf16.mxu0 0
        %581 = vmatpush1.bf16.msra.mxu0 0
        %582 = vmatprep.subr.bf16.mxu0 0
        %583 = vmatpush1.bf16.msra.mxu0 0
        %584 = vmatprep.subr.bf16.mxu0 0
        %585 = vmatpush1.bf16.msra.mxu0 0
        %586 = vmatprep.subr.bf16.mxu0 0
        %587 = vmatpush1.bf16.msra.mxu0 0
        %588 = vmatprep.mubr.bf16.mxu0 0
        %589 = vmatmul.mubr.bf16.gmra.mrb[0].mxu0 %v265
        %v590 = vpop.f32.mrb[0].mxu0
        %v591 = vadd.f32 %v551, %v590
        %v592 = vpop.f32.mrb[0].mxu0
        %v593 = vpop.f32.mrb[0].mxu0
        %v594 = vpop.f32.mrb[0].mxu0
        %595 = vdwg.mxu0
        %v596 = vpack.c.bf16 %v591, %v591
        %v598 = vunpack.c.l.b16 %v596
        %v599 = vpack.c.b16 %v598, %v598
        %600 = vrot.lane.b32.xlu0 %v599, 2
        %v601 = vpop.permute.xlu0 %600
        %603 = vst.msk [vmem:[%s542] sm:$0xf] %vm318, %v601
        %s604 = sadd.s32 %s239, 5
        %p605 = scmp.ge.s32.totalorder %s604, 2
        %p606 = scmp.lt.s32.totalorder %s604, 18
        %p607 = pnand %p605, %p606
        %p608 = pneg %p607
        %s609 = scalar_select %p608, 1, 0
        %v610 = vstv %s609
        %vm611 = vcmp.eq.s32.totalorder %v610, 1
        %v612 = vsel %vm611, %v241, 0.0
        %s613 = scalar_lea.vmem [#allocation2], 20
        %614 = vst.msk [vmem:[%s613] sm:$0xf] %vm251, 0
        %615 = vst.msk [vmem:[%s613] sm:$0xf] %vm253, 0
        %s616 = smul.addr %s604, 2
        %s617 = scalar_lea.vmem %s236, %s616
        %v618 = vld [vmem:[%s617] sm:$0x3]
        %620 = vset.pattern.permute.xlu0 0
        %621 = vperm.xlu0 %620, %v612
        %v622 = vpop.permute.xlu0 %621
        %v625 = vsel %vm267, %v618, 0
        %627 = vmatprep.subr.bf16.mxu0 0
        %628 = vmatpush1.bf16.msra.mxu0 %v625
        %629 = vmatprep.subr.bf16.mxu0 0
        %630 = vmatpush1.bf16.msra.mxu0 0
        %631 = vmatprep.subr.bf16.mxu0 0
        %632 = vmatpush1.bf16.msra.mxu0 0
        %633 = vmatprep.subr.bf16.mxu0 0
        %634 = vmatpush1.bf16.msra.mxu0 0
        %635 = vmatprep.subr.bf16.mxu0 0
        %636 = vmatpush1.bf16.msra.mxu0 0
        %637 = vmatprep.subr.bf16.mxu0 0
        %638 = vmatpush1.bf16.msra.mxu0 0
        %639 = vmatprep.subr.bf16.mxu0 0
        %640 = vmatpush1.bf16.msra.mxu0 0
        %641 = vmatprep.subr.bf16.mxu0 0
        %642 = vmatpush1.bf16.msra.mxu0 0
        %643 = vmatprep.subr.bf16.mxu0 0
        %644 = vmatpush1.bf16.msra.mxu0 0
        %645 = vmatprep.subr.bf16.mxu0 0
        %646 = vmatpush1.bf16.msra.mxu0 0
        %647 = vmatprep.subr.bf16.mxu0 0
        %648 = vmatpush1.bf16.msra.mxu0 0
        %649 = vmatprep.subr.bf16.mxu0 0
        %650 = vmatpush1.bf16.msra.mxu0 0
        %651 = vmatprep.subr.bf16.mxu0 0
        %652 = vmatpush1.bf16.msra.mxu0 0
        %653 = vmatprep.subr.bf16.mxu0 0
        %654 = vmatpush1.bf16.msra.mxu0 0
        %655 = vmatprep.subr.bf16.mxu0 0
        %656 = vmatpush1.bf16.msra.mxu0 0
        %657 = vmatprep.subr.bf16.mxu0 0
        %658 = vmatpush1.bf16.msra.mxu0 0
        %659 = vmatprep.mubr.bf16.mxu0 0
        %660 = vmatmul.mubr.bf16.gmra.mrb[0].mxu0 %v265
        %v661 = vpop.f32.mrb[0].mxu0
        %v662 = vadd.f32 %v622, %v661
        %v663 = vpop.f32.mrb[0].mxu0
        %v664 = vpop.f32.mrb[0].mxu0
        %v665 = vpop.f32.mrb[0].mxu0
        %666 = vdwg.mxu0
        %v667 = vpack.c.bf16 %v662, %v662
        %v669 = vunpack.c.l.b16 %v667
        %v670 = vpack.c.b16 %v669, %v669
        %671 = vrot.lane.b32.xlu0 %v670, 2
        %v672 = vpop.permute.xlu0 %671
        %674 = vst.msk [vmem:[%s613] sm:$0xf] %vm318, %v672
        %s675 = sadd.s32 %s239, 6
        %p676 = scmp.ge.s32.totalorder %s675, 2
        %p677 = scmp.lt.s32.totalorder %s675, 18
        %p678 = pnand %p676, %p677
        %p679 = pneg %p678
        %s680 = scalar_select %p679, 1, 0
        %v681 = vstv %s680
        %vm682 = vcmp.eq.s32.totalorder %v681, 1
        %v683 = vsel %vm682, %v241, 0.0
        %s684 = scalar_lea.vmem [#allocation2], 24
        %685 = vst.msk [vmem:[%s684] sm:$0xf] %vm251, 0
        %686 = vst.msk [vmem:[%s684] sm:$0xf] %vm253, 0
        %s687 = smul.addr %s675, 2
        %s688 = scalar_lea.vmem %s236, %s687
        %v689 = vld [vmem:[%s688] sm:$0x3]
        %691 = vset.pattern.permute.xlu0 0
        %692 = vperm.xlu0 %691, %v683
        %v693 = vpop.permute.xlu0 %692
        %v696 = vsel %vm267, %v689, 0
        %698 = vmatprep.subr.bf16.mxu0 0
        %699 = vmatpush1.bf16.msra.mxu0 %v696
        %700 = vmatprep.subr.bf16.mxu0 0
        %701 = vmatpush1.bf16.msra.mxu0 0
        %702 = vmatprep.subr.bf16.mxu0 0
        %703 = vmatpush1.bf16.msra.mxu0 0
        %704 = vmatprep.subr.bf16.mxu0 0
        %705 = vmatpush1.bf16.msra.mxu0 0
        %706 = vmatprep.subr.bf16.mxu0 0
        %707 = vmatpush1.bf16.msra.mxu0 0
        %708 = vmatprep.subr.bf16.mxu0 0
        %709 = vmatpush1.bf16.msra.mxu0 0
        %710 = vmatprep.subr.bf16.mxu0 0
        %711 = vmatpush1.bf16.msra.mxu0 0
        %712 = vmatprep.subr.bf16.mxu0 0
        %713 = vmatpush1.bf16.msra.mxu0 0
        %714 = vmatprep.subr.bf16.mxu0 0
        %715 = vmatpush1.bf16.msra.mxu0 0
        %716 = vmatprep.subr.bf16.mxu0 0
        %717 = vmatpush1.bf16.msra.mxu0 0
        %718 = vmatprep.subr.bf16.mxu0 0
        %719 = vmatpush1.bf16.msra.mxu0 0
        %720 = vmatprep.subr.bf16.mxu0 0
        %721 = vmatpush1.bf16.msra.mxu0 0
        %722 = vmatprep.subr.bf16.mxu0 0
        %723 = vmatpush1.bf16.msra.mxu0 0
        %724 = vmatprep.subr.bf16.mxu0 0
        %725 = vmatpush1.bf16.msra.mxu0 0
        %726 = vmatprep.subr.bf16.mxu0 0
        %727 = vmatpush1.bf16.msra.mxu0 0
        %728 = vmatprep.subr.bf16.mxu0 0
        %729 = vmatpush1.bf16.msra.mxu0 0
        %730 = vmatprep.mubr.bf16.mxu0 0
        %731 = vmatmul.mubr.bf16.gmra.mrb[0].mxu0 %v265
        %v732 = vpop.f32.mrb[0].mxu0
        %v733 = vadd.f32 %v693, %v732
        %v734 = vpop.f32.mrb[0].mxu0
        %v735 = vpop.f32.mrb[0].mxu0
        %v736 = vpop.f32.mrb[0].mxu0
        %737 = vdwg.mxu0
        %v738 = vpack.c.bf16 %v733, %v733
        %v740 = vunpack.c.l.b16 %v738
        %v741 = vpack.c.b16 %v740, %v740
        %742 = vrot.lane.b32.xlu0 %v741, 2
        %v743 = vpop.permute.xlu0 %742
        %745 = vst.msk [vmem:[%s684] sm:$0xf] %vm318, %v743
        %s746 = sadd.s32 %s239, 7
        %p747 = scmp.ge.s32.totalorder %s746, 2
        %p748 = scmp.lt.s32.totalorder %s746, 18
        %p749 = pnand %p747, %p748
        %p750 = pneg %p749
        %s751 = scalar_select %p750, 1, 0
        %v752 = vstv %s751
        %vm753 = vcmp.eq.s32.totalorder %v752, 1
        %v754 = vsel %vm753, %v241, 0.0
        %s755 = scalar_lea.vmem [#allocation2], 28
        %756 = vst.msk [vmem:[%s755] sm:$0xf] %vm251, 0
        %757 = vst.msk [vmem:[%s755] sm:$0xf] %vm253, 0
        %s758 = smul.addr %s746, 2
        %s759 = scalar_lea.vmem %s236, %s758
        %v760 = vld [vmem:[%s759] sm:$0x3]
        %762 = vset.pattern.permute.xlu0 0
        %763 = vperm.xlu0 %762, %v754
        %v764 = vpop.permute.xlu0 %763
        %v767 = vsel %vm267, %v760, 0
        %769 = vmatprep.subr.bf16.mxu0 0
        %770 = vmatpush1.bf16.msra.mxu0 %v767
        %771 = vmatprep.subr.bf16.mxu0 0
        %772 = vmatpush1.bf16.msra.mxu0 0
        %773 = vmatprep.subr.bf16.mxu0 0
        %774 = vmatpush1.bf16.msra.mxu0 0
        %775 = vmatprep.subr.bf16.mxu0 0
        %776 = vmatpush1.bf16.msra.mxu0 0
        %777 = vmatprep.subr.bf16.mxu0 0
        %778 = vmatpush1.bf16.msra.mxu0 0
        %779 = vmatprep.subr.bf16.mxu0 0
        %780 = vmatpush1.bf16.msra.mxu0 0
        %781 = vmatprep.subr.bf16.mxu0 0
        %782 = vmatpush1.bf16.msra.mxu0 0
        %783 = vmatprep.subr.bf16.mxu0 0
        %784 = vmatpush1.bf16.msra.mxu0 0
        %785 = vmatprep.subr.bf16.mxu0 0
        %786 = vmatpush1.bf16.msra.mxu0 0
        %787 = vmatprep.subr.bf16.mxu0 0
        %788 = vmatpush1.bf16.msra.mxu0 0
        %789 = vmatprep.subr.bf16.mxu0 0
        %790 = vmatpush1.bf16.msra.mxu0 0
        %791 = vmatprep.subr.bf16.mxu0 0
        %792 = vmatpush1.bf16.msra.mxu0 0
        %793 = vmatprep.subr.bf16.mxu0 0
        %794 = vmatpush1.bf16.msra.mxu0 0
        %795 = vmatprep.subr.bf16.mxu0 0
        %796 = vmatpush1.bf16.msra.mxu0 0
        %797 = vmatprep.subr.bf16.mxu0 0
        %798 = vmatpush1.bf16.msra.mxu0 0
        %799 = vmatprep.subr.bf16.mxu0 0
        %800 = vmatpush1.bf16.msra.mxu0 0
        %801 = vmatprep.mubr.bf16.mxu0 0
        %802 = vmatmul.mubr.bf16.gmra.mrb[0].mxu0 %v265
        %v803 = vpop.f32.mrb[0].mxu0
        %v804 = vadd.f32 %v764, %v803
        %v805 = vpop.f32.mrb[0].mxu0
        %v806 = vpop.f32.mrb[0].mxu0
        %v807 = vpop.f32.mrb[0].mxu0
        %808 = vdwg.mxu0
        %v809 = vpack.c.bf16 %v804, %v804
        %v811 = vunpack.c.l.b16 %v809
        %v812 = vpack.c.b16 %v811, %v811
        %813 = vrot.lane.b32.xlu0 %v812, 2
        %v814 = vpop.permute.xlu0 %813
        %816 = vst.msk [vmem:[%s755] sm:$0xf] %vm318, %v814
        %s817 = sadd.s32 %s239, 8
        %p818 = scmp.ge.s32.totalorder %s817, 2
        %p819 = scmp.lt.s32.totalorder %s817, 18
        %p820 = pnand %p818, %p819
        %p821 = pneg %p820
        %s822 = scalar_select %p821, 1, 0
        %v823 = vstv %s822
        %vm824 = vcmp.eq.s32.totalorder %v823, 1
        %v825 = vsel %vm824, %v241, 0.0
        %s826 = scalar_lea.vmem [#allocation2], 32
        %827 = vst.msk [vmem:[%s826] sm:$0xf] %vm251, 0
        %828 = vst.msk [vmem:[%s826] sm:$0xf] %vm253, 0
        %s829 = smul.addr %s817, 2
        %s830 = scalar_lea.vmem %s236, %s829
        %v831 = vld [vmem:[%s830] sm:$0x3]
        %833 = vset.pattern.permute.xlu0 0
        %834 = vperm.xlu0 %833, %v825
        %v835 = vpop.permute.xlu0 %834
        %v838 = vsel %vm267, %v831, 0
        %840 = vmatprep.subr.bf16.mxu0 0
        %841 = vmatpush1.bf16.msra.mxu0 %v838
        %842 = vmatprep.subr.bf16.mxu0 0
        %843 = vmatpush1.bf16.msra.mxu0 0
        %844 = vmatprep.subr.bf16.mxu0 0
        %845 = vmatpush1.bf16.msra.mxu0 0
        %846 = vmatprep.subr.bf16.mxu0 0
        %847 = vmatpush1.bf16.msra.mxu0 0
        %848 = vmatprep.subr.bf16.mxu0 0
        %849 = vmatpush1.bf16.msra.mxu0 0
        %850 = vmatprep.subr.bf16.mxu0 0
        %851 = vmatpush1.bf16.msra.mxu0 0
        %852 = vmatprep.subr.bf16.mxu0 0
        %853 = vmatpush1.bf16.msra.mxu0 0
        %854 = vmatprep.subr.bf16.mxu0 0
        %855 = vmatpush1.bf16.msra.mxu0 0
        %856 = vmatprep.subr.bf16.mxu0 0
        %857 = vmatpush1.bf16.msra.mxu0 0
        %858 = vmatprep.subr.bf16.mxu0 0
        %859 = vmatpush1.bf16.msra.mxu0 0
        %860 = vmatprep.subr.bf16.mxu0 0
        %861 = vmatpush1.bf16.msra.mxu0 0
        %862 = vmatprep.subr.bf16.mxu0 0
        %863 = vmatpush1.bf16.msra.mxu0 0
        %864 = vmatprep.subr.bf16.mxu0 0
        %865 = vmatpush1.bf16.msra.mxu0 0
        %866 = vmatprep.subr.bf16.mxu0 0
        %867 = vmatpush1.bf16.msra.mxu0 0
        %868 = vmatprep.subr.bf16.mxu0 0
        %869 = vmatpush1.bf16.msra.mxu0 0
        %870 = vmatprep.subr.bf16.mxu0 0
        %871 = vmatpush1.bf16.msra.mxu0 0
        %872 = vmatprep.mubr.bf16.mxu0 0
        %873 = vmatmul.mubr.bf16.gmra.mrb[0].mxu0 %v265
        %v874 = vpop.f32.mrb[0].mxu0
        %v875 = vadd.f32 %v835, %v874
        %v876 = vpop.f32.mrb[0].mxu0
        %v877 = vpop.f32.mrb[0].mxu0
        %v878 = vpop.f32.mrb[0].mxu0
        %879 = vdwg.mxu0
        %v880 = vpack.c.bf16 %v875, %v875
        %v882 = vunpack.c.l.b16 %v880
        %v883 = vpack.c.b16 %v882, %v882
        %884 = vrot.lane.b32.xlu0 %v883, 2
        %v885 = vpop.permute.xlu0 %884
        %887 = vst.msk [vmem:[%s826] sm:$0xf] %vm318, %v885
        %s888 = sadd.s32 %s239, 9
        %p889 = scmp.ge.s32.totalorder %s888, 2
        %p890 = scmp.lt.s32.totalorder %s888, 18
        %p891 = pnand %p889, %p890
        %p892 = pneg %p891
        %s893 = scalar_select %p892, 1, 0
        %v894 = vstv %s893
        %vm895 = vcmp.eq.s32.totalorder %v894, 1
        %v896 = vsel %vm895, %v241, 0.0
        %s897 = scalar_lea.vmem [#allocation2], 36
        %898 = vst.msk [vmem:[%s897] sm:$0xf] %vm251, 0
        %899 = vst.msk [vmem:[%s897] sm:$0xf] %vm253, 0
        %s900 = smul.addr %s888, 2
        %s901 = scalar_lea.vmem %s236, %s900
        %v902 = vld [vmem:[%s901] sm:$0x3]
        %904 = vset.pattern.permute.xlu0 0
        %905 = vperm.xlu0 %904, %v896
        %v906 = vpop.permute.xlu0 %905
        %v909 = vsel %vm267, %v902, 0
        %911 = vmatprep.subr.bf16.mxu0 0
        %912 = vmatpush1.bf16.msra.mxu0 %v909
        %913 = vmatprep.subr.bf16.mxu0 0
        %914 = vmatpush1.bf16.msra.mxu0 0
        %915 = vmatprep.subr.bf16.mxu0 0
        %916 = vmatpush1.bf16.msra.mxu0 0
        %917 = vmatprep.subr.bf16.mxu0 0
        %918 = vmatpush1.bf16.msra.mxu0 0
        %919 = vmatprep.subr.bf16.mxu0 0
        %920 = vmatpush1.bf16.msra.mxu0 0
        %921 = vmatprep.subr.bf16.mxu0 0
        %922 = vmatpush1.bf16.msra.mxu0 0
        %923 = vmatprep.subr.bf16.mxu0 0
        %924 = vmatpush1.bf16.msra.mxu0 0
        %925 = vmatprep.subr.bf16.mxu0 0
        %926 = vmatpush1.bf16.msra.mxu0 0
        %927 = vmatprep.subr.bf16.mxu0 0
        %928 = vmatpush1.bf16.msra.mxu0 0
        %929 = vmatprep.subr.bf16.mxu0 0
        %930 = vmatpush1.bf16.msra.mxu0 0
        %931 = vmatprep.subr.bf16.mxu0 0
        %932 = vmatpush1.bf16.msra.mxu0 0
        %933 = vmatprep.subr.bf16.mxu0 0
        %934 = vmatpush1.bf16.msra.mxu0 0
        %935 = vmatprep.subr.bf16.mxu0 0
        %936 = vmatpush1.bf16.msra.mxu0 0
        %937 = vmatprep.subr.bf16.mxu0 0
        %938 = vmatpush1.bf16.msra.mxu0 0
        %939 = vmatprep.subr.bf16.mxu0 0
        %940 = vmatpush1.bf16.msra.mxu0 0
        %941 = vmatprep.subr.bf16.mxu0 0
        %942 = vmatpush1.bf16.msra.mxu0 0
        %943 = vmatprep.mubr.bf16.mxu0 0
        %944 = vmatmul.mubr.bf16.gmra.mrb[0].mxu0 %v265
        %v945 = vpop.f32.mrb[0].mxu0
        %v946 = vadd.f32 %v906, %v945
        %v947 = vpop.f32.mrb[0].mxu0
        %v948 = vpop.f32.mrb[0].mxu0
        %v949 = vpop.f32.mrb[0].mxu0
        %950 = vdwg.mxu0
        %v951 = vpack.c.bf16 %v946, %v946
        %v953 = vunpack.c.l.b16 %v951
        %v954 = vpack.c.b16 %v953, %v953
        %955 = vrot.lane.b32.xlu0 %v954, 2
        %v956 = vpop.permute.xlu0 %955
        %958 = vst.msk [vmem:[%s897] sm:$0xf] %vm318, %v956
        %s959 = sadd.s32 %s239, 10
        %p960 = scmp.ge.s32.totalorder %s959, 2
        %p961 = scmp.lt.s32.totalorder %s959, 18
        %p962 = pnand %p960, %p961
        %p963 = pneg %p962
        %s964 = scalar_select %p963, 1, 0
        %v965 = vstv %s964
        %vm966 = vcmp.eq.s32.totalorder %v965, 1
        %v967 = vsel %vm966, %v241, 0.0
        %s968 = scalar_lea.vmem [#allocation2], 40
        %969 = vst.msk [vmem:[%s968] sm:$0xf] %vm251, 0
        %970 = vst.msk [vmem:[%s968] sm:$0xf] %vm253, 0
        %s971 = smul.addr %s959, 2
        %s972 = scalar_lea.vmem %s236, %s971
        %v973 = vld [vmem:[%s972] sm:$0x3]
        %975 = vset.pattern.permute.xlu0 0
        %976 = vperm.xlu0 %975, %v967
        %v977 = vpop.permute.xlu0 %976
        %v980 = vsel %vm267, %v973, 0
        %982 = vmatprep.subr.bf16.mxu0 0
        %983 = vmatpush1.bf16.msra.mxu0 %v980
        %984 = vmatprep.subr.bf16.mxu0 0
        %985 = vmatpush1.bf16.msra.mxu0 0
        %986 = vmatprep.subr.bf16.mxu0 0
        %987 = vmatpush1.bf16.msra.mxu0 0
        %988 = vmatprep.subr.bf16.mxu0 0
        %989 = vmatpush1.bf16.msra.mxu0 0
        %990 = vmatprep.subr.bf16.mxu0 0
        %991 = vmatpush1.bf16.msra.mxu0 0
        %992 = vmatprep.subr.bf16.mxu0 0
        %993 = vmatpush1.bf16.msra.mxu0 0
        %994 = vmatprep.subr.bf16.mxu0 0
        %995 = vmatpush1.bf16.msra.mxu0 0
        %996 = vmatprep.subr.bf16.mxu0 0
        %997 = vmatpush1.bf16.msra.mxu0 0
        %998 = vmatprep.subr.bf16.mxu0 0
        %999 = vmatpush1.bf16.msra.mxu0 0
        %1000 = vmatprep.subr.bf16.mxu0 0
        %1001 = vmatpush1.bf16.msra.mxu0 0
        %1002 = vmatprep.subr.bf16.mxu0 0
        %1003 = vmatpush1.bf16.msra.mxu0 0
        %1004 = vmatprep.subr.bf16.mxu0 0
        %1005 = vmatpush1.bf16.msra.mxu0 0
        %1006 = vmatprep.subr.bf16.mxu0 0
        %1007 = vmatpush1.bf16.msra.mxu0 0
        %1008 = vmatprep.subr.bf16.mxu0 0
        %1009 = vmatpush1.bf16.msra.mxu0 0
        %1010 = vmatprep.subr.bf16.mxu0 0
        %1011 = vmatpush1.bf16.msra.mxu0 0
        %1012 = vmatprep.subr.bf16.mxu0 0
        %1013 = vmatpush1.bf16.msra.mxu0 0
        %1014 = vmatprep.mubr.bf16.mxu0 0
        %1015 = vmatmul.mubr.bf16.gmra.mrb[0].mxu0 %v265
        %v1016 = vpop.f32.mrb[0].mxu0
        %v1017 = vadd.f32 %v977, %v1016
        %v1018 = vpop.f32.mrb[0].mxu0
        %v1019 = vpop.f32.mrb[0].mxu0
        %v1020 = vpop.f32.mrb[0].mxu0
        %1021 = vdwg.mxu0
        %v1022 = vpack.c.bf16 %v1017, %v1017
        %v1024 = vunpack.c.l.b16 %v1022
        %v1025 = vpack.c.b16 %v1024, %v1024
        %1026 = vrot.lane.b32.xlu0 %v1025, 2
        %v1027 = vpop.permute.xlu0 %1026
        %1029 = vst.msk [vmem:[%s968] sm:$0xf] %vm318, %v1027
        %s1030 = sadd.s32 %s239, 11
        %p1031 = scmp.ge.s32.totalorder %s1030, 2
        %p1032 = scmp.lt.s32.totalorder %s1030, 18
        %p1033 = pnand %p1031, %p1032
        %p1034 = pneg %p1033
        %s1035 = scalar_select %p1034, 1, 0
        %v1036 = vstv %s1035
        %vm1037 = vcmp.eq.s32.totalorder %v1036, 1
        %v1038 = vsel %vm1037, %v241, 0.0
        %s1039 = scalar_lea.vmem [#allocation2], 44
        %1040 = vst.msk [vmem:[%s1039] sm:$0xf] %vm251, 0
        %1041 = vst.msk [vmem:[%s1039] sm:$0xf] %vm253, 0
        %s1042 = smul.addr %s1030, 2
        %s1043 = scalar_lea.vmem %s236, %s1042
        %v1044 = vld [vmem:[%s1043] sm:$0x3]
        %1046 = vset.pattern.permute.xlu0 0
        %1047 = vperm.xlu0 %1046, %v1038
        %v1048 = vpop.permute.xlu0 %1047
        %v1051 = vsel %vm267, %v1044, 0
        %1053 = vmatprep.subr.bf16.mxu0 0
        %1054 = vmatpush1.bf16.msra.mxu0 %v1051
        %1055 = vmatprep.subr.bf16.mxu0 0
        %1056 = vmatpush1.bf16.msra.mxu0 0
        %1057 = vmatprep.subr.bf16.mxu0 0
        %1058 = vmatpush1.bf16.msra.mxu0 0
        %1059 = vmatprep.subr.bf16.mxu0 0
        %1060 = vmatpush1.bf16.msra.mxu0 0
        %1061 = vmatprep.subr.bf16.mxu0 0
        %1062 = vmatpush1.bf16.msra.mxu0 0
        %1063 = vmatprep.subr.bf16.mxu0 0
        %1064 = vmatpush1.bf16.msra.mxu0 0
        %1065 = vmatprep.subr.bf16.mxu0 0
        %1066 = vmatpush1.bf16.msra.mxu0 0
        %1067 = vmatprep.subr.bf16.mxu0 0
        %1068 = vmatpush1.bf16.msra.mxu0 0
        %1069 = vmatprep.subr.bf16.mxu0 0
        %1070 = vmatpush1.bf16.msra.mxu0 0
        %1071 = vmatprep.subr.bf16.mxu0 0
        %1072 = vmatpush1.bf16.msra.mxu0 0
        %1073 = vmatprep.subr.bf16.mxu0 0
        %1074 = vmatpush1.bf16.msra.mxu0 0
        %1075 = vmatprep.subr.bf16.mxu0 0
        %1076 = vmatpush1.bf16.msra.mxu0 0
        %1077 = vmatprep.subr.bf16.mxu0 0
        %1078 = vmatpush1.bf16.msra.mxu0 0
        %1079 = vmatprep.subr.bf16.mxu0 0
        %1080 = vmatpush1.bf16.msra.mxu0 0
        %1081 = vmatprep.subr.bf16.mxu0 0
        %1082 = vmatpush1.bf16.msra.mxu0 0
        %1083 = vmatprep.subr.bf16.mxu0 0
        %1084 = vmatpush1.bf16.msra.mxu0 0
        %1085 = vmatprep.mubr.bf16.mxu0 0
        %1086 = vmatmul.mubr.bf16.gmra.mrb[0].mxu0 %v265
        %v1087 = vpop.f32.mrb[0].mxu0
        %v1088 = vadd.f32 %v1048, %v1087
        %v1089 = vpop.f32.mrb[0].mxu0
        %v1090 = vpop.f32.mrb[0].mxu0
        %v1091 = vpop.f32.mrb[0].mxu0
        %1092 = vdwg.mxu0
        %v1093 = vpack.c.bf16 %v1088, %v1088
        %v1095 = vunpack.c.l.b16 %v1093
        %v1096 = vpack.c.b16 %v1095, %v1095
        %1097 = vrot.lane.b32.xlu0 %v1096, 2
        %v1098 = vpop.permute.xlu0 %1097
        %1100 = vst.msk [vmem:[%s1039] sm:$0xf] %vm318, %v1098
        %v1101 = vld [vmem:[%s3] sm:$0xf]
        %s1102 = scalar_lea.vmem %s3, 4
        %v1103 = vld [vmem:[%s1102] sm:$0xf]
        %s1104 = scalar_lea.vmem %s3, 8
        %v1105 = vld [vmem:[%s1104] sm:$0xf]
        %s1106 = scalar_lea.vmem %s3, 12
        %v1107 = vld [vmem:[%s1106] sm:$0xf]
        %s1108 = scalar_lea.vmem %s3, 16
        %v1109 = vld [vmem:[%s1108] sm:$0xf]
        %s1110 = scalar_lea.vmem %s3, 20
        %v1111 = vld [vmem:[%s1110] sm:$0xf]
        %s1112 = scalar_lea.vmem %s3, 24
        %v1113 = vld [vmem:[%s1112] sm:$0xf]
        %s1114 = scalar_lea.vmem %s3, 28
        %v1115 = vld [vmem:[%s1114] sm:$0xf]
        %s1116 = scalar_lea.vmem %s3, 32
        %v1117 = vld [vmem:[%s1116] sm:$0xf]
        %v1118 = vld [vmem:[#allocation2] sm:$0xf]
        %v1120 = vunpack.c.l.b16 %v1118
        %v1121 = vpack.c.b16 %v1120, %v1120
        %1122 = vrot.lane.b32.xlu0 %v1121, 126
        %v1123 = vpop.permute.xlu0 %1122
        %vm1124 = vcmask 64512
        %v1126 = vsel %vm1124, %v1103, 0
        %vm1128 = vcmask 1043456
        %v1130 = vsel %vm1128, %v1123, 0
        %1132 = vmatprep.subr.bf16.mxu0 0
        %1133 = vmatpush1.bf16.msra.mxu0 %v1130
        %1134 = vmatprep.subr.bf16.mxu0 0
        %1135 = vmatpush1.bf16.msra.mxu0 0
        %1136 = vmatprep.subr.bf16.mxu0 0
        %1137 = vmatpush1.bf16.msra.mxu0 0
        %1138 = vmatprep.subr.bf16.mxu0 0
        %1139 = vmatpush1.bf16.msra.mxu0 0
        %1140 = vmatprep.subr.bf16.mxu0 0
        %1141 = vmatpush1.bf16.msra.mxu0 0
        %1142 = vmatprep.subr.bf16.mxu0 0
        %1143 = vmatpush1.bf16.msra.mxu0 0
        %1144 = vmatprep.subr.bf16.mxu0 0
        %1145 = vmatpush1.bf16.msra.mxu0 0
        %1146 = vmatprep.subr.bf16.mxu0 0
        %1147 = vmatpush1.bf16.msra.mxu0 0
        %1148 = vmatprep.subr.bf16.mxu0 0
        %1149 = vmatpush1.bf16.msra.mxu0 0
        %1150 = vmatprep.subr.bf16.mxu0 0
        %1151 = vmatpush1.bf16.msra.mxu0 0
        %1152 = vmatprep.subr.bf16.mxu0 0
        %1153 = vmatpush1.bf16.msra.mxu0 0
        %1154 = vmatprep.subr.bf16.mxu0 0
        %1155 = vmatpush1.bf16.msra.mxu0 0
        %1156 = vmatprep.subr.bf16.mxu0 0
        %1157 = vmatpush1.bf16.msra.mxu0 0
        %1158 = vmatprep.subr.bf16.mxu0 0
        %1159 = vmatpush1.bf16.msra.mxu0 0
        %1160 = vmatprep.subr.bf16.mxu0 0
        %1161 = vmatpush1.bf16.msra.mxu0 0
        %1162 = vmatprep.subr.bf16.mxu0 0
        %1163 = vmatpush1.bf16.msra.mxu0 0
        %1164 = vmatprep.mubr.bf16.mxu0 0
        %1165 = vmatmul.mubr.bf16.gmra.mrb[0].mxu0 %v1126
        %v1166 = vpop.f32.mrb[0].mxu0
        %v1167 = vadd.f32 0.0, %v1166
        %v1168 = vpop.f32.mrb[0].mxu0
        %v1169 = vpop.f32.mrb[0].mxu0
        %v1170 = vpop.f32.mrb[0].mxu0
        %1171 = vdwg.mxu0
        %v1173 = vsel %vm1124, %v1101, 0
        %v1176 = vsel %vm1128, %v1118, 0
        %1178 = vmatprep.subr.bf16.mxu0 0
        %1179 = vmatpush1.bf16.msra.mxu0 %v1176
        %1180 = vmatprep.subr.bf16.mxu0 0
        %1181 = vmatpush1.bf16.msra.mxu0 0
        %1182 = vmatprep.subr.bf16.mxu0 0
        %1183 = vmatpush1.bf16.msra.mxu0 0
        %1184 = vmatprep.subr.bf16.mxu0 0
        %1185 = vmatpush1.bf16.msra.mxu0 0
        %1186 = vmatprep.subr.bf16.mxu0 0
        %1187 = vmatpush1.bf16.msra.mxu0 0
        %1188 = vmatprep.subr.bf16.mxu0 0
        %1189 = vmatpush1.bf16.msra.mxu0 0
        %1190 = vmatprep.subr.bf16.mxu0 0
        %1191 = vmatpush1.bf16.msra.mxu0 0
        %1192 = vmatprep.subr.bf16.mxu0 0
        %1193 = vmatpush1.bf16.msra.mxu0 0
        %1194 = vmatprep.subr.bf16.mxu0 0
        %1195 = vmatpush1.bf16.msra.mxu0 0
        %1196 = vmatprep.subr.bf16.mxu0 0
        %1197 = vmatpush1.bf16.msra.mxu0 0
        %1198 = vmatprep.subr.bf16.mxu0 0
        %1199 = vmatpush1.bf16.msra.mxu0 0
        %1200 = vmatprep.subr.bf16.mxu0 0
        %1201 = vmatpush1.bf16.msra.mxu0 0
        %1202 = vmatprep.subr.bf16.mxu0 0
        %1203 = vmatpush1.bf16.msra.mxu0 0
        %1204 = vmatprep.subr.bf16.mxu0 0
        %1205 = vmatpush1.bf16.msra.mxu0 0
        %1206 = vmatprep.subr.bf16.mxu0 0
        %1207 = vmatpush1.bf16.msra.mxu0 0
        %1208 = vmatprep.subr.bf16.mxu0 0
        %1209 = vmatpush1.bf16.msra.mxu0 0
        %1210 = vmatprep.mubr.bf16.mxu0 0
        %1211 = vmatmul.mubr.bf16.gmra.mrb[0].mxu0 %v1173
        %v1212 = vpop.f32.mrb[0].mxu0
        %v1213 = vadd.f32 %v1167, %v1212
        %v1214 = vpop.f32.mrb[0].mxu0
        %v1215 = vpop.f32.mrb[0].mxu0
        %v1216 = vpop.f32.mrb[0].mxu0
        %1217 = vdwg.mxu0
        %1218 = vrot.lane.b32.xlu0 %v1121, 124
        %v1219 = vpop.permute.xlu0 %1218
        %v1221 = vsel %vm1124, %v1105, 0
        %v1224 = vsel %vm1128, %v1219, 0
        %1226 = vmatprep.subr.bf16.mxu0 0
        %1227 = vmatpush1.bf16.msra.mxu0 %v1224
        %1228 = vmatprep.subr.bf16.mxu0 0
        %1229 = vmatpush1.bf16.msra.mxu0 0
        %1230 = vmatprep.subr.bf16.mxu0 0
        %1231 = vmatpush1.bf16.msra.mxu0 0
        %1232 = vmatprep.subr.bf16.mxu0 0
        %1233 = vmatpush1.bf16.msra.mxu0 0
        %1234 = vmatprep.subr.bf16.mxu0 0
        %1235 = vmatpush1.bf16.msra.mxu0 0
        %1236 = vmatprep.subr.bf16.mxu0 0
        %1237 = vmatpush1.bf16.msra.mxu0 0
        %1238 = vmatprep.subr.bf16.mxu0 0
        %1239 = vmatpush1.bf16.msra.mxu0 0
        %1240 = vmatprep.subr.bf16.mxu0 0
        %1241 = vmatpush1.bf16.msra.mxu0 0
        %1242 = vmatprep.subr.bf16.mxu0 0
        %1243 = vmatpush1.bf16.msra.mxu0 0
        %1244 = vmatprep.subr.bf16.mxu0 0
        %1245 = vmatpush1.bf16.msra.mxu0 0
        %1246 = vmatprep.subr.bf16.mxu0 0
        %1247 = vmatpush1.bf16.msra.mxu0 0
        %1248 = vmatprep.subr.bf16.mxu0 0
        %1249 = vmatpush1.bf16.msra.mxu0 0
        %1250 = vmatprep.subr.bf16.mxu0 0
        %1251 = vmatpush1.bf16.msra.mxu0 0
        %1252 = vmatprep.subr.bf16.mxu0 0
        %1253 = vmatpush1.bf16.msra.mxu0 0
        %1254 = vmatprep.subr.bf16.mxu0 0
        %1255 = vmatpush1.bf16.msra.mxu0 0
        %1256 = vmatprep.subr.bf16.mxu0 0
        %1257 = vmatpush1.bf16.msra.mxu0 0
        %1258 = vmatprep.mubr.bf16.mxu0 0
        %1259 = vmatmul.mubr.bf16.gmra.mrb[0].mxu0 %v1221
        %v1260 = vpop.f32.mrb[0].mxu0
        %v1261 = vadd.f32 0.0, %v1260
        %v1262 = vpop.f32.mrb[0].mxu0
        %v1263 = vpop.f32.mrb[0].mxu0
        %v1264 = vpop.f32.mrb[0].mxu0
        %1265 = vdwg.mxu0
        %v1266 = vadd.f32 %v1213, %v1261
        %v1267 = vld [vmem:[%s400] sm:$0xf]
        %v1269 = vsel %vm1124, %v1107, 0
        %v1272 = vsel %vm1128, %v1267, 0
        %1274 = vmatprep.subr.bf16.mxu0 0
        %1275 = vmatpush1.bf16.msra.mxu0 %v1272
        %1276 = vmatprep.subr.bf16.mxu0 0
        %1277 = vmatpush1.bf16.msra.mxu0 0
        %1278 = vmatprep.subr.bf16.mxu0 0
        %1279 = vmatpush1.bf16.msra.mxu0 0
        %1280 = vmatprep.subr.bf16.mxu0 0
        %1281 = vmatpush1.bf16.msra.mxu0 0
        %1282 = vmatprep.subr.bf16.mxu0 0
        %1283 = vmatpush1.bf16.msra.mxu0 0
        %1284 = vmatprep.subr.bf16.mxu0 0
        %1285 = vmatpush1.bf16.msra.mxu0 0
        %1286 = vmatprep.subr.bf16.mxu0 0
        %1287 = vmatpush1.bf16.msra.mxu0 0
        %1288 = vmatprep.subr.bf16.mxu0 0
        %1289 = vmatpush1.bf16.msra.mxu0 0
        %1290 = vmatprep.subr.bf16.mxu0 0
        %1291 = vmatpush1.bf16.msra.mxu0 0
        %1292 = vmatprep.subr.bf16.mxu0 0
        %1293 = vmatpush1.bf16.msra.mxu0 0
        %1294 = vmatprep.subr.bf16.mxu0 0
        %1295 = vmatpush1.bf16.msra.mxu0 0
        %1296 = vmatprep.subr.bf16.mxu0 0
        %1297 = vmatpush1.bf16.msra.mxu0 0
        %1298 = vmatprep.subr.bf16.mxu0 0
        %1299 = vmatpush1.bf16.msra.mxu0 0
        %1300 = vmatprep.subr.bf16.mxu0 0
        %1301 = vmatpush1.bf16.msra.mxu0 0
        %1302 = vmatprep.subr.bf16.mxu0 0
        %1303 = vmatpush1.bf16.msra.mxu0 0
        %1304 = vmatprep.subr.bf16.mxu0 0
        %1305 = vmatpush1.bf16.msra.mxu0 0
        %1306 = vmatprep.mubr.bf16.mxu0 0
        %1307 = vmatmul.mubr.bf16.gmra.mrb[0].mxu0 %v1269
        %v1308 = vpop.f32.mrb[0].mxu0
        %v1309 = vadd.f32 0.0, %v1308
        %v1310 = vpop.f32.mrb[0].mxu0
        %v1311 = vpop.f32.mrb[0].mxu0
        %v1312 = vpop.f32.mrb[0].mxu0
        %1313 = vdwg.mxu0
        %v1314 = vadd.f32 %v1266, %v1309
        %v1316 = vunpack.c.l.b16 %v1267
        %v1317 = vpack.c.b16 %v1316, %v1316
        %1318 = vrot.lane.b32.xlu0 %v1317, 126
        %v1319 = vpop.permute.xlu0 %1318
        %v1321 = vsel %vm1124, %v1109, 0
        %v1324 = vsel %vm1128, %v1319, 0
        %1326 = vmatprep.subr.bf16.mxu0 0
        %1327 = vmatpush1.bf16.msra.mxu0 %v1324
        %1328 = vmatprep.subr.bf16.mxu0 0
        %1329 = vmatpush1.bf16.msra.mxu0 0
        %1330 = vmatprep.subr.bf16.mxu0 0
        %1331 = vmatpush1.bf16.msra.mxu0 0
        %1332 = vmatprep.subr.bf16.mxu0 0
        %1333 = vmatpush1.bf16.msra.mxu0 0
        %1334 = vmatprep.subr.bf16.mxu0 0
        %1335 = vmatpush1.bf16.msra.mxu0 0
        %1336 = vmatprep.subr.bf16.mxu0 0
        %1337 = vmatpush1.bf16.msra.mxu0 0
        %1338 = vmatprep.subr.bf16.mxu0 0
        %1339 = vmatpush1.bf16.msra.mxu0 0
        %1340 = vmatprep.subr.bf16.mxu0 0
        %1341 = vmatpush1.bf16.msra.mxu0 0
        %1342 = vmatprep.subr.bf16.mxu0 0
        %1343 = vmatpush1.bf16.msra.mxu0 0
        %1344 = vmatprep.subr.bf16.mxu0 0
        %1345 = vmatpush1.bf16.msra.mxu0 0
        %1346 = vmatprep.subr.bf16.mxu0 0
        %1347 = vmatpush1.bf16.msra.mxu0 0
        %1348 = vmatprep.subr.bf16.mxu0 0
        %1349 = vmatpush1.bf16.msra.mxu0 0
        %1350 = vmatprep.subr.bf16.mxu0 0
        %1351 = vmatpush1.bf16.msra.mxu0 0
        %1352 = vmatprep.subr.bf16.mxu0 0
        %1353 = vmatpush1.bf16.msra.mxu0 0
        %1354 = vmatprep.subr.bf16.mxu0 0
        %1355 = vmatpush1.bf16.msra.mxu0 0
        %1356 = vmatprep.subr.bf16.mxu0 0
        %1357 = vmatpush1.bf16.msra.mxu0 0
        %1358 = vmatprep.mubr.bf16.mxu0 0
        %1359 = vmatmul.mubr.bf16.gmra.mrb[0].mxu0 %v1321
        %v1360 = vpop.f32.mrb[0].mxu0
        %v1361 = vadd.f32 0.0, %v1360
        %v1362 = vpop.f32.mrb[0].mxu0
        %v1363 = vpop.f32.mrb[0].mxu0
        %v1364 = vpop.f32.mrb[0].mxu0
        %1365 = vdwg.mxu0
        %v1366 = vadd.f32 %v1314, %v1361
        %1367 = vrot.lane.b32.xlu0 %v1317, 124
        %v1368 = vpop.permute.xlu0 %1367
        %v1370 = vsel %vm1124, %v1111, 0
        %v1373 = vsel %vm1128, %v1368, 0
        %1375 = vmatprep.subr.bf16.mxu0 0
        %1376 = vmatpush1.bf16.msra.mxu0 %v1373
        %1377 = vmatprep.subr.bf16.mxu0 0
        %1378 = vmatpush1.bf16.msra.mxu0 0
        %1379 = vmatprep.subr.bf16.mxu0 0
        %1380 = vmatpush1.bf16.msra.mxu0 0
        %1381 = vmatprep.subr.bf16.mxu0 0
        %1382 = vmatpush1.bf16.msra.mxu0 0
        %1383 = vmatprep.subr.bf16.mxu0 0
        %1384 = vmatpush1.bf16.msra.mxu0 0
        %1385 = vmatprep.subr.bf16.mxu0 0
        %1386 = vmatpush1.bf16.msra.mxu0 0
        %1387 = vmatprep.subr.bf16.mxu0 0
        %1388 = vmatpush1.bf16.msra.mxu0 0
        %1389 = vmatprep.subr.bf16.mxu0 0
        %1390 = vmatpush1.bf16.msra.mxu0 0
        %1391 = vmatprep.subr.bf16.mxu0 0
        %1392 = vmatpush1.bf16.msra.mxu0 0
        %1393 = vmatprep.subr.bf16.mxu0 0
        %1394 = vmatpush1.bf16.msra.mxu0 0
        %1395 = vmatprep.subr.bf16.mxu0 0
        %1396 = vmatpush1.bf16.msra.mxu0 0
        %1397 = vmatprep.subr.bf16.mxu0 0
        %1398 = vmatpush1.bf16.msra.mxu0 0
        %1399 = vmatprep.subr.bf16.mxu0 0
        %1400 = vmatpush1.bf16.msra.mxu0 0
        %1401 = vmatprep.subr.bf16.mxu0 0
        %1402 = vmatpush1.bf16.msra.mxu0 0
        %1403 = vmatprep.subr.bf16.mxu0 0
        %1404 = vmatpush1.bf16.msra.mxu0 0
        %1405 = vmatprep.subr.bf16.mxu0 0
        %1406 = vmatpush1.bf16.msra.mxu0 0
        %1407 = vmatprep.mubr.bf16.mxu0 0
        %1408 = vmatmul.mubr.bf16.gmra.mrb[0].mxu0 %v1370
        %v1409 = vpop.f32.mrb[0].mxu0
        %v1410 = vadd.f32 0.0, %v1409
        %v1411 = vpop.f32.mrb[0].mxu0
        %v1412 = vpop.f32.mrb[0].mxu0
        %v1413 = vpop.f32.mrb[0].mxu0
        %1414 = vdwg.mxu0
        %v1415 = vadd.f32 %v1366, %v1410
        %v1416 = vld [vmem:[%s542] sm:$0xf]
        %v1418 = vsel %vm1124, %v1113, 0
        %v1421 = vsel %vm1128, %v1416, 0
        %1423 = vmatprep.subr.bf16.mxu0 0
        %1424 = vmatpush1.bf16.msra.mxu0 %v1421
        %1425 = vmatprep.subr.bf16.mxu0 0
        %1426 = vmatpush1.bf16.msra.mxu0 0
        %1427 = vmatprep.subr.bf16.mxu0 0
        %1428 = vmatpush1.bf16.msra.mxu0 0
        %1429 = vmatprep.subr.bf16.mxu0 0
        %1430 = vmatpush1.bf16.msra.mxu0 0
        %1431 = vmatprep.subr.bf16.mxu0 0
        %1432 = vmatpush1.bf16.msra.mxu0 0
        %1433 = vmatprep.subr.bf16.mxu0 0
        %1434 = vmatpush1.bf16.msra.mxu0 0
        %1435 = vmatprep.subr.bf16.mxu0 0
        %1436 = vmatpush1.bf16.msra.mxu0 0
        %1437 = vmatprep.subr.bf16.mxu0 0
        %1438 = vmatpush1.bf16.msra.mxu0 0
        %1439 = vmatprep.subr.bf16.mxu0 0
        %1440 = vmatpush1.bf16.msra.mxu0 0
        %1441 = vmatprep.subr.bf16.mxu0 0
        %1442 = vmatpush1.bf16.msra.mxu0 0
        %1443 = vmatprep.subr.bf16.mxu0 0
        %1444 = vmatpush1.bf16.msra.mxu0 0
        %1445 = vmatprep.subr.bf16.mxu0 0
        %1446 = vmatpush1.bf16.msra.mxu0 0
        %1447 = vmatprep.subr.bf16.mxu0 0
        %1448 = vmatpush1.bf16.msra.mxu0 0
        %1449 = vmatprep.subr.bf16.mxu0 0
        %1450 = vmatpush1.bf16.msra.mxu0 0
        %1451 = vmatprep.subr.bf16.mxu0 0
        %1452 = vmatpush1.bf16.msra.mxu0 0
        %1453 = vmatprep.subr.bf16.mxu0 0
        %1454 = vmatpush1.bf16.msra.mxu0 0
        %1455 = vmatprep.mubr.bf16.mxu0 0
        %1456 = vmatmul.mubr.bf16.gmra.mrb[0].mxu0 %v1418
        %v1457 = vpop.f32.mrb[0].mxu0
        %v1458 = vadd.f32 0.0, %v1457
        %v1459 = vpop.f32.mrb[0].mxu0
        %v1460 = vpop.f32.mrb[0].mxu0
        %v1461 = vpop.f32.mrb[0].mxu0
        %1462 = vdwg.mxu0
        %v1463 = vadd.f32 %v1415, %v1458
        %v1465 = vunpack.c.l.b16 %v1416
        %v1466 = vpack.c.b16 %v1465, %v1465
        %1467 = vrot.lane.b32.xlu0 %v1466, 126
        %v1468 = vpop.permute.xlu0 %1467
        %v1470 = vsel %vm1124, %v1115, 0
        %v1473 = vsel %vm1128, %v1468, 0
        %1475 = vmatprep.subr.bf16.mxu0 0
        %1476 = vmatpush1.bf16.msra.mxu0 %v1473
        %1477 = vmatprep.subr.bf16.mxu0 0
        %1478 = vmatpush1.bf16.msra.mxu0 0
        %1479 = vmatprep.subr.bf16.mxu0 0
        %1480 = vmatpush1.bf16.msra.mxu0 0
        %1481 = vmatprep.subr.bf16.mxu0 0
        %1482 = vmatpush1.bf16.msra.mxu0 0
        %1483 = vmatprep.subr.bf16.mxu0 0
        %1484 = vmatpush1.bf16.msra.mxu0 0
        %1485 = vmatprep.subr.bf16.mxu0 0
        %1486 = vmatpush1.bf16.msra.mxu0 0
        %1487 = vmatprep.subr.bf16.mxu0 0
        %1488 = vmatpush1.bf16.msra.mxu0 0
        %1489 = vmatprep.subr.bf16.mxu0 0
        %1490 = vmatpush1.bf16.msra.mxu0 0
        %1491 = vmatprep.subr.bf16.mxu0 0
        %1492 = vmatpush1.bf16.msra.mxu0 0
        %1493 = vmatprep.subr.bf16.mxu0 0
        %1494 = vmatpush1.bf16.msra.mxu0 0
        %1495 = vmatprep.subr.bf16.mxu0 0
        %1496 = vmatpush1.bf16.msra.mxu0 0
        %1497 = vmatprep.subr.bf16.mxu0 0
        %1498 = vmatpush1.bf16.msra.mxu0 0
        %1499 = vmatprep.subr.bf16.mxu0 0
        %1500 = vmatpush1.bf16.msra.mxu0 0
        %1501 = vmatprep.subr.bf16.mxu0 0
        %1502 = vmatpush1.bf16.msra.mxu0 0
        %1503 = vmatprep.subr.bf16.mxu0 0
        %1504 = vmatpush1.bf16.msra.mxu0 0
        %1505 = vmatprep.subr.bf16.mxu0 0
        %1506 = vmatpush1.bf16.msra.mxu0 0
        %1507 = vmatprep.mubr.bf16.mxu0 0
        %1508 = vmatmul.mubr.bf16.gmra.mrb[0].mxu0 %v1470
        %v1509 = vpop.f32.mrb[0].mxu0
        %v1510 = vadd.f32 0.0, %v1509
        %v1511 = vpop.f32.mrb[0].mxu0
        %v1512 = vpop.f32.mrb[0].mxu0
        %v1513 = vpop.f32.mrb[0].mxu0
        %1514 = vdwg.mxu0
        %v1515 = vadd.f32 %v1463, %v1510
        %1516 = vrot.lane.b32.xlu0 %v1466, 124
        %v1517 = vpop.permute.xlu0 %1516
        %v1519 = vsel %vm1124, %v1117, 0
        %v1522 = vsel %vm1128, %v1517, 0
        %1524 = vmatprep.subr.bf16.mxu0 0
        %1525 = vmatpush1.bf16.msra.mxu0 %v1522
        %1526 = vmatprep.subr.bf16.mxu0 0
        %1527 = vmatpush1.bf16.msra.mxu0 0
        %1528 = vmatprep.subr.bf16.mxu0 0
        %1529 = vmatpush1.bf16.msra.mxu0 0
        %1530 = vmatprep.subr.bf16.mxu0 0
        %1531 = vmatpush1.bf16.msra.mxu0 0
        %1532 = vmatprep.subr.bf16.mxu0 0
        %1533 = vmatpush1.bf16.msra.mxu0 0
        %1534 = vmatprep.subr.bf16.mxu0 0
        %1535 = vmatpush1.bf16.msra.mxu0 0
        %1536 = vmatprep.subr.bf16.mxu0 0
        %1537 = vmatpush1.bf16.msra.mxu0 0
        %1538 = vmatprep.subr.bf16.mxu0 0
        %1539 = vmatpush1.bf16.msra.mxu0 0
        %1540 = vmatprep.subr.bf16.mxu0 0
        %1541 = vmatpush1.bf16.msra.mxu0 0
        %1542 = vmatprep.subr.bf16.mxu0 0
        %1543 = vmatpush1.bf16.msra.mxu0 0
        %1544 = vmatprep.subr.bf16.mxu0 0
        %1545 = vmatpush1.bf16.msra.mxu0 0
        %1546 = vmatprep.subr.bf16.mxu0 0
        %1547 = vmatpush1.bf16.msra.mxu0 0
        %1548 = vmatprep.subr.bf16.mxu0 0
        %1549 = vmatpush1.bf16.msra.mxu0 0
        %1550 = vmatprep.subr.bf16.mxu0 0
        %1551 = vmatpush1.bf16.msra.mxu0 0
        %1552 = vmatprep.subr.bf16.mxu0 0
        %1553 = vmatpush1.bf16.msra.mxu0 0
        %1554 = vmatprep.subr.bf16.mxu0 0
        %1555 = vmatpush1.bf16.msra.mxu0 0
        %1556 = vmatprep.mubr.bf16.mxu0 0
        %1557 = vmatmul.mubr.bf16.gmra.mrb[0].mxu0 %v1519
        %v1558 = vpop.f32.mrb[0].mxu0
        %v1559 = vadd.f32 0.0, %v1558
        %v1560 = vpop.f32.mrb[0].mxu0
        %v1561 = vpop.f32.mrb[0].mxu0
        %v1562 = vpop.f32.mrb[0].mxu0
        %1563 = vdwg.mxu0
        %v1564 = vadd.f32 %v1515, %v1559
        %v1565 = vunpack.c.l.bf16 %v1267
        %1567 = vset.pattern.permute.xlu0 0
        %1568 = vperm.xlu0 %1567, %v242
        %v1569 = vpop.permute.xlu0 %1568
        %v1571 = vadd.f32 %v1564, %v1569
        %1573 = vrot.lane.b32.xlu0 %v1565, 126
        %v1574 = vpop.permute.xlu0 %1573
        %v1576 = vadd.f32 %v1571, %v1574
        %v1577 = vpack.c.bf16 %v1576, %v1576
        %vm1578 = vcmask 125952
        %1579 = vst.msk [vmem:[%s231] sm:$0xf] %vm1578, %v1577
        %v1580 = vld [vmem:[%s329] sm:$0xf]
        %v1582 = vunpack.c.l.b16 %v1580
        %v1583 = vpack.c.b16 %v1582, %v1582
        %1584 = vrot.lane.b32.xlu0 %v1583, 126
        %v1585 = vpop.permute.xlu0 %1584
        %v1587 = vsel %vm1128, %v1585, 0
        %1589 = vmatprep.subr.bf16.mxu0 0
        %1590 = vmatpush1.bf16.msra.mxu0 %v1587
        %1591 = vmatprep.subr.bf16.mxu0 0
        %1592 = vmatpush1.bf16.msra.mxu0 0
        %1593 = vmatprep.subr.bf16.mxu0 0
        %1594 = vmatpush1.bf16.msra.mxu0 0
        %1595 = vmatprep.subr.bf16.mxu0 0
        %1596 = vmatpush1.bf16.msra.mxu0 0
        %1597 = vmatprep.subr.bf16.mxu0 0
        %1598 = vmatpush1.bf16.msra.mxu0 0
        %1599 = vmatprep.subr.bf16.mxu0 0
        %1600 = vmatpush1.bf16.msra.mxu0 0
        %1601 = vmatprep.subr.bf16.mxu0 0
        %1602 = vmatpush1.bf16.msra.mxu0 0
        %1603 = vmatprep.subr.bf16.mxu0 0
        %1604 = vmatpush1.bf16.msra.mxu0 0
        %1605 = vmatprep.subr.bf16.mxu0 0
        %1606 = vmatpush1.bf16.msra.mxu0 0
        %1607 = vmatprep.subr.bf16.mxu0 0
        %1608 = vmatpush1.bf16.msra.mxu0 0
        %1609 = vmatprep.subr.bf16.mxu0 0
        %1610 = vmatpush1.bf16.msra.mxu0 0
        %1611 = vmatprep.subr.bf16.mxu0 0
        %1612 = vmatpush1.bf16.msra.mxu0 0
        %1613 = vmatprep.subr.bf16.mxu0 0
        %1614 = vmatpush1.bf16.msra.mxu0 0
        %1615 = vmatprep.subr.bf16.mxu0 0
        %1616 = vmatpush1.bf16.msra.mxu0 0
        %1617 = vmatprep.subr.bf16.mxu0 0
        %1618 = vmatpush1.bf16.msra.mxu0 0
        %1619 = vmatprep.subr.bf16.mxu0 0
        %1620 = vmatpush1.bf16.msra.mxu0 0
        %1621 = vmatprep.mubr.bf16.mxu0 0
        %1622 = vmatmul.mubr.bf16.gmra.mrb[0].mxu0 %v1126
        %v1623 = vpop.f32.mrb[0].mxu0
        %v1624 = vadd.f32 0.0, %v1623
        %v1625 = vpop.f32.mrb[0].mxu0
        %v1626 = vpop.f32.mrb[0].mxu0
        %v1627 = vpop.f32.mrb[0].mxu0
        %1628 = vdwg.mxu0
        %v1630 = vsel %vm1128, %v1580, 0
        %1632 = vmatprep.subr.bf16.mxu0 0
        %1633 = vmatpush1.bf16.msra.mxu0 %v1630
        %1634 = vmatprep.subr.bf16.mxu0 0
        %1635 = vmatpush1.bf16.msra.mxu0 0
        %1636 = vmatprep.subr.bf16.mxu0 0
        %1637 = vmatpush1.bf16.msra.mxu0 0
        %1638 = vmatprep.subr.bf16.mxu0 0
        %1639 = vmatpush1.bf16.msra.mxu0 0
        %1640 = vmatprep.subr.bf16.mxu0 0
        %1641 = vmatpush1.bf16.msra.mxu0 0
        %1642 = vmatprep.subr.bf16.mxu0 0
        %1643 = vmatpush1.bf16.msra.mxu0 0
        %1644 = vmatprep.subr.bf16.mxu0 0
        %1645 = vmatpush1.bf16.msra.mxu0 0
        %1646 = vmatprep.subr.bf16.mxu0 0
        %1647 = vmatpush1.bf16.msra.mxu0 0
        %1648 = vmatprep.subr.bf16.mxu0 0
        %1649 = vmatpush1.bf16.msra.mxu0 0
        %1650 = vmatprep.subr.bf16.mxu0 0
        %1651 = vmatpush1.bf16.msra.mxu0 0
        %1652 = vmatprep.subr.bf16.mxu0 0
        %1653 = vmatpush1.bf16.msra.mxu0 0
        %1654 = vmatprep.subr.bf16.mxu0 0
        %1655 = vmatpush1.bf16.msra.mxu0 0
        %1656 = vmatprep.subr.bf16.mxu0 0
        %1657 = vmatpush1.bf16.msra.mxu0 0
        %1658 = vmatprep.subr.bf16.mxu0 0
        %1659 = vmatpush1.bf16.msra.mxu0 0
        %1660 = vmatprep.subr.bf16.mxu0 0
        %1661 = vmatpush1.bf16.msra.mxu0 0
        %1662 = vmatprep.subr.bf16.mxu0 0
        %1663 = vmatpush1.bf16.msra.mxu0 0
        %1664 = vmatprep.mubr.bf16.mxu0 0
        %1665 = vmatmul.mubr.bf16.gmra.mrb[0].mxu0 %v1173
        %v1666 = vpop.f32.mrb[0].mxu0
        %v1667 = vadd.f32 %v1624, %v1666
        %v1668 = vpop.f32.mrb[0].mxu0
        %v1669 = vpop.f32.mrb[0].mxu0
        %v1670 = vpop.f32.mrb[0].mxu0
        %1671 = vdwg.mxu0
        %1672 = vrot.lane.b32.xlu0 %v1583, 124
        %v1673 = vpop.permute.xlu0 %1672
        %v1675 = vsel %vm1128, %v1673, 0
        %1677 = vmatprep.subr.bf16.mxu0 0
        %1678 = vmatpush1.bf16.msra.mxu0 %v1675
        %1679 = vmatprep.subr.bf16.mxu0 0
        %1680 = vmatpush1.bf16.msra.mxu0 0
        %1681 = vmatprep.subr.bf16.mxu0 0
        %1682 = vmatpush1.bf16.msra.mxu0 0
        %1683 = vmatprep.subr.bf16.mxu0 0
        %1684 = vmatpush1.bf16.msra.mxu0 0
        %1685 = vmatprep.subr.bf16.mxu0 0
        %1686 = vmatpush1.bf16.msra.mxu0 0
        %1687 = vmatprep.subr.bf16.mxu0 0
        %1688 = vmatpush1.bf16.msra.mxu0 0
        %1689 = vmatprep.subr.bf16.mxu0 0
        %1690 = vmatpush1.bf16.msra.mxu0 0
        %1691 = vmatprep.subr.bf16.mxu0 0
        %1692 = vmatpush1.bf16.msra.mxu0 0
        %1693 = vmatprep.subr.bf16.mxu0 0
        %1694 = vmatpush1.bf16.msra.mxu0 0
        %1695 = vmatprep.subr.bf16.mxu0 0
        %1696 = vmatpush1.bf16.msra.mxu0 0
        %1697 = vmatprep.subr.bf16.mxu0 0
        %1698 = vmatpush1.bf16.msra.mxu0 0
        %1699 = vmatprep.subr.bf16.mxu0 0
        %1700 = vmatpush1.bf16.msra.mxu0 0
        %1701 = vmatprep.subr.bf16.mxu0 0
        %1702 = vmatpush1.bf16.msra.mxu0 0
        %1703 = vmatprep.subr.bf16.mxu0 0
        %1704 = vmatpush1.bf16.msra.mxu0 0
        %1705 = vmatprep.subr.bf16.mxu0 0
        %1706 = vmatpush1.bf16.msra.mxu0 0
        %1707 = vmatprep.subr.bf16.mxu0 0
        %1708 = vmatpush1.bf16.msra.mxu0 0
        %1709 = vmatprep.mubr.bf16.mxu0 0
        %1710 = vmatmul.mubr.bf16.gmra.mrb[0].mxu0 %v1221
        %v1711 = vpop.f32.mrb[0].mxu0
        %v1712 = vadd.f32 0.0, %v1711
        %v1713 = vpop.f32.mrb[0].mxu0
        %v1714 = vpop.f32.mrb[0].mxu0
        %v1715 = vpop.f32.mrb[0].mxu0
        %1716 = vdwg.mxu0
        %v1717 = vadd.f32 %v1667, %v1712
        %v1718 = vld [vmem:[%s471] sm:$0xf]
        %v1720 = vsel %vm1128, %v1718, 0
        %1722 = vmatprep.subr.bf16.mxu0 0
        %1723 = vmatpush1.bf16.msra.mxu0 %v1720
        %1724 = vmatprep.subr.bf16.mxu0 0
        %1725 = vmatpush1.bf16.msra.mxu0 0
        %1726 = vmatprep.subr.bf16.mxu0 0
        %1727 = vmatpush1.bf16.msra.mxu0 0
        %1728 = vmatprep.subr.bf16.mxu0 0
        %1729 = vmatpush1.bf16.msra.mxu0 0
        %1730 = vmatprep.subr.bf16.mxu0 0
        %1731 = vmatpush1.bf16.msra.mxu0 0
        %1732 = vmatprep.subr.bf16.mxu0 0
        %1733 = vmatpush1.bf16.msra.mxu0 0
        %1734 = vmatprep.subr.bf16.mxu0 0
        %1735 = vmatpush1.bf16.msra.mxu0 0
        %1736 = vmatprep.subr.bf16.mxu0 0
        %1737 = vmatpush1.bf16.msra.mxu0 0
        %1738 = vmatprep.subr.bf16.mxu0 0
        %1739 = vmatpush1.bf16.msra.mxu0 0
        %1740 = vmatprep.subr.bf16.mxu0 0
        %1741 = vmatpush1.bf16.msra.mxu0 0
        %1742 = vmatprep.subr.bf16.mxu0 0
        %1743 = vmatpush1.bf16.msra.mxu0 0
        %1744 = vmatprep.subr.bf16.mxu0 0
        %1745 = vmatpush1.bf16.msra.mxu0 0
        %1746 = vmatprep.subr.bf16.mxu0 0
        %1747 = vmatpush1.bf16.msra.mxu0 0
        %1748 = vmatprep.subr.bf16.mxu0 0
        %1749 = vmatpush1.bf16.msra.mxu0 0
        %1750 = vmatprep.subr.bf16.mxu0 0
        %1751 = vmatpush1.bf16.msra.mxu0 0
        %1752 = vmatprep.subr.bf16.mxu0 0
        %1753 = vmatpush1.bf16.msra.mxu0 0
        %1754 = vmatprep.mubr.bf16.mxu0 0
        %1755 = vmatmul.mubr.bf16.gmra.mrb[0].mxu0 %v1269
        %v1756 = vpop.f32.mrb[0].mxu0
        %v1757 = vadd.f32 0.0, %v1756
        %v1758 = vpop.f32.mrb[0].mxu0
        %v1759 = vpop.f32.mrb[0].mxu0
        %v1760 = vpop.f32.mrb[0].mxu0
        %1761 = vdwg.mxu0
        %v1762 = vadd.f32 %v1717, %v1757
        %v1764 = vunpack.c.l.b16 %v1718
        %v1765 = vpack.c.b16 %v1764, %v1764
        %1766 = vrot.lane.b32.xlu0 %v1765, 126
        %v1767 = vpop.permute.xlu0 %1766
        %v1769 = vsel %vm1128, %v1767, 0
        %1771 = vmatprep.subr.bf16.mxu0 0
        %1772 = vmatpush1.bf16.msra.mxu0 %v1769
        %1773 = vmatprep.subr.bf16.mxu0 0
        %1774 = vmatpush1.bf16.msra.mxu0 0
        %1775 = vmatprep.subr.bf16.mxu0 0
        %1776 = vmatpush1.bf16.msra.mxu0 0
        %1777 = vmatprep.subr.bf16.mxu0 0
        %1778 = vmatpush1.bf16.msra.mxu0 0
        %1779 = vmatprep.subr.bf16.mxu0 0
        %1780 = vmatpush1.bf16.msra.mxu0 0
        %1781 = vmatprep.subr.bf16.mxu0 0
        %1782 = vmatpush1.bf16.msra.mxu0 0
        %1783 = vmatprep.subr.bf16.mxu0 0
        %1784 = vmatpush1.bf16.msra.mxu0 0
        %1785 = vmatprep.subr.bf16.mxu0 0
        %1786 = vmatpush1.bf16.msra.mxu0 0
        %1787 = vmatprep.subr.bf16.mxu0 0
        %1788 = vmatpush1.bf16.msra.mxu0 0
        %1789 = vmatprep.subr.bf16.mxu0 0
        %1790 = vmatpush1.bf16.msra.mxu0 0
        %1791 = vmatprep.subr.bf16.mxu0 0
        %1792 = vmatpush1.bf16.msra.mxu0 0
        %1793 = vmatprep.subr.bf16.mxu0 0
        %1794 = vmatpush1.bf16.msra.mxu0 0
        %1795 = vmatprep.subr.bf16.mxu0 0
        %1796 = vmatpush1.bf16.msra.mxu0 0
        %1797 = vmatprep.subr.bf16.mxu0 0
        %1798 = vmatpush1.bf16.msra.mxu0 0
        %1799 = vmatprep.subr.bf16.mxu0 0
        %1800 = vmatpush1.bf16.msra.mxu0 0
        %1801 = vmatprep.subr.bf16.mxu0 0
        %1802 = vmatpush1.bf16.msra.mxu0 0
        %1803 = vmatprep.mubr.bf16.mxu0 0
        %1804 = vmatmul.mubr.bf16.gmra.mrb[0].mxu0 %v1321
        %v1805 = vpop.f32.mrb[0].mxu0
        %v1806 = vadd.f32 0.0, %v1805
        %v1807 = vpop.f32.mrb[0].mxu0
        %v1808 = vpop.f32.mrb[0].mxu0
        %v1809 = vpop.f32.mrb[0].mxu0
        %1810 = vdwg.mxu0
        %v1811 = vadd.f32 %v1762, %v1806
        %1812 = vrot.lane.b32.xlu0 %v1765, 124
        %v1813 = vpop.permute.xlu0 %1812
        %v1815 = vsel %vm1128, %v1813, 0
        %1817 = vmatprep.subr.bf16.mxu0 0
        %1818 = vmatpush1.bf16.msra.mxu0 %v1815
        %1819 = vmatprep.subr.bf16.mxu0 0
        %1820 = vmatpush1.bf16.msra.mxu0 0
        %1821 = vmatprep.subr.bf16.mxu0 0
        %1822 = vmatpush1.bf16.msra.mxu0 0
        %1823 = vmatprep.subr.bf16.mxu0 0
        %1824 = vmatpush1.bf16.msra.mxu0 0
        %1825 = vmatprep.subr.bf16.mxu0 0
        %1826 = vmatpush1.bf16.msra.mxu0 0
        %1827 = vmatprep.subr.bf16.mxu0 0
        %1828 = vmatpush1.bf16.msra.mxu0 0
        %1829 = vmatprep.subr.bf16.mxu0 0
        %1830 = vmatpush1.bf16.msra.mxu0 0
        %1831 = vmatprep.subr.bf16.mxu0 0
        %1832 = vmatpush1.bf16.msra.mxu0 0
        %1833 = vmatprep.subr.bf16.mxu0 0
        %1834 = vmatpush1.bf16.msra.mxu0 0
        %1835 = vmatprep.subr.bf16.mxu0 0
        %1836 = vmatpush1.bf16.msra.mxu0 0
        %1837 = vmatprep.subr.bf16.mxu0 0
        %1838 = vmatpush1.bf16.msra.mxu0 0
        %1839 = vmatprep.subr.bf16.mxu0 0
        %1840 = vmatpush1.bf16.msra.mxu0 0
        %1841 = vmatprep.subr.bf16.mxu0 0
        %1842 = vmatpush1.bf16.msra.mxu0 0
        %1843 = vmatprep.subr.bf16.mxu0 0
        %1844 = vmatpush1.bf16.msra.mxu0 0
        %1845 = vmatprep.subr.bf16.mxu0 0
        %1846 = vmatpush1.bf16.msra.mxu0 0
        %1847 = vmatprep.subr.bf16.mxu0 0
        %1848 = vmatpush1.bf16.msra.mxu0 0
        %1849 = vmatprep.mubr.bf16.mxu0 0
        %1850 = vmatmul.mubr.bf16.gmra.mrb[0].mxu0 %v1370
        %v1851 = vpop.f32.mrb[0].mxu0
        %v1852 = vadd.f32 0.0, %v1851
        %v1853 = vpop.f32.mrb[0].mxu0
        %v1854 = vpop.f32.mrb[0].mxu0
        %v1855 = vpop.f32.mrb[0].mxu0
        %1856 = vdwg.mxu0
        %v1857 = vadd.f32 %v1811, %v1852
        %v1858 = vld [vmem:[%s613] sm:$0xf]
        %v1860 = vsel %vm1128, %v1858, 0
        %1862 = vmatprep.subr.bf16.mxu0 0
        %1863 = vmatpush1.bf16.msra.mxu0 %v1860
        %1864 = vmatprep.subr.bf16.mxu0 0
        %1865 = vmatpush1.bf16.msra.mxu0 0
        %1866 = vmatprep.subr.bf16.mxu0 0
        %1867 = vmatpush1.bf16.msra.mxu0 0
        %1868 = vmatprep.subr.bf16.mxu0 0
        %1869 = vmatpush1.bf16.msra.mxu0 0
        %1870 = vmatprep.subr.bf16.mxu0 0
        %1871 = vmatpush1.bf16.msra.mxu0 0
        %1872 = vmatprep.subr.bf16.mxu0 0
        %1873 = vmatpush1.bf16.msra.mxu0 0
        %1874 = vmatprep.subr.bf16.mxu0 0
        %1875 = vmatpush1.bf16.msra.mxu0 0
        %1876 = vmatprep.subr.bf16.mxu0 0
        %1877 = vmatpush1.bf16.msra.mxu0 0
        %1878 = vmatprep.subr.bf16.mxu0 0
        %1879 = vmatpush1.bf16.msra.mxu0 0
        %1880 = vmatprep.subr.bf16.mxu0 0
        %1881 = vmatpush1.bf16.msra.mxu0 0
        %1882 = vmatprep.subr.bf16.mxu0 0
        %1883 = vmatpush1.bf16.msra.mxu0 0
        %1884 = vmatprep.subr.bf16.mxu0 0
        %1885 = vmatpush1.bf16.msra.mxu0 0
        %1886 = vmatprep.subr.bf16.mxu0 0
        %1887 = vmatpush1.bf16.msra.mxu0 0
        %1888 = vmatprep.subr.bf16.mxu0 0
        %1889 = vmatpush1.bf16.msra.mxu0 0
        %1890 = vmatprep.subr.bf16.mxu0 0
        %1891 = vmatpush1.bf16.msra.mxu0 0
        %1892 = vmatprep.subr.bf16.mxu0 0
        %1893 = vmatpush1.bf16.msra.mxu0 0
        %1894 = vmatprep.mubr.bf16.mxu0 0
        %1895 = vmatmul.mubr.bf16.gmra.mrb[0].mxu0 %v1418
        %v1896 = vpop.f32.mrb[0].mxu0
        %v1897 = vadd.f32 0.0, %v1896
        %v1898 = vpop.f32.mrb[0].mxu0
        %v1899 = vpop.f32.mrb[0].mxu0
        %v1900 = vpop.f32.mrb[0].mxu0
        %1901 = vdwg.mxu0
        %v1902 = vadd.f32 %v1857, %v1897
        %v1904 = vunpack.c.l.b16 %v1858
        %v1905 = vpack.c.b16 %v1904, %v1904
        %1906 = vrot.lane.b32.xlu0 %v1905, 126
        %v1907 = vpop.permute.xlu0 %1906
        %v1909 = vsel %vm1128, %v1907, 0
        %1911 = vmatprep.subr.bf16.mxu0 0
        %1912 = vmatpush1.bf16.msra.mxu0 %v1909
        %1913 = vmatprep.subr.bf16.mxu0 0
        %1914 = vmatpush1.bf16.msra.mxu0 0
        %1915 = vmatprep.subr.bf16.mxu0 0
        %1916 = vmatpush1.bf16.msra.mxu0 0
        %1917 = vmatprep.subr.bf16.mxu0 0
        %1918 = vmatpush1.bf16.msra.mxu0 0
        %1919 = vmatprep.subr.bf16.mxu0 0
        %1920 = vmatpush1.bf16.msra.mxu0 0
        %1921 = vmatprep.subr.bf16.mxu0 0
        %1922 = vmatpush1.bf16.msra.mxu0 0
        %1923 = vmatprep.subr.bf16.mxu0 0
        %1924 = vmatpush1.bf16.msra.mxu0 0
        %1925 = vmatprep.subr.bf16.mxu0 0
        %1926 = vmatpush1.bf16.msra.mxu0 0
        %1927 = vmatprep.subr.bf16.mxu0 0
        %1928 = vmatpush1.bf16.msra.mxu0 0
        %1929 = vmatprep.subr.bf16.mxu0 0
        %1930 = vmatpush1.bf16.msra.mxu0 0
        %1931 = vmatprep.subr.bf16.mxu0 0
        %1932 = vmatpush1.bf16.msra.mxu0 0
        %1933 = vmatprep.subr.bf16.mxu0 0
        %1934 = vmatpush1.bf16.msra.mxu0 0
        %1935 = vmatprep.subr.bf16.mxu0 0
        %1936 = vmatpush1.bf16.msra.mxu0 0
        %1937 = vmatprep.subr.bf16.mxu0 0
        %1938 = vmatpush1.bf16.msra.mxu0 0
        %1939 = vmatprep.subr.bf16.mxu0 0
        %1940 = vmatpush1.bf16.msra.mxu0 0
        %1941 = vmatprep.subr.bf16.mxu0 0
        %1942 = vmatpush1.bf16.msra.mxu0 0
        %1943 = vmatprep.mubr.bf16.mxu0 0
        %1944 = vmatmul.mubr.bf16.gmra.mrb[0].mxu0 %v1470
        %v1945 = vpop.f32.mrb[0].mxu0
        %v1946 = vadd.f32 0.0, %v1945
        %v1947 = vpop.f32.mrb[0].mxu0
        %v1948 = vpop.f32.mrb[0].mxu0
        %v1949 = vpop.f32.mrb[0].mxu0
        %1950 = vdwg.mxu0
        %v1951 = vadd.f32 %v1902, %v1946
        %1952 = vrot.lane.b32.xlu0 %v1905, 124
        %v1953 = vpop.permute.xlu0 %1952
        %v1955 = vsel %vm1128, %v1953, 0
        %1957 = vmatprep.subr.bf16.mxu0 0
        %1958 = vmatpush1.bf16.msra.mxu0 %v1955
        %1959 = vmatprep.subr.bf16.mxu0 0
        %1960 = vmatpush1.bf16.msra.mxu0 0
        %1961 = vmatprep.subr.bf16.mxu0 0
        %1962 = vmatpush1.bf16.msra.mxu0 0
        %1963 = vmatprep.subr.bf16.mxu0 0
        %1964 = vmatpush1.bf16.msra.mxu0 0
        %1965 = vmatprep.subr.bf16.mxu0 0
        %1966 = vmatpush1.bf16.msra.mxu0 0
        %1967 = vmatprep.subr.bf16.mxu0 0
        %1968 = vmatpush1.bf16.msra.mxu0 0
        %1969 = vmatprep.subr.bf16.mxu0 0
        %1970 = vmatpush1.bf16.msra.mxu0 0
        %1971 = vmatprep.subr.bf16.mxu0 0
        %1972 = vmatpush1.bf16.msra.mxu0 0
        %1973 = vmatprep.subr.bf16.mxu0 0
        %1974 = vmatpush1.bf16.msra.mxu0 0
        %1975 = vmatprep.subr.bf16.mxu0 0
        %1976 = vmatpush1.bf16.msra.mxu0 0
        %1977 = vmatprep.subr.bf16.mxu0 0
        %1978 = vmatpush1.bf16.msra.mxu0 0
        %1979 = vmatprep.subr.bf16.mxu0 0
        %1980 = vmatpush1.bf16.msra.mxu0 0
        %1981 = vmatprep.subr.bf16.mxu0 0
        %1982 = vmatpush1.bf16.msra.mxu0 0
        %1983 = vmatprep.subr.bf16.mxu0 0
        %1984 = vmatpush1.bf16.msra.mxu0 0
        %1985 = vmatprep.subr.bf16.mxu0 0
        %1986 = vmatpush1.bf16.msra.mxu0 0
        %1987 = vmatprep.subr.bf16.mxu0 0
        %1988 = vmatpush1.bf16.msra.mxu0 0
        %1989 = vmatprep.mubr.bf16.mxu0 0
        %1990 = vmatmul.mubr.bf16.gmra.mrb[0].mxu0 %v1519
        %v1991 = vpop.f32.mrb[0].mxu0
        %v1992 = vadd.f32 0.0, %v1991
        %v1993 = vpop.f32.mrb[0].mxu0
        %v1994 = vpop.f32.mrb[0].mxu0
        %v1995 = vpop.f32.mrb[0].mxu0
        %1996 = vdwg.mxu0
        %v1997 = vadd.f32 %v1951, %v1992
        %v1998 = vunpack.c.l.bf16 %v1718
        %v1999 = vadd.f32 %v1997, %v1569
        %2001 = vrot.lane.b32.xlu0 %v1998, 126
        %v2002 = vpop.permute.xlu0 %2001
        %v2004 = vadd.f32 %v1999, %v2002
        %v2005 = vpack.c.bf16 %v2004, %v2004
        %s2006 = scalar_lea.vmem %s231, 4 [#allocation3]
        %2007 = vst.msk [vmem:[%s2006] sm:$0xf] %vm1578, %v2005
        %v2008 = vld [vmem:[%s400] sm:$0xf]
        %v2010 = vunpack.c.l.b16 %v2008
        %v2011 = vpack.c.b16 %v2010, %v2010
        %2012 = vrot.lane.b32.xlu0 %v2011, 126
        %v2013 = vpop.permute.xlu0 %2012
        %v2015 = vsel %vm1128, %v2013, 0
        %2017 = vmatprep.subr.bf16.mxu0 0
        %2018 = vmatpush1.bf16.msra.mxu0 %v2015
        %2019 = vmatprep.subr.bf16.mxu0 0
        %2020 = vmatpush1.bf16.msra.mxu0 0
        %2021 = vmatprep.subr.bf16.mxu0 0
        %2022 = vmatpush1.bf16.msra.mxu0 0
        %2023 = vmatprep.subr.bf16.mxu0 0
        %2024 = vmatpush1.bf16.msra.mxu0 0
        %2025 = vmatprep.subr.bf16.mxu0 0
        %2026 = vmatpush1.bf16.msra.mxu0 0
        %2027 = vmatprep.subr.bf16.mxu0 0
        %2028 = vmatpush1.bf16.msra.mxu0 0
        %2029 = vmatprep.subr.bf16.mxu0 0
        %2030 = vmatpush1.bf16.msra.mxu0 0
        %2031 = vmatprep.subr.bf16.mxu0 0
        %2032 = vmatpush1.bf16.msra.mxu0 0
        %2033 = vmatprep.subr.bf16.mxu0 0
        %2034 = vmatpush1.bf16.msra.mxu0 0
        %2035 = vmatprep.subr.bf16.mxu0 0
        %2036 = vmatpush1.bf16.msra.mxu0 0
        %2037 = vmatprep.subr.bf16.mxu0 0
        %2038 = vmatpush1.bf16.msra.mxu0 0
        %2039 = vmatprep.subr.bf16.mxu0 0
        %2040 = vmatpush1.bf16.msra.mxu0 0
        %2041 = vmatprep.subr.bf16.mxu0 0
        %2042 = vmatpush1.bf16.msra.mxu0 0
        %2043 = vmatprep.subr.bf16.mxu0 0
        %2044 = vmatpush1.bf16.msra.mxu0 0
        %2045 = vmatprep.subr.bf16.mxu0 0
        %2046 = vmatpush1.bf16.msra.mxu0 0
        %2047 = vmatprep.subr.bf16.mxu0 0
        %2048 = vmatpush1.bf16.msra.mxu0 0
        %2049 = vmatprep.mubr.bf16.mxu0 0
        %2050 = vmatmul.mubr.bf16.gmra.mrb[0].mxu0 %v1126
        %v2051 = vpop.f32.mrb[0].mxu0
        %v2052 = vadd.f32 0.0, %v2051
        %v2053 = vpop.f32.mrb[0].mxu0
        %v2054 = vpop.f32.mrb[0].mxu0
        %v2055 = vpop.f32.mrb[0].mxu0
        %2056 = vdwg.mxu0
        %v2058 = vsel %vm1128, %v2008, 0
        %2060 = vmatprep.subr.bf16.mxu0 0
        %2061 = vmatpush1.bf16.msra.mxu0 %v2058
        %2062 = vmatprep.subr.bf16.mxu0 0
        %2063 = vmatpush1.bf16.msra.mxu0 0
        %2064 = vmatprep.subr.bf16.mxu0 0
        %2065 = vmatpush1.bf16.msra.mxu0 0
        %2066 = vmatprep.subr.bf16.mxu0 0
        %2067 = vmatpush1.bf16.msra.mxu0 0
        %2068 = vmatprep.subr.bf16.mxu0 0
        %2069 = vmatpush1.bf16.msra.mxu0 0
        %2070 = vmatprep.subr.bf16.mxu0 0
        %2071 = vmatpush1.bf16.msra.mxu0 0
        %2072 = vmatprep.subr.bf16.mxu0 0
        %2073 = vmatpush1.bf16.msra.mxu0 0
        %2074 = vmatprep.subr.bf16.mxu0 0
        %2075 = vmatpush1.bf16.msra.mxu0 0
        %2076 = vmatprep.subr.bf16.mxu0 0
        %2077 = vmatpush1.bf16.msra.mxu0 0
        %2078 = vmatprep.subr.bf16.mxu0 0
        %2079 = vmatpush1.bf16.msra.mxu0 0
        %2080 = vmatprep.subr.bf16.mxu0 0
        %2081 = vmatpush1.bf16.msra.mxu0 0
        %2082 = vmatprep.subr.bf16.mxu0 0
        %2083 = vmatpush1.bf16.msra.mxu0 0
        %2084 = vmatprep.subr.bf16.mxu0 0
        %2085 = vmatpush1.bf16.msra.mxu0 0
        %2086 = vmatprep.subr.bf16.mxu0 0
        %2087 = vmatpush1.bf16.msra.mxu0 0
        %2088 = vmatprep.subr.bf16.mxu0 0
        %2089 = vmatpush1.bf16.msra.mxu0 0
        %2090 = vmatprep.subr.bf16.mxu0 0
        %2091 = vmatpush1.bf16.msra.mxu0 0
        %2092 = vmatprep.mubr.bf16.mxu0 0
        %2093 = vmatmul.mubr.bf16.gmra.mrb[0].mxu0 %v1173
        %v2094 = vpop.f32.mrb[0].mxu0
        %v2095 = vadd.f32 %v2052, %v2094
        %v2096 = vpop.f32.mrb[0].mxu0
        %v2097 = vpop.f32.mrb[0].mxu0
        %v2098 = vpop.f32.mrb[0].mxu0
        %2099 = vdwg.mxu0
        %2100 = vrot.lane.b32.xlu0 %v2011, 124
        %v2101 = vpop.permute.xlu0 %2100
        %v2103 = vsel %vm1128, %v2101, 0
        %2105 = vmatprep.subr.bf16.mxu0 0
        %2106 = vmatpush1.bf16.msra.mxu0 %v2103
        %2107 = vmatprep.subr.bf16.mxu0 0
        %2108 = vmatpush1.bf16.msra.mxu0 0
        %2109 = vmatprep.subr.bf16.mxu0 0
        %2110 = vmatpush1.bf16.msra.mxu0 0
        %2111 = vmatprep.subr.bf16.mxu0 0
        %2112 = vmatpush1.bf16.msra.mxu0 0
        %2113 = vmatprep.subr.bf16.mxu0 0
        %2114 = vmatpush1.bf16.msra.mxu0 0
        %2115 = vmatprep.subr.bf16.mxu0 0
        %2116 = vmatpush1.bf16.msra.mxu0 0
        %2117 = vmatprep.subr.bf16.mxu0 0
        %2118 = vmatpush1.bf16.msra.mxu0 0
        %2119 = vmatprep.subr.bf16.mxu0 0
        %2120 = vmatpush1.bf16.msra.mxu0 0
        %2121 = vmatprep.subr.bf16.mxu0 0
        %2122 = vmatpush1.bf16.msra.mxu0 0
        %2123 = vmatprep.subr.bf16.mxu0 0
        %2124 = vmatpush1.bf16.msra.mxu0 0
        %2125 = vmatprep.subr.bf16.mxu0 0
        %2126 = vmatpush1.bf16.msra.mxu0 0
        %2127 = vmatprep.subr.bf16.mxu0 0
        %2128 = vmatpush1.bf16.msra.mxu0 0
        %2129 = vmatprep.subr.bf16.mxu0 0
        %2130 = vmatpush1.bf16.msra.mxu0 0
        %2131 = vmatprep.subr.bf16.mxu0 0
        %2132 = vmatpush1.bf16.msra.mxu0 0
        %2133 = vmatprep.subr.bf16.mxu0 0
        %2134 = vmatpush1.bf16.msra.mxu0 0
        %2135 = vmatprep.subr.bf16.mxu0 0
        %2136 = vmatpush1.bf16.msra.mxu0 0
        %2137 = vmatprep.mubr.bf16.mxu0 0
        %2138 = vmatmul.mubr.bf16.gmra.mrb[0].mxu0 %v1221
        %v2139 = vpop.f32.mrb[0].mxu0
        %v2140 = vadd.f32 0.0, %v2139
        %v2141 = vpop.f32.mrb[0].mxu0
        %v2142 = vpop.f32.mrb[0].mxu0
        %v2143 = vpop.f32.mrb[0].mxu0
        %2144 = vdwg.mxu0
        %v2145 = vadd.f32 %v2095, %v2140
        %v2146 = vld [vmem:[%s542] sm:$0xf]
        %v2148 = vsel %vm1128, %v2146, 0
        %2150 = vmatprep.subr.bf16.mxu0 0
        %2151 = vmatpush1.bf16.msra.mxu0 %v2148
        %2152 = vmatprep.subr.bf16.mxu0 0
        %2153 = vmatpush1.bf16.msra.mxu0 0
        %2154 = vmatprep.subr.bf16.mxu0 0
        %2155 = vmatpush1.bf16.msra.mxu0 0
        %2156 = vmatprep.subr.bf16.mxu0 0
        %2157 = vmatpush1.bf16.msra.mxu0 0
        %2158 = vmatprep.subr.bf16.mxu0 0
        %2159 = vmatpush1.bf16.msra.mxu0 0
        %2160 = vmatprep.subr.bf16.mxu0 0
        %2161 = vmatpush1.bf16.msra.mxu0 0
        %2162 = vmatprep.subr.bf16.mxu0 0
        %2163 = vmatpush1.bf16.msra.mxu0 0
        %2164 = vmatprep.subr.bf16.mxu0 0
        %2165 = vmatpush1.bf16.msra.mxu0 0
        %2166 = vmatprep.subr.bf16.mxu0 0
        %2167 = vmatpush1.bf16.msra.mxu0 0
        %2168 = vmatprep.subr.bf16.mxu0 0
        %2169 = vmatpush1.bf16.msra.mxu0 0
        %2170 = vmatprep.subr.bf16.mxu0 0
        %2171 = vmatpush1.bf16.msra.mxu0 0
        %2172 = vmatprep.subr.bf16.mxu0 0
        %2173 = vmatpush1.bf16.msra.mxu0 0
        %2174 = vmatprep.subr.bf16.mxu0 0
        %2175 = vmatpush1.bf16.msra.mxu0 0
        %2176 = vmatprep.subr.bf16.mxu0 0
        %2177 = vmatpush1.bf16.msra.mxu0 0
        %2178 = vmatprep.subr.bf16.mxu0 0
        %2179 = vmatpush1.bf16.msra.mxu0 0
        %2180 = vmatprep.subr.bf16.mxu0 0
        %2181 = vmatpush1.bf16.msra.mxu0 0
        %2182 = vmatprep.mubr.bf16.mxu0 0
        %2183 = vmatmul.mubr.bf16.gmra.mrb[0].mxu0 %v1269
        %v2184 = vpop.f32.mrb[0].mxu0
        %v2185 = vadd.f32 0.0, %v2184
        %v2186 = vpop.f32.mrb[0].mxu0
        %v2187 = vpop.f32.mrb[0].mxu0
        %v2188 = vpop.f32.mrb[0].mxu0
        %2189 = vdwg.mxu0
        %v2190 = vadd.f32 %v2145, %v2185
        %v2192 = vunpack.c.l.b16 %v2146
        %v2193 = vpack.c.b16 %v2192, %v2192
        %2194 = vrot.lane.b32.xlu0 %v2193, 126
        %v2195 = vpop.permute.xlu0 %2194
        %v2197 = vsel %vm1128, %v2195, 0
        %2199 = vmatprep.subr.bf16.mxu0 0
        %2200 = vmatpush1.bf16.msra.mxu0 %v2197
        %2201 = vmatprep.subr.bf16.mxu0 0
        %2202 = vmatpush1.bf16.msra.mxu0 0
        %2203 = vmatprep.subr.bf16.mxu0 0
        %2204 = vmatpush1.bf16.msra.mxu0 0
        %2205 = vmatprep.subr.bf16.mxu0 0
        %2206 = vmatpush1.bf16.msra.mxu0 0
        %2207 = vmatprep.subr.bf16.mxu0 0
        %2208 = vmatpush1.bf16.msra.mxu0 0
        %2209 = vmatprep.subr.bf16.mxu0 0
        %2210 = vmatpush1.bf16.msra.mxu0 0
        %2211 = vmatprep.subr.bf16.mxu0 0
        %2212 = vmatpush1.bf16.msra.mxu0 0
        %2213 = vmatprep.subr.bf16.mxu0 0
        %2214 = vmatpush1.bf16.msra.mxu0 0
        %2215 = vmatprep.subr.bf16.mxu0 0
        %2216 = vmatpush1.bf16.msra.mxu0 0
        %2217 = vmatprep.subr.bf16.mxu0 0
        %2218 = vmatpush1.bf16.msra.mxu0 0
        %2219 = vmatprep.subr.bf16.mxu0 0
        %2220 = vmatpush1.bf16.msra.mxu0 0
        %2221 = vmatprep.subr.bf16.mxu0 0
        %2222 = vmatpush1.bf16.msra.mxu0 0
        %2223 = vmatprep.subr.bf16.mxu0 0
        %2224 = vmatpush1.bf16.msra.mxu0 0
        %2225 = vmatprep.subr.bf16.mxu0 0
        %2226 = vmatpush1.bf16.msra.mxu0 0
        %2227 = vmatprep.subr.bf16.mxu0 0
        %2228 = vmatpush1.bf16.msra.mxu0 0
        %2229 = vmatprep.subr.bf16.mxu0 0
        %2230 = vmatpush1.bf16.msra.mxu0 0
        %2231 = vmatprep.mubr.bf16.mxu0 0
        %2232 = vmatmul.mubr.bf16.gmra.mrb[0].mxu0 %v1321
        %v2233 = vpop.f32.mrb[0].mxu0
        %v2234 = vadd.f32 0.0, %v2233
        %v2235 = vpop.f32.mrb[0].mxu0
        %v2236 = vpop.f32.mrb[0].mxu0
        %v2237 = vpop.f32.mrb[0].mxu0
        %2238 = vdwg.mxu0
        %v2239 = vadd.f32 %v2190, %v2234
        %2240 = vrot.lane.b32.xlu0 %v2193, 124
        %v2241 = vpop.permute.xlu0 %2240
        %v2243 = vsel %vm1128, %v2241, 0
        %2245 = vmatprep.subr.bf16.mxu0 0
        %2246 = vmatpush1.bf16.msra.mxu0 %v2243
        %2247 = vmatprep.subr.bf16.mxu0 0
        %2248 = vmatpush1.bf16.msra.mxu0 0
        %2249 = vmatprep.subr.bf16.mxu0 0
        %2250 = vmatpush1.bf16.msra.mxu0 0
        %2251 = vmatprep.subr.bf16.mxu0 0
        %2252 = vmatpush1.bf16.msra.mxu0 0
        %2253 = vmatprep.subr.bf16.mxu0 0
        %2254 = vmatpush1.bf16.msra.mxu0 0
        %2255 = vmatprep.subr.bf16.mxu0 0
        %2256 = vmatpush1.bf16.msra.mxu0 0
        %2257 = vmatprep.subr.bf16.mxu0 0
        %2258 = vmatpush1.bf16.msra.mxu0 0
        %2259 = vmatprep.subr.bf16.mxu0 0
        %2260 = vmatpush1.bf16.msra.mxu0 0
        %2261 = vmatprep.subr.bf16.mxu0 0
        %2262 = vmatpush1.bf16.msra.mxu0 0
        %2263 = vmatprep.subr.bf16.mxu0 0
        %2264 = vmatpush1.bf16.msra.mxu0 0
        %2265 = vmatprep.subr.bf16.mxu0 0
        %2266 = vmatpush1.bf16.msra.mxu0 0
        %2267 = vmatprep.subr.bf16.mxu0 0
        %2268 = vmatpush1.bf16.msra.mxu0 0
        %2269 = vmatprep.subr.bf16.mxu0 0
        %2270 = vmatpush1.bf16.msra.mxu0 0
        %2271 = vmatprep.subr.bf16.mxu0 0
        %2272 = vmatpush1.bf16.msra.mxu0 0
        %2273 = vmatprep.subr.bf16.mxu0 0
        %2274 = vmatpush1.bf16.msra.mxu0 0
        %2275 = vmatprep.subr.bf16.mxu0 0
        %2276 = vmatpush1.bf16.msra.mxu0 0
        %2277 = vmatprep.mubr.bf16.mxu0 0
        %2278 = vmatmul.mubr.bf16.gmra.mrb[0].mxu0 %v1370
        %v2279 = vpop.f32.mrb[0].mxu0
        %v2280 = vadd.f32 0.0, %v2279
        %v2281 = vpop.f32.mrb[0].mxu0
        %v2282 = vpop.f32.mrb[0].mxu0
        %v2283 = vpop.f32.mrb[0].mxu0
        %2284 = vdwg.mxu0
        %v2285 = vadd.f32 %v2239, %v2280
        %v2286 = vld [vmem:[%s684] sm:$0xf]
        %v2288 = vsel %vm1128, %v2286, 0
        %2290 = vmatprep.subr.bf16.mxu0 0
        %2291 = vmatpush1.bf16.msra.mxu0 %v2288
        %2292 = vmatprep.subr.bf16.mxu0 0
        %2293 = vmatpush1.bf16.msra.mxu0 0
        %2294 = vmatprep.subr.bf16.mxu0 0
        %2295 = vmatpush1.bf16.msra.mxu0 0
        %2296 = vmatprep.subr.bf16.mxu0 0
        %2297 = vmatpush1.bf16.msra.mxu0 0
        %2298 = vmatprep.subr.bf16.mxu0 0
        %2299 = vmatpush1.bf16.msra.mxu0 0
        %2300 = vmatprep.subr.bf16.mxu0 0
        %2301 = vmatpush1.bf16.msra.mxu0 0
        %2302 = vmatprep.subr.bf16.mxu0 0
        %2303 = vmatpush1.bf16.msra.mxu0 0
        %2304 = vmatprep.subr.bf16.mxu0 0
        %2305 = vmatpush1.bf16.msra.mxu0 0
        %2306 = vmatprep.subr.bf16.mxu0 0
        %2307 = vmatpush1.bf16.msra.mxu0 0
        %2308 = vmatprep.subr.bf16.mxu0 0
        %2309 = vmatpush1.bf16.msra.mxu0 0
        %2310 = vmatprep.subr.bf16.mxu0 0
        %2311 = vmatpush1.bf16.msra.mxu0 0
        %2312 = vmatprep.subr.bf16.mxu0 0
        %2313 = vmatpush1.bf16.msra.mxu0 0
        %2314 = vmatprep.subr.bf16.mxu0 0
        %2315 = vmatpush1.bf16.msra.mxu0 0
        %2316 = vmatprep.subr.bf16.mxu0 0
        %2317 = vmatpush1.bf16.msra.mxu0 0
        %2318 = vmatprep.subr.bf16.mxu0 0
        %2319 = vmatpush1.bf16.msra.mxu0 0
        %2320 = vmatprep.subr.bf16.mxu0 0
        %2321 = vmatpush1.bf16.msra.mxu0 0
        %2322 = vmatprep.mubr.bf16.mxu0 0
        %2323 = vmatmul.mubr.bf16.gmra.mrb[0].mxu0 %v1418
        %v2324 = vpop.f32.mrb[0].mxu0
        %v2325 = vadd.f32 0.0, %v2324
        %v2326 = vpop.f32.mrb[0].mxu0
        %v2327 = vpop.f32.mrb[0].mxu0
        %v2328 = vpop.f32.mrb[0].mxu0
        %2329 = vdwg.mxu0
        %v2330 = vadd.f32 %v2285, %v2325
        %v2332 = vunpack.c.l.b16 %v2286
        %v2333 = vpack.c.b16 %v2332, %v2332
        %2334 = vrot.lane.b32.xlu0 %v2333, 126
        %v2335 = vpop.permute.xlu0 %2334
        %v2337 = vsel %vm1128, %v2335, 0
        %2339 = vmatprep.subr.bf16.mxu0 0
        %2340 = vmatpush1.bf16.msra.mxu0 %v2337
        %2341 = vmatprep.subr.bf16.mxu0 0
        %2342 = vmatpush1.bf16.msra.mxu0 0
        %2343 = vmatprep.subr.bf16.mxu0 0
        %2344 = vmatpush1.bf16.msra.mxu0 0
        %2345 = vmatprep.subr.bf16.mxu0 0
        %2346 = vmatpush1.bf16.msra.mxu0 0
        %2347 = vmatprep.subr.bf16.mxu0 0
        %2348 = vmatpush1.bf16.msra.mxu0 0
        %2349 = vmatprep.subr.bf16.mxu0 0
        %2350 = vmatpush1.bf16.msra.mxu0 0
        %2351 = vmatprep.subr.bf16.mxu0 0
        %2352 = vmatpush1.bf16.msra.mxu0 0
        %2353 = vmatprep.subr.bf16.mxu0 0
        %2354 = vmatpush1.bf16.msra.mxu0 0
        %2355 = vmatprep.subr.bf16.mxu0 0
        %2356 = vmatpush1.bf16.msra.mxu0 0
        %2357 = vmatprep.subr.bf16.mxu0 0
        %2358 = vmatpush1.bf16.msra.mxu0 0
        %2359 = vmatprep.subr.bf16.mxu0 0
        %2360 = vmatpush1.bf16.msra.mxu0 0
        %2361 = vmatprep.subr.bf16.mxu0 0
        %2362 = vmatpush1.bf16.msra.mxu0 0
        %2363 = vmatprep.subr.bf16.mxu0 0
        %2364 = vmatpush1.bf16.msra.mxu0 0
        %2365 = vmatprep.subr.bf16.mxu0 0
        %2366 = vmatpush1.bf16.msra.mxu0 0
        %2367 = vmatprep.subr.bf16.mxu0 0
        %2368 = vmatpush1.bf16.msra.mxu0 0
        %2369 = vmatprep.subr.bf16.mxu0 0
        %2370 = vmatpush1.bf16.msra.mxu0 0
        %2371 = vmatprep.mubr.bf16.mxu0 0
        %2372 = vmatmul.mubr.bf16.gmra.mrb[0].mxu0 %v1470
        %v2373 = vpop.f32.mrb[0].mxu0
        %v2374 = vadd.f32 0.0, %v2373
        %v2375 = vpop.f32.mrb[0].mxu0
        %v2376 = vpop.f32.mrb[0].mxu0
        %v2377 = vpop.f32.mrb[0].mxu0
        %2378 = vdwg.mxu0
        %v2379 = vadd.f32 %v2330, %v2374
        %2380 = vrot.lane.b32.xlu0 %v2333, 124
        %v2381 = vpop.permute.xlu0 %2380
        %v2383 = vsel %vm1128, %v2381, 0
        %2385 = vmatprep.subr.bf16.mxu0 0
        %2386 = vmatpush1.bf16.msra.mxu0 %v2383
        %2387 = vmatprep.subr.bf16.mxu0 0
        %2388 = vmatpush1.bf16.msra.mxu0 0
        %2389 = vmatprep.subr.bf16.mxu0 0
        %2390 = vmatpush1.bf16.msra.mxu0 0
        %2391 = vmatprep.subr.bf16.mxu0 0
        %2392 = vmatpush1.bf16.msra.mxu0 0
        %2393 = vmatprep.subr.bf16.mxu0 0
        %2394 = vmatpush1.bf16.msra.mxu0 0
        %2395 = vmatprep.subr.bf16.mxu0 0
        %2396 = vmatpush1.bf16.msra.mxu0 0
        %2397 = vmatprep.subr.bf16.mxu0 0
        %2398 = vmatpush1.bf16.msra.mxu0 0
        %2399 = vmatprep.subr.bf16.mxu0 0
        %2400 = vmatpush1.bf16.msra.mxu0 0
        %2401 = vmatprep.subr.bf16.mxu0 0
        %2402 = vmatpush1.bf16.msra.mxu0 0
        %2403 = vmatprep.subr.bf16.mxu0 0
        %2404 = vmatpush1.bf16.msra.mxu0 0
        %2405 = vmatprep.subr.bf16.mxu0 0
        %2406 = vmatpush1.bf16.msra.mxu0 0
        %2407 = vmatprep.subr.bf16.mxu0 0
        %2408 = vmatpush1.bf16.msra.mxu0 0
        %2409 = vmatprep.subr.bf16.mxu0 0
        %2410 = vmatpush1.bf16.msra.mxu0 0
        %2411 = vmatprep.subr.bf16.mxu0 0
        %2412 = vmatpush1.bf16.msra.mxu0 0
        %2413 = vmatprep.subr.bf16.mxu0 0
        %2414 = vmatpush1.bf16.msra.mxu0 0
        %2415 = vmatprep.subr.bf16.mxu0 0
        %2416 = vmatpush1.bf16.msra.mxu0 0
        %2417 = vmatprep.mubr.bf16.mxu0 0
        %2418 = vmatmul.mubr.bf16.gmra.mrb[0].mxu0 %v1519
        %v2419 = vpop.f32.mrb[0].mxu0
        %v2420 = vadd.f32 0.0, %v2419
        %v2421 = vpop.f32.mrb[0].mxu0
        %v2422 = vpop.f32.mrb[0].mxu0
        %v2423 = vpop.f32.mrb[0].mxu0
        %2424 = vdwg.mxu0
        %v2425 = vadd.f32 %v2379, %v2420
        %v2426 = vunpack.c.l.bf16 %v2146
        %v2427 = vadd.f32 %v2425, %v1569
        %2429 = vrot.lane.b32.xlu0 %v2426, 126
        %v2430 = vpop.permute.xlu0 %2429
        %v2432 = vadd.f32 %v2427, %v2430
        %v2433 = vpack.c.bf16 %v2432, %v2432
        %s2434 = scalar_lea.vmem %s231, 8 [#allocation3]
        %2435 = vst.msk [vmem:[%s2434] sm:$0xf] %vm1578, %v2433
        %v2436 = vld [vmem:[%s471] sm:$0xf]
        %v2438 = vunpack.c.l.b16 %v2436
        %v2439 = vpack.c.b16 %v2438, %v2438
        %2440 = vrot.lane.b32.xlu0 %v2439, 126
        %v2441 = vpop.permute.xlu0 %2440
        %v2443 = vsel %vm1128, %v2441, 0
        %2445 = vmatprep.subr.bf16.mxu0 0
        %2446 = vmatpush1.bf16.msra.mxu0 %v2443
        %2447 = vmatprep.subr.bf16.mxu0 0
        %2448 = vmatpush1.bf16.msra.mxu0 0
        %2449 = vmatprep.subr.bf16.mxu0 0
        %2450 = vmatpush1.bf16.msra.mxu0 0
        %2451 = vmatprep.subr.bf16.mxu0 0
        %2452 = vmatpush1.bf16.msra.mxu0 0
        %2453 = vmatprep.subr.bf16.mxu0 0
        %2454 = vmatpush1.bf16.msra.mxu0 0
        %2455 = vmatprep.subr.bf16.mxu0 0
        %2456 = vmatpush1.bf16.msra.mxu0 0
        %2457 = vmatprep.subr.bf16.mxu0 0
        %2458 = vmatpush1.bf16.msra.mxu0 0
        %2459 = vmatprep.subr.bf16.mxu0 0
        %2460 = vmatpush1.bf16.msra.mxu0 0
        %2461 = vmatprep.subr.bf16.mxu0 0
        %2462 = vmatpush1.bf16.msra.mxu0 0
        %2463 = vmatprep.subr.bf16.mxu0 0
        %2464 = vmatpush1.bf16.msra.mxu0 0
        %2465 = vmatprep.subr.bf16.mxu0 0
        %2466 = vmatpush1.bf16.msra.mxu0 0
        %2467 = vmatprep.subr.bf16.mxu0 0
        %2468 = vmatpush1.bf16.msra.mxu0 0
        %2469 = vmatprep.subr.bf16.mxu0 0
        %2470 = vmatpush1.bf16.msra.mxu0 0
        %2471 = vmatprep.subr.bf16.mxu0 0
        %2472 = vmatpush1.bf16.msra.mxu0 0
        %2473 = vmatprep.subr.bf16.mxu0 0
        %2474 = vmatpush1.bf16.msra.mxu0 0
        %2475 = vmatprep.subr.bf16.mxu0 0
        %2476 = vmatpush1.bf16.msra.mxu0 0
        %2477 = vmatprep.mubr.bf16.mxu0 0
        %2478 = vmatmul.mubr.bf16.gmra.mrb[0].mxu0 %v1126
        %v2479 = vpop.f32.mrb[0].mxu0
        %v2480 = vadd.f32 0.0, %v2479
        %v2481 = vpop.f32.mrb[0].mxu0
        %v2482 = vpop.f32.mrb[0].mxu0
        %v2483 = vpop.f32.mrb[0].mxu0
        %2484 = vdwg.mxu0
        %v2486 = vsel %vm1128, %v2436, 0
        %2488 = vmatprep.subr.bf16.mxu0 0
        %2489 = vmatpush1.bf16.msra.mxu0 %v2486
        %2490 = vmatprep.subr.bf16.mxu0 0
        %2491 = vmatpush1.bf16.msra.mxu0 0
        %2492 = vmatprep.subr.bf16.mxu0 0
        %2493 = vmatpush1.bf16.msra.mxu0 0
        %2494 = vmatprep.subr.bf16.mxu0 0
        %2495 = vmatpush1.bf16.msra.mxu0 0
        %2496 = vmatprep.subr.bf16.mxu0 0
        %2497 = vmatpush1.bf16.msra.mxu0 0
        %2498 = vmatprep.subr.bf16.mxu0 0
        %2499 = vmatpush1.bf16.msra.mxu0 0
        %2500 = vmatprep.subr.bf16.mxu0 0
        %2501 = vmatpush1.bf16.msra.mxu0 0
        %2502 = vmatprep.subr.bf16.mxu0 0
        %2503 = vmatpush1.bf16.msra.mxu0 0
        %2504 = vmatprep.subr.bf16.mxu0 0
        %2505 = vmatpush1.bf16.msra.mxu0 0
        %2506 = vmatprep.subr.bf16.mxu0 0
        %2507 = vmatpush1.bf16.msra.mxu0 0
        %2508 = vmatprep.subr.bf16.mxu0 0
        %2509 = vmatpush1.bf16.msra.mxu0 0
        %2510 = vmatprep.subr.bf16.mxu0 0
        %2511 = vmatpush1.bf16.msra.mxu0 0
        %2512 = vmatprep.subr.bf16.mxu0 0
        %2513 = vmatpush1.bf16.msra.mxu0 0
        %2514 = vmatprep.subr.bf16.mxu0 0
        %2515 = vmatpush1.bf16.msra.mxu0 0
        %2516 = vmatprep.subr.bf16.mxu0 0
        %2517 = vmatpush1.bf16.msra.mxu0 0
        %2518 = vmatprep.subr.bf16.mxu0 0
        %2519 = vmatpush1.bf16.msra.mxu0 0
        %2520 = vmatprep.mubr.bf16.mxu0 0
        %2521 = vmatmul.mubr.bf16.gmra.mrb[0].mxu0 %v1173
        %v2522 = vpop.f32.mrb[0].mxu0
        %v2523 = vadd.f32 %v2480, %v2522
        %v2524 = vpop.f32.mrb[0].mxu0
        %v2525 = vpop.f32.mrb[0].mxu0
        %v2526 = vpop.f32.mrb[0].mxu0
        %2527 = vdwg.mxu0
        %2528 = vrot.lane.b32.xlu0 %v2439, 124
        %v2529 = vpop.permute.xlu0 %2528
        %v2531 = vsel %vm1128, %v2529, 0
        %2533 = vmatprep.subr.bf16.mxu0 0
        %2534 = vmatpush1.bf16.msra.mxu0 %v2531
        %2535 = vmatprep.subr.bf16.mxu0 0
        %2536 = vmatpush1.bf16.msra.mxu0 0
        %2537 = vmatprep.subr.bf16.mxu0 0
        %2538 = vmatpush1.bf16.msra.mxu0 0
        %2539 = vmatprep.subr.bf16.mxu0 0
        %2540 = vmatpush1.bf16.msra.mxu0 0
        %2541 = vmatprep.subr.bf16.mxu0 0
        %2542 = vmatpush1.bf16.msra.mxu0 0
        %2543 = vmatprep.subr.bf16.mxu0 0
        %2544 = vmatpush1.bf16.msra.mxu0 0
        %2545 = vmatprep.subr.bf16.mxu0 0
        %2546 = vmatpush1.bf16.msra.mxu0 0
        %2547 = vmatprep.subr.bf16.mxu0 0
        %2548 = vmatpush1.bf16.msra.mxu0 0
        %2549 = vmatprep.subr.bf16.mxu0 0
        %2550 = vmatpush1.bf16.msra.mxu0 0
        %2551 = vmatprep.subr.bf16.mxu0 0
        %2552 = vmatpush1.bf16.msra.mxu0 0
        %2553 = vmatprep.subr.bf16.mxu0 0
        %2554 = vmatpush1.bf16.msra.mxu0 0
        %2555 = vmatprep.subr.bf16.mxu0 0
        %2556 = vmatpush1.bf16.msra.mxu0 0
        %2557 = vmatprep.subr.bf16.mxu0 0
        %2558 = vmatpush1.bf16.msra.mxu0 0
        %2559 = vmatprep.subr.bf16.mxu0 0
        %2560 = vmatpush1.bf16.msra.mxu0 0
        %2561 = vmatprep.subr.bf16.mxu0 0
        %2562 = vmatpush1.bf16.msra.mxu0 0
        %2563 = vmatprep.subr.bf16.mxu0 0
        %2564 = vmatpush1.bf16.msra.mxu0 0
        %2565 = vmatprep.mubr.bf16.mxu0 0
        %2566 = vmatmul.mubr.bf16.gmra.mrb[0].mxu0 %v1221
        %v2567 = vpop.f32.mrb[0].mxu0
        %v2568 = vadd.f32 0.0, %v2567
        %v2569 = vpop.f32.mrb[0].mxu0
        %v2570 = vpop.f32.mrb[0].mxu0
        %v2571 = vpop.f32.mrb[0].mxu0
        %2572 = vdwg.mxu0
        %v2573 = vadd.f32 %v2523, %v2568
        %v2574 = vld [vmem:[%s613] sm:$0xf]
        %v2576 = vsel %vm1128, %v2574, 0
        %2578 = vmatprep.subr.bf16.mxu0 0
        %2579 = vmatpush1.bf16.msra.mxu0 %v2576
        %2580 = vmatprep.subr.bf16.mxu0 0
        %2581 = vmatpush1.bf16.msra.mxu0 0
        %2582 = vmatprep.subr.bf16.mxu0 0
        %2583 = vmatpush1.bf16.msra.mxu0 0
        %2584 = vmatprep.subr.bf16.mxu0 0
        %2585 = vmatpush1.bf16.msra.mxu0 0
        %2586 = vmatprep.subr.bf16.mxu0 0
        %2587 = vmatpush1.bf16.msra.mxu0 0
        %2588 = vmatprep.subr.bf16.mxu0 0
        %2589 = vmatpush1.bf16.msra.mxu0 0
        %2590 = vmatprep.subr.bf16.mxu0 0
        %2591 = vmatpush1.bf16.msra.mxu0 0
        %2592 = vmatprep.subr.bf16.mxu0 0
        %2593 = vmatpush1.bf16.msra.mxu0 0
        %2594 = vmatprep.subr.bf16.mxu0 0
        %2595 = vmatpush1.bf16.msra.mxu0 0
        %2596 = vmatprep.subr.bf16.mxu0 0
        %2597 = vmatpush1.bf16.msra.mxu0 0
        %2598 = vmatprep.subr.bf16.mxu0 0
        %2599 = vmatpush1.bf16.msra.mxu0 0
        %2600 = vmatprep.subr.bf16.mxu0 0
        %2601 = vmatpush1.bf16.msra.mxu0 0
        %2602 = vmatprep.subr.bf16.mxu0 0
        %2603 = vmatpush1.bf16.msra.mxu0 0
        %2604 = vmatprep.subr.bf16.mxu0 0
        %2605 = vmatpush1.bf16.msra.mxu0 0
        %2606 = vmatprep.subr.bf16.mxu0 0
        %2607 = vmatpush1.bf16.msra.mxu0 0
        %2608 = vmatprep.subr.bf16.mxu0 0
        %2609 = vmatpush1.bf16.msra.mxu0 0
        %2610 = vmatprep.mubr.bf16.mxu0 0
        %2611 = vmatmul.mubr.bf16.gmra.mrb[0].mxu0 %v1269
        %v2612 = vpop.f32.mrb[0].mxu0
        %v2613 = vadd.f32 0.0, %v2612
        %v2614 = vpop.f32.mrb[0].mxu0
        %v2615 = vpop.f32.mrb[0].mxu0
        %v2616 = vpop.f32.mrb[0].mxu0
        %2617 = vdwg.mxu0
        %v2618 = vadd.f32 %v2573, %v2613
        %v2620 = vunpack.c.l.b16 %v2574
        %v2621 = vpack.c.b16 %v2620, %v2620
        %2622 = vrot.lane.b32.xlu0 %v2621, 126
        %v2623 = vpop.permute.xlu0 %2622
        %v2625 = vsel %vm1128, %v2623, 0
        %2627 = vmatprep.subr.bf16.mxu0 0
        %2628 = vmatpush1.bf16.msra.mxu0 %v2625
        %2629 = vmatprep.subr.bf16.mxu0 0
        %2630 = vmatpush1.bf16.msra.mxu0 0
        %2631 = vmatprep.subr.bf16.mxu0 0
        %2632 = vmatpush1.bf16.msra.mxu0 0
        %2633 = vmatprep.subr.bf16.mxu0 0
        %2634 = vmatpush1.bf16.msra.mxu0 0
        %2635 = vmatprep.subr.bf16.mxu0 0
        %2636 = vmatpush1.bf16.msra.mxu0 0
        %2637 = vmatprep.subr.bf16.mxu0 0
        %2638 = vmatpush1.bf16.msra.mxu0 0
        %2639 = vmatprep.subr.bf16.mxu0 0
        %2640 = vmatpush1.bf16.msra.mxu0 0
        %2641 = vmatprep.subr.bf16.mxu0 0
        %2642 = vmatpush1.bf16.msra.mxu0 0
        %2643 = vmatprep.subr.bf16.mxu0 0
        %2644 = vmatpush1.bf16.msra.mxu0 0
        %2645 = vmatprep.subr.bf16.mxu0 0
        %2646 = vmatpush1.bf16.msra.mxu0 0
        %2647 = vmatprep.subr.bf16.mxu0 0
        %2648 = vmatpush1.bf16.msra.mxu0 0
        %2649 = vmatprep.subr.bf16.mxu0 0
        %2650 = vmatpush1.bf16.msra.mxu0 0
        %2651 = vmatprep.subr.bf16.mxu0 0
        %2652 = vmatpush1.bf16.msra.mxu0 0
        %2653 = vmatprep.subr.bf16.mxu0 0
        %2654 = vmatpush1.bf16.msra.mxu0 0
        %2655 = vmatprep.subr.bf16.mxu0 0
        %2656 = vmatpush1.bf16.msra.mxu0 0
        %2657 = vmatprep.subr.bf16.mxu0 0
        %2658 = vmatpush1.bf16.msra.mxu0 0
        %2659 = vmatprep.mubr.bf16.mxu0 0
        %2660 = vmatmul.mubr.bf16.gmra.mrb[0].mxu0 %v1321
        %v2661 = vpop.f32.mrb[0].mxu0
        %v2662 = vadd.f32 0.0, %v2661
        %v2663 = vpop.f32.mrb[0].mxu0
        %v2664 = vpop.f32.mrb[0].mxu0
        %v2665 = vpop.f32.mrb[0].mxu0
        %2666 = vdwg.mxu0
        %v2667 = vadd.f32 %v2618, %v2662
        %2668 = vrot.lane.b32.xlu0 %v2621, 124
        %v2669 = vpop.permute.xlu0 %2668
        %v2671 = vsel %vm1128, %v2669, 0
        %2673 = vmatprep.subr.bf16.mxu0 0
        %2674 = vmatpush1.bf16.msra.mxu0 %v2671
        %2675 = vmatprep.subr.bf16.mxu0 0
        %2676 = vmatpush1.bf16.msra.mxu0 0
        %2677 = vmatprep.subr.bf16.mxu0 0
        %2678 = vmatpush1.bf16.msra.mxu0 0
        %2679 = vmatprep.subr.bf16.mxu0 0
        %2680 = vmatpush1.bf16.msra.mxu0 0
        %2681 = vmatprep.subr.bf16.mxu0 0
        %2682 = vmatpush1.bf16.msra.mxu0 0
        %2683 = vmatprep.subr.bf16.mxu0 0
        %2684 = vmatpush1.bf16.msra.mxu0 0
        %2685 = vmatprep.subr.bf16.mxu0 0
        %2686 = vmatpush1.bf16.msra.mxu0 0
        %2687 = vmatprep.subr.bf16.mxu0 0
        %2688 = vmatpush1.bf16.msra.mxu0 0
        %2689 = vmatprep.subr.bf16.mxu0 0
        %2690 = vmatpush1.bf16.msra.mxu0 0
        %2691 = vmatprep.subr.bf16.mxu0 0
        %2692 = vmatpush1.bf16.msra.mxu0 0
        %2693 = vmatprep.subr.bf16.mxu0 0
        %2694 = vmatpush1.bf16.msra.mxu0 0
        %2695 = vmatprep.subr.bf16.mxu0 0
        %2696 = vmatpush1.bf16.msra.mxu0 0
        %2697 = vmatprep.subr.bf16.mxu0 0
        %2698 = vmatpush1.bf16.msra.mxu0 0
        %2699 = vmatprep.subr.bf16.mxu0 0
        %2700 = vmatpush1.bf16.msra.mxu0 0
        %2701 = vmatprep.subr.bf16.mxu0 0
        %2702 = vmatpush1.bf16.msra.mxu0 0
        %2703 = vmatprep.subr.bf16.mxu0 0
        %2704 = vmatpush1.bf16.msra.mxu0 0
        %2705 = vmatprep.mubr.bf16.mxu0 0
        %2706 = vmatmul.mubr.bf16.gmra.mrb[0].mxu0 %v1370
        %v2707 = vpop.f32.mrb[0].mxu0
        %v2708 = vadd.f32 0.0, %v2707
        %v2709 = vpop.f32.mrb[0].mxu0
        %v2710 = vpop.f32.mrb[0].mxu0
        %v2711 = vpop.f32.mrb[0].mxu0
        %2712 = vdwg.mxu0
        %v2713 = vadd.f32 %v2667, %v2708
        %v2714 = vld [vmem:[%s755] sm:$0xf]
        %v2716 = vsel %vm1128, %v2714, 0
        %2718 = vmatprep.subr.bf16.mxu0 0
        %2719 = vmatpush1.bf16.msra.mxu0 %v2716
        %2720 = vmatprep.subr.bf16.mxu0 0
        %2721 = vmatpush1.bf16.msra.mxu0 0
        %2722 = vmatprep.subr.bf16.mxu0 0
        %2723 = vmatpush1.bf16.msra.mxu0 0
        %2724 = vmatprep.subr.bf16.mxu0 0
        %2725 = vmatpush1.bf16.msra.mxu0 0
        %2726 = vmatprep.subr.bf16.mxu0 0
        %2727 = vmatpush1.bf16.msra.mxu0 0
        %2728 = vmatprep.subr.bf16.mxu0 0
        %2729 = vmatpush1.bf16.msra.mxu0 0
        %2730 = vmatprep.subr.bf16.mxu0 0
        %2731 = vmatpush1.bf16.msra.mxu0 0
        %2732 = vmatprep.subr.bf16.mxu0 0
        %2733 = vmatpush1.bf16.msra.mxu0 0
        %2734 = vmatprep.subr.bf16.mxu0 0
        %2735 = vmatpush1.bf16.msra.mxu0 0
        %2736 = vmatprep.subr.bf16.mxu0 0
        %2737 = vmatpush1.bf16.msra.mxu0 0
        %2738 = vmatprep.subr.bf16.mxu0 0
        %2739 = vmatpush1.bf16.msra.mxu0 0
        %2740 = vmatprep.subr.bf16.mxu0 0
        %2741 = vmatpush1.bf16.msra.mxu0 0
        %2742 = vmatprep.subr.bf16.mxu0 0
        %2743 = vmatpush1.bf16.msra.mxu0 0
        %2744 = vmatprep.subr.bf16.mxu0 0
        %2745 = vmatpush1.bf16.msra.mxu0 0
        %2746 = vmatprep.subr.bf16.mxu0 0
        %2747 = vmatpush1.bf16.msra.mxu0 0
        %2748 = vmatprep.subr.bf16.mxu0 0
        %2749 = vmatpush1.bf16.msra.mxu0 0
        %2750 = vmatprep.mubr.bf16.mxu0 0
        %2751 = vmatmul.mubr.bf16.gmra.mrb[0].mxu0 %v1418
        %v2752 = vpop.f32.mrb[0].mxu0
        %v2753 = vadd.f32 0.0, %v2752
        %v2754 = vpop.f32.mrb[0].mxu0
        %v2755 = vpop.f32.mrb[0].mxu0
        %v2756 = vpop.f32.mrb[0].mxu0
        %2757 = vdwg.mxu0
        %v2758 = vadd.f32 %v2713, %v2753
        %v2760 = vunpack.c.l.b16 %v2714
        %v2761 = vpack.c.b16 %v2760, %v2760
        %2762 = vrot.lane.b32.xlu0 %v2761, 126
        %v2763 = vpop.permute.xlu0 %2762
        %v2765 = vsel %vm1128, %v2763, 0
        %2767 = vmatprep.subr.bf16.mxu0 0
        %2768 = vmatpush1.bf16.msra.mxu0 %v2765
        %2769 = vmatprep.subr.bf16.mxu0 0
        %2770 = vmatpush1.bf16.msra.mxu0 0
        %2771 = vmatprep.subr.bf16.mxu0 0
        %2772 = vmatpush1.bf16.msra.mxu0 0
        %2773 = vmatprep.subr.bf16.mxu0 0
        %2774 = vmatpush1.bf16.msra.mxu0 0
        %2775 = vmatprep.subr.bf16.mxu0 0
        %2776 = vmatpush1.bf16.msra.mxu0 0
        %2777 = vmatprep.subr.bf16.mxu0 0
        %2778 = vmatpush1.bf16.msra.mxu0 0
        %2779 = vmatprep.subr.bf16.mxu0 0
        %2780 = vmatpush1.bf16.msra.mxu0 0
        %2781 = vmatprep.subr.bf16.mxu0 0
        %2782 = vmatpush1.bf16.msra.mxu0 0
        %2783 = vmatprep.subr.bf16.mxu0 0
        %2784 = vmatpush1.bf16.msra.mxu0 0
        %2785 = vmatprep.subr.bf16.mxu0 0
        %2786 = vmatpush1.bf16.msra.mxu0 0
        %2787 = vmatprep.subr.bf16.mxu0 0
        %2788 = vmatpush1.bf16.msra.mxu0 0
        %2789 = vmatprep.subr.bf16.mxu0 0
        %2790 = vmatpush1.bf16.msra.mxu0 0
        %2791 = vmatprep.subr.bf16.mxu0 0
        %2792 = vmatpush1.bf16.msra.mxu0 0
        %2793 = vmatprep.subr.bf16.mxu0 0
        %2794 = vmatpush1.bf16.msra.mxu0 0
        %2795 = vmatprep.subr.bf16.mxu0 0
        %2796 = vmatpush1.bf16.msra.mxu0 0
        %2797 = vmatprep.subr.bf16.mxu0 0
        %2798 = vmatpush1.bf16.msra.mxu0 0
        %2799 = vmatprep.mubr.bf16.mxu0 0
        %2800 = vmatmul.mubr.bf16.gmra.mrb[0].mxu0 %v1470
        %v2801 = vpop.f32.mrb[0].mxu0
        %v2802 = vadd.f32 0.0, %v2801
        %v2803 = vpop.f32.mrb[0].mxu0
        %v2804 = vpop.f32.mrb[0].mxu0
        %v2805 = vpop.f32.mrb[0].mxu0
        %2806 = vdwg.mxu0
        %v2807 = vadd.f32 %v2758, %v2802
        %2808 = vrot.lane.b32.xlu0 %v2761, 124
        %v2809 = vpop.permute.xlu0 %2808
        %v2811 = vsel %vm1128, %v2809, 0
        %2813 = vmatprep.subr.bf16.mxu0 0
        %2814 = vmatpush1.bf16.msra.mxu0 %v2811
        %2815 = vmatprep.subr.bf16.mxu0 0
        %2816 = vmatpush1.bf16.msra.mxu0 0
        %2817 = vmatprep.subr.bf16.mxu0 0
        %2818 = vmatpush1.bf16.msra.mxu0 0
        %2819 = vmatprep.subr.bf16.mxu0 0
        %2820 = vmatpush1.bf16.msra.mxu0 0
        %2821 = vmatprep.subr.bf16.mxu0 0
        %2822 = vmatpush1.bf16.msra.mxu0 0
        %2823 = vmatprep.subr.bf16.mxu0 0
        %2824 = vmatpush1.bf16.msra.mxu0 0
        %2825 = vmatprep.subr.bf16.mxu0 0
        %2826 = vmatpush1.bf16.msra.mxu0 0
        %2827 = vmatprep.subr.bf16.mxu0 0
        %2828 = vmatpush1.bf16.msra.mxu0 0
        %2829 = vmatprep.subr.bf16.mxu0 0
        %2830 = vmatpush1.bf16.msra.mxu0 0
        %2831 = vmatprep.subr.bf16.mxu0 0
        %2832 = vmatpush1.bf16.msra.mxu0 0
        %2833 = vmatprep.subr.bf16.mxu0 0
        %2834 = vmatpush1.bf16.msra.mxu0 0
        %2835 = vmatprep.subr.bf16.mxu0 0
        %2836 = vmatpush1.bf16.msra.mxu0 0
        %2837 = vmatprep.subr.bf16.mxu0 0
        %2838 = vmatpush1.bf16.msra.mxu0 0
        %2839 = vmatprep.subr.bf16.mxu0 0
        %2840 = vmatpush1.bf16.msra.mxu0 0
        %2841 = vmatprep.subr.bf16.mxu0 0
        %2842 = vmatpush1.bf16.msra.mxu0 0
        %2843 = vmatprep.subr.bf16.mxu0 0
        %2844 = vmatpush1.bf16.msra.mxu0 0
        %2845 = vmatprep.mubr.bf16.mxu0 0
        %2846 = vmatmul.mubr.bf16.gmra.mrb[0].mxu0 %v1519
        %v2847 = vpop.f32.mrb[0].mxu0
        %v2848 = vadd.f32 0.0, %v2847
        %v2849 = vpop.f32.mrb[0].mxu0
        %v2850 = vpop.f32.mrb[0].mxu0
        %v2851 = vpop.f32.mrb[0].mxu0
        %2852 = vdwg.mxu0
        %v2853 = vadd.f32 %v2807, %v2848
        %v2854 = vunpack.c.l.bf16 %v2574
        %v2855 = vadd.f32 %v2853, %v1569
        %2857 = vrot.lane.b32.xlu0 %v2854, 126
        %v2858 = vpop.permute.xlu0 %2857
        %v2860 = vadd.f32 %v2855, %v2858
        %v2861 = vpack.c.bf16 %v2860, %v2860
        %s2862 = scalar_lea.vmem %s231, 12 [#allocation3]
        %2863 = vst.msk [vmem:[%s2862] sm:$0xf] %vm1578, %v2861
        %v2864 = vld [vmem:[%s542] sm:$0xf]
        %v2866 = vunpack.c.l.b16 %v2864
        %v2867 = vpack.c.b16 %v2866, %v2866
        %2868 = vrot.lane.b32.xlu0 %v2867, 126
        %v2869 = vpop.permute.xlu0 %2868
        %v2871 = vsel %vm1128, %v2869, 0
        %2873 = vmatprep.subr.bf16.mxu0 0
        %2874 = vmatpush1.bf16.msra.mxu0 %v2871
        %2875 = vmatprep.subr.bf16.mxu0 0
        %2876 = vmatpush1.bf16.msra.mxu0 0
        %2877 = vmatprep.subr.bf16.mxu0 0
        %2878 = vmatpush1.bf16.msra.mxu0 0
        %2879 = vmatprep.subr.bf16.mxu0 0
        %2880 = vmatpush1.bf16.msra.mxu0 0
        %2881 = vmatprep.subr.bf16.mxu0 0
        %2882 = vmatpush1.bf16.msra.mxu0 0
        %2883 = vmatprep.subr.bf16.mxu0 0
        %2884 = vmatpush1.bf16.msra.mxu0 0
        %2885 = vmatprep.subr.bf16.mxu0 0
        %2886 = vmatpush1.bf16.msra.mxu0 0
        %2887 = vmatprep.subr.bf16.mxu0 0
        %2888 = vmatpush1.bf16.msra.mxu0 0
        %2889 = vmatprep.subr.bf16.mxu0 0
        %2890 = vmatpush1.bf16.msra.mxu0 0
        %2891 = vmatprep.subr.bf16.mxu0 0
        %2892 = vmatpush1.bf16.msra.mxu0 0
        %2893 = vmatprep.subr.bf16.mxu0 0
        %2894 = vmatpush1.bf16.msra.mxu0 0
        %2895 = vmatprep.subr.bf16.mxu0 0
        %2896 = vmatpush1.bf16.msra.mxu0 0
        %2897 = vmatprep.subr.bf16.mxu0 0
        %2898 = vmatpush1.bf16.msra.mxu0 0
        %2899 = vmatprep.subr.bf16.mxu0 0
        %2900 = vmatpush1.bf16.msra.mxu0 0
        %2901 = vmatprep.subr.bf16.mxu0 0
        %2902 = vmatpush1.bf16.msra.mxu0 0
        %2903 = vmatprep.subr.bf16.mxu0 0
        %2904 = vmatpush1.bf16.msra.mxu0 0
        %2905 = vmatprep.mubr.bf16.mxu0 0
        %2906 = vmatmul.mubr.bf16.gmra.mrb[0].mxu0 %v1126
        %v2907 = vpop.f32.mrb[0].mxu0
        %v2908 = vadd.f32 0.0, %v2907
        %v2909 = vpop.f32.mrb[0].mxu0
        %v2910 = vpop.f32.mrb[0].mxu0
        %v2911 = vpop.f32.mrb[0].mxu0
        %2912 = vdwg.mxu0
        %v2914 = vsel %vm1128, %v2864, 0
        %2916 = vmatprep.subr.bf16.mxu0 0
        %2917 = vmatpush1.bf16.msra.mxu0 %v2914
        %2918 = vmatprep.subr.bf16.mxu0 0
        %2919 = vmatpush1.bf16.msra.mxu0 0
        %2920 = vmatprep.subr.bf16.mxu0 0
        %2921 = vmatpush1.bf16.msra.mxu0 0
        %2922 = vmatprep.subr.bf16.mxu0 0
        %2923 = vmatpush1.bf16.msra.mxu0 0
        %2924 = vmatprep.subr.bf16.mxu0 0
        %2925 = vmatpush1.bf16.msra.mxu0 0
        %2926 = vmatprep.subr.bf16.mxu0 0
        %2927 = vmatpush1.bf16.msra.mxu0 0
        %2928 = vmatprep.subr.bf16.mxu0 0
        %2929 = vmatpush1.bf16.msra.mxu0 0
        %2930 = vmatprep.subr.bf16.mxu0 0
        %2931 = vmatpush1.bf16.msra.mxu0 0
        %2932 = vmatprep.subr.bf16.mxu0 0
        %2933 = vmatpush1.bf16.msra.mxu0 0
        %2934 = vmatprep.subr.bf16.mxu0 0
        %2935 = vmatpush1.bf16.msra.mxu0 0
        %2936 = vmatprep.subr.bf16.mxu0 0
        %2937 = vmatpush1.bf16.msra.mxu0 0
        %2938 = vmatprep.subr.bf16.mxu0 0
        %2939 = vmatpush1.bf16.msra.mxu0 0
        %2940 = vmatprep.subr.bf16.mxu0 0
        %2941 = vmatpush1.bf16.msra.mxu0 0
        %2942 = vmatprep.subr.bf16.mxu0 0
        %2943 = vmatpush1.bf16.msra.mxu0 0
        %2944 = vmatprep.subr.bf16.mxu0 0
        %2945 = vmatpush1.bf16.msra.mxu0 0
        %2946 = vmatprep.subr.bf16.mxu0 0
        %2947 = vmatpush1.bf16.msra.mxu0 0
        %2948 = vmatprep.mubr.bf16.mxu0 0
        %2949 = vmatmul.mubr.bf16.gmra.mrb[0].mxu0 %v1173
        %v2950 = vpop.f32.mrb[0].mxu0
        %v2951 = vadd.f32 %v2908, %v2950
        %v2952 = vpop.f32.mrb[0].mxu0
        %v2953 = vpop.f32.mrb[0].mxu0
        %v2954 = vpop.f32.mrb[0].mxu0
        %2955 = vdwg.mxu0
        %2956 = vrot.lane.b32.xlu0 %v2867, 124
        %v2957 = vpop.permute.xlu0 %2956
        %v2959 = vsel %vm1128, %v2957, 0
        %2961 = vmatprep.subr.bf16.mxu0 0
        %2962 = vmatpush1.bf16.msra.mxu0 %v2959
        %2963 = vmatprep.subr.bf16.mxu0 0
        %2964 = vmatpush1.bf16.msra.mxu0 0
        %2965 = vmatprep.subr.bf16.mxu0 0
        %2966 = vmatpush1.bf16.msra.mxu0 0
        %2967 = vmatprep.subr.bf16.mxu0 0
        %2968 = vmatpush1.bf16.msra.mxu0 0
        %2969 = vmatprep.subr.bf16.mxu0 0
        %2970 = vmatpush1.bf16.msra.mxu0 0
        %2971 = vmatprep.subr.bf16.mxu0 0
        %2972 = vmatpush1.bf16.msra.mxu0 0
        %2973 = vmatprep.subr.bf16.mxu0 0
        %2974 = vmatpush1.bf16.msra.mxu0 0
        %2975 = vmatprep.subr.bf16.mxu0 0
        %2976 = vmatpush1.bf16.msra.mxu0 0
        %2977 = vmatprep.subr.bf16.mxu0 0
        %2978 = vmatpush1.bf16.msra.mxu0 0
        %2979 = vmatprep.subr.bf16.mxu0 0
        %2980 = vmatpush1.bf16.msra.mxu0 0
        %2981 = vmatprep.subr.bf16.mxu0 0
        %2982 = vmatpush1.bf16.msra.mxu0 0
        %2983 = vmatprep.subr.bf16.mxu0 0
        %2984 = vmatpush1.bf16.msra.mxu0 0
        %2985 = vmatprep.subr.bf16.mxu0 0
        %2986 = vmatpush1.bf16.msra.mxu0 0
        %2987 = vmatprep.subr.bf16.mxu0 0
        %2988 = vmatpush1.bf16.msra.mxu0 0
        %2989 = vmatprep.subr.bf16.mxu0 0
        %2990 = vmatpush1.bf16.msra.mxu0 0
        %2991 = vmatprep.subr.bf16.mxu0 0
        %2992 = vmatpush1.bf16.msra.mxu0 0
        %2993 = vmatprep.mubr.bf16.mxu0 0
        %2994 = vmatmul.mubr.bf16.gmra.mrb[0].mxu0 %v1221
        %v2995 = vpop.f32.mrb[0].mxu0
        %v2996 = vadd.f32 0.0, %v2995
        %v2997 = vpop.f32.mrb[0].mxu0
        %v2998 = vpop.f32.mrb[0].mxu0
        %v2999 = vpop.f32.mrb[0].mxu0
        %3000 = vdwg.mxu0
        %v3001 = vadd.f32 %v2951, %v2996
        %v3002 = vld [vmem:[%s684] sm:$0xf]
        %v3004 = vsel %vm1128, %v3002, 0
        %3006 = vmatprep.subr.bf16.mxu0 0
        %3007 = vmatpush1.bf16.msra.mxu0 %v3004
        %3008 = vmatprep.subr.bf16.mxu0 0
        %3009 = vmatpush1.bf16.msra.mxu0 0
        %3010 = vmatprep.subr.bf16.mxu0 0
        %3011 = vmatpush1.bf16.msra.mxu0 0
        %3012 = vmatprep.subr.bf16.mxu0 0
        %3013 = vmatpush1.bf16.msra.mxu0 0
        %3014 = vmatprep.subr.bf16.mxu0 0
        %3015 = vmatpush1.bf16.msra.mxu0 0
        %3016 = vmatprep.subr.bf16.mxu0 0
        %3017 = vmatpush1.bf16.msra.mxu0 0
        %3018 = vmatprep.subr.bf16.mxu0 0
        %3019 = vmatpush1.bf16.msra.mxu0 0
        %3020 = vmatprep.subr.bf16.mxu0 0
        %3021 = vmatpush1.bf16.msra.mxu0 0
        %3022 = vmatprep.subr.bf16.mxu0 0
        %3023 = vmatpush1.bf16.msra.mxu0 0
        %3024 = vmatprep.subr.bf16.mxu0 0
        %3025 = vmatpush1.bf16.msra.mxu0 0
        %3026 = vmatprep.subr.bf16.mxu0 0
        %3027 = vmatpush1.bf16.msra.mxu0 0
        %3028 = vmatprep.subr.bf16.mxu0 0
        %3029 = vmatpush1.bf16.msra.mxu0 0
        %3030 = vmatprep.subr.bf16.mxu0 0
        %3031 = vmatpush1.bf16.msra.mxu0 0
        %3032 = vmatprep.subr.bf16.mxu0 0
        %3033 = vmatpush1.bf16.msra.mxu0 0
        %3034 = vmatprep.subr.bf16.mxu0 0
        %3035 = vmatpush1.bf16.msra.mxu0 0
        %3036 = vmatprep.subr.bf16.mxu0 0
        %3037 = vmatpush1.bf16.msra.mxu0 0
        %3038 = vmatprep.mubr.bf16.mxu0 0
        %3039 = vmatmul.mubr.bf16.gmra.mrb[0].mxu0 %v1269
        %v3040 = vpop.f32.mrb[0].mxu0
        %v3041 = vadd.f32 0.0, %v3040
        %v3042 = vpop.f32.mrb[0].mxu0
        %v3043 = vpop.f32.mrb[0].mxu0
        %v3044 = vpop.f32.mrb[0].mxu0
        %3045 = vdwg.mxu0
        %v3046 = vadd.f32 %v3001, %v3041
        %v3048 = vunpack.c.l.b16 %v3002
        %v3049 = vpack.c.b16 %v3048, %v3048
        %3050 = vrot.lane.b32.xlu0 %v3049, 126
        %v3051 = vpop.permute.xlu0 %3050
        %v3053 = vsel %vm1128, %v3051, 0
        %3055 = vmatprep.subr.bf16.mxu0 0
        %3056 = vmatpush1.bf16.msra.mxu0 %v3053
        %3057 = vmatprep.subr.bf16.mxu0 0
        %3058 = vmatpush1.bf16.msra.mxu0 0
        %3059 = vmatprep.subr.bf16.mxu0 0
        %3060 = vmatpush1.bf16.msra.mxu0 0
        %3061 = vmatprep.subr.bf16.mxu0 0
        %3062 = vmatpush1.bf16.msra.mxu0 0
        %3063 = vmatprep.subr.bf16.mxu0 0
        %3064 = vmatpush1.bf16.msra.mxu0 0
        %3065 = vmatprep.subr.bf16.mxu0 0
        %3066 = vmatpush1.bf16.msra.mxu0 0
        %3067 = vmatprep.subr.bf16.mxu0 0
        %3068 = vmatpush1.bf16.msra.mxu0 0
        %3069 = vmatprep.subr.bf16.mxu0 0
        %3070 = vmatpush1.bf16.msra.mxu0 0
        %3071 = vmatprep.subr.bf16.mxu0 0
        %3072 = vmatpush1.bf16.msra.mxu0 0
        %3073 = vmatprep.subr.bf16.mxu0 0
        %3074 = vmatpush1.bf16.msra.mxu0 0
        %3075 = vmatprep.subr.bf16.mxu0 0
        %3076 = vmatpush1.bf16.msra.mxu0 0
        %3077 = vmatprep.subr.bf16.mxu0 0
        %3078 = vmatpush1.bf16.msra.mxu0 0
        %3079 = vmatprep.subr.bf16.mxu0 0
        %3080 = vmatpush1.bf16.msra.mxu0 0
        %3081 = vmatprep.subr.bf16.mxu0 0
        %3082 = vmatpush1.bf16.msra.mxu0 0
        %3083 = vmatprep.subr.bf16.mxu0 0
        %3084 = vmatpush1.bf16.msra.mxu0 0
        %3085 = vmatprep.subr.bf16.mxu0 0
        %3086 = vmatpush1.bf16.msra.mxu0 0
        %3087 = vmatprep.mubr.bf16.mxu0 0
        %3088 = vmatmul.mubr.bf16.gmra.mrb[0].mxu0 %v1321
        %v3089 = vpop.f32.mrb[0].mxu0
        %v3090 = vadd.f32 0.0, %v3089
        %v3091 = vpop.f32.mrb[0].mxu0
        %v3092 = vpop.f32.mrb[0].mxu0
        %v3093 = vpop.f32.mrb[0].mxu0
        %3094 = vdwg.mxu0
        %v3095 = vadd.f32 %v3046, %v3090
        %3096 = vrot.lane.b32.xlu0 %v3049, 124
        %v3097 = vpop.permute.xlu0 %3096
        %v3099 = vsel %vm1128, %v3097, 0
        %3101 = vmatprep.subr.bf16.mxu0 0
        %3102 = vmatpush1.bf16.msra.mxu0 %v3099
        %3103 = vmatprep.subr.bf16.mxu0 0
        %3104 = vmatpush1.bf16.msra.mxu0 0
        %3105 = vmatprep.subr.bf16.mxu0 0
        %3106 = vmatpush1.bf16.msra.mxu0 0
        %3107 = vmatprep.subr.bf16.mxu0 0
        %3108 = vmatpush1.bf16.msra.mxu0 0
        %3109 = vmatprep.subr.bf16.mxu0 0
        %3110 = vmatpush1.bf16.msra.mxu0 0
        %3111 = vmatprep.subr.bf16.mxu0 0
        %3112 = vmatpush1.bf16.msra.mxu0 0
        %3113 = vmatprep.subr.bf16.mxu0 0
        %3114 = vmatpush1.bf16.msra.mxu0 0
        %3115 = vmatprep.subr.bf16.mxu0 0
        %3116 = vmatpush1.bf16.msra.mxu0 0
        %3117 = vmatprep.subr.bf16.mxu0 0
        %3118 = vmatpush1.bf16.msra.mxu0 0
        %3119 = vmatprep.subr.bf16.mxu0 0
        %3120 = vmatpush1.bf16.msra.mxu0 0
        %3121 = vmatprep.subr.bf16.mxu0 0
        %3122 = vmatpush1.bf16.msra.mxu0 0
        %3123 = vmatprep.subr.bf16.mxu0 0
        %3124 = vmatpush1.bf16.msra.mxu0 0
        %3125 = vmatprep.subr.bf16.mxu0 0
        %3126 = vmatpush1.bf16.msra.mxu0 0
        %3127 = vmatprep.subr.bf16.mxu0 0
        %3128 = vmatpush1.bf16.msra.mxu0 0
        %3129 = vmatprep.subr.bf16.mxu0 0
        %3130 = vmatpush1.bf16.msra.mxu0 0
        %3131 = vmatprep.subr.bf16.mxu0 0
        %3132 = vmatpush1.bf16.msra.mxu0 0
        %3133 = vmatprep.mubr.bf16.mxu0 0
        %3134 = vmatmul.mubr.bf16.gmra.mrb[0].mxu0 %v1370
        %v3135 = vpop.f32.mrb[0].mxu0
        %v3136 = vadd.f32 0.0, %v3135
        %v3137 = vpop.f32.mrb[0].mxu0
        %v3138 = vpop.f32.mrb[0].mxu0
        %v3139 = vpop.f32.mrb[0].mxu0
        %3140 = vdwg.mxu0
        %v3141 = vadd.f32 %v3095, %v3136
        %v3142 = vld [vmem:[%s826] sm:$0xf]
        %v3144 = vsel %vm1128, %v3142, 0
        %3146 = vmatprep.subr.bf16.mxu0 0
        %3147 = vmatpush1.bf16.msra.mxu0 %v3144
        %3148 = vmatprep.subr.bf16.mxu0 0
        %3149 = vmatpush1.bf16.msra.mxu0 0
        %3150 = vmatprep.subr.bf16.mxu0 0
        %3151 = vmatpush1.bf16.msra.mxu0 0
        %3152 = vmatprep.subr.bf16.mxu0 0
        %3153 = vmatpush1.bf16.msra.mxu0 0
        %3154 = vmatprep.subr.bf16.mxu0 0
        %3155 = vmatpush1.bf16.msra.mxu0 0
        %3156 = vmatprep.subr.bf16.mxu0 0
        %3157 = vmatpush1.bf16.msra.mxu0 0
        %3158 = vmatprep.subr.bf16.mxu0 0
        %3159 = vmatpush1.bf16.msra.mxu0 0
        %3160 = vmatprep.subr.bf16.mxu0 0
        %3161 = vmatpush1.bf16.msra.mxu0 0
        %3162 = vmatprep.subr.bf16.mxu0 0
        %3163 = vmatpush1.bf16.msra.mxu0 0
        %3164 = vmatprep.subr.bf16.mxu0 0
        %3165 = vmatpush1.bf16.msra.mxu0 0
        %3166 = vmatprep.subr.bf16.mxu0 0
        %3167 = vmatpush1.bf16.msra.mxu0 0
        %3168 = vmatprep.subr.bf16.mxu0 0
        %3169 = vmatpush1.bf16.msra.mxu0 0
        %3170 = vmatprep.subr.bf16.mxu0 0
        %3171 = vmatpush1.bf16.msra.mxu0 0
        %3172 = vmatprep.subr.bf16.mxu0 0
        %3173 = vmatpush1.bf16.msra.mxu0 0
        %3174 = vmatprep.subr.bf16.mxu0 0
        %3175 = vmatpush1.bf16.msra.mxu0 0
        %3176 = vmatprep.subr.bf16.mxu0 0
        %3177 = vmatpush1.bf16.msra.mxu0 0
        %3178 = vmatprep.mubr.bf16.mxu0 0
        %3179 = vmatmul.mubr.bf16.gmra.mrb[0].mxu0 %v1418
        %v3180 = vpop.f32.mrb[0].mxu0
        %v3181 = vadd.f32 0.0, %v3180
        %v3182 = vpop.f32.mrb[0].mxu0
        %v3183 = vpop.f32.mrb[0].mxu0
        %v3184 = vpop.f32.mrb[0].mxu0
        %3185 = vdwg.mxu0
        %v3186 = vadd.f32 %v3141, %v3181
        %v3188 = vunpack.c.l.b16 %v3142
        %v3189 = vpack.c.b16 %v3188, %v3188
        %3190 = vrot.lane.b32.xlu0 %v3189, 126
        %v3191 = vpop.permute.xlu0 %3190
        %v3193 = vsel %vm1128, %v3191, 0
        %3195 = vmatprep.subr.bf16.mxu0 0
        %3196 = vmatpush1.bf16.msra.mxu0 %v3193
        %3197 = vmatprep.subr.bf16.mxu0 0
        %3198 = vmatpush1.bf16.msra.mxu0 0
        %3199 = vmatprep.subr.bf16.mxu0 0
        %3200 = vmatpush1.bf16.msra.mxu0 0
        %3201 = vmatprep.subr.bf16.mxu0 0
        %3202 = vmatpush1.bf16.msra.mxu0 0
        %3203 = vmatprep.subr.bf16.mxu0 0
        %3204 = vmatpush1.bf16.msra.mxu0 0
        %3205 = vmatprep.subr.bf16.mxu0 0
        %3206 = vmatpush1.bf16.msra.mxu0 0
        %3207 = vmatprep.subr.bf16.mxu0 0
        %3208 = vmatpush1.bf16.msra.mxu0 0
        %3209 = vmatprep.subr.bf16.mxu0 0
        %3210 = vmatpush1.bf16.msra.mxu0 0
        %3211 = vmatprep.subr.bf16.mxu0 0
        %3212 = vmatpush1.bf16.msra.mxu0 0
        %3213 = vmatprep.subr.bf16.mxu0 0
        %3214 = vmatpush1.bf16.msra.mxu0 0
        %3215 = vmatprep.subr.bf16.mxu0 0
        %3216 = vmatpush1.bf16.msra.mxu0 0
        %3217 = vmatprep.subr.bf16.mxu0 0
        %3218 = vmatpush1.bf16.msra.mxu0 0
        %3219 = vmatprep.subr.bf16.mxu0 0
        %3220 = vmatpush1.bf16.msra.mxu0 0
        %3221 = vmatprep.subr.bf16.mxu0 0
        %3222 = vmatpush1.bf16.msra.mxu0 0
        %3223 = vmatprep.subr.bf16.mxu0 0
        %3224 = vmatpush1.bf16.msra.mxu0 0
        %3225 = vmatprep.subr.bf16.mxu0 0
        %3226 = vmatpush1.bf16.msra.mxu0 0
        %3227 = vmatprep.mubr.bf16.mxu0 0
        %3228 = vmatmul.mubr.bf16.gmra.mrb[0].mxu0 %v1470
        %v3229 = vpop.f32.mrb[0].mxu0
        %v3230 = vadd.f32 0.0, %v3229
        %v3231 = vpop.f32.mrb[0].mxu0
        %v3232 = vpop.f32.mrb[0].mxu0
        %v3233 = vpop.f32.mrb[0].mxu0
        %3234 = vdwg.mxu0
        %v3235 = vadd.f32 %v3186, %v3230
        %3236 = vrot.lane.b32.xlu0 %v3189, 124
        %v3237 = vpop.permute.xlu0 %3236
        %v3239 = vsel %vm1128, %v3237, 0
        %3241 = vmatprep.subr.bf16.mxu0 0
        %3242 = vmatpush1.bf16.msra.mxu0 %v3239
        %3243 = vmatprep.subr.bf16.mxu0 0
        %3244 = vmatpush1.bf16.msra.mxu0 0
        %3245 = vmatprep.subr.bf16.mxu0 0
        %3246 = vmatpush1.bf16.msra.mxu0 0
        %3247 = vmatprep.subr.bf16.mxu0 0
        %3248 = vmatpush1.bf16.msra.mxu0 0
        %3249 = vmatprep.subr.bf16.mxu0 0
        %3250 = vmatpush1.bf16.msra.mxu0 0
        %3251 = vmatprep.subr.bf16.mxu0 0
        %3252 = vmatpush1.bf16.msra.mxu0 0
        %3253 = vmatprep.subr.bf16.mxu0 0
        %3254 = vmatpush1.bf16.msra.mxu0 0
        %3255 = vmatprep.subr.bf16.mxu0 0
        %3256 = vmatpush1.bf16.msra.mxu0 0
        %3257 = vmatprep.subr.bf16.mxu0 0
        %3258 = vmatpush1.bf16.msra.mxu0 0
        %3259 = vmatprep.subr.bf16.mxu0 0
        %3260 = vmatpush1.bf16.msra.mxu0 0
        %3261 = vmatprep.subr.bf16.mxu0 0
        %3262 = vmatpush1.bf16.msra.mxu0 0
        %3263 = vmatprep.subr.bf16.mxu0 0
        %3264 = vmatpush1.bf16.msra.mxu0 0
        %3265 = vmatprep.subr.bf16.mxu0 0
        %3266 = vmatpush1.bf16.msra.mxu0 0
        %3267 = vmatprep.subr.bf16.mxu0 0
        %3268 = vmatpush1.bf16.msra.mxu0 0
        %3269 = vmatprep.subr.bf16.mxu0 0
        %3270 = vmatpush1.bf16.msra.mxu0 0
        %3271 = vmatprep.subr.bf16.mxu0 0
        %3272 = vmatpush1.bf16.msra.mxu0 0
        %3273 = vmatprep.mubr.bf16.mxu0 0
        %3274 = vmatmul.mubr.bf16.gmra.mrb[0].mxu0 %v1519
        %v3275 = vpop.f32.mrb[0].mxu0
        %v3276 = vadd.f32 0.0, %v3275
        %v3277 = vpop.f32.mrb[0].mxu0
        %v3278 = vpop.f32.mrb[0].mxu0
        %v3279 = vpop.f32.mrb[0].mxu0
        %3280 = vdwg.mxu0
        %v3281 = vadd.f32 %v3235, %v3276
        %v3282 = vunpack.c.l.bf16 %v3002
        %v3283 = vadd.f32 %v3281, %v1569
        %3285 = vrot.lane.b32.xlu0 %v3282, 126
        %v3286 = vpop.permute.xlu0 %3285
        %v3288 = vadd.f32 %v3283, %v3286
        %v3289 = vpack.c.bf16 %v3288, %v3288
        %s3290 = scalar_lea.vmem %s231, 16 [#allocation3]
        %3291 = vst.msk [vmem:[%s3290] sm:$0xf] %vm1578, %v3289
        %v3292 = vld [vmem:[%s613] sm:$0xf]
        %v3294 = vunpack.c.l.b16 %v3292
        %v3295 = vpack.c.b16 %v3294, %v3294
        %3296 = vrot.lane.b32.xlu0 %v3295, 126
        %v3297 = vpop.permute.xlu0 %3296
        %v3299 = vsel %vm1128, %v3297, 0
        %3301 = vmatprep.subr.bf16.mxu0 0
        %3302 = vmatpush1.bf16.msra.mxu0 %v3299
        %3303 = vmatprep.subr.bf16.mxu0 0
        %3304 = vmatpush1.bf16.msra.mxu0 0
        %3305 = vmatprep.subr.bf16.mxu0 0
        %3306 = vmatpush1.bf16.msra.mxu0 0
        %3307 = vmatprep.subr.bf16.mxu0 0
        %3308 = vmatpush1.bf16.msra.mxu0 0
        %3309 = vmatprep.subr.bf16.mxu0 0
        %3310 = vmatpush1.bf16.msra.mxu0 0
        %3311 = vmatprep.subr.bf16.mxu0 0
        %3312 = vmatpush1.bf16.msra.mxu0 0
        %3313 = vmatprep.subr.bf16.mxu0 0
        %3314 = vmatpush1.bf16.msra.mxu0 0
        %3315 = vmatprep.subr.bf16.mxu0 0
        %3316 = vmatpush1.bf16.msra.mxu0 0
        %3317 = vmatprep.subr.bf16.mxu0 0
        %3318 = vmatpush1.bf16.msra.mxu0 0
        %3319 = vmatprep.subr.bf16.mxu0 0
        %3320 = vmatpush1.bf16.msra.mxu0 0
        %3321 = vmatprep.subr.bf16.mxu0 0
        %3322 = vmatpush1.bf16.msra.mxu0 0
        %3323 = vmatprep.subr.bf16.mxu0 0
        %3324 = vmatpush1.bf16.msra.mxu0 0
        %3325 = vmatprep.subr.bf16.mxu0 0
        %3326 = vmatpush1.bf16.msra.mxu0 0
        %3327 = vmatprep.subr.bf16.mxu0 0
        %3328 = vmatpush1.bf16.msra.mxu0 0
        %3329 = vmatprep.subr.bf16.mxu0 0
        %3330 = vmatpush1.bf16.msra.mxu0 0
        %3331 = vmatprep.subr.bf16.mxu0 0
        %3332 = vmatpush1.bf16.msra.mxu0 0
        %3333 = vmatprep.mubr.bf16.mxu0 0
        %3334 = vmatmul.mubr.bf16.gmra.mrb[0].mxu0 %v1126
        %v3335 = vpop.f32.mrb[0].mxu0
        %v3336 = vadd.f32 0.0, %v3335
        %v3337 = vpop.f32.mrb[0].mxu0
        %v3338 = vpop.f32.mrb[0].mxu0
        %v3339 = vpop.f32.mrb[0].mxu0
        %3340 = vdwg.mxu0
        %v3342 = vsel %vm1128, %v3292, 0
        %3344 = vmatprep.subr.bf16.mxu0 0
        %3345 = vmatpush1.bf16.msra.mxu0 %v3342
        %3346 = vmatprep.subr.bf16.mxu0 0
        %3347 = vmatpush1.bf16.msra.mxu0 0
        %3348 = vmatprep.subr.bf16.mxu0 0
        %3349 = vmatpush1.bf16.msra.mxu0 0
        %3350 = vmatprep.subr.bf16.mxu0 0
        %3351 = vmatpush1.bf16.msra.mxu0 0
        %3352 = vmatprep.subr.bf16.mxu0 0
        %3353 = vmatpush1.bf16.msra.mxu0 0
        %3354 = vmatprep.subr.bf16.mxu0 0
        %3355 = vmatpush1.bf16.msra.mxu0 0
        %3356 = vmatprep.subr.bf16.mxu0 0
        %3357 = vmatpush1.bf16.msra.mxu0 0
        %3358 = vmatprep.subr.bf16.mxu0 0
        %3359 = vmatpush1.bf16.msra.mxu0 0
        %3360 = vmatprep.subr.bf16.mxu0 0
        %3361 = vmatpush1.bf16.msra.mxu0 0
        %3362 = vmatprep.subr.bf16.mxu0 0
        %3363 = vmatpush1.bf16.msra.mxu0 0
        %3364 = vmatprep.subr.bf16.mxu0 0
        %3365 = vmatpush1.bf16.msra.mxu0 0
        %3366 = vmatprep.subr.bf16.mxu0 0
        %3367 = vmatpush1.bf16.msra.mxu0 0
        %3368 = vmatprep.subr.bf16.mxu0 0
        %3369 = vmatpush1.bf16.msra.mxu0 0
        %3370 = vmatprep.subr.bf16.mxu0 0
        %3371 = vmatpush1.bf16.msra.mxu0 0
        %3372 = vmatprep.subr.bf16.mxu0 0
        %3373 = vmatpush1.bf16.msra.mxu0 0
        %3374 = vmatprep.subr.bf16.mxu0 0
        %3375 = vmatpush1.bf16.msra.mxu0 0
        %3376 = vmatprep.mubr.bf16.mxu0 0
        %3377 = vmatmul.mubr.bf16.gmra.mrb[0].mxu0 %v1173
        %v3378 = vpop.f32.mrb[0].mxu0
        %v3379 = vadd.f32 %v3336, %v3378
        %v3380 = vpop.f32.mrb[0].mxu0
        %v3381 = vpop.f32.mrb[0].mxu0
        %v3382 = vpop.f32.mrb[0].mxu0
        %3383 = vdwg.mxu0
        %3384 = vrot.lane.b32.xlu0 %v3295, 124
        %v3385 = vpop.permute.xlu0 %3384
        %v3387 = vsel %vm1128, %v3385, 0
        %3389 = vmatprep.subr.bf16.mxu0 0
        %3390 = vmatpush1.bf16.msra.mxu0 %v3387
        %3391 = vmatprep.subr.bf16.mxu0 0
        %3392 = vmatpush1.bf16.msra.mxu0 0
        %3393 = vmatprep.subr.bf16.mxu0 0
        %3394 = vmatpush1.bf16.msra.mxu0 0
        %3395 = vmatprep.subr.bf16.mxu0 0
        %3396 = vmatpush1.bf16.msra.mxu0 0
        %3397 = vmatprep.subr.bf16.mxu0 0
        %3398 = vmatpush1.bf16.msra.mxu0 0
        %3399 = vmatprep.subr.bf16.mxu0 0
        %3400 = vmatpush1.bf16.msra.mxu0 0
        %3401 = vmatprep.subr.bf16.mxu0 0
        %3402 = vmatpush1.bf16.msra.mxu0 0
        %3403 = vmatprep.subr.bf16.mxu0 0
        %3404 = vmatpush1.bf16.msra.mxu0 0
        %3405 = vmatprep.subr.bf16.mxu0 0
        %3406 = vmatpush1.bf16.msra.mxu0 0
        %3407 = vmatprep.subr.bf16.mxu0 0
        %3408 = vmatpush1.bf16.msra.mxu0 0
        %3409 = vmatprep.subr.bf16.mxu0 0
        %3410 = vmatpush1.bf16.msra.mxu0 0
        %3411 = vmatprep.subr.bf16.mxu0 0
        %3412 = vmatpush1.bf16.msra.mxu0 0
        %3413 = vmatprep.subr.bf16.mxu0 0
        %3414 = vmatpush1.bf16.msra.mxu0 0
        %3415 = vmatprep.subr.bf16.mxu0 0
        %3416 = vmatpush1.bf16.msra.mxu0 0
        %3417 = vmatprep.subr.bf16.mxu0 0
        %3418 = vmatpush1.bf16.msra.mxu0 0
        %3419 = vmatprep.subr.bf16.mxu0 0
        %3420 = vmatpush1.bf16.msra.mxu0 0
        %3421 = vmatprep.mubr.bf16.mxu0 0
        %3422 = vmatmul.mubr.bf16.gmra.mrb[0].mxu0 %v1221
        %v3423 = vpop.f32.mrb[0].mxu0
        %v3424 = vadd.f32 0.0, %v3423
        %v3425 = vpop.f32.mrb[0].mxu0
        %v3426 = vpop.f32.mrb[0].mxu0
        %v3427 = vpop.f32.mrb[0].mxu0
        %3428 = vdwg.mxu0
        %v3429 = vadd.f32 %v3379, %v3424
        %v3430 = vld [vmem:[%s755] sm:$0xf]
        %v3432 = vsel %vm1128, %v3430, 0
        %3434 = vmatprep.subr.bf16.mxu0 0
        %3435 = vmatpush1.bf16.msra.mxu0 %v3432
        %3436 = vmatprep.subr.bf16.mxu0 0
        %3437 = vmatpush1.bf16.msra.mxu0 0
        %3438 = vmatprep.subr.bf16.mxu0 0
        %3439 = vmatpush1.bf16.msra.mxu0 0
        %3440 = vmatprep.subr.bf16.mxu0 0
        %3441 = vmatpush1.bf16.msra.mxu0 0
        %3442 = vmatprep.subr.bf16.mxu0 0
        %3443 = vmatpush1.bf16.msra.mxu0 0
        %3444 = vmatprep.subr.bf16.mxu0 0
        %3445 = vmatpush1.bf16.msra.mxu0 0
        %3446 = vmatprep.subr.bf16.mxu0 0
        %3447 = vmatpush1.bf16.msra.mxu0 0
        %3448 = vmatprep.subr.bf16.mxu0 0
        %3449 = vmatpush1.bf16.msra.mxu0 0
        %3450 = vmatprep.subr.bf16.mxu0 0
        %3451 = vmatpush1.bf16.msra.mxu0 0
        %3452 = vmatprep.subr.bf16.mxu0 0
        %3453 = vmatpush1.bf16.msra.mxu0 0
        %3454 = vmatprep.subr.bf16.mxu0 0
        %3455 = vmatpush1.bf16.msra.mxu0 0
        %3456 = vmatprep.subr.bf16.mxu0 0
        %3457 = vmatpush1.bf16.msra.mxu0 0
        %3458 = vmatprep.subr.bf16.mxu0 0
        %3459 = vmatpush1.bf16.msra.mxu0 0
        %3460 = vmatprep.subr.bf16.mxu0 0
        %3461 = vmatpush1.bf16.msra.mxu0 0
        %3462 = vmatprep.subr.bf16.mxu0 0
        %3463 = vmatpush1.bf16.msra.mxu0 0
        %3464 = vmatprep.subr.bf16.mxu0 0
        %3465 = vmatpush1.bf16.msra.mxu0 0
        %3466 = vmatprep.mubr.bf16.mxu0 0
        %3467 = vmatmul.mubr.bf16.gmra.mrb[0].mxu0 %v1269
        %v3468 = vpop.f32.mrb[0].mxu0
        %v3469 = vadd.f32 0.0, %v3468
        %v3470 = vpop.f32.mrb[0].mxu0
        %v3471 = vpop.f32.mrb[0].mxu0
        %v3472 = vpop.f32.mrb[0].mxu0
        %3473 = vdwg.mxu0
        %v3474 = vadd.f32 %v3429, %v3469
        %v3476 = vunpack.c.l.b16 %v3430
        %v3477 = vpack.c.b16 %v3476, %v3476
        %3478 = vrot.lane.b32.xlu0 %v3477, 126
        %v3479 = vpop.permute.xlu0 %3478
        %v3481 = vsel %vm1128, %v3479, 0
        %3483 = vmatprep.subr.bf16.mxu0 0
        %3484 = vmatpush1.bf16.msra.mxu0 %v3481
        %3485 = vmatprep.subr.bf16.mxu0 0
        %3486 = vmatpush1.bf16.msra.mxu0 0
        %3487 = vmatprep.subr.bf16.mxu0 0
        %3488 = vmatpush1.bf16.msra.mxu0 0
        %3489 = vmatprep.subr.bf16.mxu0 0
        %3490 = vmatpush1.bf16.msra.mxu0 0
        %3491 = vmatprep.subr.bf16.mxu0 0
        %3492 = vmatpush1.bf16.msra.mxu0 0
        %3493 = vmatprep.subr.bf16.mxu0 0
        %3494 = vmatpush1.bf16.msra.mxu0 0
        %3495 = vmatprep.subr.bf16.mxu0 0
        %3496 = vmatpush1.bf16.msra.mxu0 0
        %3497 = vmatprep.subr.bf16.mxu0 0
        %3498 = vmatpush1.bf16.msra.mxu0 0
        %3499 = vmatprep.subr.bf16.mxu0 0
        %3500 = vmatpush1.bf16.msra.mxu0 0
        %3501 = vmatprep.subr.bf16.mxu0 0
        %3502 = vmatpush1.bf16.msra.mxu0 0
        %3503 = vmatprep.subr.bf16.mxu0 0
        %3504 = vmatpush1.bf16.msra.mxu0 0
        %3505 = vmatprep.subr.bf16.mxu0 0
        %3506 = vmatpush1.bf16.msra.mxu0 0
        %3507 = vmatprep.subr.bf16.mxu0 0
        %3508 = vmatpush1.bf16.msra.mxu0 0
        %3509 = vmatprep.subr.bf16.mxu0 0
        %3510 = vmatpush1.bf16.msra.mxu0 0
        %3511 = vmatprep.subr.bf16.mxu0 0
        %3512 = vmatpush1.bf16.msra.mxu0 0
        %3513 = vmatprep.subr.bf16.mxu0 0
        %3514 = vmatpush1.bf16.msra.mxu0 0
        %3515 = vmatprep.mubr.bf16.mxu0 0
        %3516 = vmatmul.mubr.bf16.gmra.mrb[0].mxu0 %v1321
        %v3517 = vpop.f32.mrb[0].mxu0
        %v3518 = vadd.f32 0.0, %v3517
        %v3519 = vpop.f32.mrb[0].mxu0
        %v3520 = vpop.f32.mrb[0].mxu0
        %v3521 = vpop.f32.mrb[0].mxu0
        %3522 = vdwg.mxu0
        %v3523 = vadd.f32 %v3474, %v3518
        %3524 = vrot.lane.b32.xlu0 %v3477, 124
        %v3525 = vpop.permute.xlu0 %3524
        %v3527 = vsel %vm1128, %v3525, 0
        %3529 = vmatprep.subr.bf16.mxu0 0
        %3530 = vmatpush1.bf16.msra.mxu0 %v3527
        %3531 = vmatprep.subr.bf16.mxu0 0
        %3532 = vmatpush1.bf16.msra.mxu0 0
        %3533 = vmatprep.subr.bf16.mxu0 0
        %3534 = vmatpush1.bf16.msra.mxu0 0
        %3535 = vmatprep.subr.bf16.mxu0 0
        %3536 = vmatpush1.bf16.msra.mxu0 0
        %3537 = vmatprep.subr.bf16.mxu0 0
        %3538 = vmatpush1.bf16.msra.mxu0 0
        %3539 = vmatprep.subr.bf16.mxu0 0
        %3540 = vmatpush1.bf16.msra.mxu0 0
        %3541 = vmatprep.subr.bf16.mxu0 0
        %3542 = vmatpush1.bf16.msra.mxu0 0
        %3543 = vmatprep.subr.bf16.mxu0 0
        %3544 = vmatpush1.bf16.msra.mxu0 0
        %3545 = vmatprep.subr.bf16.mxu0 0
        %3546 = vmatpush1.bf16.msra.mxu0 0
        %3547 = vmatprep.subr.bf16.mxu0 0
        %3548 = vmatpush1.bf16.msra.mxu0 0
        %3549 = vmatprep.subr.bf16.mxu0 0
        %3550 = vmatpush1.bf16.msra.mxu0 0
        %3551 = vmatprep.subr.bf16.mxu0 0
        %3552 = vmatpush1.bf16.msra.mxu0 0
        %3553 = vmatprep.subr.bf16.mxu0 0
        %3554 = vmatpush1.bf16.msra.mxu0 0
        %3555 = vmatprep.subr.bf16.mxu0 0
        %3556 = vmatpush1.bf16.msra.mxu0 0
        %3557 = vmatprep.subr.bf16.mxu0 0
        %3558 = vmatpush1.bf16.msra.mxu0 0
        %3559 = vmatprep.subr.bf16.mxu0 0
        %3560 = vmatpush1.bf16.msra.mxu0 0
        %3561 = vmatprep.mubr.bf16.mxu0 0
        %3562 = vmatmul.mubr.bf16.gmra.mrb[0].mxu0 %v1370
        %v3563 = vpop.f32.mrb[0].mxu0
        %v3564 = vadd.f32 0.0, %v3563
        %v3565 = vpop.f32.mrb[0].mxu0
        %v3566 = vpop.f32.mrb[0].mxu0
        %v3567 = vpop.f32.mrb[0].mxu0
        %3568 = vdwg.mxu0
        %v3569 = vadd.f32 %v3523, %v3564
        %v3570 = vld [vmem:[%s897] sm:$0xf]
        %v3572 = vsel %vm1128, %v3570, 0
        %3574 = vmatprep.subr.bf16.mxu0 0
        %3575 = vmatpush1.bf16.msra.mxu0 %v3572
        %3576 = vmatprep.subr.bf16.mxu0 0
        %3577 = vmatpush1.bf16.msra.mxu0 0
        %3578 = vmatprep.subr.bf16.mxu0 0
        %3579 = vmatpush1.bf16.msra.mxu0 0
        %3580 = vmatprep.subr.bf16.mxu0 0
        %3581 = vmatpush1.bf16.msra.mxu0 0
        %3582 = vmatprep.subr.bf16.mxu0 0
        %3583 = vmatpush1.bf16.msra.mxu0 0
        %3584 = vmatprep.subr.bf16.mxu0 0
        %3585 = vmatpush1.bf16.msra.mxu0 0
        %3586 = vmatprep.subr.bf16.mxu0 0
        %3587 = vmatpush1.bf16.msra.mxu0 0
        %3588 = vmatprep.subr.bf16.mxu0 0
        %3589 = vmatpush1.bf16.msra.mxu0 0
        %3590 = vmatprep.subr.bf16.mxu0 0
        %3591 = vmatpush1.bf16.msra.mxu0 0
        %3592 = vmatprep.subr.bf16.mxu0 0
        %3593 = vmatpush1.bf16.msra.mxu0 0
        %3594 = vmatprep.subr.bf16.mxu0 0
        %3595 = vmatpush1.bf16.msra.mxu0 0
        %3596 = vmatprep.subr.bf16.mxu0 0
        %3597 = vmatpush1.bf16.msra.mxu0 0
        %3598 = vmatprep.subr.bf16.mxu0 0
        %3599 = vmatpush1.bf16.msra.mxu0 0
        %3600 = vmatprep.subr.bf16.mxu0 0
        %3601 = vmatpush1.bf16.msra.mxu0 0
        %3602 = vmatprep.subr.bf16.mxu0 0
        %3603 = vmatpush1.bf16.msra.mxu0 0
        %3604 = vmatprep.subr.bf16.mxu0 0
        %3605 = vmatpush1.bf16.msra.mxu0 0
        %3606 = vmatprep.mubr.bf16.mxu0 0
        %3607 = vmatmul.mubr.bf16.gmra.mrb[0].mxu0 %v1418
        %v3608 = vpop.f32.mrb[0].mxu0
        %v3609 = vadd.f32 0.0, %v3608
        %v3610 = vpop.f32.mrb[0].mxu0
        %v3611 = vpop.f32.mrb[0].mxu0
        %v3612 = vpop.f32.mrb[0].mxu0
        %3613 = vdwg.mxu0
        %v3614 = vadd.f32 %v3569, %v3609
        %v3616 = vunpack.c.l.b16 %v3570
        %v3617 = vpack.c.b16 %v3616, %v3616
        %3618 = vrot.lane.b32.xlu0 %v3617, 126
        %v3619 = vpop.permute.xlu0 %3618
        %v3621 = vsel %vm1128, %v3619, 0
        %3623 = vmatprep.subr.bf16.mxu0 0
        %3624 = vmatpush1.bf16.msra.mxu0 %v3621
        %3625 = vmatprep.subr.bf16.mxu0 0
        %3626 = vmatpush1.bf16.msra.mxu0 0
        %3627 = vmatprep.subr.bf16.mxu0 0
        %3628 = vmatpush1.bf16.msra.mxu0 0
        %3629 = vmatprep.subr.bf16.mxu0 0
        %3630 = vmatpush1.bf16.msra.mxu0 0
        %3631 = vmatprep.subr.bf16.mxu0 0
        %3632 = vmatpush1.bf16.msra.mxu0 0
        %3633 = vmatprep.subr.bf16.mxu0 0
        %3634 = vmatpush1.bf16.msra.mxu0 0
        %3635 = vmatprep.subr.bf16.mxu0 0
        %3636 = vmatpush1.bf16.msra.mxu0 0
        %3637 = vmatprep.subr.bf16.mxu0 0
        %3638 = vmatpush1.bf16.msra.mxu0 0
        %3639 = vmatprep.subr.bf16.mxu0 0
        %3640 = vmatpush1.bf16.msra.mxu0 0
        %3641 = vmatprep.subr.bf16.mxu0 0
        %3642 = vmatpush1.bf16.msra.mxu0 0
        %3643 = vmatprep.subr.bf16.mxu0 0
        %3644 = vmatpush1.bf16.msra.mxu0 0
        %3645 = vmatprep.subr.bf16.mxu0 0
        %3646 = vmatpush1.bf16.msra.mxu0 0
        %3647 = vmatprep.subr.bf16.mxu0 0
        %3648 = vmatpush1.bf16.msra.mxu0 0
        %3649 = vmatprep.subr.bf16.mxu0 0
        %3650 = vmatpush1.bf16.msra.mxu0 0
        %3651 = vmatprep.subr.bf16.mxu0 0
        %3652 = vmatpush1.bf16.msra.mxu0 0
        %3653 = vmatprep.subr.bf16.mxu0 0
        %3654 = vmatpush1.bf16.msra.mxu0 0
        %3655 = vmatprep.mubr.bf16.mxu0 0
        %3656 = vmatmul.mubr.bf16.gmra.mrb[0].mxu0 %v1470
        %v3657 = vpop.f32.mrb[0].mxu0
        %v3658 = vadd.f32 0.0, %v3657
        %v3659 = vpop.f32.mrb[0].mxu0
        %v3660 = vpop.f32.mrb[0].mxu0
        %v3661 = vpop.f32.mrb[0].mxu0
        %3662 = vdwg.mxu0
        %v3663 = vadd.f32 %v3614, %v3658
        %3664 = vrot.lane.b32.xlu0 %v3617, 124
        %v3665 = vpop.permute.xlu0 %3664
        %v3667 = vsel %vm1128, %v3665, 0
        %3669 = vmatprep.subr.bf16.mxu0 0
        %3670 = vmatpush1.bf16.msra.mxu0 %v3667
        %3671 = vmatprep.subr.bf16.mxu0 0
        %3672 = vmatpush1.bf16.msra.mxu0 0
        %3673 = vmatprep.subr.bf16.mxu0 0
        %3674 = vmatpush1.bf16.msra.mxu0 0
        %3675 = vmatprep.subr.bf16.mxu0 0
        %3676 = vmatpush1.bf16.msra.mxu0 0
        %3677 = vmatprep.subr.bf16.mxu0 0
        %3678 = vmatpush1.bf16.msra.mxu0 0
        %3679 = vmatprep.subr.bf16.mxu0 0
        %3680 = vmatpush1.bf16.msra.mxu0 0
        %3681 = vmatprep.subr.bf16.mxu0 0
        %3682 = vmatpush1.bf16.msra.mxu0 0
        %3683 = vmatprep.subr.bf16.mxu0 0
        %3684 = vmatpush1.bf16.msra.mxu0 0
        %3685 = vmatprep.subr.bf16.mxu0 0
        %3686 = vmatpush1.bf16.msra.mxu0 0
        %3687 = vmatprep.subr.bf16.mxu0 0
        %3688 = vmatpush1.bf16.msra.mxu0 0
        %3689 = vmatprep.subr.bf16.mxu0 0
        %3690 = vmatpush1.bf16.msra.mxu0 0
        %3691 = vmatprep.subr.bf16.mxu0 0
        %3692 = vmatpush1.bf16.msra.mxu0 0
        %3693 = vmatprep.subr.bf16.mxu0 0
        %3694 = vmatpush1.bf16.msra.mxu0 0
        %3695 = vmatprep.subr.bf16.mxu0 0
        %3696 = vmatpush1.bf16.msra.mxu0 0
        %3697 = vmatprep.subr.bf16.mxu0 0
        %3698 = vmatpush1.bf16.msra.mxu0 0
        %3699 = vmatprep.subr.bf16.mxu0 0
        %3700 = vmatpush1.bf16.msra.mxu0 0
        %3701 = vmatprep.mubr.bf16.mxu0 0
        %3702 = vmatmul.mubr.bf16.gmra.mrb[0].mxu0 %v1519
        %v3703 = vpop.f32.mrb[0].mxu0
        %v3704 = vadd.f32 0.0, %v3703
        %v3705 = vpop.f32.mrb[0].mxu0
        %v3706 = vpop.f32.mrb[0].mxu0
        %v3707 = vpop.f32.mrb[0].mxu0
        %3708 = vdwg.mxu0
        %v3709 = vadd.f32 %v3663, %v3704
        %v3710 = vunpack.c.l.bf16 %v3430
        %v3711 = vadd.f32 %v3709, %v1569
        %3713 = vrot.lane.b32.xlu0 %v3710, 126
        %v3714 = vpop.permute.xlu0 %3713
        %v3716 = vadd.f32 %v3711, %v3714
        %v3717 = vpack.c.bf16 %v3716, %v3716
        %s3718 = scalar_lea.vmem %s231, 20 [#allocation3]
        %3719 = vst.msk [vmem:[%s3718] sm:$0xf] %vm1578, %v3717
        %v3720 = vld [vmem:[%s684] sm:$0xf]
        %v3722 = vunpack.c.l.b16 %v3720
        %v3723 = vpack.c.b16 %v3722, %v3722
        %3724 = vrot.lane.b32.xlu0 %v3723, 126
        %v3725 = vpop.permute.xlu0 %3724
        %v3727 = vsel %vm1128, %v3725, 0
        %3729 = vmatprep.subr.bf16.mxu0 0
        %3730 = vmatpush1.bf16.msra.mxu0 %v3727
        %3731 = vmatprep.subr.bf16.mxu0 0
        %3732 = vmatpush1.bf16.msra.mxu0 0
        %3733 = vmatprep.subr.bf16.mxu0 0
        %3734 = vmatpush1.bf16.msra.mxu0 0
        %3735 = vmatprep.subr.bf16.mxu0 0
        %3736 = vmatpush1.bf16.msra.mxu0 0
        %3737 = vmatprep.subr.bf16.mxu0 0
        %3738 = vmatpush1.bf16.msra.mxu0 0
        %3739 = vmatprep.subr.bf16.mxu0 0
        %3740 = vmatpush1.bf16.msra.mxu0 0
        %3741 = vmatprep.subr.bf16.mxu0 0
        %3742 = vmatpush1.bf16.msra.mxu0 0
        %3743 = vmatprep.subr.bf16.mxu0 0
        %3744 = vmatpush1.bf16.msra.mxu0 0
        %3745 = vmatprep.subr.bf16.mxu0 0
        %3746 = vmatpush1.bf16.msra.mxu0 0
        %3747 = vmatprep.subr.bf16.mxu0 0
        %3748 = vmatpush1.bf16.msra.mxu0 0
        %3749 = vmatprep.subr.bf16.mxu0 0
        %3750 = vmatpush1.bf16.msra.mxu0 0
        %3751 = vmatprep.subr.bf16.mxu0 0
        %3752 = vmatpush1.bf16.msra.mxu0 0
        %3753 = vmatprep.subr.bf16.mxu0 0
        %3754 = vmatpush1.bf16.msra.mxu0 0
        %3755 = vmatprep.subr.bf16.mxu0 0
        %3756 = vmatpush1.bf16.msra.mxu0 0
        %3757 = vmatprep.subr.bf16.mxu0 0
        %3758 = vmatpush1.bf16.msra.mxu0 0
        %3759 = vmatprep.subr.bf16.mxu0 0
        %3760 = vmatpush1.bf16.msra.mxu0 0
        %3761 = vmatprep.mubr.bf16.mxu0 0
        %3762 = vmatmul.mubr.bf16.gmra.mrb[0].mxu0 %v1126
        %v3763 = vpop.f32.mrb[0].mxu0
        %v3764 = vadd.f32 0.0, %v3763
        %v3765 = vpop.f32.mrb[0].mxu0
        %v3766 = vpop.f32.mrb[0].mxu0
        %v3767 = vpop.f32.mrb[0].mxu0
        %3768 = vdwg.mxu0
        %v3770 = vsel %vm1128, %v3720, 0
        %3772 = vmatprep.subr.bf16.mxu0 0
        %3773 = vmatpush1.bf16.msra.mxu0 %v3770
        %3774 = vmatprep.subr.bf16.mxu0 0
        %3775 = vmatpush1.bf16.msra.mxu0 0
        %3776 = vmatprep.subr.bf16.mxu0 0
        %3777 = vmatpush1.bf16.msra.mxu0 0
        %3778 = vmatprep.subr.bf16.mxu0 0
        %3779 = vmatpush1.bf16.msra.mxu0 0
        %3780 = vmatprep.subr.bf16.mxu0 0
        %3781 = vmatpush1.bf16.msra.mxu0 0
        %3782 = vmatprep.subr.bf16.mxu0 0
        %3783 = vmatpush1.bf16.msra.mxu0 0
        %3784 = vmatprep.subr.bf16.mxu0 0
        %3785 = vmatpush1.bf16.msra.mxu0 0
        %3786 = vmatprep.subr.bf16.mxu0 0
        %3787 = vmatpush1.bf16.msra.mxu0 0
        %3788 = vmatprep.subr.bf16.mxu0 0
        %3789 = vmatpush1.bf16.msra.mxu0 0
        %3790 = vmatprep.subr.bf16.mxu0 0
        %3791 = vmatpush1.bf16.msra.mxu0 0
        %3792 = vmatprep.subr.bf16.mxu0 0
        %3793 = vmatpush1.bf16.msra.mxu0 0
        %3794 = vmatprep.subr.bf16.mxu0 0
        %3795 = vmatpush1.bf16.msra.mxu0 0
        %3796 = vmatprep.subr.bf16.mxu0 0
        %3797 = vmatpush1.bf16.msra.mxu0 0
        %3798 = vmatprep.subr.bf16.mxu0 0
        %3799 = vmatpush1.bf16.msra.mxu0 0
        %3800 = vmatprep.subr.bf16.mxu0 0
        %3801 = vmatpush1.bf16.msra.mxu0 0
        %3802 = vmatprep.subr.bf16.mxu0 0
        %3803 = vmatpush1.bf16.msra.mxu0 0
        %3804 = vmatprep.mubr.bf16.mxu0 0
        %3805 = vmatmul.mubr.bf16.gmra.mrb[0].mxu0 %v1173
        %v3806 = vpop.f32.mrb[0].mxu0
        %v3807 = vadd.f32 %v3764, %v3806
        %v3808 = vpop.f32.mrb[0].mxu0
        %v3809 = vpop.f32.mrb[0].mxu0
        %v3810 = vpop.f32.mrb[0].mxu0
        %3811 = vdwg.mxu0
        %3812 = vrot.lane.b32.xlu0 %v3723, 124
        %v3813 = vpop.permute.xlu0 %3812
        %v3815 = vsel %vm1128, %v3813, 0
        %3817 = vmatprep.subr.bf16.mxu0 0
        %3818 = vmatpush1.bf16.msra.mxu0 %v3815
        %3819 = vmatprep.subr.bf16.mxu0 0
        %3820 = vmatpush1.bf16.msra.mxu0 0
        %3821 = vmatprep.subr.bf16.mxu0 0
        %3822 = vmatpush1.bf16.msra.mxu0 0
        %3823 = vmatprep.subr.bf16.mxu0 0
        %3824 = vmatpush1.bf16.msra.mxu0 0
        %3825 = vmatprep.subr.bf16.mxu0 0
        %3826 = vmatpush1.bf16.msra.mxu0 0
        %3827 = vmatprep.subr.bf16.mxu0 0
        %3828 = vmatpush1.bf16.msra.mxu0 0
        %3829 = vmatprep.subr.bf16.mxu0 0
        %3830 = vmatpush1.bf16.msra.mxu0 0
        %3831 = vmatprep.subr.bf16.mxu0 0
        %3832 = vmatpush1.bf16.msra.mxu0 0
        %3833 = vmatprep.subr.bf16.mxu0 0
        %3834 = vmatpush1.bf16.msra.mxu0 0
        %3835 = vmatprep.subr.bf16.mxu0 0
        %3836 = vmatpush1.bf16.msra.mxu0 0
        %3837 = vmatprep.subr.bf16.mxu0 0
        %3838 = vmatpush1.bf16.msra.mxu0 0
        %3839 = vmatprep.subr.bf16.mxu0 0
        %3840 = vmatpush1.bf16.msra.mxu0 0
        %3841 = vmatprep.subr.bf16.mxu0 0
        %3842 = vmatpush1.bf16.msra.mxu0 0
        %3843 = vmatprep.subr.bf16.mxu0 0
        %3844 = vmatpush1.bf16.msra.mxu0 0
        %3845 = vmatprep.subr.bf16.mxu0 0
        %3846 = vmatpush1.bf16.msra.mxu0 0
        %3847 = vmatprep.subr.bf16.mxu0 0
        %3848 = vmatpush1.bf16.msra.mxu0 0
        %3849 = vmatprep.mubr.bf16.mxu0 0
        %3850 = vmatmul.mubr.bf16.gmra.mrb[0].mxu0 %v1221
        %v3851 = vpop.f32.mrb[0].mxu0
        %v3852 = vadd.f32 0.0, %v3851
        %v3853 = vpop.f32.mrb[0].mxu0
        %v3854 = vpop.f32.mrb[0].mxu0
        %v3855 = vpop.f32.mrb[0].mxu0
        %3856 = vdwg.mxu0
        %v3857 = vadd.f32 %v3807, %v3852
        %v3858 = vld [vmem:[%s826] sm:$0xf]
        %v3860 = vsel %vm1128, %v3858, 0
        %3862 = vmatprep.subr.bf16.mxu0 0
        %3863 = vmatpush1.bf16.msra.mxu0 %v3860
        %3864 = vmatprep.subr.bf16.mxu0 0
        %3865 = vmatpush1.bf16.msra.mxu0 0
        %3866 = vmatprep.subr.bf16.mxu0 0
        %3867 = vmatpush1.bf16.msra.mxu0 0
        %3868 = vmatprep.subr.bf16.mxu0 0
        %3869 = vmatpush1.bf16.msra.mxu0 0
        %3870 = vmatprep.subr.bf16.mxu0 0
        %3871 = vmatpush1.bf16.msra.mxu0 0
        %3872 = vmatprep.subr.bf16.mxu0 0
        %3873 = vmatpush1.bf16.msra.mxu0 0
        %3874 = vmatprep.subr.bf16.mxu0 0
        %3875 = vmatpush1.bf16.msra.mxu0 0
        %3876 = vmatprep.subr.bf16.mxu0 0
        %3877 = vmatpush1.bf16.msra.mxu0 0
        %3878 = vmatprep.subr.bf16.mxu0 0
        %3879 = vmatpush1.bf16.msra.mxu0 0
        %3880 = vmatprep.subr.bf16.mxu0 0
        %3881 = vmatpush1.bf16.msra.mxu0 0
        %3882 = vmatprep.subr.bf16.mxu0 0
        %3883 = vmatpush1.bf16.msra.mxu0 0
        %3884 = vmatprep.subr.bf16.mxu0 0
        %3885 = vmatpush1.bf16.msra.mxu0 0
        %3886 = vmatprep.subr.bf16.mxu0 0
        %3887 = vmatpush1.bf16.msra.mxu0 0
        %3888 = vmatprep.subr.bf16.mxu0 0
        %3889 = vmatpush1.bf16.msra.mxu0 0
        %3890 = vmatprep.subr.bf16.mxu0 0
        %3891 = vmatpush1.bf16.msra.mxu0 0
        %3892 = vmatprep.subr.bf16.mxu0 0
        %3893 = vmatpush1.bf16.msra.mxu0 0
        %3894 = vmatprep.mubr.bf16.mxu0 0
        %3895 = vmatmul.mubr.bf16.gmra.mrb[0].mxu0 %v1269
        %v3896 = vpop.f32.mrb[0].mxu0
        %v3897 = vadd.f32 0.0, %v3896
        %v3898 = vpop.f32.mrb[0].mxu0
        %v3899 = vpop.f32.mrb[0].mxu0
        %v3900 = vpop.f32.mrb[0].mxu0
        %3901 = vdwg.mxu0
        %v3902 = vadd.f32 %v3857, %v3897
        %v3904 = vunpack.c.l.b16 %v3858
        %v3905 = vpack.c.b16 %v3904, %v3904
        %3906 = vrot.lane.b32.xlu0 %v3905, 126
        %v3907 = vpop.permute.xlu0 %3906
        %v3909 = vsel %vm1128, %v3907, 0
        %3911 = vmatprep.subr.bf16.mxu0 0
        %3912 = vmatpush1.bf16.msra.mxu0 %v3909
        %3913 = vmatprep.subr.bf16.mxu0 0
        %3914 = vmatpush1.bf16.msra.mxu0 0
        %3915 = vmatprep.subr.bf16.mxu0 0
        %3916 = vmatpush1.bf16.msra.mxu0 0
        %3917 = vmatprep.subr.bf16.mxu0 0
        %3918 = vmatpush1.bf16.msra.mxu0 0
        %3919 = vmatprep.subr.bf16.mxu0 0
        %3920 = vmatpush1.bf16.msra.mxu0 0
        %3921 = vmatprep.subr.bf16.mxu0 0
        %3922 = vmatpush1.bf16.msra.mxu0 0
        %3923 = vmatprep.subr.bf16.mxu0 0
        %3924 = vmatpush1.bf16.msra.mxu0 0
        %3925 = vmatprep.subr.bf16.mxu0 0
        %3926 = vmatpush1.bf16.msra.mxu0 0
        %3927 = vmatprep.subr.bf16.mxu0 0
        %3928 = vmatpush1.bf16.msra.mxu0 0
        %3929 = vmatprep.subr.bf16.mxu0 0
        %3930 = vmatpush1.bf16.msra.mxu0 0
        %3931 = vmatprep.subr.bf16.mxu0 0
        %3932 = vmatpush1.bf16.msra.mxu0 0
        %3933 = vmatprep.subr.bf16.mxu0 0
        %3934 = vmatpush1.bf16.msra.mxu0 0
        %3935 = vmatprep.subr.bf16.mxu0 0
        %3936 = vmatpush1.bf16.msra.mxu0 0
        %3937 = vmatprep.subr.bf16.mxu0 0
        %3938 = vmatpush1.bf16.msra.mxu0 0
        %3939 = vmatprep.subr.bf16.mxu0 0
        %3940 = vmatpush1.bf16.msra.mxu0 0
        %3941 = vmatprep.subr.bf16.mxu0 0
        %3942 = vmatpush1.bf16.msra.mxu0 0
        %3943 = vmatprep.mubr.bf16.mxu0 0
        %3944 = vmatmul.mubr.bf16.gmra.mrb[0].mxu0 %v1321
        %v3945 = vpop.f32.mrb[0].mxu0
        %v3946 = vadd.f32 0.0, %v3945
        %v3947 = vpop.f32.mrb[0].mxu0
        %v3948 = vpop.f32.mrb[0].mxu0
        %v3949 = vpop.f32.mrb[0].mxu0
        %3950 = vdwg.mxu0
        %v3951 = vadd.f32 %v3902, %v3946
        %3952 = vrot.lane.b32.xlu0 %v3905, 124
        %v3953 = vpop.permute.xlu0 %3952
        %v3955 = vsel %vm1128, %v3953, 0
        %3957 = vmatprep.subr.bf16.mxu0 0
        %3958 = vmatpush1.bf16.msra.mxu0 %v3955
        %3959 = vmatprep.subr.bf16.mxu0 0
        %3960 = vmatpush1.bf16.msra.mxu0 0
        %3961 = vmatprep.subr.bf16.mxu0 0
        %3962 = vmatpush1.bf16.msra.mxu0 0
        %3963 = vmatprep.subr.bf16.mxu0 0
        %3964 = vmatpush1.bf16.msra.mxu0 0
        %3965 = vmatprep.subr.bf16.mxu0 0
        %3966 = vmatpush1.bf16.msra.mxu0 0
        %3967 = vmatprep.subr.bf16.mxu0 0
        %3968 = vmatpush1.bf16.msra.mxu0 0
        %3969 = vmatprep.subr.bf16.mxu0 0
        %3970 = vmatpush1.bf16.msra.mxu0 0
        %3971 = vmatprep.subr.bf16.mxu0 0
        %3972 = vmatpush1.bf16.msra.mxu0 0
        %3973 = vmatprep.subr.bf16.mxu0 0
        %3974 = vmatpush1.bf16.msra.mxu0 0
        %3975 = vmatprep.subr.bf16.mxu0 0
        %3976 = vmatpush1.bf16.msra.mxu0 0
        %3977 = vmatprep.subr.bf16.mxu0 0
        %3978 = vmatpush1.bf16.msra.mxu0 0
        %3979 = vmatprep.subr.bf16.mxu0 0
        %3980 = vmatpush1.bf16.msra.mxu0 0
        %3981 = vmatprep.subr.bf16.mxu0 0
        %3982 = vmatpush1.bf16.msra.mxu0 0
        %3983 = vmatprep.subr.bf16.mxu0 0
        %3984 = vmatpush1.bf16.msra.mxu0 0
        %3985 = vmatprep.subr.bf16.mxu0 0
        %3986 = vmatpush1.bf16.msra.mxu0 0
        %3987 = vmatprep.subr.bf16.mxu0 0
        %3988 = vmatpush1.bf16.msra.mxu0 0
        %3989 = vmatprep.mubr.bf16.mxu0 0
        %3990 = vmatmul.mubr.bf16.gmra.mrb[0].mxu0 %v1370
        %v3991 = vpop.f32.mrb[0].mxu0
        %v3992 = vadd.f32 0.0, %v3991
        %v3993 = vpop.f32.mrb[0].mxu0
        %v3994 = vpop.f32.mrb[0].mxu0
        %v3995 = vpop.f32.mrb[0].mxu0
        %3996 = vdwg.mxu0
        %v3997 = vadd.f32 %v3951, %v3992
        %v3998 = vld [vmem:[%s968] sm:$0xf]
        %v4000 = vsel %vm1128, %v3998, 0
        %4002 = vmatprep.subr.bf16.mxu0 0
        %4003 = vmatpush1.bf16.msra.mxu0 %v4000
        %4004 = vmatprep.subr.bf16.mxu0 0
        %4005 = vmatpush1.bf16.msra.mxu0 0
        %4006 = vmatprep.subr.bf16.mxu0 0
        %4007 = vmatpush1.bf16.msra.mxu0 0
        %4008 = vmatprep.subr.bf16.mxu0 0
        %4009 = vmatpush1.bf16.msra.mxu0 0
        %4010 = vmatprep.subr.bf16.mxu0 0
        %4011 = vmatpush1.bf16.msra.mxu0 0
        %4012 = vmatprep.subr.bf16.mxu0 0
        %4013 = vmatpush1.bf16.msra.mxu0 0
        %4014 = vmatprep.subr.bf16.mxu0 0
        %4015 = vmatpush1.bf16.msra.mxu0 0
        %4016 = vmatprep.subr.bf16.mxu0 0
        %4017 = vmatpush1.bf16.msra.mxu0 0
        %4018 = vmatprep.subr.bf16.mxu0 0
        %4019 = vmatpush1.bf16.msra.mxu0 0
        %4020 = vmatprep.subr.bf16.mxu0 0
        %4021 = vmatpush1.bf16.msra.mxu0 0
        %4022 = vmatprep.subr.bf16.mxu0 0
        %4023 = vmatpush1.bf16.msra.mxu0 0
        %4024 = vmatprep.subr.bf16.mxu0 0
        %4025 = vmatpush1.bf16.msra.mxu0 0
        %4026 = vmatprep.subr.bf16.mxu0 0
        %4027 = vmatpush1.bf16.msra.mxu0 0
        %4028 = vmatprep.subr.bf16.mxu0 0
        %4029 = vmatpush1.bf16.msra.mxu0 0
        %4030 = vmatprep.subr.bf16.mxu0 0
        %4031 = vmatpush1.bf16.msra.mxu0 0
        %4032 = vmatprep.subr.bf16.mxu0 0
        %4033 = vmatpush1.bf16.msra.mxu0 0
        %4034 = vmatprep.mubr.bf16.mxu0 0
        %4035 = vmatmul.mubr.bf16.gmra.mrb[0].mxu0 %v1418
        %v4036 = vpop.f32.mrb[0].mxu0
        %v4037 = vadd.f32 0.0, %v4036
        %v4038 = vpop.f32.mrb[0].mxu0
        %v4039 = vpop.f32.mrb[0].mxu0
        %v4040 = vpop.f32.mrb[0].mxu0
        %4041 = vdwg.mxu0
        %v4042 = vadd.f32 %v3997, %v4037
        %v4044 = vunpack.c.l.b16 %v3998
        %v4045 = vpack.c.b16 %v4044, %v4044
        %4046 = vrot.lane.b32.xlu0 %v4045, 126
        %v4047 = vpop.permute.xlu0 %4046
        %v4049 = vsel %vm1128, %v4047, 0
        %4051 = vmatprep.subr.bf16.mxu0 0
        %4052 = vmatpush1.bf16.msra.mxu0 %v4049
        %4053 = vmatprep.subr.bf16.mxu0 0
        %4054 = vmatpush1.bf16.msra.mxu0 0
        %4055 = vmatprep.subr.bf16.mxu0 0
        %4056 = vmatpush1.bf16.msra.mxu0 0
        %4057 = vmatprep.subr.bf16.mxu0 0
        %4058 = vmatpush1.bf16.msra.mxu0 0
        %4059 = vmatprep.subr.bf16.mxu0 0
        %4060 = vmatpush1.bf16.msra.mxu0 0
        %4061 = vmatprep.subr.bf16.mxu0 0
        %4062 = vmatpush1.bf16.msra.mxu0 0
        %4063 = vmatprep.subr.bf16.mxu0 0
        %4064 = vmatpush1.bf16.msra.mxu0 0
        %4065 = vmatprep.subr.bf16.mxu0 0
        %4066 = vmatpush1.bf16.msra.mxu0 0
        %4067 = vmatprep.subr.bf16.mxu0 0
        %4068 = vmatpush1.bf16.msra.mxu0 0
        %4069 = vmatprep.subr.bf16.mxu0 0
        %4070 = vmatpush1.bf16.msra.mxu0 0
        %4071 = vmatprep.subr.bf16.mxu0 0
        %4072 = vmatpush1.bf16.msra.mxu0 0
        %4073 = vmatprep.subr.bf16.mxu0 0
        %4074 = vmatpush1.bf16.msra.mxu0 0
        %4075 = vmatprep.subr.bf16.mxu0 0
        %4076 = vmatpush1.bf16.msra.mxu0 0
        %4077 = vmatprep.subr.bf16.mxu0 0
        %4078 = vmatpush1.bf16.msra.mxu0 0
        %4079 = vmatprep.subr.bf16.mxu0 0
        %4080 = vmatpush1.bf16.msra.mxu0 0
        %4081 = vmatprep.subr.bf16.mxu0 0
        %4082 = vmatpush1.bf16.msra.mxu0 0
        %4083 = vmatprep.mubr.bf16.mxu0 0
        %4084 = vmatmul.mubr.bf16.gmra.mrb[0].mxu0 %v1470
        %v4085 = vpop.f32.mrb[0].mxu0
        %v4086 = vadd.f32 0.0, %v4085
        %v4087 = vpop.f32.mrb[0].mxu0
        %v4088 = vpop.f32.mrb[0].mxu0
        %v4089 = vpop.f32.mrb[0].mxu0
        %4090 = vdwg.mxu0
        %v4091 = vadd.f32 %v4042, %v4086
        %4092 = vrot.lane.b32.xlu0 %v4045, 124
        %v4093 = vpop.permute.xlu0 %4092
        %v4095 = vsel %vm1128, %v4093, 0
        %4097 = vmatprep.subr.bf16.mxu0 0
        %4098 = vmatpush1.bf16.msra.mxu0 %v4095
        %4099 = vmatprep.subr.bf16.mxu0 0
        %4100 = vmatpush1.bf16.msra.mxu0 0
        %4101 = vmatprep.subr.bf16.mxu0 0
        %4102 = vmatpush1.bf16.msra.mxu0 0
        %4103 = vmatprep.subr.bf16.mxu0 0
        %4104 = vmatpush1.bf16.msra.mxu0 0
        %4105 = vmatprep.subr.bf16.mxu0 0
        %4106 = vmatpush1.bf16.msra.mxu0 0
        %4107 = vmatprep.subr.bf16.mxu0 0
        %4108 = vmatpush1.bf16.msra.mxu0 0
        %4109 = vmatprep.subr.bf16.mxu0 0
        %4110 = vmatpush1.bf16.msra.mxu0 0
        %4111 = vmatprep.subr.bf16.mxu0 0
        %4112 = vmatpush1.bf16.msra.mxu0 0
        %4113 = vmatprep.subr.bf16.mxu0 0
        %4114 = vmatpush1.bf16.msra.mxu0 0
        %4115 = vmatprep.subr.bf16.mxu0 0
        %4116 = vmatpush1.bf16.msra.mxu0 0
        %4117 = vmatprep.subr.bf16.mxu0 0
        %4118 = vmatpush1.bf16.msra.mxu0 0
        %4119 = vmatprep.subr.bf16.mxu0 0
        %4120 = vmatpush1.bf16.msra.mxu0 0
        %4121 = vmatprep.subr.bf16.mxu0 0
        %4122 = vmatpush1.bf16.msra.mxu0 0
        %4123 = vmatprep.subr.bf16.mxu0 0
        %4124 = vmatpush1.bf16.msra.mxu0 0
        %4125 = vmatprep.subr.bf16.mxu0 0
        %4126 = vmatpush1.bf16.msra.mxu0 0
        %4127 = vmatprep.subr.bf16.mxu0 0
        %4128 = vmatpush1.bf16.msra.mxu0 0
        %4129 = vmatprep.mubr.bf16.mxu0 0
        %4130 = vmatmul.mubr.bf16.gmra.mrb[0].mxu0 %v1519
        %v4131 = vpop.f32.mrb[0].mxu0
        %v4132 = vadd.f32 0.0, %v4131
        %v4133 = vpop.f32.mrb[0].mxu0
        %v4134 = vpop.f32.mrb[0].mxu0
        %v4135 = vpop.f32.mrb[0].mxu0
        %4136 = vdwg.mxu0
        %v4137 = vadd.f32 %v4091, %v4132
        %v4138 = vunpack.c.l.bf16 %v3858
        %v4139 = vadd.f32 %v4137, %v1569
        %4141 = vrot.lane.b32.xlu0 %v4138, 126
        %v4142 = vpop.permute.xlu0 %4141
        %v4144 = vadd.f32 %v4139, %v4142
        %v4145 = vpack.c.bf16 %v4144, %v4144
        %s4146 = scalar_lea.vmem %s231, 24 [#allocation3]
        %4147 = vst.msk [vmem:[%s4146] sm:$0xf] %vm1578, %v4145
        %v4148 = vld [vmem:[%s755] sm:$0xf]
        %v4150 = vunpack.c.l.b16 %v4148
        %v4151 = vpack.c.b16 %v4150, %v4150
        %4152 = vrot.lane.b32.xlu0 %v4151, 126
        %v4153 = vpop.permute.xlu0 %4152
        %v4155 = vsel %vm1128, %v4153, 0
        %4157 = vmatprep.subr.bf16.mxu0 0
        %4158 = vmatpush1.bf16.msra.mxu0 %v4155
        %4159 = vmatprep.subr.bf16.mxu0 0
        %4160 = vmatpush1.bf16.msra.mxu0 0
        %4161 = vmatprep.subr.bf16.mxu0 0
        %4162 = vmatpush1.bf16.msra.mxu0 0
        %4163 = vmatprep.subr.bf16.mxu0 0
        %4164 = vmatpush1.bf16.msra.mxu0 0
        %4165 = vmatprep.subr.bf16.mxu0 0
        %4166 = vmatpush1.bf16.msra.mxu0 0
        %4167 = vmatprep.subr.bf16.mxu0 0
        %4168 = vmatpush1.bf16.msra.mxu0 0
        %4169 = vmatprep.subr.bf16.mxu0 0
        %4170 = vmatpush1.bf16.msra.mxu0 0
        %4171 = vmatprep.subr.bf16.mxu0 0
        %4172 = vmatpush1.bf16.msra.mxu0 0
        %4173 = vmatprep.subr.bf16.mxu0 0
        %4174 = vmatpush1.bf16.msra.mxu0 0
        %4175 = vmatprep.subr.bf16.mxu0 0
        %4176 = vmatpush1.bf16.msra.mxu0 0
        %4177 = vmatprep.subr.bf16.mxu0 0
        %4178 = vmatpush1.bf16.msra.mxu0 0
        %4179 = vmatprep.subr.bf16.mxu0 0
        %4180 = vmatpush1.bf16.msra.mxu0 0
        %4181 = vmatprep.subr.bf16.mxu0 0
        %4182 = vmatpush1.bf16.msra.mxu0 0
        %4183 = vmatprep.subr.bf16.mxu0 0
        %4184 = vmatpush1.bf16.msra.mxu0 0
        %4185 = vmatprep.subr.bf16.mxu0 0
        %4186 = vmatpush1.bf16.msra.mxu0 0
        %4187 = vmatprep.subr.bf16.mxu0 0
        %4188 = vmatpush1.bf16.msra.mxu0 0
        %4189 = vmatprep.mubr.bf16.mxu0 0
        %4190 = vmatmul.mubr.bf16.gmra.mrb[0].mxu0 %v1126
        %v4191 = vpop.f32.mrb[0].mxu0
        %v4192 = vadd.f32 0.0, %v4191
        %v4193 = vpop.f32.mrb[0].mxu0
        %v4194 = vpop.f32.mrb[0].mxu0
        %v4195 = vpop.f32.mrb[0].mxu0
        %4196 = vdwg.mxu0
        %v4198 = vsel %vm1128, %v4148, 0
        %4200 = vmatprep.subr.bf16.mxu0 0
        %4201 = vmatpush1.bf16.msra.mxu0 %v4198
        %4202 = vmatprep.subr.bf16.mxu0 0
        %4203 = vmatpush1.bf16.msra.mxu0 0
        %4204 = vmatprep.subr.bf16.mxu0 0
        %4205 = vmatpush1.bf16.msra.mxu0 0
        %4206 = vmatprep.subr.bf16.mxu0 0
        %4207 = vmatpush1.bf16.msra.mxu0 0
        %4208 = vmatprep.subr.bf16.mxu0 0
        %4209 = vmatpush1.bf16.msra.mxu0 0
        %4210 = vmatprep.subr.bf16.mxu0 0
        %4211 = vmatpush1.bf16.msra.mxu0 0
        %4212 = vmatprep.subr.bf16.mxu0 0
        %4213 = vmatpush1.bf16.msra.mxu0 0
        %4214 = vmatprep.subr.bf16.mxu0 0
        %4215 = vmatpush1.bf16.msra.mxu0 0
        %4216 = vmatprep.subr.bf16.mxu0 0
        %4217 = vmatpush1.bf16.msra.mxu0 0
        %4218 = vmatprep.subr.bf16.mxu0 0
        %4219 = vmatpush1.bf16.msra.mxu0 0
        %4220 = vmatprep.subr.bf16.mxu0 0
        %4221 = vmatpush1.bf16.msra.mxu0 0
        %4222 = vmatprep.subr.bf16.mxu0 0
        %4223 = vmatpush1.bf16.msra.mxu0 0
        %4224 = vmatprep.subr.bf16.mxu0 0
        %4225 = vmatpush1.bf16.msra.mxu0 0
        %4226 = vmatprep.subr.bf16.mxu0 0
        %4227 = vmatpush1.bf16.msra.mxu0 0
        %4228 = vmatprep.subr.bf16.mxu0 0
        %4229 = vmatpush1.bf16.msra.mxu0 0
        %4230 = vmatprep.subr.bf16.mxu0 0
        %4231 = vmatpush1.bf16.msra.mxu0 0
        %4232 = vmatprep.mubr.bf16.mxu0 0
        %4233 = vmatmul.mubr.bf16.gmra.mrb[0].mxu0 %v1173
        %v4234 = vpop.f32.mrb[0].mxu0
        %v4235 = vadd.f32 %v4192, %v4234
        %v4236 = vpop.f32.mrb[0].mxu0
        %v4237 = vpop.f32.mrb[0].mxu0
        %v4238 = vpop.f32.mrb[0].mxu0
        %4239 = vdwg.mxu0
        %4240 = vrot.lane.b32.xlu0 %v4151, 124
        %v4241 = vpop.permute.xlu0 %4240
        %v4243 = vsel %vm1128, %v4241, 0
        %4245 = vmatprep.subr.bf16.mxu0 0
        %4246 = vmatpush1.bf16.msra.mxu0 %v4243
        %4247 = vmatprep.subr.bf16.mxu0 0
        %4248 = vmatpush1.bf16.msra.mxu0 0
        %4249 = vmatprep.subr.bf16.mxu0 0
        %4250 = vmatpush1.bf16.msra.mxu0 0
        %4251 = vmatprep.subr.bf16.mxu0 0
        %4252 = vmatpush1.bf16.msra.mxu0 0
        %4253 = vmatprep.subr.bf16.mxu0 0
        %4254 = vmatpush1.bf16.msra.mxu0 0
        %4255 = vmatprep.subr.bf16.mxu0 0
        %4256 = vmatpush1.bf16.msra.mxu0 0
        %4257 = vmatprep.subr.bf16.mxu0 0
        %4258 = vmatpush1.bf16.msra.mxu0 0
        %4259 = vmatprep.subr.bf16.mxu0 0
        %4260 = vmatpush1.bf16.msra.mxu0 0
        %4261 = vmatprep.subr.bf16.mxu0 0
        %4262 = vmatpush1.bf16.msra.mxu0 0
        %4263 = vmatprep.subr.bf16.mxu0 0
        %4264 = vmatpush1.bf16.msra.mxu0 0
        %4265 = vmatprep.subr.bf16.mxu0 0
        %4266 = vmatpush1.bf16.msra.mxu0 0
        %4267 = vmatprep.subr.bf16.mxu0 0
        %4268 = vmatpush1.bf16.msra.mxu0 0
        %4269 = vmatprep.subr.bf16.mxu0 0
        %4270 = vmatpush1.bf16.msra.mxu0 0
        %4271 = vmatprep.subr.bf16.mxu0 0
        %4272 = vmatpush1.bf16.msra.mxu0 0
        %4273 = vmatprep.subr.bf16.mxu0 0
        %4274 = vmatpush1.bf16.msra.mxu0 0
        %4275 = vmatprep.subr.bf16.mxu0 0
        %4276 = vmatpush1.bf16.msra.mxu0 0
        %4277 = vmatprep.mubr.bf16.mxu0 0
        %4278 = vmatmul.mubr.bf16.gmra.mrb[0].mxu0 %v1221
        %v4279 = vpop.f32.mrb[0].mxu0
        %v4280 = vadd.f32 0.0, %v4279
        %v4281 = vpop.f32.mrb[0].mxu0
        %v4282 = vpop.f32.mrb[0].mxu0
        %v4283 = vpop.f32.mrb[0].mxu0
        %4284 = vdwg.mxu0
        %v4285 = vadd.f32 %v4235, %v4280
        %v4286 = vld [vmem:[%s897] sm:$0xf]
        %v4288 = vsel %vm1128, %v4286, 0
        %4290 = vmatprep.subr.bf16.mxu0 0
        %4291 = vmatpush1.bf16.msra.mxu0 %v4288
        %4292 = vmatprep.subr.bf16.mxu0 0
        %4293 = vmatpush1.bf16.msra.mxu0 0
        %4294 = vmatprep.subr.bf16.mxu0 0
        %4295 = vmatpush1.bf16.msra.mxu0 0
        %4296 = vmatprep.subr.bf16.mxu0 0
        %4297 = vmatpush1.bf16.msra.mxu0 0
        %4298 = vmatprep.subr.bf16.mxu0 0
        %4299 = vmatpush1.bf16.msra.mxu0 0
        %4300 = vmatprep.subr.bf16.mxu0 0
        %4301 = vmatpush1.bf16.msra.mxu0 0
        %4302 = vmatprep.subr.bf16.mxu0 0
        %4303 = vmatpush1.bf16.msra.mxu0 0
        %4304 = vmatprep.subr.bf16.mxu0 0
        %4305 = vmatpush1.bf16.msra.mxu0 0
        %4306 = vmatprep.subr.bf16.mxu0 0
        %4307 = vmatpush1.bf16.msra.mxu0 0
        %4308 = vmatprep.subr.bf16.mxu0 0
        %4309 = vmatpush1.bf16.msra.mxu0 0
        %4310 = vmatprep.subr.bf16.mxu0 0
        %4311 = vmatpush1.bf16.msra.mxu0 0
        %4312 = vmatprep.subr.bf16.mxu0 0
        %4313 = vmatpush1.bf16.msra.mxu0 0
        %4314 = vmatprep.subr.bf16.mxu0 0
        %4315 = vmatpush1.bf16.msra.mxu0 0
        %4316 = vmatprep.subr.bf16.mxu0 0
        %4317 = vmatpush1.bf16.msra.mxu0 0
        %4318 = vmatprep.subr.bf16.mxu0 0
        %4319 = vmatpush1.bf16.msra.mxu0 0
        %4320 = vmatprep.subr.bf16.mxu0 0
        %4321 = vmatpush1.bf16.msra.mxu0 0
        %4322 = vmatprep.mubr.bf16.mxu0 0
        %4323 = vmatmul.mubr.bf16.gmra.mrb[0].mxu0 %v1269
        %v4324 = vpop.f32.mrb[0].mxu0
        %v4325 = vadd.f32 0.0, %v4324
        %v4326 = vpop.f32.mrb[0].mxu0
        %v4327 = vpop.f32.mrb[0].mxu0
        %v4328 = vpop.f32.mrb[0].mxu0
        %4329 = vdwg.mxu0
        %v4330 = vadd.f32 %v4285, %v4325
        %v4332 = vunpack.c.l.b16 %v4286
        %v4333 = vpack.c.b16 %v4332, %v4332
        %4334 = vrot.lane.b32.xlu0 %v4333, 126
        %v4335 = vpop.permute.xlu0 %4334
        %v4337 = vsel %vm1128, %v4335, 0
        %4339 = vmatprep.subr.bf16.mxu0 0
        %4340 = vmatpush1.bf16.msra.mxu0 %v4337
        %4341 = vmatprep.subr.bf16.mxu0 0
        %4342 = vmatpush1.bf16.msra.mxu0 0
        %4343 = vmatprep.subr.bf16.mxu0 0
        %4344 = vmatpush1.bf16.msra.mxu0 0
        %4345 = vmatprep.subr.bf16.mxu0 0
        %4346 = vmatpush1.bf16.msra.mxu0 0
        %4347 = vmatprep.subr.bf16.mxu0 0
        %4348 = vmatpush1.bf16.msra.mxu0 0
        %4349 = vmatprep.subr.bf16.mxu0 0
        %4350 = vmatpush1.bf16.msra.mxu0 0
        %4351 = vmatprep.subr.bf16.mxu0 0
        %4352 = vmatpush1.bf16.msra.mxu0 0
        %4353 = vmatprep.subr.bf16.mxu0 0
        %4354 = vmatpush1.bf16.msra.mxu0 0
        %4355 = vmatprep.subr.bf16.mxu0 0
        %4356 = vmatpush1.bf16.msra.mxu0 0
        %4357 = vmatprep.subr.bf16.mxu0 0
        %4358 = vmatpush1.bf16.msra.mxu0 0
        %4359 = vmatprep.subr.bf16.mxu0 0
        %4360 = vmatpush1.bf16.msra.mxu0 0
        %4361 = vmatprep.subr.bf16.mxu0 0
        %4362 = vmatpush1.bf16.msra.mxu0 0
        %4363 = vmatprep.subr.bf16.mxu0 0
        %4364 = vmatpush1.bf16.msra.mxu0 0
        %4365 = vmatprep.subr.bf16.mxu0 0
        %4366 = vmatpush1.bf16.msra.mxu0 0
        %4367 = vmatprep.subr.bf16.mxu0 0
        %4368 = vmatpush1.bf16.msra.mxu0 0
        %4369 = vmatprep.subr.bf16.mxu0 0
        %4370 = vmatpush1.bf16.msra.mxu0 0
        %4371 = vmatprep.mubr.bf16.mxu0 0
        %4372 = vmatmul.mubr.bf16.gmra.mrb[0].mxu0 %v1321
        %v4373 = vpop.f32.mrb[0].mxu0
        %v4374 = vadd.f32 0.0, %v4373
        %v4375 = vpop.f32.mrb[0].mxu0
        %v4376 = vpop.f32.mrb[0].mxu0
        %v4377 = vpop.f32.mrb[0].mxu0
        %4378 = vdwg.mxu0
        %v4379 = vadd.f32 %v4330, %v4374
        %4380 = vrot.lane.b32.xlu0 %v4333, 124
        %v4381 = vpop.permute.xlu0 %4380
        %v4383 = vsel %vm1128, %v4381, 0
        %4385 = vmatprep.subr.bf16.mxu0 0
        %4386 = vmatpush1.bf16.msra.mxu0 %v4383
        %4387 = vmatprep.subr.bf16.mxu0 0
        %4388 = vmatpush1.bf16.msra.mxu0 0
        %4389 = vmatprep.subr.bf16.mxu0 0
        %4390 = vmatpush1.bf16.msra.mxu0 0
        %4391 = vmatprep.subr.bf16.mxu0 0
        %4392 = vmatpush1.bf16.msra.mxu0 0
        %4393 = vmatprep.subr.bf16.mxu0 0
        %4394 = vmatpush1.bf16.msra.mxu0 0
        %4395 = vmatprep.subr.bf16.mxu0 0
        %4396 = vmatpush1.bf16.msra.mxu0 0
        %4397 = vmatprep.subr.bf16.mxu0 0
        %4398 = vmatpush1.bf16.msra.mxu0 0
        %4399 = vmatprep.subr.bf16.mxu0 0
        %4400 = vmatpush1.bf16.msra.mxu0 0
        %4401 = vmatprep.subr.bf16.mxu0 0
        %4402 = vmatpush1.bf16.msra.mxu0 0
        %4403 = vmatprep.subr.bf16.mxu0 0
        %4404 = vmatpush1.bf16.msra.mxu0 0
        %4405 = vmatprep.subr.bf16.mxu0 0
        %4406 = vmatpush1.bf16.msra.mxu0 0
        %4407 = vmatprep.subr.bf16.mxu0 0
        %4408 = vmatpush1.bf16.msra.mxu0 0
        %4409 = vmatprep.subr.bf16.mxu0 0
        %4410 = vmatpush1.bf16.msra.mxu0 0
        %4411 = vmatprep.subr.bf16.mxu0 0
        %4412 = vmatpush1.bf16.msra.mxu0 0
        %4413 = vmatprep.subr.bf16.mxu0 0
        %4414 = vmatpush1.bf16.msra.mxu0 0
        %4415 = vmatprep.subr.bf16.mxu0 0
        %4416 = vmatpush1.bf16.msra.mxu0 0
        %4417 = vmatprep.mubr.bf16.mxu0 0
        %4418 = vmatmul.mubr.bf16.gmra.mrb[0].mxu0 %v1370
        %v4419 = vpop.f32.mrb[0].mxu0
        %v4420 = vadd.f32 0.0, %v4419
        %v4421 = vpop.f32.mrb[0].mxu0
        %v4422 = vpop.f32.mrb[0].mxu0
        %v4423 = vpop.f32.mrb[0].mxu0
        %4424 = vdwg.mxu0
        %v4425 = vadd.f32 %v4379, %v4420
        %v4426 = vld [vmem:[%s1039] sm:$0xf]
        %v4428 = vsel %vm1128, %v4426, 0
        %4430 = vmatprep.subr.bf16.mxu0 0
        %4431 = vmatpush1.bf16.msra.mxu0 %v4428
        %4432 = vmatprep.subr.bf16.mxu0 0
        %4433 = vmatpush1.bf16.msra.mxu0 0
        %4434 = vmatprep.subr.bf16.mxu0 0
        %4435 = vmatpush1.bf16.msra.mxu0 0
        %4436 = vmatprep.subr.bf16.mxu0 0
        %4437 = vmatpush1.bf16.msra.mxu0 0
        %4438 = vmatprep.subr.bf16.mxu0 0
        %4439 = vmatpush1.bf16.msra.mxu0 0
        %4440 = vmatprep.subr.bf16.mxu0 0
        %4441 = vmatpush1.bf16.msra.mxu0 0
        %4442 = vmatprep.subr.bf16.mxu0 0
        %4443 = vmatpush1.bf16.msra.mxu0 0
        %4444 = vmatprep.subr.bf16.mxu0 0
        %4445 = vmatpush1.bf16.msra.mxu0 0
        %4446 = vmatprep.subr.bf16.mxu0 0
        %4447 = vmatpush1.bf16.msra.mxu0 0
        %4448 = vmatprep.subr.bf16.mxu0 0
        %4449 = vmatpush1.bf16.msra.mxu0 0
        %4450 = vmatprep.subr.bf16.mxu0 0
        %4451 = vmatpush1.bf16.msra.mxu0 0
        %4452 = vmatprep.subr.bf16.mxu0 0
        %4453 = vmatpush1.bf16.msra.mxu0 0
        %4454 = vmatprep.subr.bf16.mxu0 0
        %4455 = vmatpush1.bf16.msra.mxu0 0
        %4456 = vmatprep.subr.bf16.mxu0 0
        %4457 = vmatpush1.bf16.msra.mxu0 0
        %4458 = vmatprep.subr.bf16.mxu0 0
        %4459 = vmatpush1.bf16.msra.mxu0 0
        %4460 = vmatprep.subr.bf16.mxu0 0
        %4461 = vmatpush1.bf16.msra.mxu0 0
        %4462 = vmatprep.mubr.bf16.mxu0 0
        %4463 = vmatmul.mubr.bf16.gmra.mrb[0].mxu0 %v1418
        %v4464 = vpop.f32.mrb[0].mxu0
        %v4465 = vadd.f32 0.0, %v4464
        %v4466 = vpop.f32.mrb[0].mxu0
        %v4467 = vpop.f32.mrb[0].mxu0
        %v4468 = vpop.f32.mrb[0].mxu0
        %4469 = vdwg.mxu0
        %v4470 = vadd.f32 %v4425, %v4465
        %v4472 = vunpack.c.l.b16 %v4426
        %v4473 = vpack.c.b16 %v4472, %v4472
        %4474 = vrot.lane.b32.xlu0 %v4473, 126
        %v4475 = vpop.permute.xlu0 %4474
        %v4477 = vsel %vm1128, %v4475, 0
        %4479 = vmatprep.subr.bf16.mxu0 0
        %4480 = vmatpush1.bf16.msra.mxu0 %v4477
        %4481 = vmatprep.subr.bf16.mxu0 0
        %4482 = vmatpush1.bf16.msra.mxu0 0
        %4483 = vmatprep.subr.bf16.mxu0 0
        %4484 = vmatpush1.bf16.msra.mxu0 0
        %4485 = vmatprep.subr.bf16.mxu0 0
        %4486 = vmatpush1.bf16.msra.mxu0 0
        %4487 = vmatprep.subr.bf16.mxu0 0
        %4488 = vmatpush1.bf16.msra.mxu0 0
        %4489 = vmatprep.subr.bf16.mxu0 0
        %4490 = vmatpush1.bf16.msra.mxu0 0
        %4491 = vmatprep.subr.bf16.mxu0 0
        %4492 = vmatpush1.bf16.msra.mxu0 0
        %4493 = vmatprep.subr.bf16.mxu0 0
        %4494 = vmatpush1.bf16.msra.mxu0 0
        %4495 = vmatprep.subr.bf16.mxu0 0
        %4496 = vmatpush1.bf16.msra.mxu0 0
        %4497 = vmatprep.subr.bf16.mxu0 0
        %4498 = vmatpush1.bf16.msra.mxu0 0
        %4499 = vmatprep.subr.bf16.mxu0 0
        %4500 = vmatpush1.bf16.msra.mxu0 0
        %4501 = vmatprep.subr.bf16.mxu0 0
        %4502 = vmatpush1.bf16.msra.mxu0 0
        %4503 = vmatprep.subr.bf16.mxu0 0
        %4504 = vmatpush1.bf16.msra.mxu0 0
        %4505 = vmatprep.subr.bf16.mxu0 0
        %4506 = vmatpush1.bf16.msra.mxu0 0
        %4507 = vmatprep.subr.bf16.mxu0 0
        %4508 = vmatpush1.bf16.msra.mxu0 0
        %4509 = vmatprep.subr.bf16.mxu0 0
        %4510 = vmatpush1.bf16.msra.mxu0 0
        %4511 = vmatprep.mubr.bf16.mxu0 0
        %4512 = vmatmul.mubr.bf16.gmra.mrb[0].mxu0 %v1470
        %v4513 = vpop.f32.mrb[0].mxu0
        %v4514 = vadd.f32 0.0, %v4513
        %v4515 = vpop.f32.mrb[0].mxu0
        %v4516 = vpop.f32.mrb[0].mxu0
        %v4517 = vpop.f32.mrb[0].mxu0
        %4518 = vdwg.mxu0
        %v4519 = vadd.f32 %v4470, %v4514
        %4520 = vrot.lane.b32.xlu0 %v4473, 124
        %v4521 = vpop.permute.xlu0 %4520
        %v4523 = vsel %vm1128, %v4521, 0
        %4525 = vmatprep.subr.bf16.mxu0 0
        %4526 = vmatpush1.bf16.msra.mxu0 %v4523
        %4527 = vmatprep.subr.bf16.mxu0 0
        %4528 = vmatpush1.bf16.msra.mxu0 0
        %4529 = vmatprep.subr.bf16.mxu0 0
        %4530 = vmatpush1.bf16.msra.mxu0 0
        %4531 = vmatprep.subr.bf16.mxu0 0
        %4532 = vmatpush1.bf16.msra.mxu0 0
        %4533 = vmatprep.subr.bf16.mxu0 0
        %4534 = vmatpush1.bf16.msra.mxu0 0
        %4535 = vmatprep.subr.bf16.mxu0 0
        %4536 = vmatpush1.bf16.msra.mxu0 0
        %4537 = vmatprep.subr.bf16.mxu0 0
        %4538 = vmatpush1.bf16.msra.mxu0 0
        %4539 = vmatprep.subr.bf16.mxu0 0
        %4540 = vmatpush1.bf16.msra.mxu0 0
        %4541 = vmatprep.subr.bf16.mxu0 0
        %4542 = vmatpush1.bf16.msra.mxu0 0
        %4543 = vmatprep.subr.bf16.mxu0 0
        %4544 = vmatpush1.bf16.msra.mxu0 0
        %4545 = vmatprep.subr.bf16.mxu0 0
        %4546 = vmatpush1.bf16.msra.mxu0 0
        %4547 = vmatprep.subr.bf16.mxu0 0
        %4548 = vmatpush1.bf16.msra.mxu0 0
        %4549 = vmatprep.subr.bf16.mxu0 0
        %4550 = vmatpush1.bf16.msra.mxu0 0
        %4551 = vmatprep.subr.bf16.mxu0 0
        %4552 = vmatpush1.bf16.msra.mxu0 0
        %4553 = vmatprep.subr.bf16.mxu0 0
        %4554 = vmatpush1.bf16.msra.mxu0 0
        %4555 = vmatprep.subr.bf16.mxu0 0
        %4556 = vmatpush1.bf16.msra.mxu0 0
        %4557 = vmatprep.mubr.bf16.mxu0 0
        %4558 = vmatmul.mubr.bf16.gmra.mrb[0].mxu0 %v1519
        %v4559 = vpop.f32.mrb[0].mxu0
        %v4560 = vadd.f32 0.0, %v4559
        %v4561 = vpop.f32.mrb[0].mxu0
        %v4562 = vpop.f32.mrb[0].mxu0
        %v4563 = vpop.f32.mrb[0].mxu0
        %4564 = vdwg.mxu0
        %v4565 = vadd.f32 %v4519, %v4560
        %v4566 = vunpack.c.l.bf16 %v4286
        %v4567 = vadd.f32 %v4565, %v1569
        %4569 = vrot.lane.b32.xlu0 %v4566, 126
        %v4570 = vpop.permute.xlu0 %4569
        %v4572 = vadd.f32 %v4567, %v4570
        %v4573 = vpack.c.bf16 %v4572, %v4572
        %s4574 = scalar_lea.vmem %s231, 28 [#allocation3]
        %4575 = vst.msk [vmem:[%s4574] sm:$0xf] %vm1578, %v4573
        %s4576 = sand.u32 %s151, 1
        %s4577 = scalar_lea.sflag [#allocation4], %s4576
        %s4578 = sand.u32 %s151, 1
        %s4579 = smul.addr %s4578, 32
        %s4580 = scalar_lea.vmem [#allocation3], %s4579
        // Predicated region
        $region41: #{tpu_custom_call.1} parent=39 // pred_check
          %p4581 = pneg %p161
        $region42: #{tpu_custom_call.1} parent=39 // pred_check_branch
          %4583 = sbr.rel (%p4581) target = $region44
        $region43: #{tpu_custom_call.1} parent=39 // pred_region
          %s4584 = smul.u32 8, %s24
          %s4586 = ssub.s32 512, 512
          %4587 = vsyncadd %s4577, %s4586
          %s4588 = smul.addr %s23, 16
          %s4589 = sadd.s32 %s4584, %s4588
          %s4590 = smul.addr %s4589, 64
          %s4591 = scalar_lea.hbm %s5, %s4590
          %s4592 = sshll.u32 %s4580, 4
          %s4593 = int_to_ptr.vmem [resolvable:$true] %s4592
          %4598 = dma.vmem_to_hbm [thread:$0]  %s4593, 512, %s4591, %s4577, 64, 64, 4
        $region44: #{tpu_custom_call.1} parent=39 // pred_fallthru
          _
      $region40: #{tpu_custom_call.1} parent=5 // pred_fallthru
        _
      %p4599 = scmp.le.s32.totalorder 2, %s14
      // Predicated region
      $region45: #{tpu_custom_call.1} parent=5 // pred_check
        %p4600 = pneg %p4599
      $region46: #{tpu_custom_call.1} parent=5 // pred_check_branch
        %4602 = sbr.rel (%p4600) target = $region48
      $region47: #{tpu_custom_call.1} parent=5 // pred_region
        %s4603 = ssub.s32 %s14, 2
        // Predicated region
        $region49: #{tpu_custom_call.1} parent=47 // pred_check
          %p4604 = pneg %p167
        $region50: #{tpu_custom_call.1} parent=47 // pred_check_branch
          %4606 = sbr.rel (%p4604) target = $region52
        $region51: #{tpu_custom_call.1} parent=47 // pred_region
          %s4607 = sand.u32 %s152, 1
          %s4608 = scalar_lea.sflag [#allocation4], %s4607
          %s4609 = sand.u32 %s152, 1
          %s4610 = smul.addr %s4609, 32
          %s4611 = scalar_lea.vmem [#allocation3], %s4610
          %4612 = dma.done %s4608, 512
        $region52: #{tpu_custom_call.1} parent=47 // pred_fallthru
          _
      $region48: #{tpu_custom_call.1} parent=5 // pred_fallthru
        _
    $region6: #{tpu_custom_call.1} parent=1 // loop_footer
      %s18 = sadd.s32 1, %s14
    $region7: #{tpu_custom_call.1} parent=1 // loop_footer_branch
      %13 = sbr.rel target = $region3
    $region8: #{tpu_custom_call.1} parent=1 // loop_exit
      _
    %4613 = vsyncpa [#allocation4], 1
    %s4614 = scalar_lea.sflag [#allocation4], 1
    %4615 = vsyncpa %s4614, 1

</llo_original>
